<compile_context>
chip_gen: v5e
topology: v5e:2x2
jax: 0.10.0
libtpu: 0.0.40
codegen_flags: <defaults>
</compile_context>

<pallas_src>
import numpy as np
import jax
import jax.numpy as jnp
from jax.experimental import pallas as pl
from jax.experimental.pallas import tpu as pltpu

# ---- config (mirrors the PyTorch `opt` dict) -------------------------------
FEAT_NUM   = 64                       # opt['feat_num']   (embedding rows)
FIELD_NUM  = 4                        # opt['field_num']
LATENT_DIM = 8                        # opt['latent_dim']
DNN_DIM    = FIELD_NUM * LATENT_DIM   # 32
CROSS_NUM  = 2                        # opt['cross']
MLP_DIMS   = (64, 32)                 # opt['mlp_dims']
MASK_INITIAL = 0.0                    # opt['mask_initial']
TEMP = 1.0

_sig = 1.0 / (1.0 + np.exp(-MASK_INITIAL))
SCALING = float(1.0 / _sig)           # 1 / sigmoid(mask_initial_value)

LANE = 128
TILE_ALIGN = 1024                     # makes the output slab (>=8, 128)-aligned


def _round_up(x, m):
    return (x + m - 1) // m * m


# ---- Pallas kernel ----------------------------------------------------------
def maskdcn_kernel(idx_ref, tab_ref, cwT_ref, cb_ref,
                   b1_ref, w2_ref, b2_ref, wcT_ref, out_ref):
    tile_b = idx_ref.shape[0]
    idx = idx_ref[...]                                   # (TILE_B, F) int32, field-offset

    # In-kernel gather: boolean one-hot over the flattened (field, feature)
    # axis (OR-accumulated, single cast to bf16), then ONE bf16 MXU matmul
    # against the fused [masked-emb | masked-emb @ W1] table.
    col = jax.lax.broadcasted_iota(jnp.int32, (tile_b, FIELD_NUM * FEAT_NUM), 1)
    hit = col == idx[:, 0:1]
    for f in range(1, FIELD_NUM):                        # unrolled (FIELD_NUM = 4)
        hit = jnp.logical_or(hit, col == idx[:, f:f + 1])
    onehot = hit.astype(jnp.bfloat16)                    # (TILE_B, F*FEAT)

    y = jnp.dot(onehot, tab_ref[...], preferred_element_type=jnp.float32)  # (TILE_B, DNN+MLP0)
    x0 = y[:, :DNN_DIM]                                  # masked, flattened embedding
    h = jnp.maximum(y[:, DNN_DIM:] + b1_ref[...], 0.0)   # MLP layer 1 (fused matmul)

    # MLP layer 2 (use_bn=False, dropout = identity in eval)
    h = jnp.dot(h, w2_ref[...], preferred_element_type=jnp.float32) + b2_ref[...]
    h = jnp.maximum(h, 0.0)

    # CrossNetwork: x_{i+1} = x0 * <x_i, w_i> + b_i + x_i   (matvec on the MXU)
    cwT = cwT_ref[...]                                   # (DNN_DIM, CROSS_NUM)
    cb = cb_ref[...]                                     # (CROSS_NUM, DNN_DIM)
    x = x0
    for i in range(CROSS_NUM):                           # unrolled at trace time
        xw = jnp.dot(x, cwT[:, i:i + 1], preferred_element_type=jnp.float32)  # (TILE_B, 1)
        x = x0 * xw + cb[i:i + 1, :] + x

    # combination: single matvec on cat([cross, dnn]) with the fused (64, 1) weight
    comb = jnp.concatenate([x, h], axis=1)               # (TILE_B, DNN + MLP1)
    res = jnp.dot(comb, wcT_ref[...], preferred_element_type=jnp.float32)     # (TILE_B, 1)

    # Lane-dense writeback: (TILE_B, 1) -> (TILE_B//128, 128) slab (XLU relayout).
    out_ref[...] = res.reshape(out_ref.shape)


# ---- weight preprocessing (once per weight update, batch-independent) -------
def preprocess_params(params):
    # Fold the per-feature-row mask into the table (exact for eval/ticket=False).
    masked_emb = params["embedding"] * (
        SCALING * jax.nn.sigmoid(TEMP * params["mask_weight"]))          # (FEAT, LAT)
    # Block-diagonal expansion so the in-kernel gather + field flatten is a
    # single matmul:  emb_exp[f*FEAT + v, f*LAT + d] = masked_emb[v, d]
    emb_exp = jnp.kron(jnp.eye(FIELD_NUM, dtype=jnp.float32), masked_emb)  # (F*FEAT, DNN)
    # Fuse MLP layer 1 into the gather matmul and store the table in bf16.
    emb_w1 = jnp.dot(emb_exp, params["w1"])                               # (F*FEAT, MLP0)
    fused_table = jnp.concatenate([emb_exp, emb_w1], axis=1).astype(jnp.bfloat16)
    wc = params["wc"]                                                    # (1, DNN + MLP[-1])
    return dict(
        fused_table=fused_table,                                         # (F*FEAT, DNN+MLP0) bf16
        cross_wT=params["cross_w"].T,                                    # (DNN, CROSS)
        cross_b=params["cross_b"],                                       # (CROSS, DNN)
        b1=params["b1"],                                                 # (1, MLP0)
        w2=params["w2"], b2=params["b2"],                                # (MLP0, MLP1), (1, MLP1)
        wc_catT=wc.T,                                                    # (DNN + MLP1, 1)
    )


# ---- wrapper ----------------------------------------------------------------
def mask_deep_cross_forward(x_idx, params, *, tile_b=4096):
    B, F = x_idx.shape
    assert F == FIELD_NUM
    kp = preprocess_params(params)

    # Only raw indices cross the HBM boundary; pre-offset per field so the
    # kernel's one-hot is over a single flattened (field, feature) axis.
    flat_idx = (x_idx.astype(jnp.int32)
                + (jnp.arange(FIELD_NUM, dtype=jnp.int32) * FEAT_NUM)[None, :])

    # --- batch tile selection -------------------------------------------
    # Tiles are 1024-aligned so the lane-dense output block is a clean
    # (tile_b//128 >= 8, 128) slab.  Clamp to the padded batch so small
    # batches don't over-pad, and keep >= 2 grid steps when the batch allows
    # so dimension_semantics=("parallel",) can split tiles across v7x's 2 TCs.
    tile_b = max(TILE_ALIGN, (int(tile_b) // TILE_ALIGN) * TILE_ALIGN)
    b_aligned = _round_up(B, TILE_ALIGN)
    num_tiles = pl.cdiv(b_aligned, tile_b)
    if num_tiles == 1 and b_aligned >= 2 * TILE_ALIGN:
        num_tiles = 2
    tile_b = _round_up(pl.cdiv(b_aligned, num_tiles), TILE_ALIGN)
    Bp = tile_b * num_tiles

    if Bp != B:
        flat_idx = jnp.pad(flat_idx, ((0, Bp - B), (0, 0)))   # padded rows -> garbage, sliced off
    grid = (num_tiles,)

    def resident(shape):      # weights: DMA'd once, stay VMEM-resident across the grid
        return pl.BlockSpec(shape, lambda i: (0, 0))

    in_specs = [
        pl.BlockSpec((tile_b, FIELD_NUM), lambda i: (i, 0)),          # indices (pipelined)
        resident((FIELD_NUM * FEAT_NUM, DNN_DIM + MLP_DIMS[0])),      # fused table (bf16)
        resident((DNN_DIM, CROSS_NUM)),                               # cross_wT
        resident((CROSS_NUM, DNN_DIM)),                               # cross_b
        resident((1, MLP_DIMS[0])),                                   # b1
        resident((MLP_DIMS[0], MLP_DIMS[1])),                         # w2
        resident((1, MLP_DIMS[1])),                                   # b2
        resident((DNN_DIM + MLP_DIMS[1], 1)),                         # wc_catT (fused)
    ]
    # Lane-dense output slab: (Bp//128, 128), one (tile_b//128, 128) block per step.
    out_specs = pl.BlockSpec((tile_b // LANE, LANE), lambda i: (i, 0))

    flops_per_row = (2 * FIELD_NUM * FEAT_NUM * (DNN_DIM + MLP_DIMS[0])  # gather + MLP1 (fused)
                     + 2 * MLP_DIMS[0] * MLP_DIMS[1]                     # MLP2
                     + CROSS_NUM * 6 * DNN_DIM                           # cross matvec + elementwise
                     + 2 * (DNN_DIM + MLP_DIMS[1]))                      # combination
    weight_bytes = sum(int(np.prod(v.shape)) * v.dtype.itemsize for v in kp.values())
    cost = pl.CostEstimate(
        flops=int(Bp) * int(flops_per_row),
        transcendentals=0,
        bytes_accessed=int(Bp) * (FIELD_NUM * 4 + 4) + int(weight_bytes))

    out = pl.pallas_call(
        maskdcn_kernel,
        out_shape=jax.ShapeDtypeStruct((Bp // LANE, LANE), jnp.float32),
        grid=grid,
        in_specs=in_specs,
        out_specs=out_specs,
        compiler_params=pltpu.CompilerParams(
            dimension_semantics=("parallel",)),
        cost_estimate=cost,
    )(flat_idx, kp["fused_table"], kp["cross_wT"], kp["cross_b"],
      kp["b1"], kp["w2"], kp["b2"], kp["wc_catT"])
    return out.reshape(Bp, 1)[:B]


# ---- deterministic parameter init (shapes from the module __init__) ---------
def init_params(key):
    ks = jax.random.split(key, 9)
    xav = float(np.sqrt(6.0 / (FEAT_NUM + LATENT_DIM)))          # xavier_uniform bound
    embedding = jax.random.uniform(ks[0], (FEAT_NUM, LATENT_DIM),
                                   jnp.float32, -xav, xav)
    # __init__ sets mask_weight = mask_initial (constant); perturb deterministically
    # so the sigmoid-mask path is non-trivially exercised (semantics unchanged).
    mask_weight = MASK_INITIAL + 0.5 * jax.random.normal(
        ks[1], (FEAT_NUM, 1), jnp.float32)
    cross_w = jax.random.normal(ks[2], (CROSS_NUM, DNN_DIM),
                                jnp.float32) / np.sqrt(DNN_DIM)
    cross_b = 0.1 * jax.random.normal(ks[3], (CROSS_NUM, DNN_DIM), jnp.float32)
    w1 = jax.random.normal(ks[4], (DNN_DIM, MLP_DIMS[0]),
                           jnp.float32) / np.sqrt(DNN_DIM)
    b1 = 0.1 * jax.random.normal(ks[5], (1, MLP_DIMS[0]), jnp.float32)
    w2 = jax.random.normal(ks[6], (MLP_DIMS[0], MLP_DIMS[1]),
                           jnp.float32) / np.sqrt(MLP_DIMS[0])
    b2 = 0.1 * jax.random.normal(ks[7], (1, MLP_DIMS[1]), jnp.float32)
    wc = jax.random.normal(ks[8], (1, DNN_DIM + MLP_DIMS[1]),
                           jnp.float32) / np.sqrt(DNN_DIM + MLP_DIMS[1])
    return dict(embedding=embedding, mask_weight=mask_weight,
                cross_w=cross_w, cross_b=cross_b,
                w1=w1, b1=b1, w2=w2, b2=b2, wc=wc)


# ---- pure-JAX reference (mirrors the PyTorch forward) ------------------------
def reference_forward(x_idx, p):
    hp = jax.lax.Precision.HIGHEST
    B, F = x_idx.shape
    embed = p["embedding"][x_idx]                                    # (B, F, LAT)
    mask = SCALING * jax.nn.sigmoid(TEMP * p["mask_weight"][x_idx])  # (B, F, 1)
    x0 = (embed * mask).reshape(B, DNN_DIM)
    x = x0
    for i in range(CROSS_NUM):
        xw = jnp.dot(x, p["cross_w"][i], precision=hp)[:, None]
        x = x0 * xw + p["cross_b"][i][None, :] + x
    h = jnp.maximum(jnp.dot(x0, p["w1"], precision=hp) + p["b1"], 0.0)
    h = jnp.maximum(jnp.dot(h, p["w2"], precision=hp) + p["b2"], 0.0)
    comb = jnp.concatenate([x, h], axis=1)
    return jnp.dot(comb, p["wc"].T, precision=hp)


if __name__ == "__main__":
    key = jax.random.PRNGKey(0)
    pkey, xkey = jax.random.split(key)
    params = init_params(pkey)

    B = 300   # small, not tile-aligned: exercises padding and the clamped tile
    x_idx = jax.random.randint(xkey, (B, FIELD_NUM), 0, FEAT_NUM, dtype=jnp.int32)

    out = jax.block_until_ready(mask_deep_cross_forward(x_idx, params))
    ref = jax.block_until_ready(reference_forward(x_idx, params))

    assert out.shape == (B, 1)
    np.testing.assert_allclose(np.asarray(out), np.asarray(ref),
                               rtol=1e-2, atol=1e-2)
    print("KERNEL_OK")
</pallas_src>

<mosaic_0001>
module attributes {stable_mosaic.version = 11 : i64} {
  func.func @maskdcn_kernel(%arg0: i32, %arg1: memref<1024x4xi32, #tpu.memory_space<vmem>>, %arg2: memref<256x96xbf16, #tpu.memory_space<vmem>>, %arg3: memref<32x2xf32, #tpu.memory_space<vmem>>, %arg4: memref<2x32xf32, #tpu.memory_space<vmem>>, %arg5: memref<1x64xf32, #tpu.memory_space<vmem>>, %arg6: memref<64x32xf32, #tpu.memory_space<vmem>>, %arg7: memref<1x32xf32, #tpu.memory_space<vmem>>, %arg8: memref<64x1xf32, #tpu.memory_space<vmem>>, %arg9: memref<8x128xf32, #tpu.memory_space<vmem>>) attributes {dimension_semantics = [#tpu.dimension_semantics<parallel>], iteration_bounds = array<i64: 1>, scalar_prefetch = 0 : i64, scratch_operands = 0 : i64, tpu.core_type = #tpu.core_type<tc>, window_params = [{transform_indices = @transform_0, window_bounds = array<i64: 1024, 4>}, {pipeline_mode = #tpu.pipeline_mode<synchronous>, transform_indices = @transform_1, window_bounds = array<i64: 256, 96>}, {pipeline_mode = #tpu.pipeline_mode<synchronous>, transform_indices = @transform_2, window_bounds = array<i64: 32, 2>}, {pipeline_mode = #tpu.pipeline_mode<synchronous>, transform_indices = @transform_3, window_bounds = array<i64: 2, 32>}, {pipeline_mode = #tpu.pipeline_mode<synchronous>, transform_indices = @transform_4, window_bounds = array<i64: 1, 64>}, {pipeline_mode = #tpu.pipeline_mode<synchronous>, transform_indices = @transform_5, window_bounds = array<i64: 64, 32>}, {pipeline_mode = #tpu.pipeline_mode<synchronous>, transform_indices = @transform_6, window_bounds = array<i64: 1, 32>}, {pipeline_mode = #tpu.pipeline_mode<synchronous>, transform_indices = @transform_7, window_bounds = array<i64: 64, 1>}, {transform_indices = @transform_8, window_bounds = array<i64: 8, 128>}]} {
    %c0 = arith.constant 0 : index
    %c0_0 = arith.constant 0 : index
    %0 = vector.load %arg1[%c0, %c0_0] : memref<1024x4xi32, #tpu.memory_space<vmem>>, vector<1024x4xi32>
    %1 = tpu.iota {dimensions = array<i32: 1>} : vector<1024x256xi32>
    %2 = vector.extract_strided_slice %0 {offsets = [0, 0], sizes = [1024, 1], strides = [1, 1]} : vector<1024x4xi32> to vector<1024x1xi32>
    %3 = vector.broadcast %2 : vector<1024x1xi32> to vector<1024x256xi32>
    %4 = arith.cmpi eq, %1, %3 : vector<1024x256xi32>
    %5 = vector.extract_strided_slice %0 {offsets = [0, 1], sizes = [1024, 1], strides = [1, 1]} : vector<1024x4xi32> to vector<1024x1xi32>
    %6 = vector.broadcast %5 : vector<1024x1xi32> to vector<1024x256xi32>
    %7 = arith.cmpi eq, %1, %6 : vector<1024x256xi32>
    %8 = arith.ori %4, %7 : vector<1024x256xi1>
    %9 = vector.extract_strided_slice %0 {offsets = [0, 2], sizes = [1024, 1], strides = [1, 1]} : vector<1024x4xi32> to vector<1024x1xi32>
    %10 = vector.broadcast %9 : vector<1024x1xi32> to vector<1024x256xi32>
    %11 = arith.cmpi eq, %1, %10 : vector<1024x256xi32>
    %12 = arith.ori %8, %11 : vector<1024x256xi1>
    %13 = vector.extract_strided_slice %0 {offsets = [0, 3], sizes = [1024, 1], strides = [1, 1]} : vector<1024x4xi32> to vector<1024x1xi32>
    %14 = vector.broadcast %13 : vector<1024x1xi32> to vector<1024x256xi32>
    %15 = arith.cmpi eq, %1, %14 : vector<1024x256xi32>
    %16 = arith.ori %12, %15 : vector<1024x256xi1>
    %17 = arith.extui %16 : vector<1024x256xi1> to vector<1024x256xi32>
    %18 = arith.sitofp %17 : vector<1024x256xi32> to vector<1024x256xf32>
    %19 = arith.truncf %18 : vector<1024x256xf32> to vector<1024x256xbf16>
    %c0_1 = arith.constant 0 : index
    %c0_2 = arith.constant 0 : index
    %20 = vector.load %arg2[%c0_1, %c0_2] : memref<256x96xbf16, #tpu.memory_space<vmem>>, vector<256x96xbf16>
    %cst = arith.constant dense<0.000000e+00> : vector<1024x96xf32>
    %21 = tpu.matmul %19, %20, %cst {dimension_numbers = #tpu.dot_dimension_numbers<[1], [0], [0], [1], [0, 0, 1, 1], [], []>} : vector<1024x256xbf16>, vector<256x96xbf16>, vector<1024x96xf32> -> vector<1024x96xf32>
    %22 = vector.extract_strided_slice %21 {offsets = [0, 0], sizes = [1024, 32], strides = [1, 1]} : vector<1024x96xf32> to vector<1024x32xf32>
    %23 = vector.extract_strided_slice %21 {offsets = [0, 32], sizes = [1024, 64], strides = [1, 1]} : vector<1024x96xf32> to vector<1024x64xf32>
    %c0_3 = arith.constant 0 : index
    %c0_4 = arith.constant 0 : index
    %24 = vector.load %arg5[%c0_3, %c0_4] : memref<1x64xf32, #tpu.memory_space<vmem>>, vector<1x64xf32>
    %25 = vector.broadcast %24 : vector<1x64xf32> to vector<1024x64xf32>
    %26 = arith.addf %23, %25 : vector<1024x64xf32>
    %cst_5 = arith.constant 0.000000e+00 : f32
    %27 = vector.broadcast %cst_5 : f32 to vector<1024x64xf32>
    %28 = arith.maximumf %26, %27 : vector<1024x64xf32>
    %c0_6 = arith.constant 0 : index
    %c0_7 = arith.constant 0 : index
    %29 = vector.load %arg6[%c0_6, %c0_7] : memref<64x32xf32, #tpu.memory_space<vmem>>, vector<64x32xf32>
    %cst_8 = arith.constant dense<0.000000e+00> : vector<1024x32xf32>
    %30 = tpu.matmul %28, %29, %cst_8 {dimension_numbers = #tpu.dot_dimension_numbers<[1], [0], [0], [1], [0, 0, 1, 1], [], []>} : vector<1024x64xf32>, vector<64x32xf32>, vector<1024x32xf32> -> vector<1024x32xf32>
    %c0_9 = arith.constant 0 : index
    %c0_10 = arith.constant 0 : index
    %31 = vector.load %arg7[%c0_9, %c0_10] : memref<1x32xf32, #tpu.memory_space<vmem>>, vector<1x32xf32>
    %32 = vector.broadcast %31 : vector<1x32xf32> to vector<1024x32xf32>
    %33 = arith.addf %30, %32 : vector<1024x32xf32>
    %cst_11 = arith.constant 0.000000e+00 : f32
    %34 = vector.broadcast %cst_11 : f32 to vector<1024x32xf32>
    %35 = arith.maximumf %33, %34 : vector<1024x32xf32>
    %c0_12 = arith.constant 0 : index
    %c0_13 = arith.constant 0 : index
    %36 = vector.load %arg3[%c0_12, %c0_13] : memref<32x2xf32, #tpu.memory_space<vmem>>, vector<32x2xf32>
    %c0_14 = arith.constant 0 : index
    %c0_15 = arith.constant 0 : index
    %37 = vector.load %arg4[%c0_14, %c0_15] : memref<2x32xf32, #tpu.memory_space<vmem>>, vector<2x32xf32>
    %38 = vector.extract_strided_slice %36 {offsets = [0, 0], sizes = [32, 1], strides = [1, 1]} : vector<32x2xf32> to vector<32x1xf32>
    %cst_16 = arith.constant dense<0.000000e+00> : vector<1024x1xf32>
    %39 = tpu.matmul %22, %38, %cst_16 {dimension_numbers = #tpu.dot_dimension_numbers<[1], [0], [0], [1], [0, 0, 1, 1], [], []>} : vector<1024x32xf32>, vector<32x1xf32>, vector<1024x1xf32> -> vector<1024x1xf32>
    %40 = vector.broadcast %39 : vector<1024x1xf32> to vector<1024x32xf32>
    %41 = arith.mulf %22, %40 : vector<1024x32xf32>
    %42 = vector.extract_strided_slice %37 {offsets = [0, 0], sizes = [1, 32], strides = [1, 1]} : vector<2x32xf32> to vector<1x32xf32>
    %43 = vector.broadcast %42 : vector<1x32xf32> to vector<1024x32xf32>
    %44 = arith.addf %41, %43 : vector<1024x32xf32>
    %45 = arith.addf %44, %22 : vector<1024x32xf32>
    %46 = vector.extract_strided_slice %36 {offsets = [0, 1], sizes = [32, 1], strides = [1, 1]} : vector<32x2xf32> to vector<32x1xf32>
    %cst_17 = arith.constant dense<0.000000e+00> : vector<1024x1xf32>
    %47 = tpu.matmul %45, %46, %cst_17 {dimension_numbers = #tpu.dot_dimension_numbers<[1], [0], [0], [1], [0, 0, 1, 1], [], []>} : vector<1024x32xf32>, vector<32x1xf32>, vector<1024x1xf32> -> vector<1024x1xf32>
    %48 = vector.broadcast %47 : vector<1024x1xf32> to vector<1024x32xf32>
    %49 = arith.mulf %22, %48 : vector<1024x32xf32>
    %50 = vector.extract_strided_slice %37 {offsets = [1, 0], sizes = [1, 32], strides = [1, 1]} : vector<2x32xf32> to vector<1x32xf32>
    %51 = vector.broadcast %50 : vector<1x32xf32> to vector<1024x32xf32>
    %52 = arith.addf %49, %51 : vector<1024x32xf32>
    %53 = arith.addf %52, %45 : vector<1024x32xf32>
    %54 = tpu.concatenate %53, %35 in 1 : vector<1024x32xf32>, vector<1024x32xf32> -> vector<1024x64xf32>
    %c0_18 = arith.constant 0 : index
    %c0_19 = arith.constant 0 : index
    %55 = vector.load %arg8[%c0_18, %c0_19] : memref<64x1xf32, #tpu.memory_space<vmem>>, vector<64x1xf32>
    %cst_20 = arith.constant dense<0.000000e+00> : vector<1024x1xf32>
    %56 = tpu.matmul %54, %55, %cst_20 {dimension_numbers = #tpu.dot_dimension_numbers<[1], [0], [0], [1], [0, 0, 1, 1], [], []>} : vector<1024x64xf32>, vector<64x1xf32>, vector<1024x1xf32> -> vector<1024x1xf32>
    %57 = vector.shape_cast %56 : vector<1024x1xf32> to vector<8x128xf32>
    %c0_21 = arith.constant 0 : index
    %c0_22 = arith.constant 0 : index
    %58 = vector.load %arg9[%c0_21, %c0_22] : memref<8x128xf32, #tpu.memory_space<vmem>>, vector<8x128xf32>
    tpu.vector_store %arg9[%c0_21, %c0_22], %57 {strides = array<i32>} : memref<8x128xf32, #tpu.memory_space<vmem>>, vector<8x128xf32>,
    return
  }
  func.func @transform_0(%arg0: i32) -> (i32, i32) {
    %c0_i32 = arith.constant 0 : i32
    %c0_i32_0 = arith.constant 0 : i32
    return %arg0, %c0_i32 : i32, i32
  }
  func.func @transform_1(%arg0: i32) -> (i32, i32) {
    %c0_i32 = arith.constant 0 : i32
    %c0_i32_0 = arith.constant 0 : i32
    %c0_i32_1 = arith.constant 0 : i32
    return %c0_i32, %c0_i32_0 : i32, i32
  }
  func.func @transform_2(%arg0: i32) -> (i32, i32) {
    %c0_i32 = arith.constant 0 : i32
    %c0_i32_0 = arith.constant 0 : i32
    %c0_i32_1 = arith.constant 0 : i32
    return %c0_i32, %c0_i32_0 : i32, i32
  }
  func.func @transform_3(%arg0: i32) -> (i32, i32) {
    %c0_i32 = arith.constant 0 : i32
    %c0_i32_0 = arith.constant 0 : i32
    %c0_i32_1 = arith.constant 0 : i32
    return %c0_i32, %c0_i32_0 : i32, i32
  }
  func.func @transform_4(%arg0: i32) -> (i32, i32) {
    %c0_i32 = arith.constant 0 : i32
    %c0_i32_0 = arith.constant 0 : i32
    %c0_i32_1 = arith.constant 0 : i32
    return %c0_i32, %c0_i32_0 : i32, i32
  }
  func.func @transform_5(%arg0: i32) -> (i32, i32) {
    %c0_i32 = arith.constant 0 : i32
    %c0_i32_0 = arith.constant 0 : i32
    %c0_i32_1 = arith.constant 0 : i32
    return %c0_i32, %c0_i32_0 : i32, i32
  }
  func.func @transform_6(%arg0: i32) -> (i32, i32) {
    %c0_i32 = arith.constant 0 : i32
    %c0_i32_0 = arith.constant 0 : i32
    %c0_i32_1 = arith.constant 0 : i32
    return %c0_i32, %c0_i32_0 : i32, i32
  }
  func.func @transform_7(%arg0: i32) -> (i32, i32) {
    %c0_i32 = arith.constant 0 : i32
    %c0_i32_0 = arith.constant 0 : i32
    %c0_i32_1 = arith.constant 0 : i32
    return %c0_i32, %c0_i32_0 : i32, i32
  }
  func.func @transform_8(%arg0: i32) -> (i32, i32) {
    %c0_i32 = arith.constant 0 : i32
    %c0_i32_0 = arith.constant 0 : i32
    return %arg0, %c0_i32 : i32, i32
  }
}

</mosaic_0001>

<llo_original>
// kernel: tpu_custom_call.1
$region0: #{tpu_custom_call.1}
  #allocation0 [shape = 'u32[]', space=smem, size = 0x4, offset = 0x4, fixed_abs, tag = 'smem constant byte address 0x4 - core index']
  #allocation1 [shape = 'u32[72,128]{1,0:T(1,128)}', space=vmem, size = 0x9000, scoped, tag = 'internal scratch']
  %s0 = inlined_call_operand.vmem [shape: s32[1024,4], index: 0, kind: input, shape index: {}]
  %s1 = inlined_call_operand.vmem [shape: bf16[256,96], index: 1, kind: input, shape index: {}]
  %s2 = inlined_call_operand.vmem [shape: f32[32,2], index: 2, kind: input, shape index: {}]
  %s3 = inlined_call_operand.vmem [shape: f32[2,32], index: 3, kind: input, shape index: {}]
  %s4 = inlined_call_operand.vmem [shape: f32[1,64], index: 4, kind: input, shape index: {}]
  %s5 = inlined_call_operand.vmem [shape: f32[64,32], index: 5, kind: input, shape index: {}]
  %s6 = inlined_call_operand.vmem [shape: f32[1,32], index: 6, kind: input, shape index: {}]
  %s7 = inlined_call_operand.vmem [shape: f32[64,1], index: 7, kind: input, shape index: {}]
  %s8 = inlined_call_operand.hbm [shape: f32[8,128], index: 8, kind: output, shape index: {}]
  %s9 = sld [smem:[#allocation0]]
  $region42: #{tpu_custom_call.1} parent=0
    _
  %s11 = ssub.s32 1, %s9
  %s12 = scalar_select 0, %s11, %s9
  $region1: #{tpu_custom_call.1} parent=0
    #allocation2 [shape = 'u8[4096]{0}', space=vmem, size = 0x1000, scoped, tag = 'output window, operand 0, single buffered']
    #allocation3 [shape = 's32[1]{0}', space=sflag, size = 0x4, scoped, tag = 'scoped memory for tpu_custom_call.1']
    %13 = vsyncpa [#allocation3], 0
    // Predicated region
    $region2: #{tpu_custom_call.1} parent=1 // pred_check
      _
    $region3: #{tpu_custom_call.1} parent=1 // pred_check_branch
      %15 = sbr.rel (0) target = $region5
    $region4: #{tpu_custom_call.1} parent=1 // pred_region
      _
    $region5: #{tpu_custom_call.1} parent=1 // pred_fallthru
      _
    // Predicated region
    $region6: #{tpu_custom_call.1} parent=1 // pred_check
      _
    $region7: #{tpu_custom_call.1} parent=1 // pred_check_branch
      %17 = sbr.rel (0) target = $region9
    $region8: #{tpu_custom_call.1} parent=1 // pred_region
      _
    $region9: #{tpu_custom_call.1} parent=1 // pred_fallthru
      _
    // Predicated region
    $region10: #{tpu_custom_call.1} parent=1 // pred_check
      _
    $region11: #{tpu_custom_call.1} parent=1 // pred_check_branch
      %19 = sbr.rel (0) target = $region13
    $region12: #{tpu_custom_call.1} parent=1 // pred_region
      _
    $region13: #{tpu_custom_call.1} parent=1 // pred_fallthru
      _
    // Predicated region
    $region14: #{tpu_custom_call.1} parent=1 // pred_check
      _
    $region15: #{tpu_custom_call.1} parent=1 // pred_check_branch
      %21 = sbr.rel (0) target = $region17
    $region16: #{tpu_custom_call.1} parent=1 // pred_region
      _
    $region17: #{tpu_custom_call.1} parent=1 // pred_fallthru
      _
    // Predicated region
    $region18: #{tpu_custom_call.1} parent=1 // pred_check
      _
    $region19: #{tpu_custom_call.1} parent=1 // pred_check_branch
      %23 = sbr.rel (0) target = $region21
    $region20: #{tpu_custom_call.1} parent=1 // pred_region
      _
    $region21: #{tpu_custom_call.1} parent=1 // pred_fallthru
      _
    // Predicated region
    $region22: #{tpu_custom_call.1} parent=1 // pred_check
      _
    $region23: #{tpu_custom_call.1} parent=1 // pred_check_branch
      %25 = sbr.rel (0) target = $region25
    $region24: #{tpu_custom_call.1} parent=1 // pred_region
      _
    $region25: #{tpu_custom_call.1} parent=1 // pred_fallthru
      _
    // Predicated region
    $region26: #{tpu_custom_call.1} parent=1 // pred_check
      _
    $region27: #{tpu_custom_call.1} parent=1 // pred_check_branch
      %27 = sbr.rel (0) target = $region29
    $region28: #{tpu_custom_call.1} parent=1 // pred_region
      _
    $region29: #{tpu_custom_call.1} parent=1 // pred_fallthru
      _
    // Predicated region
    $region30: #{tpu_custom_call.1} parent=1 // pred_check
      _
    $region31: #{tpu_custom_call.1} parent=1 // pred_check_branch
      %29 = sbr.rel (0) target = $region33
    $region32: #{tpu_custom_call.1} parent=1 // pred_region
      _
    $region33: #{tpu_custom_call.1} parent=1 // pred_fallthru
      _
    %v30 = vld [vmem:[%s0] sm:$0xff]
    %v31 = vld [vmem:[%s0 + $0x8] sm:$0xff]
    %v32 = vld [vmem:[%s0 + $0x10] sm:$0xff]
    %v33 = vld [vmem:[%s0 + $0x18] sm:$0xff]
    %v34 = vld [vmem:[%s0 + $0x20] sm:$0xff]
    %v35 = vld [vmem:[%s0 + $0x28] sm:$0xff]
    %v36 = vld [vmem:[%s0 + $0x30] sm:$0xff]
    %v37 = vld [vmem:[%s0 + $0x38] sm:$0xff]
    %v38 = vld [vmem:[%s0 + $0x40] sm:$0xff]
    %v39 = vld [vmem:[%s0 + $0x48] sm:$0xff]
    %v40 = vld [vmem:[%s0 + $0x50] sm:$0xff]
    %v41 = vld [vmem:[%s0 + $0x58] sm:$0xff]
    %v42 = vld [vmem:[%s0 + $0x60] sm:$0xff]
    %v43 = vld [vmem:[%s0 + $0x68] sm:$0xff]
    %v44 = vld [vmem:[%s0 + $0x70] sm:$0xff]
    %v45 = vld [vmem:[%s0 + $0x78] sm:$0xff]
    %v46 = vld [vmem:[%s0 + $0x80] sm:$0xff]
    %v47 = vld [vmem:[%s0 + $0x88] sm:$0xff]
    %v48 = vld [vmem:[%s0 + $0x90] sm:$0xff]
    %v49 = vld [vmem:[%s0 + $0x98] sm:$0xff]
    %v50 = vld [vmem:[%s0 + $0xa0] sm:$0xff]
    %v51 = vld [vmem:[%s0 + $0xa8] sm:$0xff]
    %v52 = vld [vmem:[%s0 + $0xb0] sm:$0xff]
    %v53 = vld [vmem:[%s0 + $0xb8] sm:$0xff]
    %v54 = vld [vmem:[%s0 + $0xc0] sm:$0xff]
    %v55 = vld [vmem:[%s0 + $0xc8] sm:$0xff]
    %v56 = vld [vmem:[%s0 + $0xd0] sm:$0xff]
    %v57 = vld [vmem:[%s0 + $0xd8] sm:$0xff]
    %v58 = vld [vmem:[%s0 + $0xe0] sm:$0xff]
    %v59 = vld [vmem:[%s0 + $0xe8] sm:$0xff]
    %v60 = vld [vmem:[%s0 + $0xf0] sm:$0xff]
    %v61 = vld [vmem:[%s0 + $0xf8] sm:$0xff]
    %v62 = vld [vmem:[%s0 + $0x100] sm:$0xff]
    %v63 = vld [vmem:[%s0 + $0x108] sm:$0xff]
    %v64 = vld [vmem:[%s0 + $0x110] sm:$0xff]
    %v65 = vld [vmem:[%s0 + $0x118] sm:$0xff]
    %v66 = vld [vmem:[%s0 + $0x120] sm:$0xff]
    %v67 = vld [vmem:[%s0 + $0x128] sm:$0xff]
    %v68 = vld [vmem:[%s0 + $0x130] sm:$0xff]
    %v69 = vld [vmem:[%s0 + $0x138] sm:$0xff]
    %v70 = vld [vmem:[%s0 + $0x140] sm:$0xff]
    %v71 = vld [vmem:[%s0 + $0x148] sm:$0xff]
    %v72 = vld [vmem:[%s0 + $0x150] sm:$0xff]
    %v73 = vld [vmem:[%s0 + $0x158] sm:$0xff]
    %v74 = vld [vmem:[%s0 + $0x160] sm:$0xff]
    %v75 = vld [vmem:[%s0 + $0x168] sm:$0xff]
    %v76 = vld [vmem:[%s0 + $0x170] sm:$0xff]
    %v77 = vld [vmem:[%s0 + $0x178] sm:$0xff]
    %v78 = vld [vmem:[%s0 + $0x180] sm:$0xff]
    %v79 = vld [vmem:[%s0 + $0x188] sm:$0xff]
    %v80 = vld [vmem:[%s0 + $0x190] sm:$0xff]
    %v81 = vld [vmem:[%s0 + $0x198] sm:$0xff]
    %v82 = vld [vmem:[%s0 + $0x1a0] sm:$0xff]
    %v83 = vld [vmem:[%s0 + $0x1a8] sm:$0xff]
    %v84 = vld [vmem:[%s0 + $0x1b0] sm:$0xff]
    %v85 = vld [vmem:[%s0 + $0x1b8] sm:$0xff]
    %v86 = vld [vmem:[%s0 + $0x1c0] sm:$0xff]
    %v87 = vld [vmem:[%s0 + $0x1c8] sm:$0xff]
    %v88 = vld [vmem:[%s0 + $0x1d0] sm:$0xff]
    %v89 = vld [vmem:[%s0 + $0x1d8] sm:$0xff]
    %v90 = vld [vmem:[%s0 + $0x1e0] sm:$0xff]
    %v91 = vld [vmem:[%s0 + $0x1e8] sm:$0xff]
    %v92 = vld [vmem:[%s0 + $0x1f0] sm:$0xff]
    %v93 = vld [vmem:[%s0 + $0x1f8] sm:$0xff]
    %v94 = vld [vmem:[%s0 + $0x200] sm:$0xff]
    %v95 = vld [vmem:[%s0 + $0x208] sm:$0xff]
    %v96 = vld [vmem:[%s0 + $0x210] sm:$0xff]
    %v97 = vld [vmem:[%s0 + $0x218] sm:$0xff]
    %v98 = vld [vmem:[%s0 + $0x220] sm:$0xff]
    %v99 = vld [vmem:[%s0 + $0x228] sm:$0xff]
    %v100 = vld [vmem:[%s0 + $0x230] sm:$0xff]
    %v101 = vld [vmem:[%s0 + $0x238] sm:$0xff]
    %v102 = vld [vmem:[%s0 + $0x240] sm:$0xff]
    %v103 = vld [vmem:[%s0 + $0x248] sm:$0xff]
    %v104 = vld [vmem:[%s0 + $0x250] sm:$0xff]
    %v105 = vld [vmem:[%s0 + $0x258] sm:$0xff]
    %v106 = vld [vmem:[%s0 + $0x260] sm:$0xff]
    %v107 = vld [vmem:[%s0 + $0x268] sm:$0xff]
    %v108 = vld [vmem:[%s0 + $0x270] sm:$0xff]
    %v109 = vld [vmem:[%s0 + $0x278] sm:$0xff]
    %v110 = vld [vmem:[%s0 + $0x280] sm:$0xff]
    %v111 = vld [vmem:[%s0 + $0x288] sm:$0xff]
    %v112 = vld [vmem:[%s0 + $0x290] sm:$0xff]
    %v113 = vld [vmem:[%s0 + $0x298] sm:$0xff]
    %v114 = vld [vmem:[%s0 + $0x2a0] sm:$0xff]
    %v115 = vld [vmem:[%s0 + $0x2a8] sm:$0xff]
    %v116 = vld [vmem:[%s0 + $0x2b0] sm:$0xff]
    %v117 = vld [vmem:[%s0 + $0x2b8] sm:$0xff]
    %v118 = vld [vmem:[%s0 + $0x2c0] sm:$0xff]
    %v119 = vld [vmem:[%s0 + $0x2c8] sm:$0xff]
    %v120 = vld [vmem:[%s0 + $0x2d0] sm:$0xff]
    %v121 = vld [vmem:[%s0 + $0x2d8] sm:$0xff]
    %v122 = vld [vmem:[%s0 + $0x2e0] sm:$0xff]
    %v123 = vld [vmem:[%s0 + $0x2e8] sm:$0xff]
    %v124 = vld [vmem:[%s0 + $0x2f0] sm:$0xff]
    %v125 = vld [vmem:[%s0 + $0x2f8] sm:$0xff]
    %v126 = vld [vmem:[%s0 + $0x300] sm:$0xff]
    %v127 = vld [vmem:[%s0 + $0x308] sm:$0xff]
    %v128 = vld [vmem:[%s0 + $0x310] sm:$0xff]
    %v129 = vld [vmem:[%s0 + $0x318] sm:$0xff]
    %v130 = vld [vmem:[%s0 + $0x320] sm:$0xff]
    %v131 = vld [vmem:[%s0 + $0x328] sm:$0xff]
    %v132 = vld [vmem:[%s0 + $0x330] sm:$0xff]
    %v133 = vld [vmem:[%s0 + $0x338] sm:$0xff]
    %v134 = vld [vmem:[%s0 + $0x340] sm:$0xff]
    %v135 = vld [vmem:[%s0 + $0x348] sm:$0xff]
    %v136 = vld [vmem:[%s0 + $0x350] sm:$0xff]
    %v137 = vld [vmem:[%s0 + $0x358] sm:$0xff]
    %v138 = vld [vmem:[%s0 + $0x360] sm:$0xff]
    %v139 = vld [vmem:[%s0 + $0x368] sm:$0xff]
    %v140 = vld [vmem:[%s0 + $0x370] sm:$0xff]
    %v141 = vld [vmem:[%s0 + $0x378] sm:$0xff]
    %v142 = vld [vmem:[%s0 + $0x380] sm:$0xff]
    %v143 = vld [vmem:[%s0 + $0x388] sm:$0xff]
    %v144 = vld [vmem:[%s0 + $0x390] sm:$0xff]
    %v145 = vld [vmem:[%s0 + $0x398] sm:$0xff]
    %v146 = vld [vmem:[%s0 + $0x3a0] sm:$0xff]
    %v147 = vld [vmem:[%s0 + $0x3a8] sm:$0xff]
    %v148 = vld [vmem:[%s0 + $0x3b0] sm:$0xff]
    %v149 = vld [vmem:[%s0 + $0x3b8] sm:$0xff]
    %v150 = vld [vmem:[%s0 + $0x3c0] sm:$0xff]
    %v151 = vld [vmem:[%s0 + $0x3c8] sm:$0xff]
    %v152 = vld [vmem:[%s0 + $0x3d0] sm:$0xff]
    %v153 = vld [vmem:[%s0 + $0x3d8] sm:$0xff]
    %v154 = vld [vmem:[%s0 + $0x3e0] sm:$0xff]
    %v155 = vld [vmem:[%s0 + $0x3e8] sm:$0xff]
    %v156 = vld [vmem:[%s0 + $0x3f0] sm:$0xff]
    %v157 = vld [vmem:[%s0 + $0x3f8] sm:$0xff]
    %v158 = vlaneseq
    %v159 = vand.u32 %v158, 127
    %v160 = vadd.s32 %v159, 128
    %161 = vset.pattern.permute.xlu0 0
    %162 = vperm.xlu0 %161, %v30
    %v163 = vpop.permute.xlu0 %162
    %164 = vset.pattern.permute.xlu0 0
    %165 = vperm.xlu0 %164, %v31
    %v166 = vpop.permute.xlu0 %165
    %167 = vset.pattern.permute.xlu0 0
    %168 = vperm.xlu0 %167, %v32
    %v169 = vpop.permute.xlu0 %168
    %170 = vset.pattern.permute.xlu0 0
    %171 = vperm.xlu0 %170, %v33
    %v172 = vpop.permute.xlu0 %171
    %173 = vset.pattern.permute.xlu0 0
    %174 = vperm.xlu0 %173, %v34
    %v175 = vpop.permute.xlu0 %174
    %176 = vset.pattern.permute.xlu0 0
    %177 = vperm.xlu0 %176, %v35
    %v178 = vpop.permute.xlu0 %177
    %179 = vset.pattern.permute.xlu0 0
    %180 = vperm.xlu0 %179, %v36
    %v181 = vpop.permute.xlu0 %180
    %182 = vset.pattern.permute.xlu0 0
    %183 = vperm.xlu0 %182, %v37
    %v184 = vpop.permute.xlu0 %183
    %185 = vset.pattern.permute.xlu0 0
    %186 = vperm.xlu0 %185, %v38
    %v187 = vpop.permute.xlu0 %186
    %188 = vset.pattern.permute.xlu0 0
    %189 = vperm.xlu0 %188, %v39
    %v190 = vpop.permute.xlu0 %189
    %191 = vset.pattern.permute.xlu0 0
    %192 = vperm.xlu0 %191, %v40
    %v193 = vpop.permute.xlu0 %192
    %194 = vset.pattern.permute.xlu0 0
    %195 = vperm.xlu0 %194, %v41
    %v196 = vpop.permute.xlu0 %195
    %197 = vset.pattern.permute.xlu0 0
    %198 = vperm.xlu0 %197, %v42
    %v199 = vpop.permute.xlu0 %198
    %200 = vset.pattern.permute.xlu0 0
    %201 = vperm.xlu0 %200, %v43
    %v202 = vpop.permute.xlu0 %201
    %203 = vset.pattern.permute.xlu0 0
    %204 = vperm.xlu0 %203, %v44
    %v205 = vpop.permute.xlu0 %204
    %206 = vset.pattern.permute.xlu0 0
    %207 = vperm.xlu0 %206, %v45
    %v208 = vpop.permute.xlu0 %207
    %209 = vset.pattern.permute.xlu0 0
    %210 = vperm.xlu0 %209, %v46
    %v211 = vpop.permute.xlu0 %210
    %212 = vset.pattern.permute.xlu0 0
    %213 = vperm.xlu0 %212, %v47
    %v214 = vpop.permute.xlu0 %213
    %215 = vset.pattern.permute.xlu0 0
    %216 = vperm.xlu0 %215, %v48
    %v217 = vpop.permute.xlu0 %216
    %218 = vset.pattern.permute.xlu0 0
    %219 = vperm.xlu0 %218, %v49
    %v220 = vpop.permute.xlu0 %219
    %221 = vset.pattern.permute.xlu0 0
    %222 = vperm.xlu0 %221, %v50
    %v223 = vpop.permute.xlu0 %222
    %224 = vset.pattern.permute.xlu0 0
    %225 = vperm.xlu0 %224, %v51
    %v226 = vpop.permute.xlu0 %225
    %227 = vset.pattern.permute.xlu0 0
    %228 = vperm.xlu0 %227, %v52
    %v229 = vpop.permute.xlu0 %228
    %230 = vset.pattern.permute.xlu0 0
    %231 = vperm.xlu0 %230, %v53
    %v232 = vpop.permute.xlu0 %231
    %233 = vset.pattern.permute.xlu0 0
    %234 = vperm.xlu0 %233, %v54
    %v235 = vpop.permute.xlu0 %234
    %236 = vset.pattern.permute.xlu0 0
    %237 = vperm.xlu0 %236, %v55
    %v238 = vpop.permute.xlu0 %237
    %239 = vset.pattern.permute.xlu0 0
    %240 = vperm.xlu0 %239, %v56
    %v241 = vpop.permute.xlu0 %240
    %242 = vset.pattern.permute.xlu0 0
    %243 = vperm.xlu0 %242, %v57
    %v244 = vpop.permute.xlu0 %243
    %245 = vset.pattern.permute.xlu0 0
    %246 = vperm.xlu0 %245, %v58
    %v247 = vpop.permute.xlu0 %246
    %248 = vset.pattern.permute.xlu0 0
    %249 = vperm.xlu0 %248, %v59
    %v250 = vpop.permute.xlu0 %249
    %251 = vset.pattern.permute.xlu0 0
    %252 = vperm.xlu0 %251, %v60
    %v253 = vpop.permute.xlu0 %252
    %254 = vset.pattern.permute.xlu0 0
    %255 = vperm.xlu0 %254, %v61
    %v256 = vpop.permute.xlu0 %255
    %257 = vset.pattern.permute.xlu0 0
    %258 = vperm.xlu0 %257, %v62
    %v259 = vpop.permute.xlu0 %258
    %260 = vset.pattern.permute.xlu0 0
    %261 = vperm.xlu0 %260, %v63
    %v262 = vpop.permute.xlu0 %261
    %263 = vset.pattern.permute.xlu0 0
    %264 = vperm.xlu0 %263, %v64
    %v265 = vpop.permute.xlu0 %264
    %266 = vset.pattern.permute.xlu0 0
    %267 = vperm.xlu0 %266, %v65
    %v268 = vpop.permute.xlu0 %267
    %269 = vset.pattern.permute.xlu0 0
    %270 = vperm.xlu0 %269, %v66
    %v271 = vpop.permute.xlu0 %270
    %272 = vset.pattern.permute.xlu0 0
    %273 = vperm.xlu0 %272, %v67
    %v274 = vpop.permute.xlu0 %273
    %275 = vset.pattern.permute.xlu0 0
    %276 = vperm.xlu0 %275, %v68
    %v277 = vpop.permute.xlu0 %276
    %278 = vset.pattern.permute.xlu0 0
    %279 = vperm.xlu0 %278, %v69
    %v280 = vpop.permute.xlu0 %279
    %281 = vset.pattern.permute.xlu0 0
    %282 = vperm.xlu0 %281, %v70
    %v283 = vpop.permute.xlu0 %282
    %284 = vset.pattern.permute.xlu0 0
    %285 = vperm.xlu0 %284, %v71
    %v286 = vpop.permute.xlu0 %285
    %287 = vset.pattern.permute.xlu0 0
    %288 = vperm.xlu0 %287, %v72
    %v289 = vpop.permute.xlu0 %288
    %290 = vset.pattern.permute.xlu0 0
    %291 = vperm.xlu0 %290, %v73
    %v292 = vpop.permute.xlu0 %291
    %293 = vset.pattern.permute.xlu0 0
    %294 = vperm.xlu0 %293, %v74
    %v295 = vpop.permute.xlu0 %294
    %296 = vset.pattern.permute.xlu0 0
    %297 = vperm.xlu0 %296, %v75
    %v298 = vpop.permute.xlu0 %297
    %299 = vset.pattern.permute.xlu0 0
    %300 = vperm.xlu0 %299, %v76
    %v301 = vpop.permute.xlu0 %300
    %302 = vset.pattern.permute.xlu0 0
    %303 = vperm.xlu0 %302, %v77
    %v304 = vpop.permute.xlu0 %303
    %305 = vset.pattern.permute.xlu0 0
    %306 = vperm.xlu0 %305, %v78
    %v307 = vpop.permute.xlu0 %306
    %308 = vset.pattern.permute.xlu0 0
    %309 = vperm.xlu0 %308, %v79
    %v310 = vpop.permute.xlu0 %309
    %311 = vset.pattern.permute.xlu0 0
    %312 = vperm.xlu0 %311, %v80
    %v313 = vpop.permute.xlu0 %312
    %314 = vset.pattern.permute.xlu0 0
    %315 = vperm.xlu0 %314, %v81
    %v316 = vpop.permute.xlu0 %315
    %317 = vset.pattern.permute.xlu0 0
    %318 = vperm.xlu0 %317, %v82
    %v319 = vpop.permute.xlu0 %318
    %320 = vset.pattern.permute.xlu0 0
    %321 = vperm.xlu0 %320, %v83
    %v322 = vpop.permute.xlu0 %321
    %323 = vset.pattern.permute.xlu0 0
    %324 = vperm.xlu0 %323, %v84
    %v325 = vpop.permute.xlu0 %324
    %326 = vset.pattern.permute.xlu0 0
    %327 = vperm.xlu0 %326, %v85
    %v328 = vpop.permute.xlu0 %327
    %329 = vset.pattern.permute.xlu0 0
    %330 = vperm.xlu0 %329, %v86
    %v331 = vpop.permute.xlu0 %330
    %332 = vset.pattern.permute.xlu0 0
    %333 = vperm.xlu0 %332, %v87
    %v334 = vpop.permute.xlu0 %333
    %335 = vset.pattern.permute.xlu0 0
    %336 = vperm.xlu0 %335, %v88
    %v337 = vpop.permute.xlu0 %336
    %338 = vset.pattern.permute.xlu0 0
    %339 = vperm.xlu0 %338, %v89
    %v340 = vpop.permute.xlu0 %339
    %341 = vset.pattern.permute.xlu0 0
    %342 = vperm.xlu0 %341, %v90
    %v343 = vpop.permute.xlu0 %342
    %344 = vset.pattern.permute.xlu0 0
    %345 = vperm.xlu0 %344, %v91
    %v346 = vpop.permute.xlu0 %345
    %347 = vset.pattern.permute.xlu0 0
    %348 = vperm.xlu0 %347, %v92
    %v349 = vpop.permute.xlu0 %348
    %350 = vset.pattern.permute.xlu0 0
    %351 = vperm.xlu0 %350, %v93
    %v352 = vpop.permute.xlu0 %351
    %353 = vset.pattern.permute.xlu0 0
    %354 = vperm.xlu0 %353, %v94
    %v355 = vpop.permute.xlu0 %354
    %356 = vset.pattern.permute.xlu0 0
    %357 = vperm.xlu0 %356, %v95
    %v358 = vpop.permute.xlu0 %357
    %359 = vset.pattern.permute.xlu0 0
    %360 = vperm.xlu0 %359, %v96
    %v361 = vpop.permute.xlu0 %360
    %362 = vset.pattern.permute.xlu0 0
    %363 = vperm.xlu0 %362, %v97
    %v364 = vpop.permute.xlu0 %363
    %365 = vset.pattern.permute.xlu0 0
    %366 = vperm.xlu0 %365, %v98
    %v367 = vpop.permute.xlu0 %366
    %368 = vset.pattern.permute.xlu0 0
    %369 = vperm.xlu0 %368, %v99
    %v370 = vpop.permute.xlu0 %369
    %371 = vset.pattern.permute.xlu0 0
    %372 = vperm.xlu0 %371, %v100
    %v373 = vpop.permute.xlu0 %372
    %374 = vset.pattern.permute.xlu0 0
    %375 = vperm.xlu0 %374, %v101
    %v376 = vpop.permute.xlu0 %375
    %377 = vset.pattern.permute.xlu0 0
    %378 = vperm.xlu0 %377, %v102
    %v379 = vpop.permute.xlu0 %378
    %380 = vset.pattern.permute.xlu0 0
    %381 = vperm.xlu0 %380, %v103
    %v382 = vpop.permute.xlu0 %381
    %383 = vset.pattern.permute.xlu0 0
    %384 = vperm.xlu0 %383, %v104
    %v385 = vpop.permute.xlu0 %384
    %386 = vset.pattern.permute.xlu0 0
    %387 = vperm.xlu0 %386, %v105
    %v388 = vpop.permute.xlu0 %387
    %389 = vset.pattern.permute.xlu0 0
    %390 = vperm.xlu0 %389, %v106
    %v391 = vpop.permute.xlu0 %390
    %392 = vset.pattern.permute.xlu0 0
    %393 = vperm.xlu0 %392, %v107
    %v394 = vpop.permute.xlu0 %393
    %395 = vset.pattern.permute.xlu0 0
    %396 = vperm.xlu0 %395, %v108
    %v397 = vpop.permute.xlu0 %396
    %398 = vset.pattern.permute.xlu0 0
    %399 = vperm.xlu0 %398, %v109
    %v400 = vpop.permute.xlu0 %399
    %401 = vset.pattern.permute.xlu0 0
    %402 = vperm.xlu0 %401, %v110
    %v403 = vpop.permute.xlu0 %402
    %404 = vset.pattern.permute.xlu0 0
    %405 = vperm.xlu0 %404, %v111
    %v406 = vpop.permute.xlu0 %405
    %407 = vset.pattern.permute.xlu0 0
    %408 = vperm.xlu0 %407, %v112
    %v409 = vpop.permute.xlu0 %408
    %410 = vset.pattern.permute.xlu0 0
    %411 = vperm.xlu0 %410, %v113
    %v412 = vpop.permute.xlu0 %411
    %413 = vset.pattern.permute.xlu0 0
    %414 = vperm.xlu0 %413, %v114
    %v415 = vpop.permute.xlu0 %414
    %416 = vset.pattern.permute.xlu0 0
    %417 = vperm.xlu0 %416, %v115
    %v418 = vpop.permute.xlu0 %417
    %419 = vset.pattern.permute.xlu0 0
    %420 = vperm.xlu0 %419, %v116
    %v421 = vpop.permute.xlu0 %420
    %422 = vset.pattern.permute.xlu0 0
    %423 = vperm.xlu0 %422, %v117
    %v424 = vpop.permute.xlu0 %423
    %425 = vset.pattern.permute.xlu0 0
    %426 = vperm.xlu0 %425, %v118
    %v427 = vpop.permute.xlu0 %426
    %428 = vset.pattern.permute.xlu0 0
    %429 = vperm.xlu0 %428, %v119
    %v430 = vpop.permute.xlu0 %429
    %431 = vset.pattern.permute.xlu0 0
    %432 = vperm.xlu0 %431, %v120
    %v433 = vpop.permute.xlu0 %432
    %434 = vset.pattern.permute.xlu0 0
    %435 = vperm.xlu0 %434, %v121
    %v436 = vpop.permute.xlu0 %435
    %437 = vset.pattern.permute.xlu0 0
    %438 = vperm.xlu0 %437, %v122
    %v439 = vpop.permute.xlu0 %438
    %440 = vset.pattern.permute.xlu0 0
    %441 = vperm.xlu0 %440, %v123
    %v442 = vpop.permute.xlu0 %441
    %443 = vset.pattern.permute.xlu0 0
    %444 = vperm.xlu0 %443, %v124
    %v445 = vpop.permute.xlu0 %444
    %446 = vset.pattern.permute.xlu0 0
    %447 = vperm.xlu0 %446, %v125
    %v448 = vpop.permute.xlu0 %447
    %449 = vset.pattern.permute.xlu0 0
    %450 = vperm.xlu0 %449, %v126
    %v451 = vpop.permute.xlu0 %450
    %452 = vset.pattern.permute.xlu0 0
    %453 = vperm.xlu0 %452, %v127
    %v454 = vpop.permute.xlu0 %453
    %455 = vset.pattern.permute.xlu0 0
    %456 = vperm.xlu0 %455, %v128
    %v457 = vpop.permute.xlu0 %456
    %458 = vset.pattern.permute.xlu0 0
    %459 = vperm.xlu0 %458, %v129
    %v460 = vpop.permute.xlu0 %459
    %461 = vset.pattern.permute.xlu0 0
    %462 = vperm.xlu0 %461, %v130
    %v463 = vpop.permute.xlu0 %462
    %464 = vset.pattern.permute.xlu0 0
    %465 = vperm.xlu0 %464, %v131
    %v466 = vpop.permute.xlu0 %465
    %467 = vset.pattern.permute.xlu0 0
    %468 = vperm.xlu0 %467, %v132
    %v469 = vpop.permute.xlu0 %468
    %470 = vset.pattern.permute.xlu0 0
    %471 = vperm.xlu0 %470, %v133
    %v472 = vpop.permute.xlu0 %471
    %473 = vset.pattern.permute.xlu0 0
    %474 = vperm.xlu0 %473, %v134
    %v475 = vpop.permute.xlu0 %474
    %476 = vset.pattern.permute.xlu0 0
    %477 = vperm.xlu0 %476, %v135
    %v478 = vpop.permute.xlu0 %477
    %479 = vset.pattern.permute.xlu0 0
    %480 = vperm.xlu0 %479, %v136
    %v481 = vpop.permute.xlu0 %480
    %482 = vset.pattern.permute.xlu0 0
    %483 = vperm.xlu0 %482, %v137
    %v484 = vpop.permute.xlu0 %483
    %485 = vset.pattern.permute.xlu0 0
    %486 = vperm.xlu0 %485, %v138
    %v487 = vpop.permute.xlu0 %486
    %488 = vset.pattern.permute.xlu0 0
    %489 = vperm.xlu0 %488, %v139
    %v490 = vpop.permute.xlu0 %489
    %491 = vset.pattern.permute.xlu0 0
    %492 = vperm.xlu0 %491, %v140
    %v493 = vpop.permute.xlu0 %492
    %494 = vset.pattern.permute.xlu0 0
    %495 = vperm.xlu0 %494, %v141
    %v496 = vpop.permute.xlu0 %495
    %497 = vset.pattern.permute.xlu0 0
    %498 = vperm.xlu0 %497, %v142
    %v499 = vpop.permute.xlu0 %498
    %500 = vset.pattern.permute.xlu0 0
    %501 = vperm.xlu0 %500, %v143
    %v502 = vpop.permute.xlu0 %501
    %503 = vset.pattern.permute.xlu0 0
    %504 = vperm.xlu0 %503, %v144
    %v505 = vpop.permute.xlu0 %504
    %506 = vset.pattern.permute.xlu0 0
    %507 = vperm.xlu0 %506, %v145
    %v508 = vpop.permute.xlu0 %507
    %509 = vset.pattern.permute.xlu0 0
    %510 = vperm.xlu0 %509, %v146
    %v511 = vpop.permute.xlu0 %510
    %512 = vset.pattern.permute.xlu0 0
    %513 = vperm.xlu0 %512, %v147
    %v514 = vpop.permute.xlu0 %513
    %515 = vset.pattern.permute.xlu0 0
    %516 = vperm.xlu0 %515, %v148
    %v517 = vpop.permute.xlu0 %516
    %518 = vset.pattern.permute.xlu0 0
    %519 = vperm.xlu0 %518, %v149
    %v520 = vpop.permute.xlu0 %519
    %521 = vset.pattern.permute.xlu0 0
    %522 = vperm.xlu0 %521, %v150
    %v523 = vpop.permute.xlu0 %522
    %524 = vset.pattern.permute.xlu0 0
    %525 = vperm.xlu0 %524, %v151
    %v526 = vpop.permute.xlu0 %525
    %527 = vset.pattern.permute.xlu0 0
    %528 = vperm.xlu0 %527, %v152
    %v529 = vpop.permute.xlu0 %528
    %530 = vset.pattern.permute.xlu0 0
    %531 = vperm.xlu0 %530, %v153
    %v532 = vpop.permute.xlu0 %531
    %533 = vset.pattern.permute.xlu0 0
    %534 = vperm.xlu0 %533, %v154
    %v535 = vpop.permute.xlu0 %534
    %536 = vset.pattern.permute.xlu0 0
    %537 = vperm.xlu0 %536, %v155
    %v538 = vpop.permute.xlu0 %537
    %539 = vset.pattern.permute.xlu0 0
    %540 = vperm.xlu0 %539, %v156
    %v541 = vpop.permute.xlu0 %540
    %542 = vset.pattern.permute.xlu0 0
    %543 = vperm.xlu0 %542, %v157
    %v544 = vpop.permute.xlu0 %543
    %vm545 = vcmp.eq.s32.totalorder %v159, %v163
    %vm546 = vcmp.eq.s32.totalorder %v160, %v163
    %vm547 = vcmp.eq.s32.totalorder %v159, %v166
    %vm548 = vcmp.eq.s32.totalorder %v160, %v166
    %vm549 = vcmp.eq.s32.totalorder %v159, %v169
    %vm550 = vcmp.eq.s32.totalorder %v160, %v169
    %vm551 = vcmp.eq.s32.totalorder %v159, %v172
    %vm552 = vcmp.eq.s32.totalorder %v160, %v172
    %vm553 = vcmp.eq.s32.totalorder %v159, %v175
    %vm554 = vcmp.eq.s32.totalorder %v160, %v175
    %vm555 = vcmp.eq.s32.totalorder %v159, %v178
    %vm556 = vcmp.eq.s32.totalorder %v160, %v178
    %vm557 = vcmp.eq.s32.totalorder %v159, %v181
    %vm558 = vcmp.eq.s32.totalorder %v160, %v181
    %vm559 = vcmp.eq.s32.totalorder %v159, %v184
    %vm560 = vcmp.eq.s32.totalorder %v160, %v184
    %vm561 = vcmp.eq.s32.totalorder %v159, %v187
    %vm562 = vcmp.eq.s32.totalorder %v160, %v187
    %vm563 = vcmp.eq.s32.totalorder %v159, %v190
    %vm564 = vcmp.eq.s32.totalorder %v160, %v190
    %vm565 = vcmp.eq.s32.totalorder %v159, %v193
    %vm566 = vcmp.eq.s32.totalorder %v160, %v193
    %vm567 = vcmp.eq.s32.totalorder %v159, %v196
    %vm568 = vcmp.eq.s32.totalorder %v160, %v196
    %vm569 = vcmp.eq.s32.totalorder %v159, %v199
    %vm570 = vcmp.eq.s32.totalorder %v160, %v199
    %vm571 = vcmp.eq.s32.totalorder %v159, %v202
    %vm572 = vcmp.eq.s32.totalorder %v160, %v202
    %vm573 = vcmp.eq.s32.totalorder %v159, %v205
    %vm574 = vcmp.eq.s32.totalorder %v160, %v205
    %vm575 = vcmp.eq.s32.totalorder %v159, %v208
    %vm576 = vcmp.eq.s32.totalorder %v160, %v208
    %vm577 = vcmp.eq.s32.totalorder %v159, %v211
    %vm578 = vcmp.eq.s32.totalorder %v160, %v211
    %vm579 = vcmp.eq.s32.totalorder %v159, %v214
    %vm580 = vcmp.eq.s32.totalorder %v160, %v214
    %vm581 = vcmp.eq.s32.totalorder %v159, %v217
    %vm582 = vcmp.eq.s32.totalorder %v160, %v217
    %vm583 = vcmp.eq.s32.totalorder %v159, %v220
    %vm584 = vcmp.eq.s32.totalorder %v160, %v220
    %vm585 = vcmp.eq.s32.totalorder %v159, %v223
    %vm586 = vcmp.eq.s32.totalorder %v160, %v223
    %vm587 = vcmp.eq.s32.totalorder %v159, %v226
    %vm588 = vcmp.eq.s32.totalorder %v160, %v226
    %vm589 = vcmp.eq.s32.totalorder %v159, %v229
    %vm590 = vcmp.eq.s32.totalorder %v160, %v229
    %vm591 = vcmp.eq.s32.totalorder %v159, %v232
    %vm592 = vcmp.eq.s32.totalorder %v160, %v232
    %vm593 = vcmp.eq.s32.totalorder %v159, %v235
    %vm594 = vcmp.eq.s32.totalorder %v160, %v235
    %vm595 = vcmp.eq.s32.totalorder %v159, %v238
    %vm596 = vcmp.eq.s32.totalorder %v160, %v238
    %vm597 = vcmp.eq.s32.totalorder %v159, %v241
    %vm598 = vcmp.eq.s32.totalorder %v160, %v241
    %vm599 = vcmp.eq.s32.totalorder %v159, %v244
    %vm600 = vcmp.eq.s32.totalorder %v160, %v244
    %vm601 = vcmp.eq.s32.totalorder %v159, %v247
    %vm602 = vcmp.eq.s32.totalorder %v160, %v247
    %vm603 = vcmp.eq.s32.totalorder %v159, %v250
    %vm604 = vcmp.eq.s32.totalorder %v160, %v250
    %vm605 = vcmp.eq.s32.totalorder %v159, %v253
    %vm606 = vcmp.eq.s32.totalorder %v160, %v253
    %vm607 = vcmp.eq.s32.totalorder %v159, %v256
    %vm608 = vcmp.eq.s32.totalorder %v160, %v256
    %vm609 = vcmp.eq.s32.totalorder %v159, %v259
    %vm610 = vcmp.eq.s32.totalorder %v160, %v259
    %vm611 = vcmp.eq.s32.totalorder %v159, %v262
    %vm612 = vcmp.eq.s32.totalorder %v160, %v262
    %vm613 = vcmp.eq.s32.totalorder %v159, %v265
    %vm614 = vcmp.eq.s32.totalorder %v160, %v265
    %vm615 = vcmp.eq.s32.totalorder %v159, %v268
    %vm616 = vcmp.eq.s32.totalorder %v160, %v268
    %vm617 = vcmp.eq.s32.totalorder %v159, %v271
    %vm618 = vcmp.eq.s32.totalorder %v160, %v271
    %vm619 = vcmp.eq.s32.totalorder %v159, %v274
    %vm620 = vcmp.eq.s32.totalorder %v160, %v274
    %vm621 = vcmp.eq.s32.totalorder %v159, %v277
    %vm622 = vcmp.eq.s32.totalorder %v160, %v277
    %vm623 = vcmp.eq.s32.totalorder %v159, %v280
    %vm624 = vcmp.eq.s32.totalorder %v160, %v280
    %vm625 = vcmp.eq.s32.totalorder %v159, %v283
    %vm626 = vcmp.eq.s32.totalorder %v160, %v283
    %vm627 = vcmp.eq.s32.totalorder %v159, %v286
    %vm628 = vcmp.eq.s32.totalorder %v160, %v286
    %vm629 = vcmp.eq.s32.totalorder %v159, %v289
    %vm630 = vcmp.eq.s32.totalorder %v160, %v289
    %vm631 = vcmp.eq.s32.totalorder %v159, %v292
    %vm632 = vcmp.eq.s32.totalorder %v160, %v292
    %vm633 = vcmp.eq.s32.totalorder %v159, %v295
    %vm634 = vcmp.eq.s32.totalorder %v160, %v295
    %vm635 = vcmp.eq.s32.totalorder %v159, %v298
    %vm636 = vcmp.eq.s32.totalorder %v160, %v298
    %vm637 = vcmp.eq.s32.totalorder %v159, %v301
    %vm638 = vcmp.eq.s32.totalorder %v160, %v301
    %vm639 = vcmp.eq.s32.totalorder %v159, %v304
    %vm640 = vcmp.eq.s32.totalorder %v160, %v304
    %vm641 = vcmp.eq.s32.totalorder %v159, %v307
    %vm642 = vcmp.eq.s32.totalorder %v160, %v307
    %vm643 = vcmp.eq.s32.totalorder %v159, %v310
    %vm644 = vcmp.eq.s32.totalorder %v160, %v310
    %vm645 = vcmp.eq.s32.totalorder %v159, %v313
    %vm646 = vcmp.eq.s32.totalorder %v160, %v313
    %vm647 = vcmp.eq.s32.totalorder %v159, %v316
    %vm648 = vcmp.eq.s32.totalorder %v160, %v316
    %vm649 = vcmp.eq.s32.totalorder %v159, %v319
    %vm650 = vcmp.eq.s32.totalorder %v160, %v319
    %vm651 = vcmp.eq.s32.totalorder %v159, %v322
    %vm652 = vcmp.eq.s32.totalorder %v160, %v322
    %vm653 = vcmp.eq.s32.totalorder %v159, %v325
    %vm654 = vcmp.eq.s32.totalorder %v160, %v325
    %vm655 = vcmp.eq.s32.totalorder %v159, %v328
    %vm656 = vcmp.eq.s32.totalorder %v160, %v328
    %vm657 = vcmp.eq.s32.totalorder %v159, %v331
    %vm658 = vcmp.eq.s32.totalorder %v160, %v331
    %vm659 = vcmp.eq.s32.totalorder %v159, %v334
    %vm660 = vcmp.eq.s32.totalorder %v160, %v334
    %vm661 = vcmp.eq.s32.totalorder %v159, %v337
    %vm662 = vcmp.eq.s32.totalorder %v160, %v337
    %vm663 = vcmp.eq.s32.totalorder %v159, %v340
    %vm664 = vcmp.eq.s32.totalorder %v160, %v340
    %vm665 = vcmp.eq.s32.totalorder %v159, %v343
    %vm666 = vcmp.eq.s32.totalorder %v160, %v343
    %vm667 = vcmp.eq.s32.totalorder %v159, %v346
    %vm668 = vcmp.eq.s32.totalorder %v160, %v346
    %vm669 = vcmp.eq.s32.totalorder %v159, %v349
    %vm670 = vcmp.eq.s32.totalorder %v160, %v349
    %vm671 = vcmp.eq.s32.totalorder %v159, %v352
    %vm672 = vcmp.eq.s32.totalorder %v160, %v352
    %vm673 = vcmp.eq.s32.totalorder %v159, %v355
    %vm674 = vcmp.eq.s32.totalorder %v160, %v355
    %vm675 = vcmp.eq.s32.totalorder %v159, %v358
    %vm676 = vcmp.eq.s32.totalorder %v160, %v358
    %vm677 = vcmp.eq.s32.totalorder %v159, %v361
    %vm678 = vcmp.eq.s32.totalorder %v160, %v361
    %vm679 = vcmp.eq.s32.totalorder %v159, %v364
    %vm680 = vcmp.eq.s32.totalorder %v160, %v364
    %vm681 = vcmp.eq.s32.totalorder %v159, %v367
    %vm682 = vcmp.eq.s32.totalorder %v160, %v367
    %vm683 = vcmp.eq.s32.totalorder %v159, %v370
    %vm684 = vcmp.eq.s32.totalorder %v160, %v370
    %vm685 = vcmp.eq.s32.totalorder %v159, %v373
    %vm686 = vcmp.eq.s32.totalorder %v160, %v373
    %vm687 = vcmp.eq.s32.totalorder %v159, %v376
    %vm688 = vcmp.eq.s32.totalorder %v160, %v376
    %vm689 = vcmp.eq.s32.totalorder %v159, %v379
    %vm690 = vcmp.eq.s32.totalorder %v160, %v379
    %vm691 = vcmp.eq.s32.totalorder %v159, %v382
    %vm692 = vcmp.eq.s32.totalorder %v160, %v382
    %vm693 = vcmp.eq.s32.totalorder %v159, %v385
    %vm694 = vcmp.eq.s32.totalorder %v160, %v385
    %vm695 = vcmp.eq.s32.totalorder %v159, %v388
    %vm696 = vcmp.eq.s32.totalorder %v160, %v388
    %vm697 = vcmp.eq.s32.totalorder %v159, %v391
    %vm698 = vcmp.eq.s32.totalorder %v160, %v391
    %vm699 = vcmp.eq.s32.totalorder %v159, %v394
    %vm700 = vcmp.eq.s32.totalorder %v160, %v394
    %vm701 = vcmp.eq.s32.totalorder %v159, %v397
    %vm702 = vcmp.eq.s32.totalorder %v160, %v397
    %vm703 = vcmp.eq.s32.totalorder %v159, %v400
    %vm704 = vcmp.eq.s32.totalorder %v160, %v400
    %vm705 = vcmp.eq.s32.totalorder %v159, %v403
    %vm706 = vcmp.eq.s32.totalorder %v160, %v403
    %vm707 = vcmp.eq.s32.totalorder %v159, %v406
    %vm708 = vcmp.eq.s32.totalorder %v160, %v406
    %vm709 = vcmp.eq.s32.totalorder %v159, %v409
    %vm710 = vcmp.eq.s32.totalorder %v160, %v409
    %vm711 = vcmp.eq.s32.totalorder %v159, %v412
    %vm712 = vcmp.eq.s32.totalorder %v160, %v412
    %vm713 = vcmp.eq.s32.totalorder %v159, %v415
    %vm714 = vcmp.eq.s32.totalorder %v160, %v415
    %vm715 = vcmp.eq.s32.totalorder %v159, %v418
    %vm716 = vcmp.eq.s32.totalorder %v160, %v418
    %vm717 = vcmp.eq.s32.totalorder %v159, %v421
    %vm718 = vcmp.eq.s32.totalorder %v160, %v421
    %vm719 = vcmp.eq.s32.totalorder %v159, %v424
    %vm720 = vcmp.eq.s32.totalorder %v160, %v424
    %vm721 = vcmp.eq.s32.totalorder %v159, %v427
    %vm722 = vcmp.eq.s32.totalorder %v160, %v427
    %vm723 = vcmp.eq.s32.totalorder %v159, %v430
    %vm724 = vcmp.eq.s32.totalorder %v160, %v430
    %vm725 = vcmp.eq.s32.totalorder %v159, %v433
    %vm726 = vcmp.eq.s32.totalorder %v160, %v433
    %vm727 = vcmp.eq.s32.totalorder %v159, %v436
    %vm728 = vcmp.eq.s32.totalorder %v160, %v436
    %vm729 = vcmp.eq.s32.totalorder %v159, %v439
    %vm730 = vcmp.eq.s32.totalorder %v160, %v439
    %vm731 = vcmp.eq.s32.totalorder %v159, %v442
    %vm732 = vcmp.eq.s32.totalorder %v160, %v442
    %vm733 = vcmp.eq.s32.totalorder %v159, %v445
    %vm734 = vcmp.eq.s32.totalorder %v160, %v445
    %vm735 = vcmp.eq.s32.totalorder %v159, %v448
    %vm736 = vcmp.eq.s32.totalorder %v160, %v448
    %vm737 = vcmp.eq.s32.totalorder %v159, %v451
    %vm738 = vcmp.eq.s32.totalorder %v160, %v451
    %vm739 = vcmp.eq.s32.totalorder %v159, %v454
    %vm740 = vcmp.eq.s32.totalorder %v160, %v454
    %vm741 = vcmp.eq.s32.totalorder %v159, %v457
    %vm742 = vcmp.eq.s32.totalorder %v160, %v457
    %vm743 = vcmp.eq.s32.totalorder %v159, %v460
    %vm744 = vcmp.eq.s32.totalorder %v160, %v460
    %vm745 = vcmp.eq.s32.totalorder %v159, %v463
    %vm746 = vcmp.eq.s32.totalorder %v160, %v463
    %vm747 = vcmp.eq.s32.totalorder %v159, %v466
    %vm748 = vcmp.eq.s32.totalorder %v160, %v466
    %vm749 = vcmp.eq.s32.totalorder %v159, %v469
    %vm750 = vcmp.eq.s32.totalorder %v160, %v469
    %vm751 = vcmp.eq.s32.totalorder %v159, %v472
    %vm752 = vcmp.eq.s32.totalorder %v160, %v472
    %vm753 = vcmp.eq.s32.totalorder %v159, %v475
    %vm754 = vcmp.eq.s32.totalorder %v160, %v475
    %vm755 = vcmp.eq.s32.totalorder %v159, %v478
    %vm756 = vcmp.eq.s32.totalorder %v160, %v478
    %vm757 = vcmp.eq.s32.totalorder %v159, %v481
    %vm758 = vcmp.eq.s32.totalorder %v160, %v481
    %vm759 = vcmp.eq.s32.totalorder %v159, %v484
    %vm760 = vcmp.eq.s32.totalorder %v160, %v484
    %vm761 = vcmp.eq.s32.totalorder %v159, %v487
    %vm762 = vcmp.eq.s32.totalorder %v160, %v487
    %vm763 = vcmp.eq.s32.totalorder %v159, %v490
    %vm764 = vcmp.eq.s32.totalorder %v160, %v490
    %vm765 = vcmp.eq.s32.totalorder %v159, %v493
    %vm766 = vcmp.eq.s32.totalorder %v160, %v493
    %vm767 = vcmp.eq.s32.totalorder %v159, %v496
    %vm768 = vcmp.eq.s32.totalorder %v160, %v496
    %vm769 = vcmp.eq.s32.totalorder %v159, %v499
    %vm770 = vcmp.eq.s32.totalorder %v160, %v499
    %vm771 = vcmp.eq.s32.totalorder %v159, %v502
    %vm772 = vcmp.eq.s32.totalorder %v160, %v502
    %vm773 = vcmp.eq.s32.totalorder %v159, %v505
    %vm774 = vcmp.eq.s32.totalorder %v160, %v505
    %vm775 = vcmp.eq.s32.totalorder %v159, %v508
    %vm776 = vcmp.eq.s32.totalorder %v160, %v508
    %vm777 = vcmp.eq.s32.totalorder %v159, %v511
    %vm778 = vcmp.eq.s32.totalorder %v160, %v511
    %vm779 = vcmp.eq.s32.totalorder %v159, %v514
    %vm780 = vcmp.eq.s32.totalorder %v160, %v514
    %vm781 = vcmp.eq.s32.totalorder %v159, %v517
    %vm782 = vcmp.eq.s32.totalorder %v160, %v517
    %vm783 = vcmp.eq.s32.totalorder %v159, %v520
    %vm784 = vcmp.eq.s32.totalorder %v160, %v520
    %vm785 = vcmp.eq.s32.totalorder %v159, %v523
    %vm786 = vcmp.eq.s32.totalorder %v160, %v523
    %vm787 = vcmp.eq.s32.totalorder %v159, %v526
    %vm788 = vcmp.eq.s32.totalorder %v160, %v526
    %vm789 = vcmp.eq.s32.totalorder %v159, %v529
    %vm790 = vcmp.eq.s32.totalorder %v160, %v529
    %vm791 = vcmp.eq.s32.totalorder %v159, %v532
    %vm792 = vcmp.eq.s32.totalorder %v160, %v532
    %vm793 = vcmp.eq.s32.totalorder %v159, %v535
    %vm794 = vcmp.eq.s32.totalorder %v160, %v535
    %vm795 = vcmp.eq.s32.totalorder %v159, %v538
    %vm796 = vcmp.eq.s32.totalorder %v160, %v538
    %vm797 = vcmp.eq.s32.totalorder %v159, %v541
    %vm798 = vcmp.eq.s32.totalorder %v160, %v541
    %vm799 = vcmp.eq.s32.totalorder %v159, %v544
    %vm800 = vcmp.eq.s32.totalorder %v160, %v544
    %801 = vset.pattern.permute.xlu0 1
    %802 = vperm.xlu0 %801, %v30
    %v803 = vpop.permute.xlu0 %802
    %804 = vset.pattern.permute.xlu0 1
    %805 = vperm.xlu0 %804, %v31
    %v806 = vpop.permute.xlu0 %805
    %807 = vset.pattern.permute.xlu0 1
    %808 = vperm.xlu0 %807, %v32
    %v809 = vpop.permute.xlu0 %808
    %810 = vset.pattern.permute.xlu0 1
    %811 = vperm.xlu0 %810, %v33
    %v812 = vpop.permute.xlu0 %811
    %813 = vset.pattern.permute.xlu0 1
    %814 = vperm.xlu0 %813, %v34
    %v815 = vpop.permute.xlu0 %814
    %816 = vset.pattern.permute.xlu0 1
    %817 = vperm.xlu0 %816, %v35
    %v818 = vpop.permute.xlu0 %817
    %819 = vset.pattern.permute.xlu0 1
    %820 = vperm.xlu0 %819, %v36
    %v821 = vpop.permute.xlu0 %820
    %822 = vset.pattern.permute.xlu0 1
    %823 = vperm.xlu0 %822, %v37
    %v824 = vpop.permute.xlu0 %823
    %825 = vset.pattern.permute.xlu0 1
    %826 = vperm.xlu0 %825, %v38
    %v827 = vpop.permute.xlu0 %826
    %828 = vset.pattern.permute.xlu0 1
    %829 = vperm.xlu0 %828, %v39
    %v830 = vpop.permute.xlu0 %829
    %831 = vset.pattern.permute.xlu0 1
    %832 = vperm.xlu0 %831, %v40
    %v833 = vpop.permute.xlu0 %832
    %834 = vset.pattern.permute.xlu0 1
    %835 = vperm.xlu0 %834, %v41
    %v836 = vpop.permute.xlu0 %835
    %837 = vset.pattern.permute.xlu0 1
    %838 = vperm.xlu0 %837, %v42
    %v839 = vpop.permute.xlu0 %838
    %840 = vset.pattern.permute.xlu0 1
    %841 = vperm.xlu0 %840, %v43
    %v842 = vpop.permute.xlu0 %841
    %843 = vset.pattern.permute.xlu0 1
    %844 = vperm.xlu0 %843, %v44
    %v845 = vpop.permute.xlu0 %844
    %846 = vset.pattern.permute.xlu0 1
    %847 = vperm.xlu0 %846, %v45
    %v848 = vpop.permute.xlu0 %847
    %849 = vset.pattern.permute.xlu0 1
    %850 = vperm.xlu0 %849, %v46
    %v851 = vpop.permute.xlu0 %850
    %852 = vset.pattern.permute.xlu0 1
    %853 = vperm.xlu0 %852, %v47
    %v854 = vpop.permute.xlu0 %853
    %855 = vset.pattern.permute.xlu0 1
    %856 = vperm.xlu0 %855, %v48
    %v857 = vpop.permute.xlu0 %856
    %858 = vset.pattern.permute.xlu0 1
    %859 = vperm.xlu0 %858, %v49
    %v860 = vpop.permute.xlu0 %859
    %861 = vset.pattern.permute.xlu0 1
    %862 = vperm.xlu0 %861, %v50
    %v863 = vpop.permute.xlu0 %862
    %864 = vset.pattern.permute.xlu0 1
    %865 = vperm.xlu0 %864, %v51
    %v866 = vpop.permute.xlu0 %865
    %867 = vset.pattern.permute.xlu0 1
    %868 = vperm.xlu0 %867, %v52
    %v869 = vpop.permute.xlu0 %868
    %870 = vset.pattern.permute.xlu0 1
    %871 = vperm.xlu0 %870, %v53
    %v872 = vpop.permute.xlu0 %871
    %873 = vset.pattern.permute.xlu0 1
    %874 = vperm.xlu0 %873, %v54
    %v875 = vpop.permute.xlu0 %874
    %876 = vset.pattern.permute.xlu0 1
    %877 = vperm.xlu0 %876, %v55
    %v878 = vpop.permute.xlu0 %877
    %879 = vset.pattern.permute.xlu0 1
    %880 = vperm.xlu0 %879, %v56
    %v881 = vpop.permute.xlu0 %880
    %882 = vset.pattern.permute.xlu0 1
    %883 = vperm.xlu0 %882, %v57
    %v884 = vpop.permute.xlu0 %883
    %885 = vset.pattern.permute.xlu0 1
    %886 = vperm.xlu0 %885, %v58
    %v887 = vpop.permute.xlu0 %886
    %888 = vset.pattern.permute.xlu0 1
    %889 = vperm.xlu0 %888, %v59
    %v890 = vpop.permute.xlu0 %889
    %891 = vset.pattern.permute.xlu0 1
    %892 = vperm.xlu0 %891, %v60
    %v893 = vpop.permute.xlu0 %892
    %894 = vset.pattern.permute.xlu0 1
    %895 = vperm.xlu0 %894, %v61
    %v896 = vpop.permute.xlu0 %895
    %897 = vset.pattern.permute.xlu0 1
    %898 = vperm.xlu0 %897, %v62
    %v899 = vpop.permute.xlu0 %898
    %900 = vset.pattern.permute.xlu0 1
    %901 = vperm.xlu0 %900, %v63
    %v902 = vpop.permute.xlu0 %901
    %903 = vset.pattern.permute.xlu0 1
    %904 = vperm.xlu0 %903, %v64
    %v905 = vpop.permute.xlu0 %904
    %906 = vset.pattern.permute.xlu0 1
    %907 = vperm.xlu0 %906, %v65
    %v908 = vpop.permute.xlu0 %907
    %909 = vset.pattern.permute.xlu0 1
    %910 = vperm.xlu0 %909, %v66
    %v911 = vpop.permute.xlu0 %910
    %912 = vset.pattern.permute.xlu0 1
    %913 = vperm.xlu0 %912, %v67
    %v914 = vpop.permute.xlu0 %913
    %915 = vset.pattern.permute.xlu0 1
    %916 = vperm.xlu0 %915, %v68
    %v917 = vpop.permute.xlu0 %916
    %918 = vset.pattern.permute.xlu0 1
    %919 = vperm.xlu0 %918, %v69
    %v920 = vpop.permute.xlu0 %919
    %921 = vset.pattern.permute.xlu0 1
    %922 = vperm.xlu0 %921, %v70
    %v923 = vpop.permute.xlu0 %922
    %924 = vset.pattern.permute.xlu0 1
    %925 = vperm.xlu0 %924, %v71
    %v926 = vpop.permute.xlu0 %925
    %927 = vset.pattern.permute.xlu0 1
    %928 = vperm.xlu0 %927, %v72
    %v929 = vpop.permute.xlu0 %928
    %930 = vset.pattern.permute.xlu0 1
    %931 = vperm.xlu0 %930, %v73
    %v932 = vpop.permute.xlu0 %931
    %933 = vset.pattern.permute.xlu0 1
    %934 = vperm.xlu0 %933, %v74
    %v935 = vpop.permute.xlu0 %934
    %936 = vset.pattern.permute.xlu0 1
    %937 = vperm.xlu0 %936, %v75
    %v938 = vpop.permute.xlu0 %937
    %939 = vset.pattern.permute.xlu0 1
    %940 = vperm.xlu0 %939, %v76
    %v941 = vpop.permute.xlu0 %940
    %942 = vset.pattern.permute.xlu0 1
    %943 = vperm.xlu0 %942, %v77
    %v944 = vpop.permute.xlu0 %943
    %945 = vset.pattern.permute.xlu0 1
    %946 = vperm.xlu0 %945, %v78
    %v947 = vpop.permute.xlu0 %946
    %948 = vset.pattern.permute.xlu0 1
    %949 = vperm.xlu0 %948, %v79
    %v950 = vpop.permute.xlu0 %949
    %951 = vset.pattern.permute.xlu0 1
    %952 = vperm.xlu0 %951, %v80
    %v953 = vpop.permute.xlu0 %952
    %954 = vset.pattern.permute.xlu0 1
    %955 = vperm.xlu0 %954, %v81
    %v956 = vpop.permute.xlu0 %955
    %957 = vset.pattern.permute.xlu0 1
    %958 = vperm.xlu0 %957, %v82
    %v959 = vpop.permute.xlu0 %958
    %960 = vset.pattern.permute.xlu0 1
    %961 = vperm.xlu0 %960, %v83
    %v962 = vpop.permute.xlu0 %961
    %963 = vset.pattern.permute.xlu0 1
    %964 = vperm.xlu0 %963, %v84
    %v965 = vpop.permute.xlu0 %964
    %966 = vset.pattern.permute.xlu0 1
    %967 = vperm.xlu0 %966, %v85
    %v968 = vpop.permute.xlu0 %967
    %969 = vset.pattern.permute.xlu0 1
    %970 = vperm.xlu0 %969, %v86
    %v971 = vpop.permute.xlu0 %970
    %972 = vset.pattern.permute.xlu0 1
    %973 = vperm.xlu0 %972, %v87
    %v974 = vpop.permute.xlu0 %973
    %975 = vset.pattern.permute.xlu0 1
    %976 = vperm.xlu0 %975, %v88
    %v977 = vpop.permute.xlu0 %976
    %978 = vset.pattern.permute.xlu0 1
    %979 = vperm.xlu0 %978, %v89
    %v980 = vpop.permute.xlu0 %979
    %981 = vset.pattern.permute.xlu0 1
    %982 = vperm.xlu0 %981, %v90
    %v983 = vpop.permute.xlu0 %982
    %984 = vset.pattern.permute.xlu0 1
    %985 = vperm.xlu0 %984, %v91
    %v986 = vpop.permute.xlu0 %985
    %987 = vset.pattern.permute.xlu0 1
    %988 = vperm.xlu0 %987, %v92
    %v989 = vpop.permute.xlu0 %988
    %990 = vset.pattern.permute.xlu0 1
    %991 = vperm.xlu0 %990, %v93
    %v992 = vpop.permute.xlu0 %991
    %993 = vset.pattern.permute.xlu0 1
    %994 = vperm.xlu0 %993, %v94
    %v995 = vpop.permute.xlu0 %994
    %996 = vset.pattern.permute.xlu0 1
    %997 = vperm.xlu0 %996, %v95
    %v998 = vpop.permute.xlu0 %997
    %999 = vset.pattern.permute.xlu0 1
    %1000 = vperm.xlu0 %999, %v96
    %v1001 = vpop.permute.xlu0 %1000
    %1002 = vset.pattern.permute.xlu0 1
    %1003 = vperm.xlu0 %1002, %v97
    %v1004 = vpop.permute.xlu0 %1003
    %1005 = vset.pattern.permute.xlu0 1
    %1006 = vperm.xlu0 %1005, %v98
    %v1007 = vpop.permute.xlu0 %1006
    %1008 = vset.pattern.permute.xlu0 1
    %1009 = vperm.xlu0 %1008, %v99
    %v1010 = vpop.permute.xlu0 %1009
    %1011 = vset.pattern.permute.xlu0 1
    %1012 = vperm.xlu0 %1011, %v100
    %v1013 = vpop.permute.xlu0 %1012
    %1014 = vset.pattern.permute.xlu0 1
    %1015 = vperm.xlu0 %1014, %v101
    %v1016 = vpop.permute.xlu0 %1015
    %1017 = vset.pattern.permute.xlu0 1
    %1018 = vperm.xlu0 %1017, %v102
    %v1019 = vpop.permute.xlu0 %1018
    %1020 = vset.pattern.permute.xlu0 1
    %1021 = vperm.xlu0 %1020, %v103
    %v1022 = vpop.permute.xlu0 %1021
    %1023 = vset.pattern.permute.xlu0 1
    %1024 = vperm.xlu0 %1023, %v104
    %v1025 = vpop.permute.xlu0 %1024
    %1026 = vset.pattern.permute.xlu0 1
    %1027 = vperm.xlu0 %1026, %v105
    %v1028 = vpop.permute.xlu0 %1027
    %1029 = vset.pattern.permute.xlu0 1
    %1030 = vperm.xlu0 %1029, %v106
    %v1031 = vpop.permute.xlu0 %1030
    %1032 = vset.pattern.permute.xlu0 1
    %1033 = vperm.xlu0 %1032, %v107
    %v1034 = vpop.permute.xlu0 %1033
    %1035 = vset.pattern.permute.xlu0 1
    %1036 = vperm.xlu0 %1035, %v108
    %v1037 = vpop.permute.xlu0 %1036
    %1038 = vset.pattern.permute.xlu0 1
    %1039 = vperm.xlu0 %1038, %v109
    %v1040 = vpop.permute.xlu0 %1039
    %1041 = vset.pattern.permute.xlu0 1
    %1042 = vperm.xlu0 %1041, %v110
    %v1043 = vpop.permute.xlu0 %1042
    %1044 = vset.pattern.permute.xlu0 1
    %1045 = vperm.xlu0 %1044, %v111
    %v1046 = vpop.permute.xlu0 %1045
    %1047 = vset.pattern.permute.xlu0 1
    %1048 = vperm.xlu0 %1047, %v112
    %v1049 = vpop.permute.xlu0 %1048
    %1050 = vset.pattern.permute.xlu0 1
    %1051 = vperm.xlu0 %1050, %v113
    %v1052 = vpop.permute.xlu0 %1051
    %1053 = vset.pattern.permute.xlu0 1
    %1054 = vperm.xlu0 %1053, %v114
    %v1055 = vpop.permute.xlu0 %1054
    %1056 = vset.pattern.permute.xlu0 1
    %1057 = vperm.xlu0 %1056, %v115
    %v1058 = vpop.permute.xlu0 %1057
    %1059 = vset.pattern.permute.xlu0 1
    %1060 = vperm.xlu0 %1059, %v116
    %v1061 = vpop.permute.xlu0 %1060
    %1062 = vset.pattern.permute.xlu0 1
    %1063 = vperm.xlu0 %1062, %v117
    %v1064 = vpop.permute.xlu0 %1063
    %1065 = vset.pattern.permute.xlu0 1
    %1066 = vperm.xlu0 %1065, %v118
    %v1067 = vpop.permute.xlu0 %1066
    %1068 = vset.pattern.permute.xlu0 1
    %1069 = vperm.xlu0 %1068, %v119
    %v1070 = vpop.permute.xlu0 %1069
    %1071 = vset.pattern.permute.xlu0 1
    %1072 = vperm.xlu0 %1071, %v120
    %v1073 = vpop.permute.xlu0 %1072
    %1074 = vset.pattern.permute.xlu0 1
    %1075 = vperm.xlu0 %1074, %v121
    %v1076 = vpop.permute.xlu0 %1075
    %1077 = vset.pattern.permute.xlu0 1
    %1078 = vperm.xlu0 %1077, %v122
    %v1079 = vpop.permute.xlu0 %1078
    %1080 = vset.pattern.permute.xlu0 1
    %1081 = vperm.xlu0 %1080, %v123
    %v1082 = vpop.permute.xlu0 %1081
    %1083 = vset.pattern.permute.xlu0 1
    %1084 = vperm.xlu0 %1083, %v124
    %v1085 = vpop.permute.xlu0 %1084
    %1086 = vset.pattern.permute.xlu0 1
    %1087 = vperm.xlu0 %1086, %v125
    %v1088 = vpop.permute.xlu0 %1087
    %1089 = vset.pattern.permute.xlu0 1
    %1090 = vperm.xlu0 %1089, %v126
    %v1091 = vpop.permute.xlu0 %1090
    %1092 = vset.pattern.permute.xlu0 1
    %1093 = vperm.xlu0 %1092, %v127
    %v1094 = vpop.permute.xlu0 %1093
    %1095 = vset.pattern.permute.xlu0 1
    %1096 = vperm.xlu0 %1095, %v128
    %v1097 = vpop.permute.xlu0 %1096
    %1098 = vset.pattern.permute.xlu0 1
    %1099 = vperm.xlu0 %1098, %v129
    %v1100 = vpop.permute.xlu0 %1099
    %1101 = vset.pattern.permute.xlu0 1
    %1102 = vperm.xlu0 %1101, %v130
    %v1103 = vpop.permute.xlu0 %1102
    %1104 = vset.pattern.permute.xlu0 1
    %1105 = vperm.xlu0 %1104, %v131
    %v1106 = vpop.permute.xlu0 %1105
    %1107 = vset.pattern.permute.xlu0 1
    %1108 = vperm.xlu0 %1107, %v132
    %v1109 = vpop.permute.xlu0 %1108
    %1110 = vset.pattern.permute.xlu0 1
    %1111 = vperm.xlu0 %1110, %v133
    %v1112 = vpop.permute.xlu0 %1111
    %1113 = vset.pattern.permute.xlu0 1
    %1114 = vperm.xlu0 %1113, %v134
    %v1115 = vpop.permute.xlu0 %1114
    %1116 = vset.pattern.permute.xlu0 1
    %1117 = vperm.xlu0 %1116, %v135
    %v1118 = vpop.permute.xlu0 %1117
    %1119 = vset.pattern.permute.xlu0 1
    %1120 = vperm.xlu0 %1119, %v136
    %v1121 = vpop.permute.xlu0 %1120
    %1122 = vset.pattern.permute.xlu0 1
    %1123 = vperm.xlu0 %1122, %v137
    %v1124 = vpop.permute.xlu0 %1123
    %1125 = vset.pattern.permute.xlu0 1
    %1126 = vperm.xlu0 %1125, %v138
    %v1127 = vpop.permute.xlu0 %1126
    %1128 = vset.pattern.permute.xlu0 1
    %1129 = vperm.xlu0 %1128, %v139
    %v1130 = vpop.permute.xlu0 %1129
    %1131 = vset.pattern.permute.xlu0 1
    %1132 = vperm.xlu0 %1131, %v140
    %v1133 = vpop.permute.xlu0 %1132
    %1134 = vset.pattern.permute.xlu0 1
    %1135 = vperm.xlu0 %1134, %v141
    %v1136 = vpop.permute.xlu0 %1135
    %1137 = vset.pattern.permute.xlu0 1
    %1138 = vperm.xlu0 %1137, %v142
    %v1139 = vpop.permute.xlu0 %1138
    %1140 = vset.pattern.permute.xlu0 1
    %1141 = vperm.xlu0 %1140, %v143
    %v1142 = vpop.permute.xlu0 %1141
    %1143 = vset.pattern.permute.xlu0 1
    %1144 = vperm.xlu0 %1143, %v144
    %v1145 = vpop.permute.xlu0 %1144
    %1146 = vset.pattern.permute.xlu0 1
    %1147 = vperm.xlu0 %1146, %v145
    %v1148 = vpop.permute.xlu0 %1147
    %1149 = vset.pattern.permute.xlu0 1
    %1150 = vperm.xlu0 %1149, %v146
    %v1151 = vpop.permute.xlu0 %1150
    %1152 = vset.pattern.permute.xlu0 1
    %1153 = vperm.xlu0 %1152, %v147
    %v1154 = vpop.permute.xlu0 %1153
    %1155 = vset.pattern.permute.xlu0 1
    %1156 = vperm.xlu0 %1155, %v148
    %v1157 = vpop.permute.xlu0 %1156
    %1158 = vset.pattern.permute.xlu0 1
    %1159 = vperm.xlu0 %1158, %v149
    %v1160 = vpop.permute.xlu0 %1159
    %1161 = vset.pattern.permute.xlu0 1
    %1162 = vperm.xlu0 %1161, %v150
    %v1163 = vpop.permute.xlu0 %1162
    %1164 = vset.pattern.permute.xlu0 1
    %1165 = vperm.xlu0 %1164, %v151
    %v1166 = vpop.permute.xlu0 %1165
    %1167 = vset.pattern.permute.xlu0 1
    %1168 = vperm.xlu0 %1167, %v152
    %v1169 = vpop.permute.xlu0 %1168
    %1170 = vset.pattern.permute.xlu0 1
    %1171 = vperm.xlu0 %1170, %v153
    %v1172 = vpop.permute.xlu0 %1171
    %1173 = vset.pattern.permute.xlu0 1
    %1174 = vperm.xlu0 %1173, %v154
    %v1175 = vpop.permute.xlu0 %1174
    %1176 = vset.pattern.permute.xlu0 1
    %1177 = vperm.xlu0 %1176, %v155
    %v1178 = vpop.permute.xlu0 %1177
    %1179 = vset.pattern.permute.xlu0 1
    %1180 = vperm.xlu0 %1179, %v156
    %v1181 = vpop.permute.xlu0 %1180
    %1182 = vset.pattern.permute.xlu0 1
    %1183 = vperm.xlu0 %1182, %v157
    %v1184 = vpop.permute.xlu0 %1183
    %vm1185 = vcmp.eq.s32.totalorder %v159, %v803
    %vm1186 = vcmp.eq.s32.totalorder %v160, %v803
    %vm1187 = vcmp.eq.s32.totalorder %v159, %v806
    %vm1188 = vcmp.eq.s32.totalorder %v160, %v806
    %vm1189 = vcmp.eq.s32.totalorder %v159, %v809
    %vm1190 = vcmp.eq.s32.totalorder %v160, %v809
    %vm1191 = vcmp.eq.s32.totalorder %v159, %v812
    %vm1192 = vcmp.eq.s32.totalorder %v160, %v812
    %vm1193 = vcmp.eq.s32.totalorder %v159, %v815
    %vm1194 = vcmp.eq.s32.totalorder %v160, %v815
    %vm1195 = vcmp.eq.s32.totalorder %v159, %v818
    %vm1196 = vcmp.eq.s32.totalorder %v160, %v818
    %vm1197 = vcmp.eq.s32.totalorder %v159, %v821
    %vm1198 = vcmp.eq.s32.totalorder %v160, %v821
    %vm1199 = vcmp.eq.s32.totalorder %v159, %v824
    %vm1200 = vcmp.eq.s32.totalorder %v160, %v824
    %vm1201 = vcmp.eq.s32.totalorder %v159, %v827
    %vm1202 = vcmp.eq.s32.totalorder %v160, %v827
    %vm1203 = vcmp.eq.s32.totalorder %v159, %v830
    %vm1204 = vcmp.eq.s32.totalorder %v160, %v830
    %vm1205 = vcmp.eq.s32.totalorder %v159, %v833
    %vm1206 = vcmp.eq.s32.totalorder %v160, %v833
    %vm1207 = vcmp.eq.s32.totalorder %v159, %v836
    %vm1208 = vcmp.eq.s32.totalorder %v160, %v836
    %vm1209 = vcmp.eq.s32.totalorder %v159, %v839
    %vm1210 = vcmp.eq.s32.totalorder %v160, %v839
    %vm1211 = vcmp.eq.s32.totalorder %v159, %v842
    %vm1212 = vcmp.eq.s32.totalorder %v160, %v842
    %vm1213 = vcmp.eq.s32.totalorder %v159, %v845
    %vm1214 = vcmp.eq.s32.totalorder %v160, %v845
    %vm1215 = vcmp.eq.s32.totalorder %v159, %v848
    %vm1216 = vcmp.eq.s32.totalorder %v160, %v848
    %vm1217 = vcmp.eq.s32.totalorder %v159, %v851
    %vm1218 = vcmp.eq.s32.totalorder %v160, %v851
    %vm1219 = vcmp.eq.s32.totalorder %v159, %v854
    %vm1220 = vcmp.eq.s32.totalorder %v160, %v854
    %vm1221 = vcmp.eq.s32.totalorder %v159, %v857
    %vm1222 = vcmp.eq.s32.totalorder %v160, %v857
    %vm1223 = vcmp.eq.s32.totalorder %v159, %v860
    %vm1224 = vcmp.eq.s32.totalorder %v160, %v860
    %vm1225 = vcmp.eq.s32.totalorder %v159, %v863
    %vm1226 = vcmp.eq.s32.totalorder %v160, %v863
    %vm1227 = vcmp.eq.s32.totalorder %v159, %v866
    %vm1228 = vcmp.eq.s32.totalorder %v160, %v866
    %vm1229 = vcmp.eq.s32.totalorder %v159, %v869
    %vm1230 = vcmp.eq.s32.totalorder %v160, %v869
    %vm1231 = vcmp.eq.s32.totalorder %v159, %v872
    %vm1232 = vcmp.eq.s32.totalorder %v160, %v872
    %vm1233 = vcmp.eq.s32.totalorder %v159, %v875
    %vm1234 = vcmp.eq.s32.totalorder %v160, %v875
    %vm1235 = vcmp.eq.s32.totalorder %v159, %v878
    %vm1236 = vcmp.eq.s32.totalorder %v160, %v878
    %vm1237 = vcmp.eq.s32.totalorder %v159, %v881
    %vm1238 = vcmp.eq.s32.totalorder %v160, %v881
    %vm1239 = vcmp.eq.s32.totalorder %v159, %v884
    %vm1240 = vcmp.eq.s32.totalorder %v160, %v884
    %vm1241 = vcmp.eq.s32.totalorder %v159, %v887
    %vm1242 = vcmp.eq.s32.totalorder %v160, %v887
    %vm1243 = vcmp.eq.s32.totalorder %v159, %v890
    %vm1244 = vcmp.eq.s32.totalorder %v160, %v890
    %vm1245 = vcmp.eq.s32.totalorder %v159, %v893
    %vm1246 = vcmp.eq.s32.totalorder %v160, %v893
    %vm1247 = vcmp.eq.s32.totalorder %v159, %v896
    %vm1248 = vcmp.eq.s32.totalorder %v160, %v896
    %vm1249 = vcmp.eq.s32.totalorder %v159, %v899
    %vm1250 = vcmp.eq.s32.totalorder %v160, %v899
    %vm1251 = vcmp.eq.s32.totalorder %v159, %v902
    %vm1252 = vcmp.eq.s32.totalorder %v160, %v902
    %vm1253 = vcmp.eq.s32.totalorder %v159, %v905
    %vm1254 = vcmp.eq.s32.totalorder %v160, %v905
    %vm1255 = vcmp.eq.s32.totalorder %v159, %v908
    %vm1256 = vcmp.eq.s32.totalorder %v160, %v908
    %vm1257 = vcmp.eq.s32.totalorder %v159, %v911
    %vm1258 = vcmp.eq.s32.totalorder %v160, %v911
    %vm1259 = vcmp.eq.s32.totalorder %v159, %v914
    %vm1260 = vcmp.eq.s32.totalorder %v160, %v914
    %vm1261 = vcmp.eq.s32.totalorder %v159, %v917
    %vm1262 = vcmp.eq.s32.totalorder %v160, %v917
    %vm1263 = vcmp.eq.s32.totalorder %v159, %v920
    %vm1264 = vcmp.eq.s32.totalorder %v160, %v920
    %vm1265 = vcmp.eq.s32.totalorder %v159, %v923
    %vm1266 = vcmp.eq.s32.totalorder %v160, %v923
    %vm1267 = vcmp.eq.s32.totalorder %v159, %v926
    %vm1268 = vcmp.eq.s32.totalorder %v160, %v926
    %vm1269 = vcmp.eq.s32.totalorder %v159, %v929
    %vm1270 = vcmp.eq.s32.totalorder %v160, %v929
    %vm1271 = vcmp.eq.s32.totalorder %v159, %v932
    %vm1272 = vcmp.eq.s32.totalorder %v160, %v932
    %vm1273 = vcmp.eq.s32.totalorder %v159, %v935
    %vm1274 = vcmp.eq.s32.totalorder %v160, %v935
    %vm1275 = vcmp.eq.s32.totalorder %v159, %v938
    %vm1276 = vcmp.eq.s32.totalorder %v160, %v938
    %vm1277 = vcmp.eq.s32.totalorder %v159, %v941
    %vm1278 = vcmp.eq.s32.totalorder %v160, %v941
    %vm1279 = vcmp.eq.s32.totalorder %v159, %v944
    %vm1280 = vcmp.eq.s32.totalorder %v160, %v944
    %vm1281 = vcmp.eq.s32.totalorder %v159, %v947
    %vm1282 = vcmp.eq.s32.totalorder %v160, %v947
    %vm1283 = vcmp.eq.s32.totalorder %v159, %v950
    %vm1284 = vcmp.eq.s32.totalorder %v160, %v950
    %vm1285 = vcmp.eq.s32.totalorder %v159, %v953
    %vm1286 = vcmp.eq.s32.totalorder %v160, %v953
    %vm1287 = vcmp.eq.s32.totalorder %v159, %v956
    %vm1288 = vcmp.eq.s32.totalorder %v160, %v956
    %vm1289 = vcmp.eq.s32.totalorder %v159, %v959
    %vm1290 = vcmp.eq.s32.totalorder %v160, %v959
    %vm1291 = vcmp.eq.s32.totalorder %v159, %v962
    %vm1292 = vcmp.eq.s32.totalorder %v160, %v962
    %vm1293 = vcmp.eq.s32.totalorder %v159, %v965
    %vm1294 = vcmp.eq.s32.totalorder %v160, %v965
    %vm1295 = vcmp.eq.s32.totalorder %v159, %v968
    %vm1296 = vcmp.eq.s32.totalorder %v160, %v968
    %vm1297 = vcmp.eq.s32.totalorder %v159, %v971
    %vm1298 = vcmp.eq.s32.totalorder %v160, %v971
    %vm1299 = vcmp.eq.s32.totalorder %v159, %v974
    %vm1300 = vcmp.eq.s32.totalorder %v160, %v974
    %vm1301 = vcmp.eq.s32.totalorder %v159, %v977
    %vm1302 = vcmp.eq.s32.totalorder %v160, %v977
    %vm1303 = vcmp.eq.s32.totalorder %v159, %v980
    %vm1304 = vcmp.eq.s32.totalorder %v160, %v980
    %vm1305 = vcmp.eq.s32.totalorder %v159, %v983
    %vm1306 = vcmp.eq.s32.totalorder %v160, %v983
    %vm1307 = vcmp.eq.s32.totalorder %v159, %v986
    %vm1308 = vcmp.eq.s32.totalorder %v160, %v986
    %vm1309 = vcmp.eq.s32.totalorder %v159, %v989
    %vm1310 = vcmp.eq.s32.totalorder %v160, %v989
    %vm1311 = vcmp.eq.s32.totalorder %v159, %v992
    %vm1312 = vcmp.eq.s32.totalorder %v160, %v992
    %vm1313 = vcmp.eq.s32.totalorder %v159, %v995
    %vm1314 = vcmp.eq.s32.totalorder %v160, %v995
    %vm1315 = vcmp.eq.s32.totalorder %v159, %v998
    %vm1316 = vcmp.eq.s32.totalorder %v160, %v998
    %vm1317 = vcmp.eq.s32.totalorder %v159, %v1001
    %vm1318 = vcmp.eq.s32.totalorder %v160, %v1001
    %vm1319 = vcmp.eq.s32.totalorder %v159, %v1004
    %vm1320 = vcmp.eq.s32.totalorder %v160, %v1004
    %vm1321 = vcmp.eq.s32.totalorder %v159, %v1007
    %vm1322 = vcmp.eq.s32.totalorder %v160, %v1007
    %vm1323 = vcmp.eq.s32.totalorder %v159, %v1010
    %vm1324 = vcmp.eq.s32.totalorder %v160, %v1010
    %vm1325 = vcmp.eq.s32.totalorder %v159, %v1013
    %vm1326 = vcmp.eq.s32.totalorder %v160, %v1013
    %vm1327 = vcmp.eq.s32.totalorder %v159, %v1016
    %vm1328 = vcmp.eq.s32.totalorder %v160, %v1016
    %vm1329 = vcmp.eq.s32.totalorder %v159, %v1019
    %vm1330 = vcmp.eq.s32.totalorder %v160, %v1019
    %vm1331 = vcmp.eq.s32.totalorder %v159, %v1022
    %vm1332 = vcmp.eq.s32.totalorder %v160, %v1022
    %vm1333 = vcmp.eq.s32.totalorder %v159, %v1025
    %vm1334 = vcmp.eq.s32.totalorder %v160, %v1025
    %vm1335 = vcmp.eq.s32.totalorder %v159, %v1028
    %vm1336 = vcmp.eq.s32.totalorder %v160, %v1028
    %vm1337 = vcmp.eq.s32.totalorder %v159, %v1031
    %vm1338 = vcmp.eq.s32.totalorder %v160, %v1031
    %vm1339 = vcmp.eq.s32.totalorder %v159, %v1034
    %vm1340 = vcmp.eq.s32.totalorder %v160, %v1034
    %vm1341 = vcmp.eq.s32.totalorder %v159, %v1037
    %vm1342 = vcmp.eq.s32.totalorder %v160, %v1037
    %vm1343 = vcmp.eq.s32.totalorder %v159, %v1040
    %vm1344 = vcmp.eq.s32.totalorder %v160, %v1040
    %vm1345 = vcmp.eq.s32.totalorder %v159, %v1043
    %vm1346 = vcmp.eq.s32.totalorder %v160, %v1043
    %vm1347 = vcmp.eq.s32.totalorder %v159, %v1046
    %vm1348 = vcmp.eq.s32.totalorder %v160, %v1046
    %vm1349 = vcmp.eq.s32.totalorder %v159, %v1049
    %vm1350 = vcmp.eq.s32.totalorder %v160, %v1049
    %vm1351 = vcmp.eq.s32.totalorder %v159, %v1052
    %vm1352 = vcmp.eq.s32.totalorder %v160, %v1052
    %vm1353 = vcmp.eq.s32.totalorder %v159, %v1055
    %vm1354 = vcmp.eq.s32.totalorder %v160, %v1055
    %vm1355 = vcmp.eq.s32.totalorder %v159, %v1058
    %vm1356 = vcmp.eq.s32.totalorder %v160, %v1058
    %vm1357 = vcmp.eq.s32.totalorder %v159, %v1061
    %vm1358 = vcmp.eq.s32.totalorder %v160, %v1061
    %vm1359 = vcmp.eq.s32.totalorder %v159, %v1064
    %vm1360 = vcmp.eq.s32.totalorder %v160, %v1064
    %vm1361 = vcmp.eq.s32.totalorder %v159, %v1067
    %vm1362 = vcmp.eq.s32.totalorder %v160, %v1067
    %vm1363 = vcmp.eq.s32.totalorder %v159, %v1070
    %vm1364 = vcmp.eq.s32.totalorder %v160, %v1070
    %vm1365 = vcmp.eq.s32.totalorder %v159, %v1073
    %vm1366 = vcmp.eq.s32.totalorder %v160, %v1073
    %vm1367 = vcmp.eq.s32.totalorder %v159, %v1076
    %vm1368 = vcmp.eq.s32.totalorder %v160, %v1076
    %vm1369 = vcmp.eq.s32.totalorder %v159, %v1079
    %vm1370 = vcmp.eq.s32.totalorder %v160, %v1079
    %vm1371 = vcmp.eq.s32.totalorder %v159, %v1082
    %vm1372 = vcmp.eq.s32.totalorder %v160, %v1082
    %vm1373 = vcmp.eq.s32.totalorder %v159, %v1085
    %vm1374 = vcmp.eq.s32.totalorder %v160, %v1085
    %vm1375 = vcmp.eq.s32.totalorder %v159, %v1088
    %vm1376 = vcmp.eq.s32.totalorder %v160, %v1088
    %vm1377 = vcmp.eq.s32.totalorder %v159, %v1091
    %vm1378 = vcmp.eq.s32.totalorder %v160, %v1091
    %vm1379 = vcmp.eq.s32.totalorder %v159, %v1094
    %vm1380 = vcmp.eq.s32.totalorder %v160, %v1094
    %vm1381 = vcmp.eq.s32.totalorder %v159, %v1097
    %vm1382 = vcmp.eq.s32.totalorder %v160, %v1097
    %vm1383 = vcmp.eq.s32.totalorder %v159, %v1100
    %vm1384 = vcmp.eq.s32.totalorder %v160, %v1100
    %vm1385 = vcmp.eq.s32.totalorder %v159, %v1103
    %vm1386 = vcmp.eq.s32.totalorder %v160, %v1103
    %vm1387 = vcmp.eq.s32.totalorder %v159, %v1106
    %vm1388 = vcmp.eq.s32.totalorder %v160, %v1106
    %vm1389 = vcmp.eq.s32.totalorder %v159, %v1109
    %vm1390 = vcmp.eq.s32.totalorder %v160, %v1109
    %vm1391 = vcmp.eq.s32.totalorder %v159, %v1112
    %vm1392 = vcmp.eq.s32.totalorder %v160, %v1112
    %vm1393 = vcmp.eq.s32.totalorder %v159, %v1115
    %vm1394 = vcmp.eq.s32.totalorder %v160, %v1115
    %vm1395 = vcmp.eq.s32.totalorder %v159, %v1118
    %vm1396 = vcmp.eq.s32.totalorder %v160, %v1118
    %vm1397 = vcmp.eq.s32.totalorder %v159, %v1121
    %vm1398 = vcmp.eq.s32.totalorder %v160, %v1121
    %vm1399 = vcmp.eq.s32.totalorder %v159, %v1124
    %vm1400 = vcmp.eq.s32.totalorder %v160, %v1124
    %vm1401 = vcmp.eq.s32.totalorder %v159, %v1127
    %vm1402 = vcmp.eq.s32.totalorder %v160, %v1127
    %vm1403 = vcmp.eq.s32.totalorder %v159, %v1130
    %vm1404 = vcmp.eq.s32.totalorder %v160, %v1130
    %vm1405 = vcmp.eq.s32.totalorder %v159, %v1133
    %vm1406 = vcmp.eq.s32.totalorder %v160, %v1133
    %vm1407 = vcmp.eq.s32.totalorder %v159, %v1136
    %vm1408 = vcmp.eq.s32.totalorder %v160, %v1136
    %vm1409 = vcmp.eq.s32.totalorder %v159, %v1139
    %vm1410 = vcmp.eq.s32.totalorder %v160, %v1139
    %vm1411 = vcmp.eq.s32.totalorder %v159, %v1142
    %vm1412 = vcmp.eq.s32.totalorder %v160, %v1142
    %vm1413 = vcmp.eq.s32.totalorder %v159, %v1145
    %vm1414 = vcmp.eq.s32.totalorder %v160, %v1145
    %vm1415 = vcmp.eq.s32.totalorder %v159, %v1148
    %vm1416 = vcmp.eq.s32.totalorder %v160, %v1148
    %vm1417 = vcmp.eq.s32.totalorder %v159, %v1151
    %vm1418 = vcmp.eq.s32.totalorder %v160, %v1151
    %vm1419 = vcmp.eq.s32.totalorder %v159, %v1154
    %vm1420 = vcmp.eq.s32.totalorder %v160, %v1154
    %vm1421 = vcmp.eq.s32.totalorder %v159, %v1157
    %vm1422 = vcmp.eq.s32.totalorder %v160, %v1157
    %vm1423 = vcmp.eq.s32.totalorder %v159, %v1160
    %vm1424 = vcmp.eq.s32.totalorder %v160, %v1160
    %vm1425 = vcmp.eq.s32.totalorder %v159, %v1163
    %vm1426 = vcmp.eq.s32.totalorder %v160, %v1163
    %vm1427 = vcmp.eq.s32.totalorder %v159, %v1166
    %vm1428 = vcmp.eq.s32.totalorder %v160, %v1166
    %vm1429 = vcmp.eq.s32.totalorder %v159, %v1169
    %vm1430 = vcmp.eq.s32.totalorder %v160, %v1169
    %vm1431 = vcmp.eq.s32.totalorder %v159, %v1172
    %vm1432 = vcmp.eq.s32.totalorder %v160, %v1172
    %vm1433 = vcmp.eq.s32.totalorder %v159, %v1175
    %vm1434 = vcmp.eq.s32.totalorder %v160, %v1175
    %vm1435 = vcmp.eq.s32.totalorder %v159, %v1178
    %vm1436 = vcmp.eq.s32.totalorder %v160, %v1178
    %vm1437 = vcmp.eq.s32.totalorder %v159, %v1181
    %vm1438 = vcmp.eq.s32.totalorder %v160, %v1181
    %vm1439 = vcmp.eq.s32.totalorder %v159, %v1184
    %vm1440 = vcmp.eq.s32.totalorder %v160, %v1184
    %vm1441 = vmor %vm545, %vm1185
    %vm1442 = vmor %vm546, %vm1186
    %vm1443 = vmor %vm547, %vm1187
    %vm1444 = vmor %vm548, %vm1188
    %vm1445 = vmor %vm549, %vm1189
    %vm1446 = vmor %vm550, %vm1190
    %vm1447 = vmor %vm551, %vm1191
    %vm1448 = vmor %vm552, %vm1192
    %vm1449 = vmor %vm553, %vm1193
    %vm1450 = vmor %vm554, %vm1194
    %vm1451 = vmor %vm555, %vm1195
    %vm1452 = vmor %vm556, %vm1196
    %vm1453 = vmor %vm557, %vm1197
    %vm1454 = vmor %vm558, %vm1198
    %vm1455 = vmor %vm559, %vm1199
    %vm1456 = vmor %vm560, %vm1200
    %vm1457 = vmor %vm561, %vm1201
    %vm1458 = vmor %vm562, %vm1202
    %vm1459 = vmor %vm563, %vm1203
    %vm1460 = vmor %vm564, %vm1204
    %vm1461 = vmor %vm565, %vm1205
    %vm1462 = vmor %vm566, %vm1206
    %vm1463 = vmor %vm567, %vm1207
    %vm1464 = vmor %vm568, %vm1208
    %vm1465 = vmor %vm569, %vm1209
    %vm1466 = vmor %vm570, %vm1210
    %vm1467 = vmor %vm571, %vm1211
    %vm1468 = vmor %vm572, %vm1212
    %vm1469 = vmor %vm573, %vm1213
    %vm1470 = vmor %vm574, %vm1214
    %vm1471 = vmor %vm575, %vm1215
    %vm1472 = vmor %vm576, %vm1216
    %vm1473 = vmor %vm577, %vm1217
    %vm1474 = vmor %vm578, %vm1218
    %vm1475 = vmor %vm579, %vm1219
    %vm1476 = vmor %vm580, %vm1220
    %vm1477 = vmor %vm581, %vm1221
    %vm1478 = vmor %vm582, %vm1222
    %vm1479 = vmor %vm583, %vm1223
    %vm1480 = vmor %vm584, %vm1224
    %vm1481 = vmor %vm585, %vm1225
    %vm1482 = vmor %vm586, %vm1226
    %vm1483 = vmor %vm587, %vm1227
    %vm1484 = vmor %vm588, %vm1228
    %vm1485 = vmor %vm589, %vm1229
    %vm1486 = vmor %vm590, %vm1230
    %vm1487 = vmor %vm591, %vm1231
    %vm1488 = vmor %vm592, %vm1232
    %vm1489 = vmor %vm593, %vm1233
    %vm1490 = vmor %vm594, %vm1234
    %vm1491 = vmor %vm595, %vm1235
    %vm1492 = vmor %vm596, %vm1236
    %vm1493 = vmor %vm597, %vm1237
    %vm1494 = vmor %vm598, %vm1238
    %vm1495 = vmor %vm599, %vm1239
    %vm1496 = vmor %vm600, %vm1240
    %vm1497 = vmor %vm601, %vm1241
    %vm1498 = vmor %vm602, %vm1242
    %vm1499 = vmor %vm603, %vm1243
    %vm1500 = vmor %vm604, %vm1244
    %vm1501 = vmor %vm605, %vm1245
    %vm1502 = vmor %vm606, %vm1246
    %vm1503 = vmor %vm607, %vm1247
    %vm1504 = vmor %vm608, %vm1248
    %vm1505 = vmor %vm609, %vm1249
    %vm1506 = vmor %vm610, %vm1250
    %vm1507 = vmor %vm611, %vm1251
    %vm1508 = vmor %vm612, %vm1252
    %vm1509 = vmor %vm613, %vm1253
    %vm1510 = vmor %vm614, %vm1254
    %vm1511 = vmor %vm615, %vm1255
    %vm1512 = vmor %vm616, %vm1256
    %vm1513 = vmor %vm617, %vm1257
    %vm1514 = vmor %vm618, %vm1258
    %vm1515 = vmor %vm619, %vm1259
    %vm1516 = vmor %vm620, %vm1260
    %vm1517 = vmor %vm621, %vm1261
    %vm1518 = vmor %vm622, %vm1262
    %vm1519 = vmor %vm623, %vm1263
    %vm1520 = vmor %vm624, %vm1264
    %vm1521 = vmor %vm625, %vm1265
    %vm1522 = vmor %vm626, %vm1266
    %vm1523 = vmor %vm627, %vm1267
    %vm1524 = vmor %vm628, %vm1268
    %vm1525 = vmor %vm629, %vm1269
    %vm1526 = vmor %vm630, %vm1270
    %vm1527 = vmor %vm631, %vm1271
    %vm1528 = vmor %vm632, %vm1272
    %vm1529 = vmor %vm633, %vm1273
    %vm1530 = vmor %vm634, %vm1274
    %vm1531 = vmor %vm635, %vm1275
    %vm1532 = vmor %vm636, %vm1276
    %vm1533 = vmor %vm637, %vm1277
    %vm1534 = vmor %vm638, %vm1278
    %vm1535 = vmor %vm639, %vm1279
    %vm1536 = vmor %vm640, %vm1280
    %vm1537 = vmor %vm641, %vm1281
    %vm1538 = vmor %vm642, %vm1282
    %vm1539 = vmor %vm643, %vm1283
    %vm1540 = vmor %vm644, %vm1284
    %vm1541 = vmor %vm645, %vm1285
    %vm1542 = vmor %vm646, %vm1286
    %vm1543 = vmor %vm647, %vm1287
    %vm1544 = vmor %vm648, %vm1288
    %vm1545 = vmor %vm649, %vm1289
    %vm1546 = vmor %vm650, %vm1290
    %vm1547 = vmor %vm651, %vm1291
    %vm1548 = vmor %vm652, %vm1292
    %vm1549 = vmor %vm653, %vm1293
    %vm1550 = vmor %vm654, %vm1294
    %vm1551 = vmor %vm655, %vm1295
    %vm1552 = vmor %vm656, %vm1296
    %vm1553 = vmor %vm657, %vm1297
    %vm1554 = vmor %vm658, %vm1298
    %vm1555 = vmor %vm659, %vm1299
    %vm1556 = vmor %vm660, %vm1300
    %vm1557 = vmor %vm661, %vm1301
    %vm1558 = vmor %vm662, %vm1302
    %vm1559 = vmor %vm663, %vm1303
    %vm1560 = vmor %vm664, %vm1304
    %vm1561 = vmor %vm665, %vm1305
    %vm1562 = vmor %vm666, %vm1306
    %vm1563 = vmor %vm667, %vm1307
    %vm1564 = vmor %vm668, %vm1308
    %vm1565 = vmor %vm669, %vm1309
    %vm1566 = vmor %vm670, %vm1310
    %vm1567 = vmor %vm671, %vm1311
    %vm1568 = vmor %vm672, %vm1312
    %vm1569 = vmor %vm673, %vm1313
    %vm1570 = vmor %vm674, %vm1314
    %vm1571 = vmor %vm675, %vm1315
    %vm1572 = vmor %vm676, %vm1316
    %vm1573 = vmor %vm677, %vm1317
    %vm1574 = vmor %vm678, %vm1318
    %vm1575 = vmor %vm679, %vm1319
    %vm1576 = vmor %vm680, %vm1320
    %vm1577 = vmor %vm681, %vm1321
    %vm1578 = vmor %vm682, %vm1322
    %vm1579 = vmor %vm683, %vm1323
    %vm1580 = vmor %vm684, %vm1324
    %vm1581 = vmor %vm685, %vm1325
    %vm1582 = vmor %vm686, %vm1326
    %vm1583 = vmor %vm687, %vm1327
    %vm1584 = vmor %vm688, %vm1328
    %vm1585 = vmor %vm689, %vm1329
    %vm1586 = vmor %vm690, %vm1330
    %vm1587 = vmor %vm691, %vm1331
    %vm1588 = vmor %vm692, %vm1332
    %vm1589 = vmor %vm693, %vm1333
    %vm1590 = vmor %vm694, %vm1334
    %vm1591 = vmor %vm695, %vm1335
    %vm1592 = vmor %vm696, %vm1336
    %vm1593 = vmor %vm697, %vm1337
    %vm1594 = vmor %vm698, %vm1338
    %vm1595 = vmor %vm699, %vm1339
    %vm1596 = vmor %vm700, %vm1340
    %vm1597 = vmor %vm701, %vm1341
    %vm1598 = vmor %vm702, %vm1342
    %vm1599 = vmor %vm703, %vm1343
    %vm1600 = vmor %vm704, %vm1344
    %vm1601 = vmor %vm705, %vm1345
    %vm1602 = vmor %vm706, %vm1346
    %vm1603 = vmor %vm707, %vm1347
    %vm1604 = vmor %vm708, %vm1348
    %vm1605 = vmor %vm709, %vm1349
    %vm1606 = vmor %vm710, %vm1350
    %vm1607 = vmor %vm711, %vm1351
    %vm1608 = vmor %vm712, %vm1352
    %vm1609 = vmor %vm713, %vm1353
    %vm1610 = vmor %vm714, %vm1354
    %vm1611 = vmor %vm715, %vm1355
    %vm1612 = vmor %vm716, %vm1356
    %vm1613 = vmor %vm717, %vm1357
    %vm1614 = vmor %vm718, %vm1358
    %vm1615 = vmor %vm719, %vm1359
    %vm1616 = vmor %vm720, %vm1360
    %vm1617 = vmor %vm721, %vm1361
    %vm1618 = vmor %vm722, %vm1362
    %vm1619 = vmor %vm723, %vm1363
    %vm1620 = vmor %vm724, %vm1364
    %vm1621 = vmor %vm725, %vm1365
    %vm1622 = vmor %vm726, %vm1366
    %vm1623 = vmor %vm727, %vm1367
    %vm1624 = vmor %vm728, %vm1368
    %vm1625 = vmor %vm729, %vm1369
    %vm1626 = vmor %vm730, %vm1370
    %vm1627 = vmor %vm731, %vm1371
    %vm1628 = vmor %vm732, %vm1372
    %vm1629 = vmor %vm733, %vm1373
    %vm1630 = vmor %vm734, %vm1374
    %vm1631 = vmor %vm735, %vm1375
    %vm1632 = vmor %vm736, %vm1376
    %vm1633 = vmor %vm737, %vm1377
    %vm1634 = vmor %vm738, %vm1378
    %vm1635 = vmor %vm739, %vm1379
    %vm1636 = vmor %vm740, %vm1380
    %vm1637 = vmor %vm741, %vm1381
    %vm1638 = vmor %vm742, %vm1382
    %vm1639 = vmor %vm743, %vm1383
    %vm1640 = vmor %vm744, %vm1384
    %vm1641 = vmor %vm745, %vm1385
    %vm1642 = vmor %vm746, %vm1386
    %vm1643 = vmor %vm747, %vm1387
    %vm1644 = vmor %vm748, %vm1388
    %vm1645 = vmor %vm749, %vm1389
    %vm1646 = vmor %vm750, %vm1390
    %vm1647 = vmor %vm751, %vm1391
    %vm1648 = vmor %vm752, %vm1392
    %vm1649 = vmor %vm753, %vm1393
    %vm1650 = vmor %vm754, %vm1394
    %vm1651 = vmor %vm755, %vm1395
    %vm1652 = vmor %vm756, %vm1396
    %vm1653 = vmor %vm757, %vm1397
    %vm1654 = vmor %vm758, %vm1398
    %vm1655 = vmor %vm759, %vm1399
    %vm1656 = vmor %vm760, %vm1400
    %vm1657 = vmor %vm761, %vm1401
    %vm1658 = vmor %vm762, %vm1402
    %vm1659 = vmor %vm763, %vm1403
    %vm1660 = vmor %vm764, %vm1404
    %vm1661 = vmor %vm765, %vm1405
    %vm1662 = vmor %vm766, %vm1406
    %vm1663 = vmor %vm767, %vm1407
    %vm1664 = vmor %vm768, %vm1408
    %vm1665 = vmor %vm769, %vm1409
    %vm1666 = vmor %vm770, %vm1410
    %vm1667 = vmor %vm771, %vm1411
    %vm1668 = vmor %vm772, %vm1412
    %vm1669 = vmor %vm773, %vm1413
    %vm1670 = vmor %vm774, %vm1414
    %vm1671 = vmor %vm775, %vm1415
    %vm1672 = vmor %vm776, %vm1416
    %vm1673 = vmor %vm777, %vm1417
    %vm1674 = vmor %vm778, %vm1418
    %vm1675 = vmor %vm779, %vm1419
    %vm1676 = vmor %vm780, %vm1420
    %vm1677 = vmor %vm781, %vm1421
    %vm1678 = vmor %vm782, %vm1422
    %vm1679 = vmor %vm783, %vm1423
    %vm1680 = vmor %vm784, %vm1424
    %vm1681 = vmor %vm785, %vm1425
    %vm1682 = vmor %vm786, %vm1426
    %vm1683 = vmor %vm787, %vm1427
    %vm1684 = vmor %vm788, %vm1428
    %vm1685 = vmor %vm789, %vm1429
    %vm1686 = vmor %vm790, %vm1430
    %vm1687 = vmor %vm791, %vm1431
    %vm1688 = vmor %vm792, %vm1432
    %vm1689 = vmor %vm793, %vm1433
    %vm1690 = vmor %vm794, %vm1434
    %vm1691 = vmor %vm795, %vm1435
    %vm1692 = vmor %vm796, %vm1436
    %vm1693 = vmor %vm797, %vm1437
    %vm1694 = vmor %vm798, %vm1438
    %vm1695 = vmor %vm799, %vm1439
    %vm1696 = vmor %vm800, %vm1440
    %1697 = vset.pattern.permute.xlu0 2
    %1698 = vperm.xlu0 %1697, %v30
    %v1699 = vpop.permute.xlu0 %1698
    %1700 = vset.pattern.permute.xlu0 2
    %1701 = vperm.xlu0 %1700, %v31
    %v1702 = vpop.permute.xlu0 %1701
    %1703 = vset.pattern.permute.xlu0 2
    %1704 = vperm.xlu0 %1703, %v32
    %v1705 = vpop.permute.xlu0 %1704
    %1706 = vset.pattern.permute.xlu0 2
    %1707 = vperm.xlu0 %1706, %v33
    %v1708 = vpop.permute.xlu0 %1707
    %1709 = vset.pattern.permute.xlu0 2
    %1710 = vperm.xlu0 %1709, %v34
    %v1711 = vpop.permute.xlu0 %1710
    %1712 = vset.pattern.permute.xlu0 2
    %1713 = vperm.xlu0 %1712, %v35
    %v1714 = vpop.permute.xlu0 %1713
    %1715 = vset.pattern.permute.xlu0 2
    %1716 = vperm.xlu0 %1715, %v36
    %v1717 = vpop.permute.xlu0 %1716
    %1718 = vset.pattern.permute.xlu0 2
    %1719 = vperm.xlu0 %1718, %v37
    %v1720 = vpop.permute.xlu0 %1719
    %1721 = vset.pattern.permute.xlu0 2
    %1722 = vperm.xlu0 %1721, %v38
    %v1723 = vpop.permute.xlu0 %1722
    %1724 = vset.pattern.permute.xlu0 2
    %1725 = vperm.xlu0 %1724, %v39
    %v1726 = vpop.permute.xlu0 %1725
    %1727 = vset.pattern.permute.xlu0 2
    %1728 = vperm.xlu0 %1727, %v40
    %v1729 = vpop.permute.xlu0 %1728
    %1730 = vset.pattern.permute.xlu0 2
    %1731 = vperm.xlu0 %1730, %v41
    %v1732 = vpop.permute.xlu0 %1731
    %1733 = vset.pattern.permute.xlu0 2
    %1734 = vperm.xlu0 %1733, %v42
    %v1735 = vpop.permute.xlu0 %1734
    %1736 = vset.pattern.permute.xlu0 2
    %1737 = vperm.xlu0 %1736, %v43
    %v1738 = vpop.permute.xlu0 %1737
    %1739 = vset.pattern.permute.xlu0 2
    %1740 = vperm.xlu0 %1739, %v44
    %v1741 = vpop.permute.xlu0 %1740
    %1742 = vset.pattern.permute.xlu0 2
    %1743 = vperm.xlu0 %1742, %v45
    %v1744 = vpop.permute.xlu0 %1743
    %1745 = vset.pattern.permute.xlu0 2
    %1746 = vperm.xlu0 %1745, %v46
    %v1747 = vpop.permute.xlu0 %1746
    %1748 = vset.pattern.permute.xlu0 2
    %1749 = vperm.xlu0 %1748, %v47
    %v1750 = vpop.permute.xlu0 %1749
    %1751 = vset.pattern.permute.xlu0 2
    %1752 = vperm.xlu0 %1751, %v48
    %v1753 = vpop.permute.xlu0 %1752
    %1754 = vset.pattern.permute.xlu0 2
    %1755 = vperm.xlu0 %1754, %v49
    %v1756 = vpop.permute.xlu0 %1755
    %1757 = vset.pattern.permute.xlu0 2
    %1758 = vperm.xlu0 %1757, %v50
    %v1759 = vpop.permute.xlu0 %1758
    %1760 = vset.pattern.permute.xlu0 2
    %1761 = vperm.xlu0 %1760, %v51
    %v1762 = vpop.permute.xlu0 %1761
    %1763 = vset.pattern.permute.xlu0 2
    %1764 = vperm.xlu0 %1763, %v52
    %v1765 = vpop.permute.xlu0 %1764
    %1766 = vset.pattern.permute.xlu0 2
    %1767 = vperm.xlu0 %1766, %v53
    %v1768 = vpop.permute.xlu0 %1767
    %1769 = vset.pattern.permute.xlu0 2
    %1770 = vperm.xlu0 %1769, %v54
    %v1771 = vpop.permute.xlu0 %1770
    %1772 = vset.pattern.permute.xlu0 2
    %1773 = vperm.xlu0 %1772, %v55
    %v1774 = vpop.permute.xlu0 %1773
    %1775 = vset.pattern.permute.xlu0 2
    %1776 = vperm.xlu0 %1775, %v56
    %v1777 = vpop.permute.xlu0 %1776
    %1778 = vset.pattern.permute.xlu0 2
    %1779 = vperm.xlu0 %1778, %v57
    %v1780 = vpop.permute.xlu0 %1779
    %1781 = vset.pattern.permute.xlu0 2
    %1782 = vperm.xlu0 %1781, %v58
    %v1783 = vpop.permute.xlu0 %1782
    %1784 = vset.pattern.permute.xlu0 2
    %1785 = vperm.xlu0 %1784, %v59
    %v1786 = vpop.permute.xlu0 %1785
    %1787 = vset.pattern.permute.xlu0 2
    %1788 = vperm.xlu0 %1787, %v60
    %v1789 = vpop.permute.xlu0 %1788
    %1790 = vset.pattern.permute.xlu0 2
    %1791 = vperm.xlu0 %1790, %v61
    %v1792 = vpop.permute.xlu0 %1791
    %1793 = vset.pattern.permute.xlu0 2
    %1794 = vperm.xlu0 %1793, %v62
    %v1795 = vpop.permute.xlu0 %1794
    %1796 = vset.pattern.permute.xlu0 2
    %1797 = vperm.xlu0 %1796, %v63
    %v1798 = vpop.permute.xlu0 %1797
    %1799 = vset.pattern.permute.xlu0 2
    %1800 = vperm.xlu0 %1799, %v64
    %v1801 = vpop.permute.xlu0 %1800
    %1802 = vset.pattern.permute.xlu0 2
    %1803 = vperm.xlu0 %1802, %v65
    %v1804 = vpop.permute.xlu0 %1803
    %1805 = vset.pattern.permute.xlu0 2
    %1806 = vperm.xlu0 %1805, %v66
    %v1807 = vpop.permute.xlu0 %1806
    %1808 = vset.pattern.permute.xlu0 2
    %1809 = vperm.xlu0 %1808, %v67
    %v1810 = vpop.permute.xlu0 %1809
    %1811 = vset.pattern.permute.xlu0 2
    %1812 = vperm.xlu0 %1811, %v68
    %v1813 = vpop.permute.xlu0 %1812
    %1814 = vset.pattern.permute.xlu0 2
    %1815 = vperm.xlu0 %1814, %v69
    %v1816 = vpop.permute.xlu0 %1815
    %1817 = vset.pattern.permute.xlu0 2
    %1818 = vperm.xlu0 %1817, %v70
    %v1819 = vpop.permute.xlu0 %1818
    %1820 = vset.pattern.permute.xlu0 2
    %1821 = vperm.xlu0 %1820, %v71
    %v1822 = vpop.permute.xlu0 %1821
    %1823 = vset.pattern.permute.xlu0 2
    %1824 = vperm.xlu0 %1823, %v72
    %v1825 = vpop.permute.xlu0 %1824
    %1826 = vset.pattern.permute.xlu0 2
    %1827 = vperm.xlu0 %1826, %v73
    %v1828 = vpop.permute.xlu0 %1827
    %1829 = vset.pattern.permute.xlu0 2
    %1830 = vperm.xlu0 %1829, %v74
    %v1831 = vpop.permute.xlu0 %1830
    %1832 = vset.pattern.permute.xlu0 2
    %1833 = vperm.xlu0 %1832, %v75
    %v1834 = vpop.permute.xlu0 %1833
    %1835 = vset.pattern.permute.xlu0 2
    %1836 = vperm.xlu0 %1835, %v76
    %v1837 = vpop.permute.xlu0 %1836
    %1838 = vset.pattern.permute.xlu0 2
    %1839 = vperm.xlu0 %1838, %v77
    %v1840 = vpop.permute.xlu0 %1839
    %1841 = vset.pattern.permute.xlu0 2
    %1842 = vperm.xlu0 %1841, %v78
    %v1843 = vpop.permute.xlu0 %1842
    %1844 = vset.pattern.permute.xlu0 2
    %1845 = vperm.xlu0 %1844, %v79
    %v1846 = vpop.permute.xlu0 %1845
    %1847 = vset.pattern.permute.xlu0 2
    %1848 = vperm.xlu0 %1847, %v80
    %v1849 = vpop.permute.xlu0 %1848
    %1850 = vset.pattern.permute.xlu0 2
    %1851 = vperm.xlu0 %1850, %v81
    %v1852 = vpop.permute.xlu0 %1851
    %1853 = vset.pattern.permute.xlu0 2
    %1854 = vperm.xlu0 %1853, %v82
    %v1855 = vpop.permute.xlu0 %1854
    %1856 = vset.pattern.permute.xlu0 2
    %1857 = vperm.xlu0 %1856, %v83
    %v1858 = vpop.permute.xlu0 %1857
    %1859 = vset.pattern.permute.xlu0 2
    %1860 = vperm.xlu0 %1859, %v84
    %v1861 = vpop.permute.xlu0 %1860
    %1862 = vset.pattern.permute.xlu0 2
    %1863 = vperm.xlu0 %1862, %v85
    %v1864 = vpop.permute.xlu0 %1863
    %1865 = vset.pattern.permute.xlu0 2
    %1866 = vperm.xlu0 %1865, %v86
    %v1867 = vpop.permute.xlu0 %1866
    %1868 = vset.pattern.permute.xlu0 2
    %1869 = vperm.xlu0 %1868, %v87
    %v1870 = vpop.permute.xlu0 %1869
    %1871 = vset.pattern.permute.xlu0 2
    %1872 = vperm.xlu0 %1871, %v88
    %v1873 = vpop.permute.xlu0 %1872
    %1874 = vset.pattern.permute.xlu0 2
    %1875 = vperm.xlu0 %1874, %v89
    %v1876 = vpop.permute.xlu0 %1875
    %1877 = vset.pattern.permute.xlu0 2
    %1878 = vperm.xlu0 %1877, %v90
    %v1879 = vpop.permute.xlu0 %1878
    %1880 = vset.pattern.permute.xlu0 2
    %1881 = vperm.xlu0 %1880, %v91
    %v1882 = vpop.permute.xlu0 %1881
    %1883 = vset.pattern.permute.xlu0 2
    %1884 = vperm.xlu0 %1883, %v92
    %v1885 = vpop.permute.xlu0 %1884
    %1886 = vset.pattern.permute.xlu0 2
    %1887 = vperm.xlu0 %1886, %v93
    %v1888 = vpop.permute.xlu0 %1887
    %1889 = vset.pattern.permute.xlu0 2
    %1890 = vperm.xlu0 %1889, %v94
    %v1891 = vpop.permute.xlu0 %1890
    %1892 = vset.pattern.permute.xlu0 2
    %1893 = vperm.xlu0 %1892, %v95
    %v1894 = vpop.permute.xlu0 %1893
    %1895 = vset.pattern.permute.xlu0 2
    %1896 = vperm.xlu0 %1895, %v96
    %v1897 = vpop.permute.xlu0 %1896
    %1898 = vset.pattern.permute.xlu0 2
    %1899 = vperm.xlu0 %1898, %v97
    %v1900 = vpop.permute.xlu0 %1899
    %1901 = vset.pattern.permute.xlu0 2
    %1902 = vperm.xlu0 %1901, %v98
    %v1903 = vpop.permute.xlu0 %1902
    %1904 = vset.pattern.permute.xlu0 2
    %1905 = vperm.xlu0 %1904, %v99
    %v1906 = vpop.permute.xlu0 %1905
    %1907 = vset.pattern.permute.xlu0 2
    %1908 = vperm.xlu0 %1907, %v100
    %v1909 = vpop.permute.xlu0 %1908
    %1910 = vset.pattern.permute.xlu0 2
    %1911 = vperm.xlu0 %1910, %v101
    %v1912 = vpop.permute.xlu0 %1911
    %1913 = vset.pattern.permute.xlu0 2
    %1914 = vperm.xlu0 %1913, %v102
    %v1915 = vpop.permute.xlu0 %1914
    %1916 = vset.pattern.permute.xlu0 2
    %1917 = vperm.xlu0 %1916, %v103
    %v1918 = vpop.permute.xlu0 %1917
    %1919 = vset.pattern.permute.xlu0 2
    %1920 = vperm.xlu0 %1919, %v104
    %v1921 = vpop.permute.xlu0 %1920
    %1922 = vset.pattern.permute.xlu0 2
    %1923 = vperm.xlu0 %1922, %v105
    %v1924 = vpop.permute.xlu0 %1923
    %1925 = vset.pattern.permute.xlu0 2
    %1926 = vperm.xlu0 %1925, %v106
    %v1927 = vpop.permute.xlu0 %1926
    %1928 = vset.pattern.permute.xlu0 2
    %1929 = vperm.xlu0 %1928, %v107
    %v1930 = vpop.permute.xlu0 %1929
    %1931 = vset.pattern.permute.xlu0 2
    %1932 = vperm.xlu0 %1931, %v108
    %v1933 = vpop.permute.xlu0 %1932
    %1934 = vset.pattern.permute.xlu0 2
    %1935 = vperm.xlu0 %1934, %v109
    %v1936 = vpop.permute.xlu0 %1935
    %1937 = vset.pattern.permute.xlu0 2
    %1938 = vperm.xlu0 %1937, %v110
    %v1939 = vpop.permute.xlu0 %1938
    %1940 = vset.pattern.permute.xlu0 2
    %1941 = vperm.xlu0 %1940, %v111
    %v1942 = vpop.permute.xlu0 %1941
    %1943 = vset.pattern.permute.xlu0 2
    %1944 = vperm.xlu0 %1943, %v112
    %v1945 = vpop.permute.xlu0 %1944
    %1946 = vset.pattern.permute.xlu0 2
    %1947 = vperm.xlu0 %1946, %v113
    %v1948 = vpop.permute.xlu0 %1947
    %1949 = vset.pattern.permute.xlu0 2
    %1950 = vperm.xlu0 %1949, %v114
    %v1951 = vpop.permute.xlu0 %1950
    %1952 = vset.pattern.permute.xlu0 2
    %1953 = vperm.xlu0 %1952, %v115
    %v1954 = vpop.permute.xlu0 %1953
    %1955 = vset.pattern.permute.xlu0 2
    %1956 = vperm.xlu0 %1955, %v116
    %v1957 = vpop.permute.xlu0 %1956
    %1958 = vset.pattern.permute.xlu0 2
    %1959 = vperm.xlu0 %1958, %v117
    %v1960 = vpop.permute.xlu0 %1959
    %1961 = vset.pattern.permute.xlu0 2
    %1962 = vperm.xlu0 %1961, %v118
    %v1963 = vpop.permute.xlu0 %1962
    %1964 = vset.pattern.permute.xlu0 2
    %1965 = vperm.xlu0 %1964, %v119
    %v1966 = vpop.permute.xlu0 %1965
    %1967 = vset.pattern.permute.xlu0 2
    %1968 = vperm.xlu0 %1967, %v120
    %v1969 = vpop.permute.xlu0 %1968
    %1970 = vset.pattern.permute.xlu0 2
    %1971 = vperm.xlu0 %1970, %v121
    %v1972 = vpop.permute.xlu0 %1971
    %1973 = vset.pattern.permute.xlu0 2
    %1974 = vperm.xlu0 %1973, %v122
    %v1975 = vpop.permute.xlu0 %1974
    %1976 = vset.pattern.permute.xlu0 2
    %1977 = vperm.xlu0 %1976, %v123
    %v1978 = vpop.permute.xlu0 %1977
    %1979 = vset.pattern.permute.xlu0 2
    %1980 = vperm.xlu0 %1979, %v124
    %v1981 = vpop.permute.xlu0 %1980
    %1982 = vset.pattern.permute.xlu0 2
    %1983 = vperm.xlu0 %1982, %v125
    %v1984 = vpop.permute.xlu0 %1983
    %1985 = vset.pattern.permute.xlu0 2
    %1986 = vperm.xlu0 %1985, %v126
    %v1987 = vpop.permute.xlu0 %1986
    %1988 = vset.pattern.permute.xlu0 2
    %1989 = vperm.xlu0 %1988, %v127
    %v1990 = vpop.permute.xlu0 %1989
    %1991 = vset.pattern.permute.xlu0 2
    %1992 = vperm.xlu0 %1991, %v128
    %v1993 = vpop.permute.xlu0 %1992
    %1994 = vset.pattern.permute.xlu0 2
    %1995 = vperm.xlu0 %1994, %v129
    %v1996 = vpop.permute.xlu0 %1995
    %1997 = vset.pattern.permute.xlu0 2
    %1998 = vperm.xlu0 %1997, %v130
    %v1999 = vpop.permute.xlu0 %1998
    %2000 = vset.pattern.permute.xlu0 2
    %2001 = vperm.xlu0 %2000, %v131
    %v2002 = vpop.permute.xlu0 %2001
    %2003 = vset.pattern.permute.xlu0 2
    %2004 = vperm.xlu0 %2003, %v132
    %v2005 = vpop.permute.xlu0 %2004
    %2006 = vset.pattern.permute.xlu0 2
    %2007 = vperm.xlu0 %2006, %v133
    %v2008 = vpop.permute.xlu0 %2007
    %2009 = vset.pattern.permute.xlu0 2
    %2010 = vperm.xlu0 %2009, %v134
    %v2011 = vpop.permute.xlu0 %2010
    %2012 = vset.pattern.permute.xlu0 2
    %2013 = vperm.xlu0 %2012, %v135
    %v2014 = vpop.permute.xlu0 %2013
    %2015 = vset.pattern.permute.xlu0 2
    %2016 = vperm.xlu0 %2015, %v136
    %v2017 = vpop.permute.xlu0 %2016
    %2018 = vset.pattern.permute.xlu0 2
    %2019 = vperm.xlu0 %2018, %v137
    %v2020 = vpop.permute.xlu0 %2019
    %2021 = vset.pattern.permute.xlu0 2
    %2022 = vperm.xlu0 %2021, %v138
    %v2023 = vpop.permute.xlu0 %2022
    %2024 = vset.pattern.permute.xlu0 2
    %2025 = vperm.xlu0 %2024, %v139
    %v2026 = vpop.permute.xlu0 %2025
    %2027 = vset.pattern.permute.xlu0 2
    %2028 = vperm.xlu0 %2027, %v140
    %v2029 = vpop.permute.xlu0 %2028
    %2030 = vset.pattern.permute.xlu0 2
    %2031 = vperm.xlu0 %2030, %v141
    %v2032 = vpop.permute.xlu0 %2031
    %2033 = vset.pattern.permute.xlu0 2
    %2034 = vperm.xlu0 %2033, %v142
    %v2035 = vpop.permute.xlu0 %2034
    %2036 = vset.pattern.permute.xlu0 2
    %2037 = vperm.xlu0 %2036, %v143
    %v2038 = vpop.permute.xlu0 %2037
    %2039 = vset.pattern.permute.xlu0 2
    %2040 = vperm.xlu0 %2039, %v144
    %v2041 = vpop.permute.xlu0 %2040
    %2042 = vset.pattern.permute.xlu0 2
    %2043 = vperm.xlu0 %2042, %v145
    %v2044 = vpop.permute.xlu0 %2043
    %2045 = vset.pattern.permute.xlu0 2
    %2046 = vperm.xlu0 %2045, %v146
    %v2047 = vpop.permute.xlu0 %2046
    %2048 = vset.pattern.permute.xlu0 2
    %2049 = vperm.xlu0 %2048, %v147
    %v2050 = vpop.permute.xlu0 %2049
    %2051 = vset.pattern.permute.xlu0 2
    %2052 = vperm.xlu0 %2051, %v148
    %v2053 = vpop.permute.xlu0 %2052
    %2054 = vset.pattern.permute.xlu0 2
    %2055 = vperm.xlu0 %2054, %v149
    %v2056 = vpop.permute.xlu0 %2055
    %2057 = vset.pattern.permute.xlu0 2
    %2058 = vperm.xlu0 %2057, %v150
    %v2059 = vpop.permute.xlu0 %2058
    %2060 = vset.pattern.permute.xlu0 2
    %2061 = vperm.xlu0 %2060, %v151
    %v2062 = vpop.permute.xlu0 %2061
    %2063 = vset.pattern.permute.xlu0 2
    %2064 = vperm.xlu0 %2063, %v152
    %v2065 = vpop.permute.xlu0 %2064
    %2066 = vset.pattern.permute.xlu0 2
    %2067 = vperm.xlu0 %2066, %v153
    %v2068 = vpop.permute.xlu0 %2067
    %2069 = vset.pattern.permute.xlu0 2
    %2070 = vperm.xlu0 %2069, %v154
    %v2071 = vpop.permute.xlu0 %2070
    %2072 = vset.pattern.permute.xlu0 2
    %2073 = vperm.xlu0 %2072, %v155
    %v2074 = vpop.permute.xlu0 %2073
    %2075 = vset.pattern.permute.xlu0 2
    %2076 = vperm.xlu0 %2075, %v156
    %v2077 = vpop.permute.xlu0 %2076
    %2078 = vset.pattern.permute.xlu0 2
    %2079 = vperm.xlu0 %2078, %v157
    %v2080 = vpop.permute.xlu0 %2079
    %vm2081 = vcmp.eq.s32.totalorder %v159, %v1699
    %vm2082 = vcmp.eq.s32.totalorder %v160, %v1699
    %vm2083 = vcmp.eq.s32.totalorder %v159, %v1702
    %vm2084 = vcmp.eq.s32.totalorder %v160, %v1702
    %vm2085 = vcmp.eq.s32.totalorder %v159, %v1705
    %vm2086 = vcmp.eq.s32.totalorder %v160, %v1705
    %vm2087 = vcmp.eq.s32.totalorder %v159, %v1708
    %vm2088 = vcmp.eq.s32.totalorder %v160, %v1708
    %vm2089 = vcmp.eq.s32.totalorder %v159, %v1711
    %vm2090 = vcmp.eq.s32.totalorder %v160, %v1711
    %vm2091 = vcmp.eq.s32.totalorder %v159, %v1714
    %vm2092 = vcmp.eq.s32.totalorder %v160, %v1714
    %vm2093 = vcmp.eq.s32.totalorder %v159, %v1717
    %vm2094 = vcmp.eq.s32.totalorder %v160, %v1717
    %vm2095 = vcmp.eq.s32.totalorder %v159, %v1720
    %vm2096 = vcmp.eq.s32.totalorder %v160, %v1720
    %vm2097 = vcmp.eq.s32.totalorder %v159, %v1723
    %vm2098 = vcmp.eq.s32.totalorder %v160, %v1723
    %vm2099 = vcmp.eq.s32.totalorder %v159, %v1726
    %vm2100 = vcmp.eq.s32.totalorder %v160, %v1726
    %vm2101 = vcmp.eq.s32.totalorder %v159, %v1729
    %vm2102 = vcmp.eq.s32.totalorder %v160, %v1729
    %vm2103 = vcmp.eq.s32.totalorder %v159, %v1732
    %vm2104 = vcmp.eq.s32.totalorder %v160, %v1732
    %vm2105 = vcmp.eq.s32.totalorder %v159, %v1735
    %vm2106 = vcmp.eq.s32.totalorder %v160, %v1735
    %vm2107 = vcmp.eq.s32.totalorder %v159, %v1738
    %vm2108 = vcmp.eq.s32.totalorder %v160, %v1738
    %vm2109 = vcmp.eq.s32.totalorder %v159, %v1741
    %vm2110 = vcmp.eq.s32.totalorder %v160, %v1741
    %vm2111 = vcmp.eq.s32.totalorder %v159, %v1744
    %vm2112 = vcmp.eq.s32.totalorder %v160, %v1744
    %vm2113 = vcmp.eq.s32.totalorder %v159, %v1747
    %vm2114 = vcmp.eq.s32.totalorder %v160, %v1747
    %vm2115 = vcmp.eq.s32.totalorder %v159, %v1750
    %vm2116 = vcmp.eq.s32.totalorder %v160, %v1750
    %vm2117 = vcmp.eq.s32.totalorder %v159, %v1753
    %vm2118 = vcmp.eq.s32.totalorder %v160, %v1753
    %vm2119 = vcmp.eq.s32.totalorder %v159, %v1756
    %vm2120 = vcmp.eq.s32.totalorder %v160, %v1756
    %vm2121 = vcmp.eq.s32.totalorder %v159, %v1759
    %vm2122 = vcmp.eq.s32.totalorder %v160, %v1759
    %vm2123 = vcmp.eq.s32.totalorder %v159, %v1762
    %vm2124 = vcmp.eq.s32.totalorder %v160, %v1762
    %vm2125 = vcmp.eq.s32.totalorder %v159, %v1765
    %vm2126 = vcmp.eq.s32.totalorder %v160, %v1765
    %vm2127 = vcmp.eq.s32.totalorder %v159, %v1768
    %vm2128 = vcmp.eq.s32.totalorder %v160, %v1768
    %vm2129 = vcmp.eq.s32.totalorder %v159, %v1771
    %vm2130 = vcmp.eq.s32.totalorder %v160, %v1771
    %vm2131 = vcmp.eq.s32.totalorder %v159, %v1774
    %vm2132 = vcmp.eq.s32.totalorder %v160, %v1774
    %vm2133 = vcmp.eq.s32.totalorder %v159, %v1777
    %vm2134 = vcmp.eq.s32.totalorder %v160, %v1777
    %vm2135 = vcmp.eq.s32.totalorder %v159, %v1780
    %vm2136 = vcmp.eq.s32.totalorder %v160, %v1780
    %vm2137 = vcmp.eq.s32.totalorder %v159, %v1783
    %vm2138 = vcmp.eq.s32.totalorder %v160, %v1783
    %vm2139 = vcmp.eq.s32.totalorder %v159, %v1786
    %vm2140 = vcmp.eq.s32.totalorder %v160, %v1786
    %vm2141 = vcmp.eq.s32.totalorder %v159, %v1789
    %vm2142 = vcmp.eq.s32.totalorder %v160, %v1789
    %vm2143 = vcmp.eq.s32.totalorder %v159, %v1792
    %vm2144 = vcmp.eq.s32.totalorder %v160, %v1792
    %vm2145 = vcmp.eq.s32.totalorder %v159, %v1795
    %vm2146 = vcmp.eq.s32.totalorder %v160, %v1795
    %vm2147 = vcmp.eq.s32.totalorder %v159, %v1798
    %vm2148 = vcmp.eq.s32.totalorder %v160, %v1798
    %vm2149 = vcmp.eq.s32.totalorder %v159, %v1801
    %vm2150 = vcmp.eq.s32.totalorder %v160, %v1801
    %vm2151 = vcmp.eq.s32.totalorder %v159, %v1804
    %vm2152 = vcmp.eq.s32.totalorder %v160, %v1804
    %vm2153 = vcmp.eq.s32.totalorder %v159, %v1807
    %vm2154 = vcmp.eq.s32.totalorder %v160, %v1807
    %vm2155 = vcmp.eq.s32.totalorder %v159, %v1810
    %vm2156 = vcmp.eq.s32.totalorder %v160, %v1810
    %vm2157 = vcmp.eq.s32.totalorder %v159, %v1813
    %vm2158 = vcmp.eq.s32.totalorder %v160, %v1813
    %vm2159 = vcmp.eq.s32.totalorder %v159, %v1816
    %vm2160 = vcmp.eq.s32.totalorder %v160, %v1816
    %vm2161 = vcmp.eq.s32.totalorder %v159, %v1819
    %vm2162 = vcmp.eq.s32.totalorder %v160, %v1819
    %vm2163 = vcmp.eq.s32.totalorder %v159, %v1822
    %vm2164 = vcmp.eq.s32.totalorder %v160, %v1822
    %vm2165 = vcmp.eq.s32.totalorder %v159, %v1825
    %vm2166 = vcmp.eq.s32.totalorder %v160, %v1825
    %vm2167 = vcmp.eq.s32.totalorder %v159, %v1828
    %vm2168 = vcmp.eq.s32.totalorder %v160, %v1828
    %vm2169 = vcmp.eq.s32.totalorder %v159, %v1831
    %vm2170 = vcmp.eq.s32.totalorder %v160, %v1831
    %vm2171 = vcmp.eq.s32.totalorder %v159, %v1834
    %vm2172 = vcmp.eq.s32.totalorder %v160, %v1834
    %vm2173 = vcmp.eq.s32.totalorder %v159, %v1837
    %vm2174 = vcmp.eq.s32.totalorder %v160, %v1837
    %vm2175 = vcmp.eq.s32.totalorder %v159, %v1840
    %vm2176 = vcmp.eq.s32.totalorder %v160, %v1840
    %vm2177 = vcmp.eq.s32.totalorder %v159, %v1843
    %vm2178 = vcmp.eq.s32.totalorder %v160, %v1843
    %vm2179 = vcmp.eq.s32.totalorder %v159, %v1846
    %vm2180 = vcmp.eq.s32.totalorder %v160, %v1846
    %vm2181 = vcmp.eq.s32.totalorder %v159, %v1849
    %vm2182 = vcmp.eq.s32.totalorder %v160, %v1849
    %vm2183 = vcmp.eq.s32.totalorder %v159, %v1852
    %vm2184 = vcmp.eq.s32.totalorder %v160, %v1852
    %vm2185 = vcmp.eq.s32.totalorder %v159, %v1855
    %vm2186 = vcmp.eq.s32.totalorder %v160, %v1855
    %vm2187 = vcmp.eq.s32.totalorder %v159, %v1858
    %vm2188 = vcmp.eq.s32.totalorder %v160, %v1858
    %vm2189 = vcmp.eq.s32.totalorder %v159, %v1861
    %vm2190 = vcmp.eq.s32.totalorder %v160, %v1861
    %vm2191 = vcmp.eq.s32.totalorder %v159, %v1864
    %vm2192 = vcmp.eq.s32.totalorder %v160, %v1864
    %vm2193 = vcmp.eq.s32.totalorder %v159, %v1867
    %vm2194 = vcmp.eq.s32.totalorder %v160, %v1867
    %vm2195 = vcmp.eq.s32.totalorder %v159, %v1870
    %vm2196 = vcmp.eq.s32.totalorder %v160, %v1870
    %vm2197 = vcmp.eq.s32.totalorder %v159, %v1873
    %vm2198 = vcmp.eq.s32.totalorder %v160, %v1873
    %vm2199 = vcmp.eq.s32.totalorder %v159, %v1876
    %vm2200 = vcmp.eq.s32.totalorder %v160, %v1876
    %vm2201 = vcmp.eq.s32.totalorder %v159, %v1879
    %vm2202 = vcmp.eq.s32.totalorder %v160, %v1879
    %vm2203 = vcmp.eq.s32.totalorder %v159, %v1882
    %vm2204 = vcmp.eq.s32.totalorder %v160, %v1882
    %vm2205 = vcmp.eq.s32.totalorder %v159, %v1885
    %vm2206 = vcmp.eq.s32.totalorder %v160, %v1885
    %vm2207 = vcmp.eq.s32.totalorder %v159, %v1888
    %vm2208 = vcmp.eq.s32.totalorder %v160, %v1888
    %vm2209 = vcmp.eq.s32.totalorder %v159, %v1891
    %vm2210 = vcmp.eq.s32.totalorder %v160, %v1891
    %vm2211 = vcmp.eq.s32.totalorder %v159, %v1894
    %vm2212 = vcmp.eq.s32.totalorder %v160, %v1894
    %vm2213 = vcmp.eq.s32.totalorder %v159, %v1897
    %vm2214 = vcmp.eq.s32.totalorder %v160, %v1897
    %vm2215 = vcmp.eq.s32.totalorder %v159, %v1900
    %vm2216 = vcmp.eq.s32.totalorder %v160, %v1900
    %vm2217 = vcmp.eq.s32.totalorder %v159, %v1903
    %vm2218 = vcmp.eq.s32.totalorder %v160, %v1903
    %vm2219 = vcmp.eq.s32.totalorder %v159, %v1906
    %vm2220 = vcmp.eq.s32.totalorder %v160, %v1906
    %vm2221 = vcmp.eq.s32.totalorder %v159, %v1909
    %vm2222 = vcmp.eq.s32.totalorder %v160, %v1909
    %vm2223 = vcmp.eq.s32.totalorder %v159, %v1912
    %vm2224 = vcmp.eq.s32.totalorder %v160, %v1912
    %vm2225 = vcmp.eq.s32.totalorder %v159, %v1915
    %vm2226 = vcmp.eq.s32.totalorder %v160, %v1915
    %vm2227 = vcmp.eq.s32.totalorder %v159, %v1918
    %vm2228 = vcmp.eq.s32.totalorder %v160, %v1918
    %vm2229 = vcmp.eq.s32.totalorder %v159, %v1921
    %vm2230 = vcmp.eq.s32.totalorder %v160, %v1921
    %vm2231 = vcmp.eq.s32.totalorder %v159, %v1924
    %vm2232 = vcmp.eq.s32.totalorder %v160, %v1924
    %vm2233 = vcmp.eq.s32.totalorder %v159, %v1927
    %vm2234 = vcmp.eq.s32.totalorder %v160, %v1927
    %vm2235 = vcmp.eq.s32.totalorder %v159, %v1930
    %vm2236 = vcmp.eq.s32.totalorder %v160, %v1930
    %vm2237 = vcmp.eq.s32.totalorder %v159, %v1933
    %vm2238 = vcmp.eq.s32.totalorder %v160, %v1933
    %vm2239 = vcmp.eq.s32.totalorder %v159, %v1936
    %vm2240 = vcmp.eq.s32.totalorder %v160, %v1936
    %vm2241 = vcmp.eq.s32.totalorder %v159, %v1939
    %vm2242 = vcmp.eq.s32.totalorder %v160, %v1939
    %vm2243 = vcmp.eq.s32.totalorder %v159, %v1942
    %vm2244 = vcmp.eq.s32.totalorder %v160, %v1942
    %vm2245 = vcmp.eq.s32.totalorder %v159, %v1945
    %vm2246 = vcmp.eq.s32.totalorder %v160, %v1945
    %vm2247 = vcmp.eq.s32.totalorder %v159, %v1948
    %vm2248 = vcmp.eq.s32.totalorder %v160, %v1948
    %vm2249 = vcmp.eq.s32.totalorder %v159, %v1951
    %vm2250 = vcmp.eq.s32.totalorder %v160, %v1951
    %vm2251 = vcmp.eq.s32.totalorder %v159, %v1954
    %vm2252 = vcmp.eq.s32.totalorder %v160, %v1954
    %vm2253 = vcmp.eq.s32.totalorder %v159, %v1957
    %vm2254 = vcmp.eq.s32.totalorder %v160, %v1957
    %vm2255 = vcmp.eq.s32.totalorder %v159, %v1960
    %vm2256 = vcmp.eq.s32.totalorder %v160, %v1960
    %vm2257 = vcmp.eq.s32.totalorder %v159, %v1963
    %vm2258 = vcmp.eq.s32.totalorder %v160, %v1963
    %vm2259 = vcmp.eq.s32.totalorder %v159, %v1966
    %vm2260 = vcmp.eq.s32.totalorder %v160, %v1966
    %vm2261 = vcmp.eq.s32.totalorder %v159, %v1969
    %vm2262 = vcmp.eq.s32.totalorder %v160, %v1969
    %vm2263 = vcmp.eq.s32.totalorder %v159, %v1972
    %vm2264 = vcmp.eq.s32.totalorder %v160, %v1972
    %vm2265 = vcmp.eq.s32.totalorder %v159, %v1975
    %vm2266 = vcmp.eq.s32.totalorder %v160, %v1975
    %vm2267 = vcmp.eq.s32.totalorder %v159, %v1978
    %vm2268 = vcmp.eq.s32.totalorder %v160, %v1978
    %vm2269 = vcmp.eq.s32.totalorder %v159, %v1981
    %vm2270 = vcmp.eq.s32.totalorder %v160, %v1981
    %vm2271 = vcmp.eq.s32.totalorder %v159, %v1984
    %vm2272 = vcmp.eq.s32.totalorder %v160, %v1984
    %vm2273 = vcmp.eq.s32.totalorder %v159, %v1987
    %vm2274 = vcmp.eq.s32.totalorder %v160, %v1987
    %vm2275 = vcmp.eq.s32.totalorder %v159, %v1990
    %vm2276 = vcmp.eq.s32.totalorder %v160, %v1990
    %vm2277 = vcmp.eq.s32.totalorder %v159, %v1993
    %vm2278 = vcmp.eq.s32.totalorder %v160, %v1993
    %vm2279 = vcmp.eq.s32.totalorder %v159, %v1996
    %vm2280 = vcmp.eq.s32.totalorder %v160, %v1996
    %vm2281 = vcmp.eq.s32.totalorder %v159, %v1999
    %vm2282 = vcmp.eq.s32.totalorder %v160, %v1999
    %vm2283 = vcmp.eq.s32.totalorder %v159, %v2002
    %vm2284 = vcmp.eq.s32.totalorder %v160, %v2002
    %vm2285 = vcmp.eq.s32.totalorder %v159, %v2005
    %vm2286 = vcmp.eq.s32.totalorder %v160, %v2005
    %vm2287 = vcmp.eq.s32.totalorder %v159, %v2008
    %vm2288 = vcmp.eq.s32.totalorder %v160, %v2008
    %vm2289 = vcmp.eq.s32.totalorder %v159, %v2011
    %vm2290 = vcmp.eq.s32.totalorder %v160, %v2011
    %vm2291 = vcmp.eq.s32.totalorder %v159, %v2014
    %vm2292 = vcmp.eq.s32.totalorder %v160, %v2014
    %vm2293 = vcmp.eq.s32.totalorder %v159, %v2017
    %vm2294 = vcmp.eq.s32.totalorder %v160, %v2017
    %vm2295 = vcmp.eq.s32.totalorder %v159, %v2020
    %vm2296 = vcmp.eq.s32.totalorder %v160, %v2020
    %vm2297 = vcmp.eq.s32.totalorder %v159, %v2023
    %vm2298 = vcmp.eq.s32.totalorder %v160, %v2023
    %vm2299 = vcmp.eq.s32.totalorder %v159, %v2026
    %vm2300 = vcmp.eq.s32.totalorder %v160, %v2026
    %vm2301 = vcmp.eq.s32.totalorder %v159, %v2029
    %vm2302 = vcmp.eq.s32.totalorder %v160, %v2029
    %vm2303 = vcmp.eq.s32.totalorder %v159, %v2032
    %vm2304 = vcmp.eq.s32.totalorder %v160, %v2032
    %vm2305 = vcmp.eq.s32.totalorder %v159, %v2035
    %vm2306 = vcmp.eq.s32.totalorder %v160, %v2035
    %vm2307 = vcmp.eq.s32.totalorder %v159, %v2038
    %vm2308 = vcmp.eq.s32.totalorder %v160, %v2038
    %vm2309 = vcmp.eq.s32.totalorder %v159, %v2041
    %vm2310 = vcmp.eq.s32.totalorder %v160, %v2041
    %vm2311 = vcmp.eq.s32.totalorder %v159, %v2044
    %vm2312 = vcmp.eq.s32.totalorder %v160, %v2044
    %vm2313 = vcmp.eq.s32.totalorder %v159, %v2047
    %vm2314 = vcmp.eq.s32.totalorder %v160, %v2047
    %vm2315 = vcmp.eq.s32.totalorder %v159, %v2050
    %vm2316 = vcmp.eq.s32.totalorder %v160, %v2050
    %vm2317 = vcmp.eq.s32.totalorder %v159, %v2053
    %vm2318 = vcmp.eq.s32.totalorder %v160, %v2053
    %vm2319 = vcmp.eq.s32.totalorder %v159, %v2056
    %vm2320 = vcmp.eq.s32.totalorder %v160, %v2056
    %vm2321 = vcmp.eq.s32.totalorder %v159, %v2059
    %vm2322 = vcmp.eq.s32.totalorder %v160, %v2059
    %vm2323 = vcmp.eq.s32.totalorder %v159, %v2062
    %vm2324 = vcmp.eq.s32.totalorder %v160, %v2062
    %vm2325 = vcmp.eq.s32.totalorder %v159, %v2065
    %vm2326 = vcmp.eq.s32.totalorder %v160, %v2065
    %vm2327 = vcmp.eq.s32.totalorder %v159, %v2068
    %vm2328 = vcmp.eq.s32.totalorder %v160, %v2068
    %vm2329 = vcmp.eq.s32.totalorder %v159, %v2071
    %vm2330 = vcmp.eq.s32.totalorder %v160, %v2071
    %vm2331 = vcmp.eq.s32.totalorder %v159, %v2074
    %vm2332 = vcmp.eq.s32.totalorder %v160, %v2074
    %vm2333 = vcmp.eq.s32.totalorder %v159, %v2077
    %vm2334 = vcmp.eq.s32.totalorder %v160, %v2077
    %vm2335 = vcmp.eq.s32.totalorder %v159, %v2080
    %vm2336 = vcmp.eq.s32.totalorder %v160, %v2080
    %vm2337 = vmor %vm1441, %vm2081
    %vm2338 = vmor %vm1442, %vm2082
    %vm2339 = vmor %vm1443, %vm2083
    %vm2340 = vmor %vm1444, %vm2084
    %vm2341 = vmor %vm1445, %vm2085
    %vm2342 = vmor %vm1446, %vm2086
    %vm2343 = vmor %vm1447, %vm2087
    %vm2344 = vmor %vm1448, %vm2088
    %vm2345 = vmor %vm1449, %vm2089
    %vm2346 = vmor %vm1450, %vm2090
    %vm2347 = vmor %vm1451, %vm2091
    %vm2348 = vmor %vm1452, %vm2092
    %vm2349 = vmor %vm1453, %vm2093
    %vm2350 = vmor %vm1454, %vm2094
    %vm2351 = vmor %vm1455, %vm2095
    %vm2352 = vmor %vm1456, %vm2096
    %vm2353 = vmor %vm1457, %vm2097
    %vm2354 = vmor %vm1458, %vm2098
    %vm2355 = vmor %vm1459, %vm2099
    %vm2356 = vmor %vm1460, %vm2100
    %vm2357 = vmor %vm1461, %vm2101
    %vm2358 = vmor %vm1462, %vm2102
    %vm2359 = vmor %vm1463, %vm2103
    %vm2360 = vmor %vm1464, %vm2104
    %vm2361 = vmor %vm1465, %vm2105
    %vm2362 = vmor %vm1466, %vm2106
    %vm2363 = vmor %vm1467, %vm2107
    %vm2364 = vmor %vm1468, %vm2108
    %vm2365 = vmor %vm1469, %vm2109
    %vm2366 = vmor %vm1470, %vm2110
    %vm2367 = vmor %vm1471, %vm2111
    %vm2368 = vmor %vm1472, %vm2112
    %vm2369 = vmor %vm1473, %vm2113
    %vm2370 = vmor %vm1474, %vm2114
    %vm2371 = vmor %vm1475, %vm2115
    %vm2372 = vmor %vm1476, %vm2116
    %vm2373 = vmor %vm1477, %vm2117
    %vm2374 = vmor %vm1478, %vm2118
    %vm2375 = vmor %vm1479, %vm2119
    %vm2376 = vmor %vm1480, %vm2120
    %vm2377 = vmor %vm1481, %vm2121
    %vm2378 = vmor %vm1482, %vm2122
    %vm2379 = vmor %vm1483, %vm2123
    %vm2380 = vmor %vm1484, %vm2124
    %vm2381 = vmor %vm1485, %vm2125
    %vm2382 = vmor %vm1486, %vm2126
    %vm2383 = vmor %vm1487, %vm2127
    %vm2384 = vmor %vm1488, %vm2128
    %vm2385 = vmor %vm1489, %vm2129
    %vm2386 = vmor %vm1490, %vm2130
    %vm2387 = vmor %vm1491, %vm2131
    %vm2388 = vmor %vm1492, %vm2132
    %vm2389 = vmor %vm1493, %vm2133
    %vm2390 = vmor %vm1494, %vm2134
    %vm2391 = vmor %vm1495, %vm2135
    %vm2392 = vmor %vm1496, %vm2136
    %vm2393 = vmor %vm1497, %vm2137
    %vm2394 = vmor %vm1498, %vm2138
    %vm2395 = vmor %vm1499, %vm2139
    %vm2396 = vmor %vm1500, %vm2140
    %vm2397 = vmor %vm1501, %vm2141
    %vm2398 = vmor %vm1502, %vm2142
    %vm2399 = vmor %vm1503, %vm2143
    %vm2400 = vmor %vm1504, %vm2144
    %vm2401 = vmor %vm1505, %vm2145
    %vm2402 = vmor %vm1506, %vm2146
    %vm2403 = vmor %vm1507, %vm2147
    %vm2404 = vmor %vm1508, %vm2148
    %vm2405 = vmor %vm1509, %vm2149
    %vm2406 = vmor %vm1510, %vm2150
    %vm2407 = vmor %vm1511, %vm2151
    %vm2408 = vmor %vm1512, %vm2152
    %vm2409 = vmor %vm1513, %vm2153
    %vm2410 = vmor %vm1514, %vm2154
    %vm2411 = vmor %vm1515, %vm2155
    %vm2412 = vmor %vm1516, %vm2156
    %vm2413 = vmor %vm1517, %vm2157
    %vm2414 = vmor %vm1518, %vm2158
    %vm2415 = vmor %vm1519, %vm2159
    %vm2416 = vmor %vm1520, %vm2160
    %vm2417 = vmor %vm1521, %vm2161
    %vm2418 = vmor %vm1522, %vm2162
    %vm2419 = vmor %vm1523, %vm2163
    %vm2420 = vmor %vm1524, %vm2164
    %vm2421 = vmor %vm1525, %vm2165
    %vm2422 = vmor %vm1526, %vm2166
    %vm2423 = vmor %vm1527, %vm2167
    %vm2424 = vmor %vm1528, %vm2168
    %vm2425 = vmor %vm1529, %vm2169
    %vm2426 = vmor %vm1530, %vm2170
    %vm2427 = vmor %vm1531, %vm2171
    %vm2428 = vmor %vm1532, %vm2172
    %vm2429 = vmor %vm1533, %vm2173
    %vm2430 = vmor %vm1534, %vm2174
    %vm2431 = vmor %vm1535, %vm2175
    %vm2432 = vmor %vm1536, %vm2176
    %vm2433 = vmor %vm1537, %vm2177
    %vm2434 = vmor %vm1538, %vm2178
    %vm2435 = vmor %vm1539, %vm2179
    %vm2436 = vmor %vm1540, %vm2180
    %vm2437 = vmor %vm1541, %vm2181
    %vm2438 = vmor %vm1542, %vm2182
    %vm2439 = vmor %vm1543, %vm2183
    %vm2440 = vmor %vm1544, %vm2184
    %vm2441 = vmor %vm1545, %vm2185
    %vm2442 = vmor %vm1546, %vm2186
    %vm2443 = vmor %vm1547, %vm2187
    %vm2444 = vmor %vm1548, %vm2188
    %vm2445 = vmor %vm1549, %vm2189
    %vm2446 = vmor %vm1550, %vm2190
    %vm2447 = vmor %vm1551, %vm2191
    %vm2448 = vmor %vm1552, %vm2192
    %vm2449 = vmor %vm1553, %vm2193
    %vm2450 = vmor %vm1554, %vm2194
    %vm2451 = vmor %vm1555, %vm2195
    %vm2452 = vmor %vm1556, %vm2196
    %vm2453 = vmor %vm1557, %vm2197
    %vm2454 = vmor %vm1558, %vm2198
    %vm2455 = vmor %vm1559, %vm2199
    %vm2456 = vmor %vm1560, %vm2200
    %vm2457 = vmor %vm1561, %vm2201
    %vm2458 = vmor %vm1562, %vm2202
    %vm2459 = vmor %vm1563, %vm2203
    %vm2460 = vmor %vm1564, %vm2204
    %vm2461 = vmor %vm1565, %vm2205
    %vm2462 = vmor %vm1566, %vm2206
    %vm2463 = vmor %vm1567, %vm2207
    %vm2464 = vmor %vm1568, %vm2208
    %vm2465 = vmor %vm1569, %vm2209
    %vm2466 = vmor %vm1570, %vm2210
    %vm2467 = vmor %vm1571, %vm2211
    %vm2468 = vmor %vm1572, %vm2212
    %vm2469 = vmor %vm1573, %vm2213
    %vm2470 = vmor %vm1574, %vm2214
    %vm2471 = vmor %vm1575, %vm2215
    %vm2472 = vmor %vm1576, %vm2216
    %vm2473 = vmor %vm1577, %vm2217
    %vm2474 = vmor %vm1578, %vm2218
    %vm2475 = vmor %vm1579, %vm2219
    %vm2476 = vmor %vm1580, %vm2220
    %vm2477 = vmor %vm1581, %vm2221
    %vm2478 = vmor %vm1582, %vm2222
    %vm2479 = vmor %vm1583, %vm2223
    %vm2480 = vmor %vm1584, %vm2224
    %vm2481 = vmor %vm1585, %vm2225
    %vm2482 = vmor %vm1586, %vm2226
    %vm2483 = vmor %vm1587, %vm2227
    %vm2484 = vmor %vm1588, %vm2228
    %vm2485 = vmor %vm1589, %vm2229
    %vm2486 = vmor %vm1590, %vm2230
    %vm2487 = vmor %vm1591, %vm2231
    %vm2488 = vmor %vm1592, %vm2232
    %vm2489 = vmor %vm1593, %vm2233
    %vm2490 = vmor %vm1594, %vm2234
    %vm2491 = vmor %vm1595, %vm2235
    %vm2492 = vmor %vm1596, %vm2236
    %vm2493 = vmor %vm1597, %vm2237
    %vm2494 = vmor %vm1598, %vm2238
    %vm2495 = vmor %vm1599, %vm2239
    %vm2496 = vmor %vm1600, %vm2240
    %vm2497 = vmor %vm1601, %vm2241
    %vm2498 = vmor %vm1602, %vm2242
    %vm2499 = vmor %vm1603, %vm2243
    %vm2500 = vmor %vm1604, %vm2244
    %vm2501 = vmor %vm1605, %vm2245
    %vm2502 = vmor %vm1606, %vm2246
    %vm2503 = vmor %vm1607, %vm2247
    %vm2504 = vmor %vm1608, %vm2248
    %vm2505 = vmor %vm1609, %vm2249
    %vm2506 = vmor %vm1610, %vm2250
    %vm2507 = vmor %vm1611, %vm2251
    %vm2508 = vmor %vm1612, %vm2252
    %vm2509 = vmor %vm1613, %vm2253
    %vm2510 = vmor %vm1614, %vm2254
    %vm2511 = vmor %vm1615, %vm2255
    %vm2512 = vmor %vm1616, %vm2256
    %vm2513 = vmor %vm1617, %vm2257
    %vm2514 = vmor %vm1618, %vm2258
    %vm2515 = vmor %vm1619, %vm2259
    %vm2516 = vmor %vm1620, %vm2260
    %vm2517 = vmor %vm1621, %vm2261
    %vm2518 = vmor %vm1622, %vm2262
    %vm2519 = vmor %vm1623, %vm2263
    %vm2520 = vmor %vm1624, %vm2264
    %vm2521 = vmor %vm1625, %vm2265
    %vm2522 = vmor %vm1626, %vm2266
    %vm2523 = vmor %vm1627, %vm2267
    %vm2524 = vmor %vm1628, %vm2268
    %vm2525 = vmor %vm1629, %vm2269
    %vm2526 = vmor %vm1630, %vm2270
    %vm2527 = vmor %vm1631, %vm2271
    %vm2528 = vmor %vm1632, %vm2272
    %vm2529 = vmor %vm1633, %vm2273
    %vm2530 = vmor %vm1634, %vm2274
    %vm2531 = vmor %vm1635, %vm2275
    %vm2532 = vmor %vm1636, %vm2276
    %vm2533 = vmor %vm1637, %vm2277
    %vm2534 = vmor %vm1638, %vm2278
    %vm2535 = vmor %vm1639, %vm2279
    %vm2536 = vmor %vm1640, %vm2280
    %vm2537 = vmor %vm1641, %vm2281
    %vm2538 = vmor %vm1642, %vm2282
    %vm2539 = vmor %vm1643, %vm2283
    %vm2540 = vmor %vm1644, %vm2284
    %vm2541 = vmor %vm1645, %vm2285
    %vm2542 = vmor %vm1646, %vm2286
    %vm2543 = vmor %vm1647, %vm2287
    %vm2544 = vmor %vm1648, %vm2288
    %vm2545 = vmor %vm1649, %vm2289
    %vm2546 = vmor %vm1650, %vm2290
    %vm2547 = vmor %vm1651, %vm2291
    %vm2548 = vmor %vm1652, %vm2292
    %vm2549 = vmor %vm1653, %vm2293
    %vm2550 = vmor %vm1654, %vm2294
    %vm2551 = vmor %vm1655, %vm2295
    %vm2552 = vmor %vm1656, %vm2296
    %vm2553 = vmor %vm1657, %vm2297
    %vm2554 = vmor %vm1658, %vm2298
    %vm2555 = vmor %vm1659, %vm2299
    %vm2556 = vmor %vm1660, %vm2300
    %vm2557 = vmor %vm1661, %vm2301
    %vm2558 = vmor %vm1662, %vm2302
    %vm2559 = vmor %vm1663, %vm2303
    %vm2560 = vmor %vm1664, %vm2304
    %vm2561 = vmor %vm1665, %vm2305
    %vm2562 = vmor %vm1666, %vm2306
    %vm2563 = vmor %vm1667, %vm2307
    %vm2564 = vmor %vm1668, %vm2308
    %vm2565 = vmor %vm1669, %vm2309
    %vm2566 = vmor %vm1670, %vm2310
    %vm2567 = vmor %vm1671, %vm2311
    %vm2568 = vmor %vm1672, %vm2312
    %vm2569 = vmor %vm1673, %vm2313
    %vm2570 = vmor %vm1674, %vm2314
    %vm2571 = vmor %vm1675, %vm2315
    %vm2572 = vmor %vm1676, %vm2316
    %vm2573 = vmor %vm1677, %vm2317
    %vm2574 = vmor %vm1678, %vm2318
    %vm2575 = vmor %vm1679, %vm2319
    %vm2576 = vmor %vm1680, %vm2320
    %vm2577 = vmor %vm1681, %vm2321
    %vm2578 = vmor %vm1682, %vm2322
    %vm2579 = vmor %vm1683, %vm2323
    %vm2580 = vmor %vm1684, %vm2324
    %vm2581 = vmor %vm1685, %vm2325
    %vm2582 = vmor %vm1686, %vm2326
    %vm2583 = vmor %vm1687, %vm2327
    %vm2584 = vmor %vm1688, %vm2328
    %vm2585 = vmor %vm1689, %vm2329
    %vm2586 = vmor %vm1690, %vm2330
    %vm2587 = vmor %vm1691, %vm2331
    %vm2588 = vmor %vm1692, %vm2332
    %vm2589 = vmor %vm1693, %vm2333
    %vm2590 = vmor %vm1694, %vm2334
    %vm2591 = vmor %vm1695, %vm2335
    %vm2592 = vmor %vm1696, %vm2336
    %2593 = vset.pattern.permute.xlu0 3
    %2594 = vperm.xlu0 %2593, %v30
    %v2595 = vpop.permute.xlu0 %2594
    %2596 = vset.pattern.permute.xlu0 3
    %2597 = vperm.xlu0 %2596, %v31
    %v2598 = vpop.permute.xlu0 %2597
    %2599 = vset.pattern.permute.xlu0 3
    %2600 = vperm.xlu0 %2599, %v32
    %v2601 = vpop.permute.xlu0 %2600
    %2602 = vset.pattern.permute.xlu0 3
    %2603 = vperm.xlu0 %2602, %v33
    %v2604 = vpop.permute.xlu0 %2603
    %2605 = vset.pattern.permute.xlu0 3
    %2606 = vperm.xlu0 %2605, %v34
    %v2607 = vpop.permute.xlu0 %2606
    %2608 = vset.pattern.permute.xlu0 3
    %2609 = vperm.xlu0 %2608, %v35
    %v2610 = vpop.permute.xlu0 %2609
    %2611 = vset.pattern.permute.xlu0 3
    %2612 = vperm.xlu0 %2611, %v36
    %v2613 = vpop.permute.xlu0 %2612
    %2614 = vset.pattern.permute.xlu0 3
    %2615 = vperm.xlu0 %2614, %v37
    %v2616 = vpop.permute.xlu0 %2615
    %2617 = vset.pattern.permute.xlu0 3
    %2618 = vperm.xlu0 %2617, %v38
    %v2619 = vpop.permute.xlu0 %2618
    %2620 = vset.pattern.permute.xlu0 3
    %2621 = vperm.xlu0 %2620, %v39
    %v2622 = vpop.permute.xlu0 %2621
    %2623 = vset.pattern.permute.xlu0 3
    %2624 = vperm.xlu0 %2623, %v40
    %v2625 = vpop.permute.xlu0 %2624
    %2626 = vset.pattern.permute.xlu0 3
    %2627 = vperm.xlu0 %2626, %v41
    %v2628 = vpop.permute.xlu0 %2627
    %2629 = vset.pattern.permute.xlu0 3
    %2630 = vperm.xlu0 %2629, %v42
    %v2631 = vpop.permute.xlu0 %2630
    %2632 = vset.pattern.permute.xlu0 3
    %2633 = vperm.xlu0 %2632, %v43
    %v2634 = vpop.permute.xlu0 %2633
    %2635 = vset.pattern.permute.xlu0 3
    %2636 = vperm.xlu0 %2635, %v44
    %v2637 = vpop.permute.xlu0 %2636
    %2638 = vset.pattern.permute.xlu0 3
    %2639 = vperm.xlu0 %2638, %v45
    %v2640 = vpop.permute.xlu0 %2639
    %2641 = vset.pattern.permute.xlu0 3
    %2642 = vperm.xlu0 %2641, %v46
    %v2643 = vpop.permute.xlu0 %2642
    %2644 = vset.pattern.permute.xlu0 3
    %2645 = vperm.xlu0 %2644, %v47
    %v2646 = vpop.permute.xlu0 %2645
    %2647 = vset.pattern.permute.xlu0 3
    %2648 = vperm.xlu0 %2647, %v48
    %v2649 = vpop.permute.xlu0 %2648
    %2650 = vset.pattern.permute.xlu0 3
    %2651 = vperm.xlu0 %2650, %v49
    %v2652 = vpop.permute.xlu0 %2651
    %2653 = vset.pattern.permute.xlu0 3
    %2654 = vperm.xlu0 %2653, %v50
    %v2655 = vpop.permute.xlu0 %2654
    %2656 = vset.pattern.permute.xlu0 3
    %2657 = vperm.xlu0 %2656, %v51
    %v2658 = vpop.permute.xlu0 %2657
    %2659 = vset.pattern.permute.xlu0 3
    %2660 = vperm.xlu0 %2659, %v52
    %v2661 = vpop.permute.xlu0 %2660
    %2662 = vset.pattern.permute.xlu0 3
    %2663 = vperm.xlu0 %2662, %v53
    %v2664 = vpop.permute.xlu0 %2663
    %2665 = vset.pattern.permute.xlu0 3
    %2666 = vperm.xlu0 %2665, %v54
    %v2667 = vpop.permute.xlu0 %2666
    %2668 = vset.pattern.permute.xlu0 3
    %2669 = vperm.xlu0 %2668, %v55
    %v2670 = vpop.permute.xlu0 %2669
    %2671 = vset.pattern.permute.xlu0 3
    %2672 = vperm.xlu0 %2671, %v56
    %v2673 = vpop.permute.xlu0 %2672
    %2674 = vset.pattern.permute.xlu0 3
    %2675 = vperm.xlu0 %2674, %v57
    %v2676 = vpop.permute.xlu0 %2675
    %2677 = vset.pattern.permute.xlu0 3
    %2678 = vperm.xlu0 %2677, %v58
    %v2679 = vpop.permute.xlu0 %2678
    %2680 = vset.pattern.permute.xlu0 3
    %2681 = vperm.xlu0 %2680, %v59
    %v2682 = vpop.permute.xlu0 %2681
    %2683 = vset.pattern.permute.xlu0 3
    %2684 = vperm.xlu0 %2683, %v60
    %v2685 = vpop.permute.xlu0 %2684
    %2686 = vset.pattern.permute.xlu0 3
    %2687 = vperm.xlu0 %2686, %v61
    %v2688 = vpop.permute.xlu0 %2687
    %2689 = vset.pattern.permute.xlu0 3
    %2690 = vperm.xlu0 %2689, %v62
    %v2691 = vpop.permute.xlu0 %2690
    %2692 = vset.pattern.permute.xlu0 3
    %2693 = vperm.xlu0 %2692, %v63
    %v2694 = vpop.permute.xlu0 %2693
    %2695 = vset.pattern.permute.xlu0 3
    %2696 = vperm.xlu0 %2695, %v64
    %v2697 = vpop.permute.xlu0 %2696
    %2698 = vset.pattern.permute.xlu0 3
    %2699 = vperm.xlu0 %2698, %v65
    %v2700 = vpop.permute.xlu0 %2699
    %2701 = vset.pattern.permute.xlu0 3
    %2702 = vperm.xlu0 %2701, %v66
    %v2703 = vpop.permute.xlu0 %2702
    %2704 = vset.pattern.permute.xlu0 3
    %2705 = vperm.xlu0 %2704, %v67
    %v2706 = vpop.permute.xlu0 %2705
    %2707 = vset.pattern.permute.xlu0 3
    %2708 = vperm.xlu0 %2707, %v68
    %v2709 = vpop.permute.xlu0 %2708
    %2710 = vset.pattern.permute.xlu0 3
    %2711 = vperm.xlu0 %2710, %v69
    %v2712 = vpop.permute.xlu0 %2711
    %2713 = vset.pattern.permute.xlu0 3
    %2714 = vperm.xlu0 %2713, %v70
    %v2715 = vpop.permute.xlu0 %2714
    %2716 = vset.pattern.permute.xlu0 3
    %2717 = vperm.xlu0 %2716, %v71
    %v2718 = vpop.permute.xlu0 %2717
    %2719 = vset.pattern.permute.xlu0 3
    %2720 = vperm.xlu0 %2719, %v72
    %v2721 = vpop.permute.xlu0 %2720
    %2722 = vset.pattern.permute.xlu0 3
    %2723 = vperm.xlu0 %2722, %v73
    %v2724 = vpop.permute.xlu0 %2723
    %2725 = vset.pattern.permute.xlu0 3
    %2726 = vperm.xlu0 %2725, %v74
    %v2727 = vpop.permute.xlu0 %2726
    %2728 = vset.pattern.permute.xlu0 3
    %2729 = vperm.xlu0 %2728, %v75
    %v2730 = vpop.permute.xlu0 %2729
    %2731 = vset.pattern.permute.xlu0 3
    %2732 = vperm.xlu0 %2731, %v76
    %v2733 = vpop.permute.xlu0 %2732
    %2734 = vset.pattern.permute.xlu0 3
    %2735 = vperm.xlu0 %2734, %v77
    %v2736 = vpop.permute.xlu0 %2735
    %2737 = vset.pattern.permute.xlu0 3
    %2738 = vperm.xlu0 %2737, %v78
    %v2739 = vpop.permute.xlu0 %2738
    %2740 = vset.pattern.permute.xlu0 3
    %2741 = vperm.xlu0 %2740, %v79
    %v2742 = vpop.permute.xlu0 %2741
    %2743 = vset.pattern.permute.xlu0 3
    %2744 = vperm.xlu0 %2743, %v80
    %v2745 = vpop.permute.xlu0 %2744
    %2746 = vset.pattern.permute.xlu0 3
    %2747 = vperm.xlu0 %2746, %v81
    %v2748 = vpop.permute.xlu0 %2747
    %2749 = vset.pattern.permute.xlu0 3
    %2750 = vperm.xlu0 %2749, %v82
    %v2751 = vpop.permute.xlu0 %2750
    %2752 = vset.pattern.permute.xlu0 3
    %2753 = vperm.xlu0 %2752, %v83
    %v2754 = vpop.permute.xlu0 %2753
    %2755 = vset.pattern.permute.xlu0 3
    %2756 = vperm.xlu0 %2755, %v84
    %v2757 = vpop.permute.xlu0 %2756
    %2758 = vset.pattern.permute.xlu0 3
    %2759 = vperm.xlu0 %2758, %v85
    %v2760 = vpop.permute.xlu0 %2759
    %2761 = vset.pattern.permute.xlu0 3
    %2762 = vperm.xlu0 %2761, %v86
    %v2763 = vpop.permute.xlu0 %2762
    %2764 = vset.pattern.permute.xlu0 3
    %2765 = vperm.xlu0 %2764, %v87
    %v2766 = vpop.permute.xlu0 %2765
    %2767 = vset.pattern.permute.xlu0 3
    %2768 = vperm.xlu0 %2767, %v88
    %v2769 = vpop.permute.xlu0 %2768
    %2770 = vset.pattern.permute.xlu0 3
    %2771 = vperm.xlu0 %2770, %v89
    %v2772 = vpop.permute.xlu0 %2771
    %2773 = vset.pattern.permute.xlu0 3
    %2774 = vperm.xlu0 %2773, %v90
    %v2775 = vpop.permute.xlu0 %2774
    %2776 = vset.pattern.permute.xlu0 3
    %2777 = vperm.xlu0 %2776, %v91
    %v2778 = vpop.permute.xlu0 %2777
    %2779 = vset.pattern.permute.xlu0 3
    %2780 = vperm.xlu0 %2779, %v92
    %v2781 = vpop.permute.xlu0 %2780
    %2782 = vset.pattern.permute.xlu0 3
    %2783 = vperm.xlu0 %2782, %v93
    %v2784 = vpop.permute.xlu0 %2783
    %2785 = vset.pattern.permute.xlu0 3
    %2786 = vperm.xlu0 %2785, %v94
    %v2787 = vpop.permute.xlu0 %2786
    %2788 = vset.pattern.permute.xlu0 3
    %2789 = vperm.xlu0 %2788, %v95
    %v2790 = vpop.permute.xlu0 %2789
    %2791 = vset.pattern.permute.xlu0 3
    %2792 = vperm.xlu0 %2791, %v96
    %v2793 = vpop.permute.xlu0 %2792
    %2794 = vset.pattern.permute.xlu0 3
    %2795 = vperm.xlu0 %2794, %v97
    %v2796 = vpop.permute.xlu0 %2795
    %2797 = vset.pattern.permute.xlu0 3
    %2798 = vperm.xlu0 %2797, %v98
    %v2799 = vpop.permute.xlu0 %2798
    %2800 = vset.pattern.permute.xlu0 3
    %2801 = vperm.xlu0 %2800, %v99
    %v2802 = vpop.permute.xlu0 %2801
    %2803 = vset.pattern.permute.xlu0 3
    %2804 = vperm.xlu0 %2803, %v100
    %v2805 = vpop.permute.xlu0 %2804
    %2806 = vset.pattern.permute.xlu0 3
    %2807 = vperm.xlu0 %2806, %v101
    %v2808 = vpop.permute.xlu0 %2807
    %2809 = vset.pattern.permute.xlu0 3
    %2810 = vperm.xlu0 %2809, %v102
    %v2811 = vpop.permute.xlu0 %2810
    %2812 = vset.pattern.permute.xlu0 3
    %2813 = vperm.xlu0 %2812, %v103
    %v2814 = vpop.permute.xlu0 %2813
    %2815 = vset.pattern.permute.xlu0 3
    %2816 = vperm.xlu0 %2815, %v104
    %v2817 = vpop.permute.xlu0 %2816
    %2818 = vset.pattern.permute.xlu0 3
    %2819 = vperm.xlu0 %2818, %v105
    %v2820 = vpop.permute.xlu0 %2819
    %2821 = vset.pattern.permute.xlu0 3
    %2822 = vperm.xlu0 %2821, %v106
    %v2823 = vpop.permute.xlu0 %2822
    %2824 = vset.pattern.permute.xlu0 3
    %2825 = vperm.xlu0 %2824, %v107
    %v2826 = vpop.permute.xlu0 %2825
    %2827 = vset.pattern.permute.xlu0 3
    %2828 = vperm.xlu0 %2827, %v108
    %v2829 = vpop.permute.xlu0 %2828
    %2830 = vset.pattern.permute.xlu0 3
    %2831 = vperm.xlu0 %2830, %v109
    %v2832 = vpop.permute.xlu0 %2831
    %2833 = vset.pattern.permute.xlu0 3
    %2834 = vperm.xlu0 %2833, %v110
    %v2835 = vpop.permute.xlu0 %2834
    %2836 = vset.pattern.permute.xlu0 3
    %2837 = vperm.xlu0 %2836, %v111
    %v2838 = vpop.permute.xlu0 %2837
    %2839 = vset.pattern.permute.xlu0 3
    %2840 = vperm.xlu0 %2839, %v112
    %v2841 = vpop.permute.xlu0 %2840
    %2842 = vset.pattern.permute.xlu0 3
    %2843 = vperm.xlu0 %2842, %v113
    %v2844 = vpop.permute.xlu0 %2843
    %2845 = vset.pattern.permute.xlu0 3
    %2846 = vperm.xlu0 %2845, %v114
    %v2847 = vpop.permute.xlu0 %2846
    %2848 = vset.pattern.permute.xlu0 3
    %2849 = vperm.xlu0 %2848, %v115
    %v2850 = vpop.permute.xlu0 %2849
    %2851 = vset.pattern.permute.xlu0 3
    %2852 = vperm.xlu0 %2851, %v116
    %v2853 = vpop.permute.xlu0 %2852
    %2854 = vset.pattern.permute.xlu0 3
    %2855 = vperm.xlu0 %2854, %v117
    %v2856 = vpop.permute.xlu0 %2855
    %2857 = vset.pattern.permute.xlu0 3
    %2858 = vperm.xlu0 %2857, %v118
    %v2859 = vpop.permute.xlu0 %2858
    %2860 = vset.pattern.permute.xlu0 3
    %2861 = vperm.xlu0 %2860, %v119
    %v2862 = vpop.permute.xlu0 %2861
    %2863 = vset.pattern.permute.xlu0 3
    %2864 = vperm.xlu0 %2863, %v120
    %v2865 = vpop.permute.xlu0 %2864
    %2866 = vset.pattern.permute.xlu0 3
    %2867 = vperm.xlu0 %2866, %v121
    %v2868 = vpop.permute.xlu0 %2867
    %2869 = vset.pattern.permute.xlu0 3
    %2870 = vperm.xlu0 %2869, %v122
    %v2871 = vpop.permute.xlu0 %2870
    %2872 = vset.pattern.permute.xlu0 3
    %2873 = vperm.xlu0 %2872, %v123
    %v2874 = vpop.permute.xlu0 %2873
    %2875 = vset.pattern.permute.xlu0 3
    %2876 = vperm.xlu0 %2875, %v124
    %v2877 = vpop.permute.xlu0 %2876
    %2878 = vset.pattern.permute.xlu0 3
    %2879 = vperm.xlu0 %2878, %v125
    %v2880 = vpop.permute.xlu0 %2879
    %2881 = vset.pattern.permute.xlu0 3
    %2882 = vperm.xlu0 %2881, %v126
    %v2883 = vpop.permute.xlu0 %2882
    %2884 = vset.pattern.permute.xlu0 3
    %2885 = vperm.xlu0 %2884, %v127
    %v2886 = vpop.permute.xlu0 %2885
    %2887 = vset.pattern.permute.xlu0 3
    %2888 = vperm.xlu0 %2887, %v128
    %v2889 = vpop.permute.xlu0 %2888
    %2890 = vset.pattern.permute.xlu0 3
    %2891 = vperm.xlu0 %2890, %v129
    %v2892 = vpop.permute.xlu0 %2891
    %2893 = vset.pattern.permute.xlu0 3
    %2894 = vperm.xlu0 %2893, %v130
    %v2895 = vpop.permute.xlu0 %2894
    %2896 = vset.pattern.permute.xlu0 3
    %2897 = vperm.xlu0 %2896, %v131
    %v2898 = vpop.permute.xlu0 %2897
    %2899 = vset.pattern.permute.xlu0 3
    %2900 = vperm.xlu0 %2899, %v132
    %v2901 = vpop.permute.xlu0 %2900
    %2902 = vset.pattern.permute.xlu0 3
    %2903 = vperm.xlu0 %2902, %v133
    %v2904 = vpop.permute.xlu0 %2903
    %2905 = vset.pattern.permute.xlu0 3
    %2906 = vperm.xlu0 %2905, %v134
    %v2907 = vpop.permute.xlu0 %2906
    %2908 = vset.pattern.permute.xlu0 3
    %2909 = vperm.xlu0 %2908, %v135
    %v2910 = vpop.permute.xlu0 %2909
    %2911 = vset.pattern.permute.xlu0 3
    %2912 = vperm.xlu0 %2911, %v136
    %v2913 = vpop.permute.xlu0 %2912
    %2914 = vset.pattern.permute.xlu0 3
    %2915 = vperm.xlu0 %2914, %v137
    %v2916 = vpop.permute.xlu0 %2915
    %2917 = vset.pattern.permute.xlu0 3
    %2918 = vperm.xlu0 %2917, %v138
    %v2919 = vpop.permute.xlu0 %2918
    %2920 = vset.pattern.permute.xlu0 3
    %2921 = vperm.xlu0 %2920, %v139
    %v2922 = vpop.permute.xlu0 %2921
    %2923 = vset.pattern.permute.xlu0 3
    %2924 = vperm.xlu0 %2923, %v140
    %v2925 = vpop.permute.xlu0 %2924
    %2926 = vset.pattern.permute.xlu0 3
    %2927 = vperm.xlu0 %2926, %v141
    %v2928 = vpop.permute.xlu0 %2927
    %2929 = vset.pattern.permute.xlu0 3
    %2930 = vperm.xlu0 %2929, %v142
    %v2931 = vpop.permute.xlu0 %2930
    %2932 = vset.pattern.permute.xlu0 3
    %2933 = vperm.xlu0 %2932, %v143
    %v2934 = vpop.permute.xlu0 %2933
    %2935 = vset.pattern.permute.xlu0 3
    %2936 = vperm.xlu0 %2935, %v144
    %v2937 = vpop.permute.xlu0 %2936
    %2938 = vset.pattern.permute.xlu0 3
    %2939 = vperm.xlu0 %2938, %v145
    %v2940 = vpop.permute.xlu0 %2939
    %2941 = vset.pattern.permute.xlu0 3
    %2942 = vperm.xlu0 %2941, %v146
    %v2943 = vpop.permute.xlu0 %2942
    %2944 = vset.pattern.permute.xlu0 3
    %2945 = vperm.xlu0 %2944, %v147
    %v2946 = vpop.permute.xlu0 %2945
    %2947 = vset.pattern.permute.xlu0 3
    %2948 = vperm.xlu0 %2947, %v148
    %v2949 = vpop.permute.xlu0 %2948
    %2950 = vset.pattern.permute.xlu0 3
    %2951 = vperm.xlu0 %2950, %v149
    %v2952 = vpop.permute.xlu0 %2951
    %2953 = vset.pattern.permute.xlu0 3
    %2954 = vperm.xlu0 %2953, %v150
    %v2955 = vpop.permute.xlu0 %2954
    %2956 = vset.pattern.permute.xlu0 3
    %2957 = vperm.xlu0 %2956, %v151
    %v2958 = vpop.permute.xlu0 %2957
    %2959 = vset.pattern.permute.xlu0 3
    %2960 = vperm.xlu0 %2959, %v152
    %v2961 = vpop.permute.xlu0 %2960
    %2962 = vset.pattern.permute.xlu0 3
    %2963 = vperm.xlu0 %2962, %v153
    %v2964 = vpop.permute.xlu0 %2963
    %2965 = vset.pattern.permute.xlu0 3
    %2966 = vperm.xlu0 %2965, %v154
    %v2967 = vpop.permute.xlu0 %2966
    %2968 = vset.pattern.permute.xlu0 3
    %2969 = vperm.xlu0 %2968, %v155
    %v2970 = vpop.permute.xlu0 %2969
    %2971 = vset.pattern.permute.xlu0 3
    %2972 = vperm.xlu0 %2971, %v156
    %v2973 = vpop.permute.xlu0 %2972
    %2974 = vset.pattern.permute.xlu0 3
    %2975 = vperm.xlu0 %2974, %v157
    %v2976 = vpop.permute.xlu0 %2975
    %vm2977 = vcmp.eq.s32.totalorder %v159, %v2595
    %vm2978 = vcmp.eq.s32.totalorder %v160, %v2595
    %vm2979 = vcmp.eq.s32.totalorder %v159, %v2598
    %vm2980 = vcmp.eq.s32.totalorder %v160, %v2598
    %vm2981 = vcmp.eq.s32.totalorder %v159, %v2601
    %vm2982 = vcmp.eq.s32.totalorder %v160, %v2601
    %vm2983 = vcmp.eq.s32.totalorder %v159, %v2604
    %vm2984 = vcmp.eq.s32.totalorder %v160, %v2604
    %vm2985 = vcmp.eq.s32.totalorder %v159, %v2607
    %vm2986 = vcmp.eq.s32.totalorder %v160, %v2607
    %vm2987 = vcmp.eq.s32.totalorder %v159, %v2610
    %vm2988 = vcmp.eq.s32.totalorder %v160, %v2610
    %vm2989 = vcmp.eq.s32.totalorder %v159, %v2613
    %vm2990 = vcmp.eq.s32.totalorder %v160, %v2613
    %vm2991 = vcmp.eq.s32.totalorder %v159, %v2616
    %vm2992 = vcmp.eq.s32.totalorder %v160, %v2616
    %vm2993 = vcmp.eq.s32.totalorder %v159, %v2619
    %vm2994 = vcmp.eq.s32.totalorder %v160, %v2619
    %vm2995 = vcmp.eq.s32.totalorder %v159, %v2622
    %vm2996 = vcmp.eq.s32.totalorder %v160, %v2622
    %vm2997 = vcmp.eq.s32.totalorder %v159, %v2625
    %vm2998 = vcmp.eq.s32.totalorder %v160, %v2625
    %vm2999 = vcmp.eq.s32.totalorder %v159, %v2628
    %vm3000 = vcmp.eq.s32.totalorder %v160, %v2628
    %vm3001 = vcmp.eq.s32.totalorder %v159, %v2631
    %vm3002 = vcmp.eq.s32.totalorder %v160, %v2631
    %vm3003 = vcmp.eq.s32.totalorder %v159, %v2634
    %vm3004 = vcmp.eq.s32.totalorder %v160, %v2634
    %vm3005 = vcmp.eq.s32.totalorder %v159, %v2637
    %vm3006 = vcmp.eq.s32.totalorder %v160, %v2637
    %vm3007 = vcmp.eq.s32.totalorder %v159, %v2640
    %vm3008 = vcmp.eq.s32.totalorder %v160, %v2640
    %vm3009 = vcmp.eq.s32.totalorder %v159, %v2643
    %vm3010 = vcmp.eq.s32.totalorder %v160, %v2643
    %vm3011 = vcmp.eq.s32.totalorder %v159, %v2646
    %vm3012 = vcmp.eq.s32.totalorder %v160, %v2646
    %vm3013 = vcmp.eq.s32.totalorder %v159, %v2649
    %vm3014 = vcmp.eq.s32.totalorder %v160, %v2649
    %vm3015 = vcmp.eq.s32.totalorder %v159, %v2652
    %vm3016 = vcmp.eq.s32.totalorder %v160, %v2652
    %vm3017 = vcmp.eq.s32.totalorder %v159, %v2655
    %vm3018 = vcmp.eq.s32.totalorder %v160, %v2655
    %vm3019 = vcmp.eq.s32.totalorder %v159, %v2658
    %vm3020 = vcmp.eq.s32.totalorder %v160, %v2658
    %vm3021 = vcmp.eq.s32.totalorder %v159, %v2661
    %vm3022 = vcmp.eq.s32.totalorder %v160, %v2661
    %vm3023 = vcmp.eq.s32.totalorder %v159, %v2664
    %vm3024 = vcmp.eq.s32.totalorder %v160, %v2664
    %vm3025 = vcmp.eq.s32.totalorder %v159, %v2667
    %vm3026 = vcmp.eq.s32.totalorder %v160, %v2667
    %vm3027 = vcmp.eq.s32.totalorder %v159, %v2670
    %vm3028 = vcmp.eq.s32.totalorder %v160, %v2670
    %vm3029 = vcmp.eq.s32.totalorder %v159, %v2673
    %vm3030 = vcmp.eq.s32.totalorder %v160, %v2673
    %vm3031 = vcmp.eq.s32.totalorder %v159, %v2676
    %vm3032 = vcmp.eq.s32.totalorder %v160, %v2676
    %vm3033 = vcmp.eq.s32.totalorder %v159, %v2679
    %vm3034 = vcmp.eq.s32.totalorder %v160, %v2679
    %vm3035 = vcmp.eq.s32.totalorder %v159, %v2682
    %vm3036 = vcmp.eq.s32.totalorder %v160, %v2682
    %vm3037 = vcmp.eq.s32.totalorder %v159, %v2685
    %vm3038 = vcmp.eq.s32.totalorder %v160, %v2685
    %vm3039 = vcmp.eq.s32.totalorder %v159, %v2688
    %vm3040 = vcmp.eq.s32.totalorder %v160, %v2688
    %vm3041 = vcmp.eq.s32.totalorder %v159, %v2691
    %vm3042 = vcmp.eq.s32.totalorder %v160, %v2691
    %vm3043 = vcmp.eq.s32.totalorder %v159, %v2694
    %vm3044 = vcmp.eq.s32.totalorder %v160, %v2694
    %vm3045 = vcmp.eq.s32.totalorder %v159, %v2697
    %vm3046 = vcmp.eq.s32.totalorder %v160, %v2697
    %vm3047 = vcmp.eq.s32.totalorder %v159, %v2700
    %vm3048 = vcmp.eq.s32.totalorder %v160, %v2700
    %vm3049 = vcmp.eq.s32.totalorder %v159, %v2703
    %vm3050 = vcmp.eq.s32.totalorder %v160, %v2703
    %vm3051 = vcmp.eq.s32.totalorder %v159, %v2706
    %vm3052 = vcmp.eq.s32.totalorder %v160, %v2706
    %vm3053 = vcmp.eq.s32.totalorder %v159, %v2709
    %vm3054 = vcmp.eq.s32.totalorder %v160, %v2709
    %vm3055 = vcmp.eq.s32.totalorder %v159, %v2712
    %vm3056 = vcmp.eq.s32.totalorder %v160, %v2712
    %vm3057 = vcmp.eq.s32.totalorder %v159, %v2715
    %vm3058 = vcmp.eq.s32.totalorder %v160, %v2715
    %vm3059 = vcmp.eq.s32.totalorder %v159, %v2718
    %vm3060 = vcmp.eq.s32.totalorder %v160, %v2718
    %vm3061 = vcmp.eq.s32.totalorder %v159, %v2721
    %vm3062 = vcmp.eq.s32.totalorder %v160, %v2721
    %vm3063 = vcmp.eq.s32.totalorder %v159, %v2724
    %vm3064 = vcmp.eq.s32.totalorder %v160, %v2724
    %vm3065 = vcmp.eq.s32.totalorder %v159, %v2727
    %vm3066 = vcmp.eq.s32.totalorder %v160, %v2727
    %vm3067 = vcmp.eq.s32.totalorder %v159, %v2730
    %vm3068 = vcmp.eq.s32.totalorder %v160, %v2730
    %vm3069 = vcmp.eq.s32.totalorder %v159, %v2733
    %vm3070 = vcmp.eq.s32.totalorder %v160, %v2733
    %vm3071 = vcmp.eq.s32.totalorder %v159, %v2736
    %vm3072 = vcmp.eq.s32.totalorder %v160, %v2736
    %vm3073 = vcmp.eq.s32.totalorder %v159, %v2739
    %vm3074 = vcmp.eq.s32.totalorder %v160, %v2739
    %vm3075 = vcmp.eq.s32.totalorder %v159, %v2742
    %vm3076 = vcmp.eq.s32.totalorder %v160, %v2742
    %vm3077 = vcmp.eq.s32.totalorder %v159, %v2745
    %vm3078 = vcmp.eq.s32.totalorder %v160, %v2745
    %vm3079 = vcmp.eq.s32.totalorder %v159, %v2748
    %vm3080 = vcmp.eq.s32.totalorder %v160, %v2748
    %vm3081 = vcmp.eq.s32.totalorder %v159, %v2751
    %vm3082 = vcmp.eq.s32.totalorder %v160, %v2751
    %vm3083 = vcmp.eq.s32.totalorder %v159, %v2754
    %vm3084 = vcmp.eq.s32.totalorder %v160, %v2754
    %vm3085 = vcmp.eq.s32.totalorder %v159, %v2757
    %vm3086 = vcmp.eq.s32.totalorder %v160, %v2757
    %vm3087 = vcmp.eq.s32.totalorder %v159, %v2760
    %vm3088 = vcmp.eq.s32.totalorder %v160, %v2760
    %vm3089 = vcmp.eq.s32.totalorder %v159, %v2763
    %vm3090 = vcmp.eq.s32.totalorder %v160, %v2763
    %vm3091 = vcmp.eq.s32.totalorder %v159, %v2766
    %vm3092 = vcmp.eq.s32.totalorder %v160, %v2766
    %vm3093 = vcmp.eq.s32.totalorder %v159, %v2769
    %vm3094 = vcmp.eq.s32.totalorder %v160, %v2769
    %vm3095 = vcmp.eq.s32.totalorder %v159, %v2772
    %vm3096 = vcmp.eq.s32.totalorder %v160, %v2772
    %vm3097 = vcmp.eq.s32.totalorder %v159, %v2775
    %vm3098 = vcmp.eq.s32.totalorder %v160, %v2775
    %vm3099 = vcmp.eq.s32.totalorder %v159, %v2778
    %vm3100 = vcmp.eq.s32.totalorder %v160, %v2778
    %vm3101 = vcmp.eq.s32.totalorder %v159, %v2781
    %vm3102 = vcmp.eq.s32.totalorder %v160, %v2781
    %vm3103 = vcmp.eq.s32.totalorder %v159, %v2784
    %vm3104 = vcmp.eq.s32.totalorder %v160, %v2784
    %vm3105 = vcmp.eq.s32.totalorder %v159, %v2787
    %vm3106 = vcmp.eq.s32.totalorder %v160, %v2787
    %vm3107 = vcmp.eq.s32.totalorder %v159, %v2790
    %vm3108 = vcmp.eq.s32.totalorder %v160, %v2790
    %vm3109 = vcmp.eq.s32.totalorder %v159, %v2793
    %vm3110 = vcmp.eq.s32.totalorder %v160, %v2793
    %vm3111 = vcmp.eq.s32.totalorder %v159, %v2796
    %vm3112 = vcmp.eq.s32.totalorder %v160, %v2796
    %vm3113 = vcmp.eq.s32.totalorder %v159, %v2799
    %vm3114 = vcmp.eq.s32.totalorder %v160, %v2799
    %vm3115 = vcmp.eq.s32.totalorder %v159, %v2802
    %vm3116 = vcmp.eq.s32.totalorder %v160, %v2802
    %vm3117 = vcmp.eq.s32.totalorder %v159, %v2805
    %vm3118 = vcmp.eq.s32.totalorder %v160, %v2805
    %vm3119 = vcmp.eq.s32.totalorder %v159, %v2808
    %vm3120 = vcmp.eq.s32.totalorder %v160, %v2808
    %vm3121 = vcmp.eq.s32.totalorder %v159, %v2811
    %vm3122 = vcmp.eq.s32.totalorder %v160, %v2811
    %vm3123 = vcmp.eq.s32.totalorder %v159, %v2814
    %vm3124 = vcmp.eq.s32.totalorder %v160, %v2814
    %vm3125 = vcmp.eq.s32.totalorder %v159, %v2817
    %vm3126 = vcmp.eq.s32.totalorder %v160, %v2817
    %vm3127 = vcmp.eq.s32.totalorder %v159, %v2820
    %vm3128 = vcmp.eq.s32.totalorder %v160, %v2820
    %vm3129 = vcmp.eq.s32.totalorder %v159, %v2823
    %vm3130 = vcmp.eq.s32.totalorder %v160, %v2823
    %vm3131 = vcmp.eq.s32.totalorder %v159, %v2826
    %vm3132 = vcmp.eq.s32.totalorder %v160, %v2826
    %vm3133 = vcmp.eq.s32.totalorder %v159, %v2829
    %vm3134 = vcmp.eq.s32.totalorder %v160, %v2829
    %vm3135 = vcmp.eq.s32.totalorder %v159, %v2832
    %vm3136 = vcmp.eq.s32.totalorder %v160, %v2832
    %vm3137 = vcmp.eq.s32.totalorder %v159, %v2835
    %vm3138 = vcmp.eq.s32.totalorder %v160, %v2835
    %vm3139 = vcmp.eq.s32.totalorder %v159, %v2838
    %vm3140 = vcmp.eq.s32.totalorder %v160, %v2838
    %vm3141 = vcmp.eq.s32.totalorder %v159, %v2841
    %vm3142 = vcmp.eq.s32.totalorder %v160, %v2841
    %vm3143 = vcmp.eq.s32.totalorder %v159, %v2844
    %vm3144 = vcmp.eq.s32.totalorder %v160, %v2844
    %vm3145 = vcmp.eq.s32.totalorder %v159, %v2847
    %vm3146 = vcmp.eq.s32.totalorder %v160, %v2847
    %vm3147 = vcmp.eq.s32.totalorder %v159, %v2850
    %vm3148 = vcmp.eq.s32.totalorder %v160, %v2850
    %vm3149 = vcmp.eq.s32.totalorder %v159, %v2853
    %vm3150 = vcmp.eq.s32.totalorder %v160, %v2853
    %vm3151 = vcmp.eq.s32.totalorder %v159, %v2856
    %vm3152 = vcmp.eq.s32.totalorder %v160, %v2856
    %vm3153 = vcmp.eq.s32.totalorder %v159, %v2859
    %vm3154 = vcmp.eq.s32.totalorder %v160, %v2859
    %vm3155 = vcmp.eq.s32.totalorder %v159, %v2862
    %vm3156 = vcmp.eq.s32.totalorder %v160, %v2862
    %vm3157 = vcmp.eq.s32.totalorder %v159, %v2865
    %vm3158 = vcmp.eq.s32.totalorder %v160, %v2865
    %vm3159 = vcmp.eq.s32.totalorder %v159, %v2868
    %vm3160 = vcmp.eq.s32.totalorder %v160, %v2868
    %vm3161 = vcmp.eq.s32.totalorder %v159, %v2871
    %vm3162 = vcmp.eq.s32.totalorder %v160, %v2871
    %vm3163 = vcmp.eq.s32.totalorder %v159, %v2874
    %vm3164 = vcmp.eq.s32.totalorder %v160, %v2874
    %vm3165 = vcmp.eq.s32.totalorder %v159, %v2877
    %vm3166 = vcmp.eq.s32.totalorder %v160, %v2877
    %vm3167 = vcmp.eq.s32.totalorder %v159, %v2880
    %vm3168 = vcmp.eq.s32.totalorder %v160, %v2880
    %vm3169 = vcmp.eq.s32.totalorder %v159, %v2883
    %vm3170 = vcmp.eq.s32.totalorder %v160, %v2883
    %vm3171 = vcmp.eq.s32.totalorder %v159, %v2886
    %vm3172 = vcmp.eq.s32.totalorder %v160, %v2886
    %vm3173 = vcmp.eq.s32.totalorder %v159, %v2889
    %vm3174 = vcmp.eq.s32.totalorder %v160, %v2889
    %vm3175 = vcmp.eq.s32.totalorder %v159, %v2892
    %vm3176 = vcmp.eq.s32.totalorder %v160, %v2892
    %vm3177 = vcmp.eq.s32.totalorder %v159, %v2895
    %vm3178 = vcmp.eq.s32.totalorder %v160, %v2895
    %vm3179 = vcmp.eq.s32.totalorder %v159, %v2898
    %vm3180 = vcmp.eq.s32.totalorder %v160, %v2898
    %vm3181 = vcmp.eq.s32.totalorder %v159, %v2901
    %vm3182 = vcmp.eq.s32.totalorder %v160, %v2901
    %vm3183 = vcmp.eq.s32.totalorder %v159, %v2904
    %vm3184 = vcmp.eq.s32.totalorder %v160, %v2904
    %vm3185 = vcmp.eq.s32.totalorder %v159, %v2907
    %vm3186 = vcmp.eq.s32.totalorder %v160, %v2907
    %vm3187 = vcmp.eq.s32.totalorder %v159, %v2910
    %vm3188 = vcmp.eq.s32.totalorder %v160, %v2910
    %vm3189 = vcmp.eq.s32.totalorder %v159, %v2913
    %vm3190 = vcmp.eq.s32.totalorder %v160, %v2913
    %vm3191 = vcmp.eq.s32.totalorder %v159, %v2916
    %vm3192 = vcmp.eq.s32.totalorder %v160, %v2916
    %vm3193 = vcmp.eq.s32.totalorder %v159, %v2919
    %vm3194 = vcmp.eq.s32.totalorder %v160, %v2919
    %vm3195 = vcmp.eq.s32.totalorder %v159, %v2922
    %vm3196 = vcmp.eq.s32.totalorder %v160, %v2922
    %vm3197 = vcmp.eq.s32.totalorder %v159, %v2925
    %vm3198 = vcmp.eq.s32.totalorder %v160, %v2925
    %vm3199 = vcmp.eq.s32.totalorder %v159, %v2928
    %vm3200 = vcmp.eq.s32.totalorder %v160, %v2928
    %vm3201 = vcmp.eq.s32.totalorder %v159, %v2931
    %vm3202 = vcmp.eq.s32.totalorder %v160, %v2931
    %vm3203 = vcmp.eq.s32.totalorder %v159, %v2934
    %vm3204 = vcmp.eq.s32.totalorder %v160, %v2934
    %vm3205 = vcmp.eq.s32.totalorder %v159, %v2937
    %vm3206 = vcmp.eq.s32.totalorder %v160, %v2937
    %vm3207 = vcmp.eq.s32.totalorder %v159, %v2940
    %vm3208 = vcmp.eq.s32.totalorder %v160, %v2940
    %vm3209 = vcmp.eq.s32.totalorder %v159, %v2943
    %vm3210 = vcmp.eq.s32.totalorder %v160, %v2943
    %vm3211 = vcmp.eq.s32.totalorder %v159, %v2946
    %vm3212 = vcmp.eq.s32.totalorder %v160, %v2946
    %vm3213 = vcmp.eq.s32.totalorder %v159, %v2949
    %vm3214 = vcmp.eq.s32.totalorder %v160, %v2949
    %vm3215 = vcmp.eq.s32.totalorder %v159, %v2952
    %vm3216 = vcmp.eq.s32.totalorder %v160, %v2952
    %vm3217 = vcmp.eq.s32.totalorder %v159, %v2955
    %vm3218 = vcmp.eq.s32.totalorder %v160, %v2955
    %vm3219 = vcmp.eq.s32.totalorder %v159, %v2958
    %vm3220 = vcmp.eq.s32.totalorder %v160, %v2958
    %vm3221 = vcmp.eq.s32.totalorder %v159, %v2961
    %vm3222 = vcmp.eq.s32.totalorder %v160, %v2961
    %vm3223 = vcmp.eq.s32.totalorder %v159, %v2964
    %vm3224 = vcmp.eq.s32.totalorder %v160, %v2964
    %vm3225 = vcmp.eq.s32.totalorder %v159, %v2967
    %vm3226 = vcmp.eq.s32.totalorder %v160, %v2967
    %vm3227 = vcmp.eq.s32.totalorder %v159, %v2970
    %vm3228 = vcmp.eq.s32.totalorder %v160, %v2970
    %vm3229 = vcmp.eq.s32.totalorder %v159, %v2973
    %vm3230 = vcmp.eq.s32.totalorder %v160, %v2973
    %vm3231 = vcmp.eq.s32.totalorder %v159, %v2976
    %vm3232 = vcmp.eq.s32.totalorder %v160, %v2976
    %vm3233 = vmor %vm2337, %vm2977
    %vm3234 = vmor %vm2338, %vm2978
    %vm3235 = vmor %vm2339, %vm2979
    %vm3236 = vmor %vm2340, %vm2980
    %vm3237 = vmor %vm2341, %vm2981
    %vm3238 = vmor %vm2342, %vm2982
    %vm3239 = vmor %vm2343, %vm2983
    %vm3240 = vmor %vm2344, %vm2984
    %vm3241 = vmor %vm2345, %vm2985
    %vm3242 = vmor %vm2346, %vm2986
    %vm3243 = vmor %vm2347, %vm2987
    %vm3244 = vmor %vm2348, %vm2988
    %vm3245 = vmor %vm2349, %vm2989
    %vm3246 = vmor %vm2350, %vm2990
    %vm3247 = vmor %vm2351, %vm2991
    %vm3248 = vmor %vm2352, %vm2992
    %vm3249 = vmor %vm2353, %vm2993
    %vm3250 = vmor %vm2354, %vm2994
    %vm3251 = vmor %vm2355, %vm2995
    %vm3252 = vmor %vm2356, %vm2996
    %vm3253 = vmor %vm2357, %vm2997
    %vm3254 = vmor %vm2358, %vm2998
    %vm3255 = vmor %vm2359, %vm2999
    %vm3256 = vmor %vm2360, %vm3000
    %vm3257 = vmor %vm2361, %vm3001
    %vm3258 = vmor %vm2362, %vm3002
    %vm3259 = vmor %vm2363, %vm3003
    %vm3260 = vmor %vm2364, %vm3004
    %vm3261 = vmor %vm2365, %vm3005
    %vm3262 = vmor %vm2366, %vm3006
    %vm3263 = vmor %vm2367, %vm3007
    %vm3264 = vmor %vm2368, %vm3008
    %vm3265 = vmor %vm2369, %vm3009
    %vm3266 = vmor %vm2370, %vm3010
    %vm3267 = vmor %vm2371, %vm3011
    %vm3268 = vmor %vm2372, %vm3012
    %vm3269 = vmor %vm2373, %vm3013
    %vm3270 = vmor %vm2374, %vm3014
    %vm3271 = vmor %vm2375, %vm3015
    %vm3272 = vmor %vm2376, %vm3016
    %vm3273 = vmor %vm2377, %vm3017
    %vm3274 = vmor %vm2378, %vm3018
    %vm3275 = vmor %vm2379, %vm3019
    %vm3276 = vmor %vm2380, %vm3020
    %vm3277 = vmor %vm2381, %vm3021
    %vm3278 = vmor %vm2382, %vm3022
    %vm3279 = vmor %vm2383, %vm3023
    %vm3280 = vmor %vm2384, %vm3024
    %vm3281 = vmor %vm2385, %vm3025
    %vm3282 = vmor %vm2386, %vm3026
    %vm3283 = vmor %vm2387, %vm3027
    %vm3284 = vmor %vm2388, %vm3028
    %vm3285 = vmor %vm2389, %vm3029
    %vm3286 = vmor %vm2390, %vm3030
    %vm3287 = vmor %vm2391, %vm3031
    %vm3288 = vmor %vm2392, %vm3032
    %vm3289 = vmor %vm2393, %vm3033
    %vm3290 = vmor %vm2394, %vm3034
    %vm3291 = vmor %vm2395, %vm3035
    %vm3292 = vmor %vm2396, %vm3036
    %vm3293 = vmor %vm2397, %vm3037
    %vm3294 = vmor %vm2398, %vm3038
    %vm3295 = vmor %vm2399, %vm3039
    %vm3296 = vmor %vm2400, %vm3040
    %vm3297 = vmor %vm2401, %vm3041
    %vm3298 = vmor %vm2402, %vm3042
    %vm3299 = vmor %vm2403, %vm3043
    %vm3300 = vmor %vm2404, %vm3044
    %vm3301 = vmor %vm2405, %vm3045
    %vm3302 = vmor %vm2406, %vm3046
    %vm3303 = vmor %vm2407, %vm3047
    %vm3304 = vmor %vm2408, %vm3048
    %vm3305 = vmor %vm2409, %vm3049
    %vm3306 = vmor %vm2410, %vm3050
    %vm3307 = vmor %vm2411, %vm3051
    %vm3308 = vmor %vm2412, %vm3052
    %vm3309 = vmor %vm2413, %vm3053
    %vm3310 = vmor %vm2414, %vm3054
    %vm3311 = vmor %vm2415, %vm3055
    %vm3312 = vmor %vm2416, %vm3056
    %vm3313 = vmor %vm2417, %vm3057
    %vm3314 = vmor %vm2418, %vm3058
    %vm3315 = vmor %vm2419, %vm3059
    %vm3316 = vmor %vm2420, %vm3060
    %vm3317 = vmor %vm2421, %vm3061
    %vm3318 = vmor %vm2422, %vm3062
    %vm3319 = vmor %vm2423, %vm3063
    %vm3320 = vmor %vm2424, %vm3064
    %vm3321 = vmor %vm2425, %vm3065
    %vm3322 = vmor %vm2426, %vm3066
    %vm3323 = vmor %vm2427, %vm3067
    %vm3324 = vmor %vm2428, %vm3068
    %vm3325 = vmor %vm2429, %vm3069
    %vm3326 = vmor %vm2430, %vm3070
    %vm3327 = vmor %vm2431, %vm3071
    %vm3328 = vmor %vm2432, %vm3072
    %vm3329 = vmor %vm2433, %vm3073
    %vm3330 = vmor %vm2434, %vm3074
    %vm3331 = vmor %vm2435, %vm3075
    %vm3332 = vmor %vm2436, %vm3076
    %vm3333 = vmor %vm2437, %vm3077
    %vm3334 = vmor %vm2438, %vm3078
    %vm3335 = vmor %vm2439, %vm3079
    %vm3336 = vmor %vm2440, %vm3080
    %vm3337 = vmor %vm2441, %vm3081
    %vm3338 = vmor %vm2442, %vm3082
    %vm3339 = vmor %vm2443, %vm3083
    %vm3340 = vmor %vm2444, %vm3084
    %vm3341 = vmor %vm2445, %vm3085
    %vm3342 = vmor %vm2446, %vm3086
    %vm3343 = vmor %vm2447, %vm3087
    %vm3344 = vmor %vm2448, %vm3088
    %vm3345 = vmor %vm2449, %vm3089
    %vm3346 = vmor %vm2450, %vm3090
    %vm3347 = vmor %vm2451, %vm3091
    %vm3348 = vmor %vm2452, %vm3092
    %vm3349 = vmor %vm2453, %vm3093
    %vm3350 = vmor %vm2454, %vm3094
    %vm3351 = vmor %vm2455, %vm3095
    %vm3352 = vmor %vm2456, %vm3096
    %vm3353 = vmor %vm2457, %vm3097
    %vm3354 = vmor %vm2458, %vm3098
    %vm3355 = vmor %vm2459, %vm3099
    %vm3356 = vmor %vm2460, %vm3100
    %vm3357 = vmor %vm2461, %vm3101
    %vm3358 = vmor %vm2462, %vm3102
    %vm3359 = vmor %vm2463, %vm3103
    %vm3360 = vmor %vm2464, %vm3104
    %vm3361 = vmor %vm2465, %vm3105
    %vm3362 = vmor %vm2466, %vm3106
    %vm3363 = vmor %vm2467, %vm3107
    %vm3364 = vmor %vm2468, %vm3108
    %vm3365 = vmor %vm2469, %vm3109
    %vm3366 = vmor %vm2470, %vm3110
    %vm3367 = vmor %vm2471, %vm3111
    %vm3368 = vmor %vm2472, %vm3112
    %vm3369 = vmor %vm2473, %vm3113
    %vm3370 = vmor %vm2474, %vm3114
    %vm3371 = vmor %vm2475, %vm3115
    %vm3372 = vmor %vm2476, %vm3116
    %vm3373 = vmor %vm2477, %vm3117
    %vm3374 = vmor %vm2478, %vm3118
    %vm3375 = vmor %vm2479, %vm3119
    %vm3376 = vmor %vm2480, %vm3120
    %vm3377 = vmor %vm2481, %vm3121
    %vm3378 = vmor %vm2482, %vm3122
    %vm3379 = vmor %vm2483, %vm3123
    %vm3380 = vmor %vm2484, %vm3124
    %vm3381 = vmor %vm2485, %vm3125
    %vm3382 = vmor %vm2486, %vm3126
    %vm3383 = vmor %vm2487, %vm3127
    %vm3384 = vmor %vm2488, %vm3128
    %vm3385 = vmor %vm2489, %vm3129
    %vm3386 = vmor %vm2490, %vm3130
    %vm3387 = vmor %vm2491, %vm3131
    %vm3388 = vmor %vm2492, %vm3132
    %vm3389 = vmor %vm2493, %vm3133
    %vm3390 = vmor %vm2494, %vm3134
    %vm3391 = vmor %vm2495, %vm3135
    %vm3392 = vmor %vm2496, %vm3136
    %vm3393 = vmor %vm2497, %vm3137
    %vm3394 = vmor %vm2498, %vm3138
    %vm3395 = vmor %vm2499, %vm3139
    %vm3396 = vmor %vm2500, %vm3140
    %vm3397 = vmor %vm2501, %vm3141
    %vm3398 = vmor %vm2502, %vm3142
    %vm3399 = vmor %vm2503, %vm3143
    %vm3400 = vmor %vm2504, %vm3144
    %vm3401 = vmor %vm2505, %vm3145
    %vm3402 = vmor %vm2506, %vm3146
    %vm3403 = vmor %vm2507, %vm3147
    %vm3404 = vmor %vm2508, %vm3148
    %vm3405 = vmor %vm2509, %vm3149
    %vm3406 = vmor %vm2510, %vm3150
    %vm3407 = vmor %vm2511, %vm3151
    %vm3408 = vmor %vm2512, %vm3152
    %vm3409 = vmor %vm2513, %vm3153
    %vm3410 = vmor %vm2514, %vm3154
    %vm3411 = vmor %vm2515, %vm3155
    %vm3412 = vmor %vm2516, %vm3156
    %vm3413 = vmor %vm2517, %vm3157
    %vm3414 = vmor %vm2518, %vm3158
    %vm3415 = vmor %vm2519, %vm3159
    %vm3416 = vmor %vm2520, %vm3160
    %vm3417 = vmor %vm2521, %vm3161
    %vm3418 = vmor %vm2522, %vm3162
    %vm3419 = vmor %vm2523, %vm3163
    %vm3420 = vmor %vm2524, %vm3164
    %vm3421 = vmor %vm2525, %vm3165
    %vm3422 = vmor %vm2526, %vm3166
    %vm3423 = vmor %vm2527, %vm3167
    %vm3424 = vmor %vm2528, %vm3168
    %vm3425 = vmor %vm2529, %vm3169
    %vm3426 = vmor %vm2530, %vm3170
    %vm3427 = vmor %vm2531, %vm3171
    %vm3428 = vmor %vm2532, %vm3172
    %vm3429 = vmor %vm2533, %vm3173
    %vm3430 = vmor %vm2534, %vm3174
    %vm3431 = vmor %vm2535, %vm3175
    %vm3432 = vmor %vm2536, %vm3176
    %vm3433 = vmor %vm2537, %vm3177
    %vm3434 = vmor %vm2538, %vm3178
    %vm3435 = vmor %vm2539, %vm3179
    %vm3436 = vmor %vm2540, %vm3180
    %vm3437 = vmor %vm2541, %vm3181
    %vm3438 = vmor %vm2542, %vm3182
    %vm3439 = vmor %vm2543, %vm3183
    %vm3440 = vmor %vm2544, %vm3184
    %vm3441 = vmor %vm2545, %vm3185
    %vm3442 = vmor %vm2546, %vm3186
    %vm3443 = vmor %vm2547, %vm3187
    %vm3444 = vmor %vm2548, %vm3188
    %vm3445 = vmor %vm2549, %vm3189
    %vm3446 = vmor %vm2550, %vm3190
    %vm3447 = vmor %vm2551, %vm3191
    %vm3448 = vmor %vm2552, %vm3192
    %vm3449 = vmor %vm2553, %vm3193
    %vm3450 = vmor %vm2554, %vm3194
    %vm3451 = vmor %vm2555, %vm3195
    %vm3452 = vmor %vm2556, %vm3196
    %vm3453 = vmor %vm2557, %vm3197
    %vm3454 = vmor %vm2558, %vm3198
    %vm3455 = vmor %vm2559, %vm3199
    %vm3456 = vmor %vm2560, %vm3200
    %vm3457 = vmor %vm2561, %vm3201
    %vm3458 = vmor %vm2562, %vm3202
    %vm3459 = vmor %vm2563, %vm3203
    %vm3460 = vmor %vm2564, %vm3204
    %vm3461 = vmor %vm2565, %vm3205
    %vm3462 = vmor %vm2566, %vm3206
    %vm3463 = vmor %vm2567, %vm3207
    %vm3464 = vmor %vm2568, %vm3208
    %vm3465 = vmor %vm2569, %vm3209
    %vm3466 = vmor %vm2570, %vm3210
    %vm3467 = vmor %vm2571, %vm3211
    %vm3468 = vmor %vm2572, %vm3212
    %vm3469 = vmor %vm2573, %vm3213
    %vm3470 = vmor %vm2574, %vm3214
    %vm3471 = vmor %vm2575, %vm3215
    %vm3472 = vmor %vm2576, %vm3216
    %vm3473 = vmor %vm2577, %vm3217
    %vm3474 = vmor %vm2578, %vm3218
    %vm3475 = vmor %vm2579, %vm3219
    %vm3476 = vmor %vm2580, %vm3220
    %vm3477 = vmor %vm2581, %vm3221
    %vm3478 = vmor %vm2582, %vm3222
    %vm3479 = vmor %vm2583, %vm3223
    %vm3480 = vmor %vm2584, %vm3224
    %vm3481 = vmor %vm2585, %vm3225
    %vm3482 = vmor %vm2586, %vm3226
    %vm3483 = vmor %vm2587, %vm3227
    %vm3484 = vmor %vm2588, %vm3228
    %vm3485 = vmor %vm2589, %vm3229
    %vm3486 = vmor %vm2590, %vm3230
    %vm3487 = vmor %vm2591, %vm3231
    %vm3488 = vmor %vm2592, %vm3232
    %v3489 = vsel %vm3233, 1, 0
    %v3490 = vsel %vm3234, 1, 0
    %v3491 = vsel %vm3235, 1, 0
    %v3492 = vsel %vm3236, 1, 0
    %v3493 = vsel %vm3237, 1, 0
    %v3494 = vsel %vm3238, 1, 0
    %v3495 = vsel %vm3239, 1, 0
    %v3496 = vsel %vm3240, 1, 0
    %v3497 = vsel %vm3241, 1, 0
    %v3498 = vsel %vm3242, 1, 0
    %v3499 = vsel %vm3243, 1, 0
    %v3500 = vsel %vm3244, 1, 0
    %v3501 = vsel %vm3245, 1, 0
    %v3502 = vsel %vm3246, 1, 0
    %v3503 = vsel %vm3247, 1, 0
    %v3504 = vsel %vm3248, 1, 0
    %v3505 = vsel %vm3249, 1, 0
    %v3506 = vsel %vm3250, 1, 0
    %v3507 = vsel %vm3251, 1, 0
    %v3508 = vsel %vm3252, 1, 0
    %v3509 = vsel %vm3253, 1, 0
    %v3510 = vsel %vm3254, 1, 0
    %v3511 = vsel %vm3255, 1, 0
    %v3512 = vsel %vm3256, 1, 0
    %v3513 = vsel %vm3257, 1, 0
    %v3514 = vsel %vm3258, 1, 0
    %v3515 = vsel %vm3259, 1, 0
    %v3516 = vsel %vm3260, 1, 0
    %v3517 = vsel %vm3261, 1, 0
    %v3518 = vsel %vm3262, 1, 0
    %v3519 = vsel %vm3263, 1, 0
    %v3520 = vsel %vm3264, 1, 0
    %v3521 = vsel %vm3265, 1, 0
    %v3522 = vsel %vm3266, 1, 0
    %v3523 = vsel %vm3267, 1, 0
    %v3524 = vsel %vm3268, 1, 0
    %v3525 = vsel %vm3269, 1, 0
    %v3526 = vsel %vm3270, 1, 0
    %v3527 = vsel %vm3271, 1, 0
    %v3528 = vsel %vm3272, 1, 0
    %v3529 = vsel %vm3273, 1, 0
    %v3530 = vsel %vm3274, 1, 0
    %v3531 = vsel %vm3275, 1, 0
    %v3532 = vsel %vm3276, 1, 0
    %v3533 = vsel %vm3277, 1, 0
    %v3534 = vsel %vm3278, 1, 0
    %v3535 = vsel %vm3279, 1, 0
    %v3536 = vsel %vm3280, 1, 0
    %v3537 = vsel %vm3281, 1, 0
    %v3538 = vsel %vm3282, 1, 0
    %v3539 = vsel %vm3283, 1, 0
    %v3540 = vsel %vm3284, 1, 0
    %v3541 = vsel %vm3285, 1, 0
    %v3542 = vsel %vm3286, 1, 0
    %v3543 = vsel %vm3287, 1, 0
    %v3544 = vsel %vm3288, 1, 0
    %v3545 = vsel %vm3289, 1, 0
    %v3546 = vsel %vm3290, 1, 0
    %v3547 = vsel %vm3291, 1, 0
    %v3548 = vsel %vm3292, 1, 0
    %v3549 = vsel %vm3293, 1, 0
    %v3550 = vsel %vm3294, 1, 0
    %v3551 = vsel %vm3295, 1, 0
    %v3552 = vsel %vm3296, 1, 0
    %v3553 = vsel %vm3297, 1, 0
    %v3554 = vsel %vm3298, 1, 0
    %v3555 = vsel %vm3299, 1, 0
    %v3556 = vsel %vm3300, 1, 0
    %v3557 = vsel %vm3301, 1, 0
    %v3558 = vsel %vm3302, 1, 0
    %v3559 = vsel %vm3303, 1, 0
    %v3560 = vsel %vm3304, 1, 0
    %v3561 = vsel %vm3305, 1, 0
    %v3562 = vsel %vm3306, 1, 0
    %v3563 = vsel %vm3307, 1, 0
    %v3564 = vsel %vm3308, 1, 0
    %v3565 = vsel %vm3309, 1, 0
    %v3566 = vsel %vm3310, 1, 0
    %v3567 = vsel %vm3311, 1, 0
    %v3568 = vsel %vm3312, 1, 0
    %v3569 = vsel %vm3313, 1, 0
    %v3570 = vsel %vm3314, 1, 0
    %v3571 = vsel %vm3315, 1, 0
    %v3572 = vsel %vm3316, 1, 0
    %v3573 = vsel %vm3317, 1, 0
    %v3574 = vsel %vm3318, 1, 0
    %v3575 = vsel %vm3319, 1, 0
    %v3576 = vsel %vm3320, 1, 0
    %v3577 = vsel %vm3321, 1, 0
    %v3578 = vsel %vm3322, 1, 0
    %v3579 = vsel %vm3323, 1, 0
    %v3580 = vsel %vm3324, 1, 0
    %v3581 = vsel %vm3325, 1, 0
    %v3582 = vsel %vm3326, 1, 0
    %v3583 = vsel %vm3327, 1, 0
    %v3584 = vsel %vm3328, 1, 0
    %v3585 = vsel %vm3329, 1, 0
    %v3586 = vsel %vm3330, 1, 0
    %v3587 = vsel %vm3331, 1, 0
    %v3588 = vsel %vm3332, 1, 0
    %v3589 = vsel %vm3333, 1, 0
    %v3590 = vsel %vm3334, 1, 0
    %v3591 = vsel %vm3335, 1, 0
    %v3592 = vsel %vm3336, 1, 0
    %v3593 = vsel %vm3337, 1, 0
    %v3594 = vsel %vm3338, 1, 0
    %v3595 = vsel %vm3339, 1, 0
    %v3596 = vsel %vm3340, 1, 0
    %v3597 = vsel %vm3341, 1, 0
    %v3598 = vsel %vm3342, 1, 0
    %v3599 = vsel %vm3343, 1, 0
    %v3600 = vsel %vm3344, 1, 0
    %v3601 = vsel %vm3345, 1, 0
    %v3602 = vsel %vm3346, 1, 0
    %v3603 = vsel %vm3347, 1, 0
    %v3604 = vsel %vm3348, 1, 0
    %v3605 = vsel %vm3349, 1, 0
    %v3606 = vsel %vm3350, 1, 0
    %v3607 = vsel %vm3351, 1, 0
    %v3608 = vsel %vm3352, 1, 0
    %v3609 = vsel %vm3353, 1, 0
    %v3610 = vsel %vm3354, 1, 0
    %v3611 = vsel %vm3355, 1, 0
    %v3612 = vsel %vm3356, 1, 0
    %v3613 = vsel %vm3357, 1, 0
    %v3614 = vsel %vm3358, 1, 0
    %v3615 = vsel %vm3359, 1, 0
    %v3616 = vsel %vm3360, 1, 0
    %v3617 = vsel %vm3361, 1, 0
    %v3618 = vsel %vm3362, 1, 0
    %v3619 = vsel %vm3363, 1, 0
    %v3620 = vsel %vm3364, 1, 0
    %v3621 = vsel %vm3365, 1, 0
    %v3622 = vsel %vm3366, 1, 0
    %v3623 = vsel %vm3367, 1, 0
    %v3624 = vsel %vm3368, 1, 0
    %v3625 = vsel %vm3369, 1, 0
    %v3626 = vsel %vm3370, 1, 0
    %v3627 = vsel %vm3371, 1, 0
    %v3628 = vsel %vm3372, 1, 0
    %v3629 = vsel %vm3373, 1, 0
    %v3630 = vsel %vm3374, 1, 0
    %v3631 = vsel %vm3375, 1, 0
    %v3632 = vsel %vm3376, 1, 0
    %v3633 = vsel %vm3377, 1, 0
    %v3634 = vsel %vm3378, 1, 0
    %v3635 = vsel %vm3379, 1, 0
    %v3636 = vsel %vm3380, 1, 0
    %v3637 = vsel %vm3381, 1, 0
    %v3638 = vsel %vm3382, 1, 0
    %v3639 = vsel %vm3383, 1, 0
    %v3640 = vsel %vm3384, 1, 0
    %v3641 = vsel %vm3385, 1, 0
    %v3642 = vsel %vm3386, 1, 0
    %v3643 = vsel %vm3387, 1, 0
    %v3644 = vsel %vm3388, 1, 0
    %v3645 = vsel %vm3389, 1, 0
    %v3646 = vsel %vm3390, 1, 0
    %v3647 = vsel %vm3391, 1, 0
    %v3648 = vsel %vm3392, 1, 0
    %v3649 = vsel %vm3393, 1, 0
    %v3650 = vsel %vm3394, 1, 0
    %v3651 = vsel %vm3395, 1, 0
    %v3652 = vsel %vm3396, 1, 0
    %v3653 = vsel %vm3397, 1, 0
    %v3654 = vsel %vm3398, 1, 0
    %v3655 = vsel %vm3399, 1, 0
    %v3656 = vsel %vm3400, 1, 0
    %v3657 = vsel %vm3401, 1, 0
    %v3658 = vsel %vm3402, 1, 0
    %v3659 = vsel %vm3403, 1, 0
    %v3660 = vsel %vm3404, 1, 0
    %v3661 = vsel %vm3405, 1, 0
    %v3662 = vsel %vm3406, 1, 0
    %v3663 = vsel %vm3407, 1, 0
    %v3664 = vsel %vm3408, 1, 0
    %v3665 = vsel %vm3409, 1, 0
    %v3666 = vsel %vm3410, 1, 0
    %v3667 = vsel %vm3411, 1, 0
    %v3668 = vsel %vm3412, 1, 0
    %v3669 = vsel %vm3413, 1, 0
    %v3670 = vsel %vm3414, 1, 0
    %v3671 = vsel %vm3415, 1, 0
    %v3672 = vsel %vm3416, 1, 0
    %v3673 = vsel %vm3417, 1, 0
    %v3674 = vsel %vm3418, 1, 0
    %v3675 = vsel %vm3419, 1, 0
    %v3676 = vsel %vm3420, 1, 0
    %v3677 = vsel %vm3421, 1, 0
    %v3678 = vsel %vm3422, 1, 0
    %v3679 = vsel %vm3423, 1, 0
    %v3680 = vsel %vm3424, 1, 0
    %v3681 = vsel %vm3425, 1, 0
    %v3682 = vsel %vm3426, 1, 0
    %v3683 = vsel %vm3427, 1, 0
    %v3684 = vsel %vm3428, 1, 0
    %v3685 = vsel %vm3429, 1, 0
    %v3686 = vsel %vm3430, 1, 0
    %v3687 = vsel %vm3431, 1, 0
    %v3688 = vsel %vm3432, 1, 0
    %v3689 = vsel %vm3433, 1, 0
    %v3690 = vsel %vm3434, 1, 0
    %v3691 = vsel %vm3435, 1, 0
    %v3692 = vsel %vm3436, 1, 0
    %v3693 = vsel %vm3437, 1, 0
    %v3694 = vsel %vm3438, 1, 0
    %v3695 = vsel %vm3439, 1, 0
    %v3696 = vsel %vm3440, 1, 0
    %v3697 = vsel %vm3441, 1, 0
    %v3698 = vsel %vm3442, 1, 0
    %v3699 = vsel %vm3443, 1, 0
    %v3700 = vsel %vm3444, 1, 0
    %v3701 = vsel %vm3445, 1, 0
    %v3702 = vsel %vm3446, 1, 0
    %v3703 = vsel %vm3447, 1, 0
    %v3704 = vsel %vm3448, 1, 0
    %v3705 = vsel %vm3449, 1, 0
    %v3706 = vsel %vm3450, 1, 0
    %v3707 = vsel %vm3451, 1, 0
    %v3708 = vsel %vm3452, 1, 0
    %v3709 = vsel %vm3453, 1, 0
    %v3710 = vsel %vm3454, 1, 0
    %v3711 = vsel %vm3455, 1, 0
    %v3712 = vsel %vm3456, 1, 0
    %v3713 = vsel %vm3457, 1, 0
    %v3714 = vsel %vm3458, 1, 0
    %v3715 = vsel %vm3459, 1, 0
    %v3716 = vsel %vm3460, 1, 0
    %v3717 = vsel %vm3461, 1, 0
    %v3718 = vsel %vm3462, 1, 0
    %v3719 = vsel %vm3463, 1, 0
    %v3720 = vsel %vm3464, 1, 0
    %v3721 = vsel %vm3465, 1, 0
    %v3722 = vsel %vm3466, 1, 0
    %v3723 = vsel %vm3467, 1, 0
    %v3724 = vsel %vm3468, 1, 0
    %v3725 = vsel %vm3469, 1, 0
    %v3726 = vsel %vm3470, 1, 0
    %v3727 = vsel %vm3471, 1, 0
    %v3728 = vsel %vm3472, 1, 0
    %v3729 = vsel %vm3473, 1, 0
    %v3730 = vsel %vm3474, 1, 0
    %v3731 = vsel %vm3475, 1, 0
    %v3732 = vsel %vm3476, 1, 0
    %v3733 = vsel %vm3477, 1, 0
    %v3734 = vsel %vm3478, 1, 0
    %v3735 = vsel %vm3479, 1, 0
    %v3736 = vsel %vm3480, 1, 0
    %v3737 = vsel %vm3481, 1, 0
    %v3738 = vsel %vm3482, 1, 0
    %v3739 = vsel %vm3483, 1, 0
    %v3740 = vsel %vm3484, 1, 0
    %v3741 = vsel %vm3485, 1, 0
    %v3742 = vsel %vm3486, 1, 0
    %v3743 = vsel %vm3487, 1, 0
    %v3744 = vsel %vm3488, 1, 0
    %v3745 = vcvt.s32.f32 %v3489
    %v3746 = vcvt.s32.f32 %v3490
    %v3747 = vcvt.s32.f32 %v3491
    %v3748 = vcvt.s32.f32 %v3492
    %v3749 = vcvt.s32.f32 %v3493
    %v3750 = vcvt.s32.f32 %v3494
    %v3751 = vcvt.s32.f32 %v3495
    %v3752 = vcvt.s32.f32 %v3496
    %v3753 = vcvt.s32.f32 %v3497
    %v3754 = vcvt.s32.f32 %v3498
    %v3755 = vcvt.s32.f32 %v3499
    %v3756 = vcvt.s32.f32 %v3500
    %v3757 = vcvt.s32.f32 %v3501
    %v3758 = vcvt.s32.f32 %v3502
    %v3759 = vcvt.s32.f32 %v3503
    %v3760 = vcvt.s32.f32 %v3504
    %v3761 = vcvt.s32.f32 %v3505
    %v3762 = vcvt.s32.f32 %v3506
    %v3763 = vcvt.s32.f32 %v3507
    %v3764 = vcvt.s32.f32 %v3508
    %v3765 = vcvt.s32.f32 %v3509
    %v3766 = vcvt.s32.f32 %v3510
    %v3767 = vcvt.s32.f32 %v3511
    %v3768 = vcvt.s32.f32 %v3512
    %v3769 = vcvt.s32.f32 %v3513
    %v3770 = vcvt.s32.f32 %v3514
    %v3771 = vcvt.s32.f32 %v3515
    %v3772 = vcvt.s32.f32 %v3516
    %v3773 = vcvt.s32.f32 %v3517
    %v3774 = vcvt.s32.f32 %v3518
    %v3775 = vcvt.s32.f32 %v3519
    %v3776 = vcvt.s32.f32 %v3520
    %v3777 = vcvt.s32.f32 %v3521
    %v3778 = vcvt.s32.f32 %v3522
    %v3779 = vcvt.s32.f32 %v3523
    %v3780 = vcvt.s32.f32 %v3524
    %v3781 = vcvt.s32.f32 %v3525
    %v3782 = vcvt.s32.f32 %v3526
    %v3783 = vcvt.s32.f32 %v3527
    %v3784 = vcvt.s32.f32 %v3528
    %v3785 = vcvt.s32.f32 %v3529
    %v3786 = vcvt.s32.f32 %v3530
    %v3787 = vcvt.s32.f32 %v3531
    %v3788 = vcvt.s32.f32 %v3532
    %v3789 = vcvt.s32.f32 %v3533
    %v3790 = vcvt.s32.f32 %v3534
    %v3791 = vcvt.s32.f32 %v3535
    %v3792 = vcvt.s32.f32 %v3536
    %v3793 = vcvt.s32.f32 %v3537
    %v3794 = vcvt.s32.f32 %v3538
    %v3795 = vcvt.s32.f32 %v3539
    %v3796 = vcvt.s32.f32 %v3540
    %v3797 = vcvt.s32.f32 %v3541
    %v3798 = vcvt.s32.f32 %v3542
    %v3799 = vcvt.s32.f32 %v3543
    %v3800 = vcvt.s32.f32 %v3544
    %v3801 = vcvt.s32.f32 %v3545
    %v3802 = vcvt.s32.f32 %v3546
    %v3803 = vcvt.s32.f32 %v3547
    %v3804 = vcvt.s32.f32 %v3548
    %v3805 = vcvt.s32.f32 %v3549
    %v3806 = vcvt.s32.f32 %v3550
    %v3807 = vcvt.s32.f32 %v3551
    %v3808 = vcvt.s32.f32 %v3552
    %v3809 = vcvt.s32.f32 %v3553
    %v3810 = vcvt.s32.f32 %v3554
    %v3811 = vcvt.s32.f32 %v3555
    %v3812 = vcvt.s32.f32 %v3556
    %v3813 = vcvt.s32.f32 %v3557
    %v3814 = vcvt.s32.f32 %v3558
    %v3815 = vcvt.s32.f32 %v3559
    %v3816 = vcvt.s32.f32 %v3560
    %v3817 = vcvt.s32.f32 %v3561
    %v3818 = vcvt.s32.f32 %v3562
    %v3819 = vcvt.s32.f32 %v3563
    %v3820 = vcvt.s32.f32 %v3564
    %v3821 = vcvt.s32.f32 %v3565
    %v3822 = vcvt.s32.f32 %v3566
    %v3823 = vcvt.s32.f32 %v3567
    %v3824 = vcvt.s32.f32 %v3568
    %v3825 = vcvt.s32.f32 %v3569
    %v3826 = vcvt.s32.f32 %v3570
    %v3827 = vcvt.s32.f32 %v3571
    %v3828 = vcvt.s32.f32 %v3572
    %v3829 = vcvt.s32.f32 %v3573
    %v3830 = vcvt.s32.f32 %v3574
    %v3831 = vcvt.s32.f32 %v3575
    %v3832 = vcvt.s32.f32 %v3576
    %v3833 = vcvt.s32.f32 %v3577
    %v3834 = vcvt.s32.f32 %v3578
    %v3835 = vcvt.s32.f32 %v3579
    %v3836 = vcvt.s32.f32 %v3580
    %v3837 = vcvt.s32.f32 %v3581
    %v3838 = vcvt.s32.f32 %v3582
    %v3839 = vcvt.s32.f32 %v3583
    %v3840 = vcvt.s32.f32 %v3584
    %v3841 = vcvt.s32.f32 %v3585
    %v3842 = vcvt.s32.f32 %v3586
    %v3843 = vcvt.s32.f32 %v3587
    %v3844 = vcvt.s32.f32 %v3588
    %v3845 = vcvt.s32.f32 %v3589
    %v3846 = vcvt.s32.f32 %v3590
    %v3847 = vcvt.s32.f32 %v3591
    %v3848 = vcvt.s32.f32 %v3592
    %v3849 = vcvt.s32.f32 %v3593
    %v3850 = vcvt.s32.f32 %v3594
    %v3851 = vcvt.s32.f32 %v3595
    %v3852 = vcvt.s32.f32 %v3596
    %v3853 = vcvt.s32.f32 %v3597
    %v3854 = vcvt.s32.f32 %v3598
    %v3855 = vcvt.s32.f32 %v3599
    %v3856 = vcvt.s32.f32 %v3600
    %v3857 = vcvt.s32.f32 %v3601
    %v3858 = vcvt.s32.f32 %v3602
    %v3859 = vcvt.s32.f32 %v3603
    %v3860 = vcvt.s32.f32 %v3604
    %v3861 = vcvt.s32.f32 %v3605
    %v3862 = vcvt.s32.f32 %v3606
    %v3863 = vcvt.s32.f32 %v3607
    %v3864 = vcvt.s32.f32 %v3608
    %v3865 = vcvt.s32.f32 %v3609
    %v3866 = vcvt.s32.f32 %v3610
    %v3867 = vcvt.s32.f32 %v3611
    %v3868 = vcvt.s32.f32 %v3612
    %v3869 = vcvt.s32.f32 %v3613
    %v3870 = vcvt.s32.f32 %v3614
    %v3871 = vcvt.s32.f32 %v3615
    %v3872 = vcvt.s32.f32 %v3616
    %v3873 = vcvt.s32.f32 %v3617
    %v3874 = vcvt.s32.f32 %v3618
    %v3875 = vcvt.s32.f32 %v3619
    %v3876 = vcvt.s32.f32 %v3620
    %v3877 = vcvt.s32.f32 %v3621
    %v3878 = vcvt.s32.f32 %v3622
    %v3879 = vcvt.s32.f32 %v3623
    %v3880 = vcvt.s32.f32 %v3624
    %v3881 = vcvt.s32.f32 %v3625
    %v3882 = vcvt.s32.f32 %v3626
    %v3883 = vcvt.s32.f32 %v3627
    %v3884 = vcvt.s32.f32 %v3628
    %v3885 = vcvt.s32.f32 %v3629
    %v3886 = vcvt.s32.f32 %v3630
    %v3887 = vcvt.s32.f32 %v3631
    %v3888 = vcvt.s32.f32 %v3632
    %v3889 = vcvt.s32.f32 %v3633
    %v3890 = vcvt.s32.f32 %v3634
    %v3891 = vcvt.s32.f32 %v3635
    %v3892 = vcvt.s32.f32 %v3636
    %v3893 = vcvt.s32.f32 %v3637
    %v3894 = vcvt.s32.f32 %v3638
    %v3895 = vcvt.s32.f32 %v3639
    %v3896 = vcvt.s32.f32 %v3640
    %v3897 = vcvt.s32.f32 %v3641
    %v3898 = vcvt.s32.f32 %v3642
    %v3899 = vcvt.s32.f32 %v3643
    %v3900 = vcvt.s32.f32 %v3644
    %v3901 = vcvt.s32.f32 %v3645
    %v3902 = vcvt.s32.f32 %v3646
    %v3903 = vcvt.s32.f32 %v3647
    %v3904 = vcvt.s32.f32 %v3648
    %v3905 = vcvt.s32.f32 %v3649
    %v3906 = vcvt.s32.f32 %v3650
    %v3907 = vcvt.s32.f32 %v3651
    %v3908 = vcvt.s32.f32 %v3652
    %v3909 = vcvt.s32.f32 %v3653
    %v3910 = vcvt.s32.f32 %v3654
    %v3911 = vcvt.s32.f32 %v3655
    %v3912 = vcvt.s32.f32 %v3656
    %v3913 = vcvt.s32.f32 %v3657
    %v3914 = vcvt.s32.f32 %v3658
    %v3915 = vcvt.s32.f32 %v3659
    %v3916 = vcvt.s32.f32 %v3660
    %v3917 = vcvt.s32.f32 %v3661
    %v3918 = vcvt.s32.f32 %v3662
    %v3919 = vcvt.s32.f32 %v3663
    %v3920 = vcvt.s32.f32 %v3664
    %v3921 = vcvt.s32.f32 %v3665
    %v3922 = vcvt.s32.f32 %v3666
    %v3923 = vcvt.s32.f32 %v3667
    %v3924 = vcvt.s32.f32 %v3668
    %v3925 = vcvt.s32.f32 %v3669
    %v3926 = vcvt.s32.f32 %v3670
    %v3927 = vcvt.s32.f32 %v3671
    %v3928 = vcvt.s32.f32 %v3672
    %v3929 = vcvt.s32.f32 %v3673
    %v3930 = vcvt.s32.f32 %v3674
    %v3931 = vcvt.s32.f32 %v3675
    %v3932 = vcvt.s32.f32 %v3676
    %v3933 = vcvt.s32.f32 %v3677
    %v3934 = vcvt.s32.f32 %v3678
    %v3935 = vcvt.s32.f32 %v3679
    %v3936 = vcvt.s32.f32 %v3680
    %v3937 = vcvt.s32.f32 %v3681
    %v3938 = vcvt.s32.f32 %v3682
    %v3939 = vcvt.s32.f32 %v3683
    %v3940 = vcvt.s32.f32 %v3684
    %v3941 = vcvt.s32.f32 %v3685
    %v3942 = vcvt.s32.f32 %v3686
    %v3943 = vcvt.s32.f32 %v3687
    %v3944 = vcvt.s32.f32 %v3688
    %v3945 = vcvt.s32.f32 %v3689
    %v3946 = vcvt.s32.f32 %v3690
    %v3947 = vcvt.s32.f32 %v3691
    %v3948 = vcvt.s32.f32 %v3692
    %v3949 = vcvt.s32.f32 %v3693
    %v3950 = vcvt.s32.f32 %v3694
    %v3951 = vcvt.s32.f32 %v3695
    %v3952 = vcvt.s32.f32 %v3696
    %v3953 = vcvt.s32.f32 %v3697
    %v3954 = vcvt.s32.f32 %v3698
    %v3955 = vcvt.s32.f32 %v3699
    %v3956 = vcvt.s32.f32 %v3700
    %v3957 = vcvt.s32.f32 %v3701
    %v3958 = vcvt.s32.f32 %v3702
    %v3959 = vcvt.s32.f32 %v3703
    %v3960 = vcvt.s32.f32 %v3704
    %v3961 = vcvt.s32.f32 %v3705
    %v3962 = vcvt.s32.f32 %v3706
    %v3963 = vcvt.s32.f32 %v3707
    %v3964 = vcvt.s32.f32 %v3708
    %v3965 = vcvt.s32.f32 %v3709
    %v3966 = vcvt.s32.f32 %v3710
    %v3967 = vcvt.s32.f32 %v3711
    %v3968 = vcvt.s32.f32 %v3712
    %v3969 = vcvt.s32.f32 %v3713
    %v3970 = vcvt.s32.f32 %v3714
    %v3971 = vcvt.s32.f32 %v3715
    %v3972 = vcvt.s32.f32 %v3716
    %v3973 = vcvt.s32.f32 %v3717
    %v3974 = vcvt.s32.f32 %v3718
    %v3975 = vcvt.s32.f32 %v3719
    %v3976 = vcvt.s32.f32 %v3720
    %v3977 = vcvt.s32.f32 %v3721
    %v3978 = vcvt.s32.f32 %v3722
    %v3979 = vcvt.s32.f32 %v3723
    %v3980 = vcvt.s32.f32 %v3724
    %v3981 = vcvt.s32.f32 %v3725
    %v3982 = vcvt.s32.f32 %v3726
    %v3983 = vcvt.s32.f32 %v3727
    %v3984 = vcvt.s32.f32 %v3728
    %v3985 = vcvt.s32.f32 %v3729
    %v3986 = vcvt.s32.f32 %v3730
    %v3987 = vcvt.s32.f32 %v3731
    %v3988 = vcvt.s32.f32 %v3732
    %v3989 = vcvt.s32.f32 %v3733
    %v3990 = vcvt.s32.f32 %v3734
    %v3991 = vcvt.s32.f32 %v3735
    %v3992 = vcvt.s32.f32 %v3736
    %v3993 = vcvt.s32.f32 %v3737
    %v3994 = vcvt.s32.f32 %v3738
    %v3995 = vcvt.s32.f32 %v3739
    %v3996 = vcvt.s32.f32 %v3740
    %v3997 = vcvt.s32.f32 %v3741
    %v3998 = vcvt.s32.f32 %v3742
    %v3999 = vcvt.s32.f32 %v3743
    %v4000 = vcvt.s32.f32 %v3744
    %v4001 = vpack.c.bf16 %v3747, %v3745
    %v4002 = vpack.c.bf16 %v3748, %v3746
    %v4003 = vpack.c.bf16 %v3751, %v3749
    %v4004 = vpack.c.bf16 %v3752, %v3750
    %v4005 = vpack.c.bf16 %v3755, %v3753
    %v4006 = vpack.c.bf16 %v3756, %v3754
    %v4007 = vpack.c.bf16 %v3759, %v3757
    %v4008 = vpack.c.bf16 %v3760, %v3758
    %v4009 = vpack.c.bf16 %v3763, %v3761
    %v4010 = vpack.c.bf16 %v3764, %v3762
    %v4011 = vpack.c.bf16 %v3767, %v3765
    %v4012 = vpack.c.bf16 %v3768, %v3766
    %v4013 = vpack.c.bf16 %v3771, %v3769
    %v4014 = vpack.c.bf16 %v3772, %v3770
    %v4015 = vpack.c.bf16 %v3775, %v3773
    %v4016 = vpack.c.bf16 %v3776, %v3774
    %v4017 = vpack.c.bf16 %v3779, %v3777
    %v4018 = vpack.c.bf16 %v3780, %v3778
    %v4019 = vpack.c.bf16 %v3783, %v3781
    %v4020 = vpack.c.bf16 %v3784, %v3782
    %v4021 = vpack.c.bf16 %v3787, %v3785
    %v4022 = vpack.c.bf16 %v3788, %v3786
    %v4023 = vpack.c.bf16 %v3791, %v3789
    %v4024 = vpack.c.bf16 %v3792, %v3790
    %v4025 = vpack.c.bf16 %v3795, %v3793
    %v4026 = vpack.c.bf16 %v3796, %v3794
    %v4027 = vpack.c.bf16 %v3799, %v3797
    %v4028 = vpack.c.bf16 %v3800, %v3798
    %v4029 = vpack.c.bf16 %v3803, %v3801
    %v4030 = vpack.c.bf16 %v3804, %v3802
    %v4031 = vpack.c.bf16 %v3807, %v3805
    %v4032 = vpack.c.bf16 %v3808, %v3806
    %v4033 = vpack.c.bf16 %v3811, %v3809
    %v4034 = vpack.c.bf16 %v3812, %v3810
    %v4035 = vpack.c.bf16 %v3815, %v3813
    %v4036 = vpack.c.bf16 %v3816, %v3814
    %v4037 = vpack.c.bf16 %v3819, %v3817
    %v4038 = vpack.c.bf16 %v3820, %v3818
    %v4039 = vpack.c.bf16 %v3823, %v3821
    %v4040 = vpack.c.bf16 %v3824, %v3822
    %v4041 = vpack.c.bf16 %v3827, %v3825
    %v4042 = vpack.c.bf16 %v3828, %v3826
    %v4043 = vpack.c.bf16 %v3831, %v3829
    %v4044 = vpack.c.bf16 %v3832, %v3830
    %v4045 = vpack.c.bf16 %v3835, %v3833
    %v4046 = vpack.c.bf16 %v3836, %v3834
    %v4047 = vpack.c.bf16 %v3839, %v3837
    %v4048 = vpack.c.bf16 %v3840, %v3838
    %v4049 = vpack.c.bf16 %v3843, %v3841
    %v4050 = vpack.c.bf16 %v3844, %v3842
    %v4051 = vpack.c.bf16 %v3847, %v3845
    %v4052 = vpack.c.bf16 %v3848, %v3846
    %v4053 = vpack.c.bf16 %v3851, %v3849
    %v4054 = vpack.c.bf16 %v3852, %v3850
    %v4055 = vpack.c.bf16 %v3855, %v3853
    %v4056 = vpack.c.bf16 %v3856, %v3854
    %v4057 = vpack.c.bf16 %v3859, %v3857
    %v4058 = vpack.c.bf16 %v3860, %v3858
    %v4059 = vpack.c.bf16 %v3863, %v3861
    %v4060 = vpack.c.bf16 %v3864, %v3862
    %v4061 = vpack.c.bf16 %v3867, %v3865
    %v4062 = vpack.c.bf16 %v3868, %v3866
    %v4063 = vpack.c.bf16 %v3871, %v3869
    %v4064 = vpack.c.bf16 %v3872, %v3870
    %v4065 = vpack.c.bf16 %v3875, %v3873
    %v4066 = vpack.c.bf16 %v3876, %v3874
    %v4067 = vpack.c.bf16 %v3879, %v3877
    %v4068 = vpack.c.bf16 %v3880, %v3878
    %v4069 = vpack.c.bf16 %v3883, %v3881
    %v4070 = vpack.c.bf16 %v3884, %v3882
    %v4071 = vpack.c.bf16 %v3887, %v3885
    %v4072 = vpack.c.bf16 %v3888, %v3886
    %v4073 = vpack.c.bf16 %v3891, %v3889
    %v4074 = vpack.c.bf16 %v3892, %v3890
    %v4075 = vpack.c.bf16 %v3895, %v3893
    %v4076 = vpack.c.bf16 %v3896, %v3894
    %v4077 = vpack.c.bf16 %v3899, %v3897
    %v4078 = vpack.c.bf16 %v3900, %v3898
    %v4079 = vpack.c.bf16 %v3903, %v3901
    %v4080 = vpack.c.bf16 %v3904, %v3902
    %v4081 = vpack.c.bf16 %v3907, %v3905
    %v4082 = vpack.c.bf16 %v3908, %v3906
    %v4083 = vpack.c.bf16 %v3911, %v3909
    %v4084 = vpack.c.bf16 %v3912, %v3910
    %v4085 = vpack.c.bf16 %v3915, %v3913
    %v4086 = vpack.c.bf16 %v3916, %v3914
    %v4087 = vpack.c.bf16 %v3919, %v3917
    %v4088 = vpack.c.bf16 %v3920, %v3918
    %v4089 = vpack.c.bf16 %v3923, %v3921
    %v4090 = vpack.c.bf16 %v3924, %v3922
    %v4091 = vpack.c.bf16 %v3927, %v3925
    %v4092 = vpack.c.bf16 %v3928, %v3926
    %v4093 = vpack.c.bf16 %v3931, %v3929
    %v4094 = vpack.c.bf16 %v3932, %v3930
    %v4095 = vpack.c.bf16 %v3935, %v3933
    %v4096 = vpack.c.bf16 %v3936, %v3934
    %v4097 = vpack.c.bf16 %v3939, %v3937
    %v4098 = vpack.c.bf16 %v3940, %v3938
    %v4099 = vpack.c.bf16 %v3943, %v3941
    %v4100 = vpack.c.bf16 %v3944, %v3942
    %v4101 = vpack.c.bf16 %v3947, %v3945
    %v4102 = vpack.c.bf16 %v3948, %v3946
    %v4103 = vpack.c.bf16 %v3951, %v3949
    %v4104 = vpack.c.bf16 %v3952, %v3950
    %v4105 = vpack.c.bf16 %v3955, %v3953
    %v4106 = vpack.c.bf16 %v3956, %v3954
    %v4107 = vpack.c.bf16 %v3959, %v3957
    %v4108 = vpack.c.bf16 %v3960, %v3958
    %v4109 = vpack.c.bf16 %v3963, %v3961
    %v4110 = vpack.c.bf16 %v3964, %v3962
    %v4111 = vpack.c.bf16 %v3967, %v3965
    %v4112 = vpack.c.bf16 %v3968, %v3966
    %v4113 = vpack.c.bf16 %v3971, %v3969
    %v4114 = vpack.c.bf16 %v3972, %v3970
    %v4115 = vpack.c.bf16 %v3975, %v3973
    %v4116 = vpack.c.bf16 %v3976, %v3974
    %v4117 = vpack.c.bf16 %v3979, %v3977
    %v4118 = vpack.c.bf16 %v3980, %v3978
    %v4119 = vpack.c.bf16 %v3983, %v3981
    %v4120 = vpack.c.bf16 %v3984, %v3982
    %v4121 = vpack.c.bf16 %v3987, %v3985
    %v4122 = vpack.c.bf16 %v3988, %v3986
    %v4123 = vpack.c.bf16 %v3991, %v3989
    %v4124 = vpack.c.bf16 %v3992, %v3990
    %v4125 = vpack.c.bf16 %v3995, %v3993
    %v4126 = vpack.c.bf16 %v3996, %v3994
    %v4127 = vpack.c.bf16 %v3999, %v3997
    %v4128 = vpack.c.bf16 %v4000, %v3998
    %v4129 = vld [vmem:[%s1] sm:$0xf]
    %v4130 = vld [vmem:[%s1 + $0x4] sm:$0xf]
    %v4131 = vld [vmem:[%s1 + $0x8] sm:$0xf]
    %v4132 = vld [vmem:[%s1 + $0xc] sm:$0xf]
    %v4133 = vld [vmem:[%s1 + $0x10] sm:$0xf]
    %v4134 = vld [vmem:[%s1 + $0x14] sm:$0xf]
    %v4135 = vld [vmem:[%s1 + $0x18] sm:$0xf]
    %v4136 = vld [vmem:[%s1 + $0x1c] sm:$0xf]
    %v4137 = vld [vmem:[%s1 + $0x20] sm:$0xf]
    %v4138 = vld [vmem:[%s1 + $0x24] sm:$0xf]
    %v4139 = vld [vmem:[%s1 + $0x28] sm:$0xf]
    %v4140 = vld [vmem:[%s1 + $0x2c] sm:$0xf]
    %v4141 = vld [vmem:[%s1 + $0x30] sm:$0xf]
    %v4142 = vld [vmem:[%s1 + $0x34] sm:$0xf]
    %v4143 = vld [vmem:[%s1 + $0x38] sm:$0xf]
    %v4144 = vld [vmem:[%s1 + $0x3c] sm:$0xf]
    %v4145 = vld [vmem:[%s1 + $0x40] sm:$0xf]
    %v4146 = vld [vmem:[%s1 + $0x44] sm:$0xf]
    %v4147 = vld [vmem:[%s1 + $0x48] sm:$0xf]
    %v4148 = vld [vmem:[%s1 + $0x4c] sm:$0xf]
    %v4149 = vld [vmem:[%s1 + $0x50] sm:$0xf]
    %v4150 = vld [vmem:[%s1 + $0x54] sm:$0xf]
    %v4151 = vld [vmem:[%s1 + $0x58] sm:$0xf]
    %v4152 = vld [vmem:[%s1 + $0x5c] sm:$0xf]
    %v4153 = vld [vmem:[%s1 + $0x60] sm:$0xf]
    %v4154 = vld [vmem:[%s1 + $0x64] sm:$0xf]
    %v4155 = vld [vmem:[%s1 + $0x68] sm:$0xf]
    %v4156 = vld [vmem:[%s1 + $0x6c] sm:$0xf]
    %v4157 = vld [vmem:[%s1 + $0x70] sm:$0xf]
    %v4158 = vld [vmem:[%s1 + $0x74] sm:$0xf]
    %v4159 = vld [vmem:[%s1 + $0x78] sm:$0xf]
    %v4160 = vld [vmem:[%s1 + $0x7c] sm:$0xf]
    %v4193 = vunpack.c.l.b16 %v4129
    %v4194 = vunpack.c.l.b16 %v4130
    %v4195 = vunpack.c.l.b16 %v4131
    %v4196 = vunpack.c.l.b16 %v4132
    %v4197 = vunpack.c.l.b16 %v4133
    %v4198 = vunpack.c.l.b16 %v4134
    %v4199 = vunpack.c.l.b16 %v4135
    %v4200 = vunpack.c.l.b16 %v4136
    %v4201 = vunpack.c.l.b16 %v4137
    %v4202 = vunpack.c.l.b16 %v4138
    %v4203 = vunpack.c.l.b16 %v4139
    %v4204 = vunpack.c.l.b16 %v4140
    %v4205 = vunpack.c.l.b16 %v4141
    %v4206 = vunpack.c.l.b16 %v4142
    %v4207 = vunpack.c.l.b16 %v4143
    %v4208 = vunpack.c.l.b16 %v4144
    %v4209 = vunpack.c.l.b16 %v4145
    %v4210 = vunpack.c.l.b16 %v4146
    %v4211 = vunpack.c.l.b16 %v4147
    %v4212 = vunpack.c.l.b16 %v4148
    %v4213 = vunpack.c.l.b16 %v4149
    %v4214 = vunpack.c.l.b16 %v4150
    %v4215 = vunpack.c.l.b16 %v4151
    %v4216 = vunpack.c.l.b16 %v4152
    %v4217 = vunpack.c.l.b16 %v4153
    %v4218 = vunpack.c.l.b16 %v4154
    %v4219 = vunpack.c.l.b16 %v4155
    %v4220 = vunpack.c.l.b16 %v4156
    %v4221 = vunpack.c.l.b16 %v4157
    %v4222 = vunpack.c.l.b16 %v4158
    %v4223 = vunpack.c.l.b16 %v4159
    %v4224 = vunpack.c.l.b16 %v4160
    %v4225 = vpack.c.b16 %v4194, %v4193
    %v4226 = vpack.c.b16 %v4196, %v4195
    %v4227 = vpack.c.b16 %v4198, %v4197
    %v4228 = vpack.c.b16 %v4200, %v4199
    %v4229 = vpack.c.b16 %v4202, %v4201
    %v4230 = vpack.c.b16 %v4204, %v4203
    %v4231 = vpack.c.b16 %v4206, %v4205
    %v4232 = vpack.c.b16 %v4208, %v4207
    %v4233 = vpack.c.b16 %v4210, %v4209
    %v4234 = vpack.c.b16 %v4212, %v4211
    %v4235 = vpack.c.b16 %v4214, %v4213
    %v4236 = vpack.c.b16 %v4216, %v4215
    %v4237 = vpack.c.b16 %v4218, %v4217
    %v4238 = vpack.c.b16 %v4220, %v4219
    %v4239 = vpack.c.b16 %v4222, %v4221
    %v4240 = vpack.c.b16 %v4224, %v4223
    %4257 = vmatpush.bf16.msra.mxu0 %v4232
    %4258 = vmatpush.bf16.msra.mxu0 %v4231
    %4259 = vmatpush.bf16.msra.mxu0 %v4230
    %4260 = vmatpush.bf16.msra.mxu0 %v4229
    %4261 = vmatpush.bf16.msra.mxu0 %v4228
    %4262 = vmatpush.bf16.msra.mxu0 %v4227
    %4263 = vmatpush.bf16.msra.mxu0 %v4226
    %4264 = vmatpush.bf16.msra.mxu0 %v4225
    %4265 = vmatmul.bf16.gmra.mxu0 %v4001
    %v4266 = vpop.f32.mrf.mxu0
    %v4267 = vadd.f32 0.0, %v4266
    %v4268 = vpop.f32.mrf.mxu0
    %v4269 = vadd.f32 0.0, %v4268
    %4270 = vmatmul.bf16.gmra.mxu0 %v4003
    %v4271 = vpop.f32.mrf.mxu0
    %v4272 = vadd.f32 0.0, %v4271
    %v4273 = vpop.f32.mrf.mxu0
    %v4274 = vadd.f32 0.0, %v4273
    %4275 = vmatmul.bf16.gmra.mxu0 %v4005
    %v4276 = vpop.f32.mrf.mxu0
    %v4277 = vadd.f32 0.0, %v4276
    %v4278 = vpop.f32.mrf.mxu0
    %v4279 = vadd.f32 0.0, %v4278
    %4280 = vmatmul.bf16.gmra.mxu0 %v4007
    %v4281 = vpop.f32.mrf.mxu0
    %v4282 = vadd.f32 0.0, %v4281
    %v4283 = vpop.f32.mrf.mxu0
    %v4284 = vadd.f32 0.0, %v4283
    %4285 = vmatmul.bf16.gmra.mxu0 %v4009
    %v4286 = vpop.f32.mrf.mxu0
    %v4287 = vadd.f32 0.0, %v4286
    %v4288 = vpop.f32.mrf.mxu0
    %v4289 = vadd.f32 0.0, %v4288
    %4290 = vmatmul.bf16.gmra.mxu0 %v4011
    %v4291 = vpop.f32.mrf.mxu0
    %v4292 = vadd.f32 0.0, %v4291
    %v4293 = vpop.f32.mrf.mxu0
    %v4294 = vadd.f32 0.0, %v4293
    %4295 = vmatmul.bf16.gmra.mxu0 %v4013
    %v4296 = vpop.f32.mrf.mxu0
    %v4297 = vadd.f32 0.0, %v4296
    %v4298 = vpop.f32.mrf.mxu0
    %v4299 = vadd.f32 0.0, %v4298
    %4300 = vmatmul.bf16.gmra.mxu0 %v4015
    %v4301 = vpop.f32.mrf.mxu0
    %v4302 = vadd.f32 0.0, %v4301
    %v4303 = vpop.f32.mrf.mxu0
    %v4304 = vadd.f32 0.0, %v4303
    %4305 = vmatmul.bf16.gmra.mxu0 %v4017
    %v4306 = vpop.f32.mrf.mxu0
    %v4307 = vadd.f32 0.0, %v4306
    %v4308 = vpop.f32.mrf.mxu0
    %v4309 = vadd.f32 0.0, %v4308
    %4310 = vmatmul.bf16.gmra.mxu0 %v4019
    %v4311 = vpop.f32.mrf.mxu0
    %v4312 = vadd.f32 0.0, %v4311
    %v4313 = vpop.f32.mrf.mxu0
    %v4314 = vadd.f32 0.0, %v4313
    %4315 = vmatmul.bf16.gmra.mxu0 %v4021
    %v4316 = vpop.f32.mrf.mxu0
    %v4317 = vadd.f32 0.0, %v4316
    %v4318 = vpop.f32.mrf.mxu0
    %v4319 = vadd.f32 0.0, %v4318
    %4320 = vmatmul.bf16.gmra.mxu0 %v4023
    %v4321 = vpop.f32.mrf.mxu0
    %v4322 = vadd.f32 0.0, %v4321
    %v4323 = vpop.f32.mrf.mxu0
    %v4324 = vadd.f32 0.0, %v4323
    %4325 = vmatmul.bf16.gmra.mxu0 %v4025
    %v4326 = vpop.f32.mrf.mxu0
    %v4327 = vadd.f32 0.0, %v4326
    %v4328 = vpop.f32.mrf.mxu0
    %v4329 = vadd.f32 0.0, %v4328
    %4330 = vmatmul.bf16.gmra.mxu0 %v4027
    %v4331 = vpop.f32.mrf.mxu0
    %v4332 = vadd.f32 0.0, %v4331
    %v4333 = vpop.f32.mrf.mxu0
    %v4334 = vadd.f32 0.0, %v4333
    %4335 = vmatmul.bf16.gmra.mxu0 %v4029
    %v4336 = vpop.f32.mrf.mxu0
    %v4337 = vadd.f32 0.0, %v4336
    %v4338 = vpop.f32.mrf.mxu0
    %v4339 = vadd.f32 0.0, %v4338
    %4340 = vmatmul.bf16.gmra.mxu0 %v4031
    %v4341 = vpop.f32.mrf.mxu0
    %v4342 = vadd.f32 0.0, %v4341
    %v4343 = vpop.f32.mrf.mxu0
    %v4344 = vadd.f32 0.0, %v4343
    %4345 = vmatmul.bf16.gmra.mxu0 %v4033
    %v4346 = vpop.f32.mrf.mxu0
    %v4347 = vadd.f32 0.0, %v4346
    %v4348 = vpop.f32.mrf.mxu0
    %v4349 = vadd.f32 0.0, %v4348
    %4350 = vmatmul.bf16.gmra.mxu0 %v4035
    %v4351 = vpop.f32.mrf.mxu0
    %v4352 = vadd.f32 0.0, %v4351
    %v4353 = vpop.f32.mrf.mxu0
    %v4354 = vadd.f32 0.0, %v4353
    %4355 = vmatmul.bf16.gmra.mxu0 %v4037
    %v4356 = vpop.f32.mrf.mxu0
    %v4357 = vadd.f32 0.0, %v4356
    %v4358 = vpop.f32.mrf.mxu0
    %v4359 = vadd.f32 0.0, %v4358
    %4360 = vmatmul.bf16.gmra.mxu0 %v4039
    %v4361 = vpop.f32.mrf.mxu0
    %v4362 = vadd.f32 0.0, %v4361
    %v4363 = vpop.f32.mrf.mxu0
    %v4364 = vadd.f32 0.0, %v4363
    %4365 = vmatmul.bf16.gmra.mxu0 %v4041
    %v4366 = vpop.f32.mrf.mxu0
    %v4367 = vadd.f32 0.0, %v4366
    %v4368 = vpop.f32.mrf.mxu0
    %v4369 = vadd.f32 0.0, %v4368
    %4370 = vmatmul.bf16.gmra.mxu0 %v4043
    %v4371 = vpop.f32.mrf.mxu0
    %v4372 = vadd.f32 0.0, %v4371
    %v4373 = vpop.f32.mrf.mxu0
    %v4374 = vadd.f32 0.0, %v4373
    %4375 = vmatmul.bf16.gmra.mxu0 %v4045
    %v4376 = vpop.f32.mrf.mxu0
    %v4377 = vadd.f32 0.0, %v4376
    %v4378 = vpop.f32.mrf.mxu0
    %v4379 = vadd.f32 0.0, %v4378
    %4380 = vmatmul.bf16.gmra.mxu0 %v4047
    %v4381 = vpop.f32.mrf.mxu0
    %v4382 = vadd.f32 0.0, %v4381
    %v4383 = vpop.f32.mrf.mxu0
    %v4384 = vadd.f32 0.0, %v4383
    %4385 = vmatmul.bf16.gmra.mxu0 %v4049
    %v4386 = vpop.f32.mrf.mxu0
    %v4387 = vadd.f32 0.0, %v4386
    %v4388 = vpop.f32.mrf.mxu0
    %v4389 = vadd.f32 0.0, %v4388
    %4390 = vmatmul.bf16.gmra.mxu0 %v4051
    %v4391 = vpop.f32.mrf.mxu0
    %v4392 = vadd.f32 0.0, %v4391
    %v4393 = vpop.f32.mrf.mxu0
    %v4394 = vadd.f32 0.0, %v4393
    %4395 = vmatmul.bf16.gmra.mxu0 %v4053
    %v4396 = vpop.f32.mrf.mxu0
    %v4397 = vadd.f32 0.0, %v4396
    %v4398 = vpop.f32.mrf.mxu0
    %v4399 = vadd.f32 0.0, %v4398
    %4400 = vmatmul.bf16.gmra.mxu0 %v4055
    %v4401 = vpop.f32.mrf.mxu0
    %v4402 = vadd.f32 0.0, %v4401
    %v4403 = vpop.f32.mrf.mxu0
    %v4404 = vadd.f32 0.0, %v4403
    %4405 = vmatmul.bf16.gmra.mxu0 %v4057
    %v4406 = vpop.f32.mrf.mxu0
    %v4407 = vadd.f32 0.0, %v4406
    %v4408 = vpop.f32.mrf.mxu0
    %v4409 = vadd.f32 0.0, %v4408
    %4410 = vmatmul.bf16.gmra.mxu0 %v4059
    %v4411 = vpop.f32.mrf.mxu0
    %v4412 = vadd.f32 0.0, %v4411
    %v4413 = vpop.f32.mrf.mxu0
    %v4414 = vadd.f32 0.0, %v4413
    %4415 = vmatmul.bf16.gmra.mxu0 %v4061
    %v4416 = vpop.f32.mrf.mxu0
    %v4417 = vadd.f32 0.0, %v4416
    %v4418 = vpop.f32.mrf.mxu0
    %v4419 = vadd.f32 0.0, %v4418
    %4420 = vmatmul.bf16.gmra.mxu0 %v4063
    %v4421 = vpop.f32.mrf.mxu0
    %v4422 = vadd.f32 0.0, %v4421
    %v4423 = vpop.f32.mrf.mxu0
    %v4424 = vadd.f32 0.0, %v4423
    %4425 = vmatmul.bf16.gmra.mxu0 %v4065
    %v4426 = vpop.f32.mrf.mxu0
    %v4427 = vadd.f32 0.0, %v4426
    %v4428 = vpop.f32.mrf.mxu0
    %v4429 = vadd.f32 0.0, %v4428
    %4430 = vmatmul.bf16.gmra.mxu0 %v4067
    %v4431 = vpop.f32.mrf.mxu0
    %v4432 = vadd.f32 0.0, %v4431
    %v4433 = vpop.f32.mrf.mxu0
    %v4434 = vadd.f32 0.0, %v4433
    %4435 = vmatmul.bf16.gmra.mxu0 %v4069
    %v4436 = vpop.f32.mrf.mxu0
    %v4437 = vadd.f32 0.0, %v4436
    %v4438 = vpop.f32.mrf.mxu0
    %v4439 = vadd.f32 0.0, %v4438
    %4440 = vmatmul.bf16.gmra.mxu0 %v4071
    %v4441 = vpop.f32.mrf.mxu0
    %v4442 = vadd.f32 0.0, %v4441
    %v4443 = vpop.f32.mrf.mxu0
    %v4444 = vadd.f32 0.0, %v4443
    %4445 = vmatmul.bf16.gmra.mxu0 %v4073
    %v4446 = vpop.f32.mrf.mxu0
    %v4447 = vadd.f32 0.0, %v4446
    %v4448 = vpop.f32.mrf.mxu0
    %v4449 = vadd.f32 0.0, %v4448
    %4450 = vmatmul.bf16.gmra.mxu0 %v4075
    %v4451 = vpop.f32.mrf.mxu0
    %v4452 = vadd.f32 0.0, %v4451
    %v4453 = vpop.f32.mrf.mxu0
    %v4454 = vadd.f32 0.0, %v4453
    %4455 = vmatmul.bf16.gmra.mxu0 %v4077
    %v4456 = vpop.f32.mrf.mxu0
    %v4457 = vadd.f32 0.0, %v4456
    %v4458 = vpop.f32.mrf.mxu0
    %v4459 = vadd.f32 0.0, %v4458
    %4460 = vmatmul.bf16.gmra.mxu0 %v4079
    %v4461 = vpop.f32.mrf.mxu0
    %v4462 = vadd.f32 0.0, %v4461
    %v4463 = vpop.f32.mrf.mxu0
    %v4464 = vadd.f32 0.0, %v4463
    %4465 = vmatmul.bf16.gmra.mxu0 %v4081
    %v4466 = vpop.f32.mrf.mxu0
    %v4467 = vadd.f32 0.0, %v4466
    %v4468 = vpop.f32.mrf.mxu0
    %v4469 = vadd.f32 0.0, %v4468
    %4470 = vmatmul.bf16.gmra.mxu0 %v4083
    %v4471 = vpop.f32.mrf.mxu0
    %v4472 = vadd.f32 0.0, %v4471
    %v4473 = vpop.f32.mrf.mxu0
    %v4474 = vadd.f32 0.0, %v4473
    %4475 = vmatmul.bf16.gmra.mxu0 %v4085
    %v4476 = vpop.f32.mrf.mxu0
    %v4477 = vadd.f32 0.0, %v4476
    %v4478 = vpop.f32.mrf.mxu0
    %v4479 = vadd.f32 0.0, %v4478
    %4480 = vmatmul.bf16.gmra.mxu0 %v4087
    %v4481 = vpop.f32.mrf.mxu0
    %v4482 = vadd.f32 0.0, %v4481
    %v4483 = vpop.f32.mrf.mxu0
    %v4484 = vadd.f32 0.0, %v4483
    %4485 = vmatmul.bf16.gmra.mxu0 %v4089
    %v4486 = vpop.f32.mrf.mxu0
    %v4487 = vadd.f32 0.0, %v4486
    %v4488 = vpop.f32.mrf.mxu0
    %v4489 = vadd.f32 0.0, %v4488
    %4490 = vmatmul.bf16.gmra.mxu0 %v4091
    %v4491 = vpop.f32.mrf.mxu0
    %v4492 = vadd.f32 0.0, %v4491
    %v4493 = vpop.f32.mrf.mxu0
    %v4494 = vadd.f32 0.0, %v4493
    %4495 = vmatmul.bf16.gmra.mxu0 %v4093
    %v4496 = vpop.f32.mrf.mxu0
    %v4497 = vadd.f32 0.0, %v4496
    %v4498 = vpop.f32.mrf.mxu0
    %v4499 = vadd.f32 0.0, %v4498
    %4500 = vmatmul.bf16.gmra.mxu0 %v4095
    %v4501 = vpop.f32.mrf.mxu0
    %v4502 = vadd.f32 0.0, %v4501
    %v4503 = vpop.f32.mrf.mxu0
    %v4504 = vadd.f32 0.0, %v4503
    %4505 = vmatmul.bf16.gmra.mxu0 %v4097
    %v4506 = vpop.f32.mrf.mxu0
    %v4507 = vadd.f32 0.0, %v4506
    %v4508 = vpop.f32.mrf.mxu0
    %v4509 = vadd.f32 0.0, %v4508
    %4510 = vmatmul.bf16.gmra.mxu0 %v4099
    %v4511 = vpop.f32.mrf.mxu0
    %v4512 = vadd.f32 0.0, %v4511
    %v4513 = vpop.f32.mrf.mxu0
    %v4514 = vadd.f32 0.0, %v4513
    %4515 = vmatmul.bf16.gmra.mxu0 %v4101
    %v4516 = vpop.f32.mrf.mxu0
    %v4517 = vadd.f32 0.0, %v4516
    %v4518 = vpop.f32.mrf.mxu0
    %v4519 = vadd.f32 0.0, %v4518
    %4520 = vmatmul.bf16.gmra.mxu0 %v4103
    %v4521 = vpop.f32.mrf.mxu0
    %v4522 = vadd.f32 0.0, %v4521
    %v4523 = vpop.f32.mrf.mxu0
    %v4524 = vadd.f32 0.0, %v4523
    %4525 = vmatmul.bf16.gmra.mxu0 %v4105
    %v4526 = vpop.f32.mrf.mxu0
    %v4527 = vadd.f32 0.0, %v4526
    %v4528 = vpop.f32.mrf.mxu0
    %v4529 = vadd.f32 0.0, %v4528
    %4530 = vmatmul.bf16.gmra.mxu0 %v4107
    %v4531 = vpop.f32.mrf.mxu0
    %v4532 = vadd.f32 0.0, %v4531
    %v4533 = vpop.f32.mrf.mxu0
    %v4534 = vadd.f32 0.0, %v4533
    %4535 = vmatmul.bf16.gmra.mxu0 %v4109
    %v4536 = vpop.f32.mrf.mxu0
    %v4537 = vadd.f32 0.0, %v4536
    %v4538 = vpop.f32.mrf.mxu0
    %v4539 = vadd.f32 0.0, %v4538
    %4540 = vmatmul.bf16.gmra.mxu0 %v4111
    %v4541 = vpop.f32.mrf.mxu0
    %v4542 = vadd.f32 0.0, %v4541
    %v4543 = vpop.f32.mrf.mxu0
    %v4544 = vadd.f32 0.0, %v4543
    %4545 = vmatmul.bf16.gmra.mxu0 %v4113
    %v4546 = vpop.f32.mrf.mxu0
    %v4547 = vadd.f32 0.0, %v4546
    %v4548 = vpop.f32.mrf.mxu0
    %v4549 = vadd.f32 0.0, %v4548
    %4550 = vmatmul.bf16.gmra.mxu0 %v4115
    %v4551 = vpop.f32.mrf.mxu0
    %v4552 = vadd.f32 0.0, %v4551
    %v4553 = vpop.f32.mrf.mxu0
    %v4554 = vadd.f32 0.0, %v4553
    %4555 = vmatmul.bf16.gmra.mxu0 %v4117
    %v4556 = vpop.f32.mrf.mxu0
    %v4557 = vadd.f32 0.0, %v4556
    %v4558 = vpop.f32.mrf.mxu0
    %v4559 = vadd.f32 0.0, %v4558
    %4560 = vmatmul.bf16.gmra.mxu0 %v4119
    %v4561 = vpop.f32.mrf.mxu0
    %v4562 = vadd.f32 0.0, %v4561
    %v4563 = vpop.f32.mrf.mxu0
    %v4564 = vadd.f32 0.0, %v4563
    %4565 = vmatmul.bf16.gmra.mxu0 %v4121
    %v4566 = vpop.f32.mrf.mxu0
    %v4567 = vadd.f32 0.0, %v4566
    %v4568 = vpop.f32.mrf.mxu0
    %v4569 = vadd.f32 0.0, %v4568
    %4570 = vmatmul.bf16.gmra.mxu0 %v4123
    %v4571 = vpop.f32.mrf.mxu0
    %v4572 = vadd.f32 0.0, %v4571
    %v4573 = vpop.f32.mrf.mxu0
    %v4574 = vadd.f32 0.0, %v4573
    %4575 = vmatmul.bf16.gmra.mxu0 %v4125
    %v4576 = vpop.f32.mrf.mxu0
    %v4577 = vadd.f32 0.0, %v4576
    %v4578 = vpop.f32.mrf.mxu0
    %v4579 = vadd.f32 0.0, %v4578
    %4580 = vmatmul.bf16.gmra.mxu0 %v4127
    %v4581 = vpop.f32.mrf.mxu0
    %v4582 = vadd.f32 0.0, %v4581
    %v4583 = vpop.f32.mrf.mxu0
    %v4584 = vadd.f32 0.0, %v4583
    %4585 = vdwg.mxu0
    %4586 = vmatpush.bf16.msra.mxu0 %v4240
    %4587 = vmatpush.bf16.msra.mxu0 %v4239
    %4588 = vmatpush.bf16.msra.mxu0 %v4238
    %4589 = vmatpush.bf16.msra.mxu0 %v4237
    %4590 = vmatpush.bf16.msra.mxu0 %v4236
    %4591 = vmatpush.bf16.msra.mxu0 %v4235
    %4592 = vmatpush.bf16.msra.mxu0 %v4234
    %4593 = vmatpush.bf16.msra.mxu0 %v4233
    %4594 = vmatmul.bf16.gmra.mxu0 %v4002
    %v4595 = vpop.f32.mrf.mxu0
    %v4596 = vadd.f32 %v4267, %v4595
    %v4597 = vpop.f32.mrf.mxu0
    %v4598 = vadd.f32 %v4269, %v4597
    %4599 = vmatmul.bf16.gmra.mxu0 %v4004
    %v4600 = vpop.f32.mrf.mxu0
    %v4601 = vadd.f32 %v4272, %v4600
    %v4602 = vpop.f32.mrf.mxu0
    %v4603 = vadd.f32 %v4274, %v4602
    %4604 = vmatmul.bf16.gmra.mxu0 %v4006
    %v4605 = vpop.f32.mrf.mxu0
    %v4606 = vadd.f32 %v4277, %v4605
    %v4607 = vpop.f32.mrf.mxu0
    %v4608 = vadd.f32 %v4279, %v4607
    %4609 = vmatmul.bf16.gmra.mxu0 %v4008
    %v4610 = vpop.f32.mrf.mxu0
    %v4611 = vadd.f32 %v4282, %v4610
    %v4612 = vpop.f32.mrf.mxu0
    %v4613 = vadd.f32 %v4284, %v4612
    %4614 = vmatmul.bf16.gmra.mxu0 %v4010
    %v4615 = vpop.f32.mrf.mxu0
    %v4616 = vadd.f32 %v4287, %v4615
    %v4617 = vpop.f32.mrf.mxu0
    %v4618 = vadd.f32 %v4289, %v4617
    %4619 = vmatmul.bf16.gmra.mxu0 %v4012
    %v4620 = vpop.f32.mrf.mxu0
    %v4621 = vadd.f32 %v4292, %v4620
    %v4622 = vpop.f32.mrf.mxu0
    %v4623 = vadd.f32 %v4294, %v4622
    %4624 = vmatmul.bf16.gmra.mxu0 %v4014
    %v4625 = vpop.f32.mrf.mxu0
    %v4626 = vadd.f32 %v4297, %v4625
    %v4627 = vpop.f32.mrf.mxu0
    %v4628 = vadd.f32 %v4299, %v4627
    %4629 = vmatmul.bf16.gmra.mxu0 %v4016
    %v4630 = vpop.f32.mrf.mxu0
    %v4631 = vadd.f32 %v4302, %v4630
    %v4632 = vpop.f32.mrf.mxu0
    %v4633 = vadd.f32 %v4304, %v4632
    %4634 = vmatmul.bf16.gmra.mxu0 %v4018
    %v4635 = vpop.f32.mrf.mxu0
    %v4636 = vadd.f32 %v4307, %v4635
    %v4637 = vpop.f32.mrf.mxu0
    %v4638 = vadd.f32 %v4309, %v4637
    %4639 = vmatmul.bf16.gmra.mxu0 %v4020
    %v4640 = vpop.f32.mrf.mxu0
    %v4641 = vadd.f32 %v4312, %v4640
    %v4642 = vpop.f32.mrf.mxu0
    %v4643 = vadd.f32 %v4314, %v4642
    %4644 = vmatmul.bf16.gmra.mxu0 %v4022
    %v4645 = vpop.f32.mrf.mxu0
    %v4646 = vadd.f32 %v4317, %v4645
    %v4647 = vpop.f32.mrf.mxu0
    %v4648 = vadd.f32 %v4319, %v4647
    %4649 = vmatmul.bf16.gmra.mxu0 %v4024
    %v4650 = vpop.f32.mrf.mxu0
    %v4651 = vadd.f32 %v4322, %v4650
    %v4652 = vpop.f32.mrf.mxu0
    %v4653 = vadd.f32 %v4324, %v4652
    %4654 = vmatmul.bf16.gmra.mxu0 %v4026
    %v4655 = vpop.f32.mrf.mxu0
    %v4656 = vadd.f32 %v4327, %v4655
    %v4657 = vpop.f32.mrf.mxu0
    %v4658 = vadd.f32 %v4329, %v4657
    %4659 = vmatmul.bf16.gmra.mxu0 %v4028
    %v4660 = vpop.f32.mrf.mxu0
    %v4661 = vadd.f32 %v4332, %v4660
    %v4662 = vpop.f32.mrf.mxu0
    %v4663 = vadd.f32 %v4334, %v4662
    %4664 = vmatmul.bf16.gmra.mxu0 %v4030
    %v4665 = vpop.f32.mrf.mxu0
    %v4666 = vadd.f32 %v4337, %v4665
    %v4667 = vpop.f32.mrf.mxu0
    %v4668 = vadd.f32 %v4339, %v4667
    %4669 = vmatmul.bf16.gmra.mxu0 %v4032
    %v4670 = vpop.f32.mrf.mxu0
    %v4671 = vadd.f32 %v4342, %v4670
    %v4672 = vpop.f32.mrf.mxu0
    %v4673 = vadd.f32 %v4344, %v4672
    %4674 = vmatmul.bf16.gmra.mxu0 %v4034
    %v4675 = vpop.f32.mrf.mxu0
    %v4676 = vadd.f32 %v4347, %v4675
    %v4677 = vpop.f32.mrf.mxu0
    %v4678 = vadd.f32 %v4349, %v4677
    %4679 = vmatmul.bf16.gmra.mxu0 %v4036
    %v4680 = vpop.f32.mrf.mxu0
    %v4681 = vadd.f32 %v4352, %v4680
    %v4682 = vpop.f32.mrf.mxu0
    %v4683 = vadd.f32 %v4354, %v4682
    %4684 = vmatmul.bf16.gmra.mxu0 %v4038
    %v4685 = vpop.f32.mrf.mxu0
    %v4686 = vadd.f32 %v4357, %v4685
    %v4687 = vpop.f32.mrf.mxu0
    %v4688 = vadd.f32 %v4359, %v4687
    %4689 = vmatmul.bf16.gmra.mxu0 %v4040
    %v4690 = vpop.f32.mrf.mxu0
    %v4691 = vadd.f32 %v4362, %v4690
    %v4692 = vpop.f32.mrf.mxu0
    %v4693 = vadd.f32 %v4364, %v4692
    %4694 = vmatmul.bf16.gmra.mxu0 %v4042
    %v4695 = vpop.f32.mrf.mxu0
    %v4696 = vadd.f32 %v4367, %v4695
    %v4697 = vpop.f32.mrf.mxu0
    %v4698 = vadd.f32 %v4369, %v4697
    %4699 = vmatmul.bf16.gmra.mxu0 %v4044
    %v4700 = vpop.f32.mrf.mxu0
    %v4701 = vadd.f32 %v4372, %v4700
    %v4702 = vpop.f32.mrf.mxu0
    %v4703 = vadd.f32 %v4374, %v4702
    %4704 = vmatmul.bf16.gmra.mxu0 %v4046
    %v4705 = vpop.f32.mrf.mxu0
    %v4706 = vadd.f32 %v4377, %v4705
    %v4707 = vpop.f32.mrf.mxu0
    %v4708 = vadd.f32 %v4379, %v4707
    %4709 = vmatmul.bf16.gmra.mxu0 %v4048
    %v4710 = vpop.f32.mrf.mxu0
    %v4711 = vadd.f32 %v4382, %v4710
    %v4712 = vpop.f32.mrf.mxu0
    %v4713 = vadd.f32 %v4384, %v4712
    %4714 = vmatmul.bf16.gmra.mxu0 %v4050
    %v4715 = vpop.f32.mrf.mxu0
    %v4716 = vadd.f32 %v4387, %v4715
    %v4717 = vpop.f32.mrf.mxu0
    %v4718 = vadd.f32 %v4389, %v4717
    %4719 = vmatmul.bf16.gmra.mxu0 %v4052
    %v4720 = vpop.f32.mrf.mxu0
    %v4721 = vadd.f32 %v4392, %v4720
    %v4722 = vpop.f32.mrf.mxu0
    %v4723 = vadd.f32 %v4394, %v4722
    %4724 = vmatmul.bf16.gmra.mxu0 %v4054
    %v4725 = vpop.f32.mrf.mxu0
    %v4726 = vadd.f32 %v4397, %v4725
    %v4727 = vpop.f32.mrf.mxu0
    %v4728 = vadd.f32 %v4399, %v4727
    %4729 = vmatmul.bf16.gmra.mxu0 %v4056
    %v4730 = vpop.f32.mrf.mxu0
    %v4731 = vadd.f32 %v4402, %v4730
    %v4732 = vpop.f32.mrf.mxu0
    %v4733 = vadd.f32 %v4404, %v4732
    %4734 = vmatmul.bf16.gmra.mxu0 %v4058
    %v4735 = vpop.f32.mrf.mxu0
    %v4736 = vadd.f32 %v4407, %v4735
    %v4737 = vpop.f32.mrf.mxu0
    %v4738 = vadd.f32 %v4409, %v4737
    %4739 = vmatmul.bf16.gmra.mxu0 %v4060
    %v4740 = vpop.f32.mrf.mxu0
    %v4741 = vadd.f32 %v4412, %v4740
    %v4742 = vpop.f32.mrf.mxu0
    %v4743 = vadd.f32 %v4414, %v4742
    %4744 = vmatmul.bf16.gmra.mxu0 %v4062
    %v4745 = vpop.f32.mrf.mxu0
    %v4746 = vadd.f32 %v4417, %v4745
    %v4747 = vpop.f32.mrf.mxu0
    %v4748 = vadd.f32 %v4419, %v4747
    %4749 = vmatmul.bf16.gmra.mxu0 %v4064
    %v4750 = vpop.f32.mrf.mxu0
    %v4751 = vadd.f32 %v4422, %v4750
    %v4752 = vpop.f32.mrf.mxu0
    %v4753 = vadd.f32 %v4424, %v4752
    %4754 = vmatmul.bf16.gmra.mxu0 %v4066
    %v4755 = vpop.f32.mrf.mxu0
    %v4756 = vadd.f32 %v4427, %v4755
    %v4757 = vpop.f32.mrf.mxu0
    %v4758 = vadd.f32 %v4429, %v4757
    %4759 = vmatmul.bf16.gmra.mxu0 %v4068
    %v4760 = vpop.f32.mrf.mxu0
    %v4761 = vadd.f32 %v4432, %v4760
    %v4762 = vpop.f32.mrf.mxu0
    %v4763 = vadd.f32 %v4434, %v4762
    %4764 = vmatmul.bf16.gmra.mxu0 %v4070
    %v4765 = vpop.f32.mrf.mxu0
    %v4766 = vadd.f32 %v4437, %v4765
    %v4767 = vpop.f32.mrf.mxu0
    %v4768 = vadd.f32 %v4439, %v4767
    %4769 = vmatmul.bf16.gmra.mxu0 %v4072
    %v4770 = vpop.f32.mrf.mxu0
    %v4771 = vadd.f32 %v4442, %v4770
    %v4772 = vpop.f32.mrf.mxu0
    %v4773 = vadd.f32 %v4444, %v4772
    %4774 = vmatmul.bf16.gmra.mxu0 %v4074
    %v4775 = vpop.f32.mrf.mxu0
    %v4776 = vadd.f32 %v4447, %v4775
    %v4777 = vpop.f32.mrf.mxu0
    %v4778 = vadd.f32 %v4449, %v4777
    %4779 = vmatmul.bf16.gmra.mxu0 %v4076
    %v4780 = vpop.f32.mrf.mxu0
    %v4781 = vadd.f32 %v4452, %v4780
    %v4782 = vpop.f32.mrf.mxu0
    %v4783 = vadd.f32 %v4454, %v4782
    %4784 = vmatmul.bf16.gmra.mxu0 %v4078
    %v4785 = vpop.f32.mrf.mxu0
    %v4786 = vadd.f32 %v4457, %v4785
    %v4787 = vpop.f32.mrf.mxu0
    %v4788 = vadd.f32 %v4459, %v4787
    %4789 = vmatmul.bf16.gmra.mxu0 %v4080
    %v4790 = vpop.f32.mrf.mxu0
    %v4791 = vadd.f32 %v4462, %v4790
    %v4792 = vpop.f32.mrf.mxu0
    %v4793 = vadd.f32 %v4464, %v4792
    %4794 = vmatmul.bf16.gmra.mxu0 %v4082
    %v4795 = vpop.f32.mrf.mxu0
    %v4796 = vadd.f32 %v4467, %v4795
    %v4797 = vpop.f32.mrf.mxu0
    %v4798 = vadd.f32 %v4469, %v4797
    %4799 = vmatmul.bf16.gmra.mxu0 %v4084
    %v4800 = vpop.f32.mrf.mxu0
    %v4801 = vadd.f32 %v4472, %v4800
    %v4802 = vpop.f32.mrf.mxu0
    %v4803 = vadd.f32 %v4474, %v4802
    %4804 = vmatmul.bf16.gmra.mxu0 %v4086
    %v4805 = vpop.f32.mrf.mxu0
    %v4806 = vadd.f32 %v4477, %v4805
    %v4807 = vpop.f32.mrf.mxu0
    %v4808 = vadd.f32 %v4479, %v4807
    %4809 = vmatmul.bf16.gmra.mxu0 %v4088
    %v4810 = vpop.f32.mrf.mxu0
    %v4811 = vadd.f32 %v4482, %v4810
    %v4812 = vpop.f32.mrf.mxu0
    %v4813 = vadd.f32 %v4484, %v4812
    %4814 = vmatmul.bf16.gmra.mxu0 %v4090
    %v4815 = vpop.f32.mrf.mxu0
    %v4816 = vadd.f32 %v4487, %v4815
    %v4817 = vpop.f32.mrf.mxu0
    %v4818 = vadd.f32 %v4489, %v4817
    %4819 = vmatmul.bf16.gmra.mxu0 %v4092
    %v4820 = vpop.f32.mrf.mxu0
    %v4821 = vadd.f32 %v4492, %v4820
    %v4822 = vpop.f32.mrf.mxu0
    %v4823 = vadd.f32 %v4494, %v4822
    %4824 = vmatmul.bf16.gmra.mxu0 %v4094
    %v4825 = vpop.f32.mrf.mxu0
    %v4826 = vadd.f32 %v4497, %v4825
    %v4827 = vpop.f32.mrf.mxu0
    %v4828 = vadd.f32 %v4499, %v4827
    %4829 = vmatmul.bf16.gmra.mxu0 %v4096
    %v4830 = vpop.f32.mrf.mxu0
    %v4831 = vadd.f32 %v4502, %v4830
    %v4832 = vpop.f32.mrf.mxu0
    %v4833 = vadd.f32 %v4504, %v4832
    %4834 = vmatmul.bf16.gmra.mxu0 %v4098
    %v4835 = vpop.f32.mrf.mxu0
    %v4836 = vadd.f32 %v4507, %v4835
    %v4837 = vpop.f32.mrf.mxu0
    %v4838 = vadd.f32 %v4509, %v4837
    %4839 = vmatmul.bf16.gmra.mxu0 %v4100
    %v4840 = vpop.f32.mrf.mxu0
    %v4841 = vadd.f32 %v4512, %v4840
    %v4842 = vpop.f32.mrf.mxu0
    %v4843 = vadd.f32 %v4514, %v4842
    %4844 = vmatmul.bf16.gmra.mxu0 %v4102
    %v4845 = vpop.f32.mrf.mxu0
    %v4846 = vadd.f32 %v4517, %v4845
    %v4847 = vpop.f32.mrf.mxu0
    %v4848 = vadd.f32 %v4519, %v4847
    %4849 = vmatmul.bf16.gmra.mxu0 %v4104
    %v4850 = vpop.f32.mrf.mxu0
    %v4851 = vadd.f32 %v4522, %v4850
    %v4852 = vpop.f32.mrf.mxu0
    %v4853 = vadd.f32 %v4524, %v4852
    %4854 = vmatmul.bf16.gmra.mxu0 %v4106
    %v4855 = vpop.f32.mrf.mxu0
    %v4856 = vadd.f32 %v4527, %v4855
    %v4857 = vpop.f32.mrf.mxu0
    %v4858 = vadd.f32 %v4529, %v4857
    %4859 = vmatmul.bf16.gmra.mxu0 %v4108
    %v4860 = vpop.f32.mrf.mxu0
    %v4861 = vadd.f32 %v4532, %v4860
    %v4862 = vpop.f32.mrf.mxu0
    %v4863 = vadd.f32 %v4534, %v4862
    %4864 = vmatmul.bf16.gmra.mxu0 %v4110
    %v4865 = vpop.f32.mrf.mxu0
    %v4866 = vadd.f32 %v4537, %v4865
    %v4867 = vpop.f32.mrf.mxu0
    %v4868 = vadd.f32 %v4539, %v4867
    %4869 = vmatmul.bf16.gmra.mxu0 %v4112
    %v4870 = vpop.f32.mrf.mxu0
    %v4871 = vadd.f32 %v4542, %v4870
    %v4872 = vpop.f32.mrf.mxu0
    %v4873 = vadd.f32 %v4544, %v4872
    %4874 = vmatmul.bf16.gmra.mxu0 %v4114
    %v4875 = vpop.f32.mrf.mxu0
    %v4876 = vadd.f32 %v4547, %v4875
    %v4877 = vpop.f32.mrf.mxu0
    %v4878 = vadd.f32 %v4549, %v4877
    %4879 = vmatmul.bf16.gmra.mxu0 %v4116
    %v4880 = vpop.f32.mrf.mxu0
    %v4881 = vadd.f32 %v4552, %v4880
    %v4882 = vpop.f32.mrf.mxu0
    %v4883 = vadd.f32 %v4554, %v4882
    %4884 = vmatmul.bf16.gmra.mxu0 %v4118
    %v4885 = vpop.f32.mrf.mxu0
    %v4886 = vadd.f32 %v4557, %v4885
    %v4887 = vpop.f32.mrf.mxu0
    %v4888 = vadd.f32 %v4559, %v4887
    %4889 = vmatmul.bf16.gmra.mxu0 %v4120
    %v4890 = vpop.f32.mrf.mxu0
    %v4891 = vadd.f32 %v4562, %v4890
    %v4892 = vpop.f32.mrf.mxu0
    %v4893 = vadd.f32 %v4564, %v4892
    %4894 = vmatmul.bf16.gmra.mxu0 %v4122
    %v4895 = vpop.f32.mrf.mxu0
    %v4896 = vadd.f32 %v4567, %v4895
    %v4897 = vpop.f32.mrf.mxu0
    %v4898 = vadd.f32 %v4569, %v4897
    %4899 = vmatmul.bf16.gmra.mxu0 %v4124
    %v4900 = vpop.f32.mrf.mxu0
    %v4901 = vadd.f32 %v4572, %v4900
    %v4902 = vpop.f32.mrf.mxu0
    %v4903 = vadd.f32 %v4574, %v4902
    %4904 = vmatmul.bf16.gmra.mxu0 %v4126
    %v4905 = vpop.f32.mrf.mxu0
    %v4906 = vadd.f32 %v4577, %v4905
    %v4907 = vpop.f32.mrf.mxu0
    %v4908 = vadd.f32 %v4579, %v4907
    %4909 = vmatmul.bf16.gmra.mxu0 %v4128
    %v4910 = vpop.f32.mrf.mxu0
    %v4911 = vadd.f32 %v4582, %v4910
    %v4912 = vpop.f32.mrf.mxu0
    %v4913 = vadd.f32 %v4584, %v4912
    %4914 = vdwg.mxu0
    %v4915 = vld [vmem:[%s4] sm:$0x1]
    %v4917 = vperm.slane %v4915, 0
    %4918 = vrot.lane.b32.xlu0 %v4917, 32
    %v4919 = vpop.permute.xlu0 %4918
    %v4921 = vadd.f32 %v4596, %v4919
    %v4922 = vadd.f32 %v4598, %v4919
    %v4923 = vadd.f32 %v4601, %v4919
    %v4924 = vadd.f32 %v4603, %v4919
    %v4925 = vadd.f32 %v4606, %v4919
    %v4926 = vadd.f32 %v4608, %v4919
    %v4927 = vadd.f32 %v4611, %v4919
    %v4928 = vadd.f32 %v4613, %v4919
    %v4929 = vadd.f32 %v4616, %v4919
    %v4930 = vadd.f32 %v4618, %v4919
    %v4931 = vadd.f32 %v4621, %v4919
    %v4932 = vadd.f32 %v4623, %v4919
    %v4933 = vadd.f32 %v4626, %v4919
    %v4934 = vadd.f32 %v4628, %v4919
    %v4935 = vadd.f32 %v4631, %v4919
    %v4936 = vadd.f32 %v4633, %v4919
    %v4937 = vadd.f32 %v4636, %v4919
    %v4938 = vadd.f32 %v4638, %v4919
    %v4939 = vadd.f32 %v4641, %v4919
    %v4940 = vadd.f32 %v4643, %v4919
    %v4941 = vadd.f32 %v4646, %v4919
    %v4942 = vadd.f32 %v4648, %v4919
    %v4943 = vadd.f32 %v4651, %v4919
    %v4944 = vadd.f32 %v4653, %v4919
    %v4945 = vadd.f32 %v4656, %v4919
    %v4946 = vadd.f32 %v4658, %v4919
    %v4947 = vadd.f32 %v4661, %v4919
    %v4948 = vadd.f32 %v4663, %v4919
    %v4949 = vadd.f32 %v4666, %v4919
    %v4950 = vadd.f32 %v4668, %v4919
    %v4951 = vadd.f32 %v4671, %v4919
    %v4952 = vadd.f32 %v4673, %v4919
    %v4953 = vadd.f32 %v4676, %v4919
    %v4954 = vadd.f32 %v4678, %v4919
    %v4955 = vadd.f32 %v4681, %v4919
    %v4956 = vadd.f32 %v4683, %v4919
    %v4957 = vadd.f32 %v4686, %v4919
    %v4958 = vadd.f32 %v4688, %v4919
    %v4959 = vadd.f32 %v4691, %v4919
    %v4960 = vadd.f32 %v4693, %v4919
    %v4961 = vadd.f32 %v4696, %v4919
    %v4962 = vadd.f32 %v4698, %v4919
    %v4963 = vadd.f32 %v4701, %v4919
    %v4964 = vadd.f32 %v4703, %v4919
    %v4965 = vadd.f32 %v4706, %v4919
    %v4966 = vadd.f32 %v4708, %v4919
    %v4967 = vadd.f32 %v4711, %v4919
    %v4968 = vadd.f32 %v4713, %v4919
    %v4969 = vadd.f32 %v4716, %v4919
    %v4970 = vadd.f32 %v4718, %v4919
    %v4971 = vadd.f32 %v4721, %v4919
    %v4972 = vadd.f32 %v4723, %v4919
    %v4973 = vadd.f32 %v4726, %v4919
    %v4974 = vadd.f32 %v4728, %v4919
    %v4975 = vadd.f32 %v4731, %v4919
    %v4976 = vadd.f32 %v4733, %v4919
    %v4977 = vadd.f32 %v4736, %v4919
    %v4978 = vadd.f32 %v4738, %v4919
    %v4979 = vadd.f32 %v4741, %v4919
    %v4980 = vadd.f32 %v4743, %v4919
    %v4981 = vadd.f32 %v4746, %v4919
    %v4982 = vadd.f32 %v4748, %v4919
    %v4983 = vadd.f32 %v4751, %v4919
    %v4984 = vadd.f32 %v4753, %v4919
    %v4985 = vadd.f32 %v4756, %v4919
    %v4986 = vadd.f32 %v4758, %v4919
    %v4987 = vadd.f32 %v4761, %v4919
    %v4988 = vadd.f32 %v4763, %v4919
    %v4989 = vadd.f32 %v4766, %v4919
    %v4990 = vadd.f32 %v4768, %v4919
    %v4991 = vadd.f32 %v4771, %v4919
    %v4992 = vadd.f32 %v4773, %v4919
    %v4993 = vadd.f32 %v4776, %v4919
    %v4994 = vadd.f32 %v4778, %v4919
    %v4995 = vadd.f32 %v4781, %v4919
    %v4996 = vadd.f32 %v4783, %v4919
    %v4997 = vadd.f32 %v4786, %v4919
    %v4998 = vadd.f32 %v4788, %v4919
    %v4999 = vadd.f32 %v4791, %v4919
    %v5000 = vadd.f32 %v4793, %v4919
    %v5001 = vadd.f32 %v4796, %v4919
    %v5002 = vadd.f32 %v4798, %v4919
    %v5003 = vadd.f32 %v4801, %v4919
    %v5004 = vadd.f32 %v4803, %v4919
    %v5005 = vadd.f32 %v4806, %v4919
    %v5006 = vadd.f32 %v4808, %v4919
    %v5007 = vadd.f32 %v4811, %v4919
    %v5008 = vadd.f32 %v4813, %v4919
    %v5009 = vadd.f32 %v4816, %v4919
    %v5010 = vadd.f32 %v4818, %v4919
    %v5011 = vadd.f32 %v4821, %v4919
    %v5012 = vadd.f32 %v4823, %v4919
    %v5013 = vadd.f32 %v4826, %v4919
    %v5014 = vadd.f32 %v4828, %v4919
    %v5015 = vadd.f32 %v4831, %v4919
    %v5016 = vadd.f32 %v4833, %v4919
    %v5017 = vadd.f32 %v4836, %v4919
    %v5018 = vadd.f32 %v4838, %v4919
    %v5019 = vadd.f32 %v4841, %v4919
    %v5020 = vadd.f32 %v4843, %v4919
    %v5021 = vadd.f32 %v4846, %v4919
    %v5022 = vadd.f32 %v4848, %v4919
    %v5023 = vadd.f32 %v4851, %v4919
    %v5024 = vadd.f32 %v4853, %v4919
    %v5025 = vadd.f32 %v4856, %v4919
    %v5026 = vadd.f32 %v4858, %v4919
    %v5027 = vadd.f32 %v4861, %v4919
    %v5028 = vadd.f32 %v4863, %v4919
    %v5029 = vadd.f32 %v4866, %v4919
    %v5030 = vadd.f32 %v4868, %v4919
    %v5031 = vadd.f32 %v4871, %v4919
    %v5032 = vadd.f32 %v4873, %v4919
    %v5033 = vadd.f32 %v4876, %v4919
    %v5034 = vadd.f32 %v4878, %v4919
    %v5035 = vadd.f32 %v4881, %v4919
    %v5036 = vadd.f32 %v4883, %v4919
    %v5037 = vadd.f32 %v4886, %v4919
    %v5038 = vadd.f32 %v4888, %v4919
    %v5039 = vadd.f32 %v4891, %v4919
    %v5040 = vadd.f32 %v4893, %v4919
    %v5041 = vadd.f32 %v4896, %v4919
    %v5042 = vadd.f32 %v4898, %v4919
    %v5043 = vadd.f32 %v4901, %v4919
    %v5044 = vadd.f32 %v4903, %v4919
    %v5045 = vadd.f32 %v4906, %v4919
    %v5046 = vadd.f32 %v4908, %v4919
    %v5047 = vadd.f32 %v4911, %v4919
    %v5048 = vadd.f32 %v4913, %v4919
    %v5049 = vmax.f32 %v4921, 0.0
    %v5050 = vmax.f32 %v4922, 0.0
    %v5051 = vmax.f32 %v4923, 0.0
    %v5052 = vmax.f32 %v4924, 0.0
    %v5053 = vmax.f32 %v4925, 0.0
    %v5054 = vmax.f32 %v4926, 0.0
    %v5055 = vmax.f32 %v4927, 0.0
    %v5056 = vmax.f32 %v4928, 0.0
    %v5057 = vmax.f32 %v4929, 0.0
    %v5058 = vmax.f32 %v4930, 0.0
    %v5059 = vmax.f32 %v4931, 0.0
    %v5060 = vmax.f32 %v4932, 0.0
    %v5061 = vmax.f32 %v4933, 0.0
    %v5062 = vmax.f32 %v4934, 0.0
    %v5063 = vmax.f32 %v4935, 0.0
    %v5064 = vmax.f32 %v4936, 0.0
    %v5065 = vmax.f32 %v4937, 0.0
    %v5066 = vmax.f32 %v4938, 0.0
    %v5067 = vmax.f32 %v4939, 0.0
    %v5068 = vmax.f32 %v4940, 0.0
    %v5069 = vmax.f32 %v4941, 0.0
    %v5070 = vmax.f32 %v4942, 0.0
    %v5071 = vmax.f32 %v4943, 0.0
    %v5072 = vmax.f32 %v4944, 0.0
    %v5073 = vmax.f32 %v4945, 0.0
    %v5074 = vmax.f32 %v4946, 0.0
    %v5075 = vmax.f32 %v4947, 0.0
    %v5076 = vmax.f32 %v4948, 0.0
    %v5077 = vmax.f32 %v4949, 0.0
    %v5078 = vmax.f32 %v4950, 0.0
    %v5079 = vmax.f32 %v4951, 0.0
    %v5080 = vmax.f32 %v4952, 0.0
    %v5081 = vmax.f32 %v4953, 0.0
    %v5082 = vmax.f32 %v4954, 0.0
    %v5083 = vmax.f32 %v4955, 0.0
    %v5084 = vmax.f32 %v4956, 0.0
    %v5085 = vmax.f32 %v4957, 0.0
    %v5086 = vmax.f32 %v4958, 0.0
    %v5087 = vmax.f32 %v4959, 0.0
    %v5088 = vmax.f32 %v4960, 0.0
    %v5089 = vmax.f32 %v4961, 0.0
    %v5090 = vmax.f32 %v4962, 0.0
    %v5091 = vmax.f32 %v4963, 0.0
    %v5092 = vmax.f32 %v4964, 0.0
    %v5093 = vmax.f32 %v4965, 0.0
    %v5094 = vmax.f32 %v4966, 0.0
    %v5095 = vmax.f32 %v4967, 0.0
    %v5096 = vmax.f32 %v4968, 0.0
    %v5097 = vmax.f32 %v4969, 0.0
    %v5098 = vmax.f32 %v4970, 0.0
    %v5099 = vmax.f32 %v4971, 0.0
    %v5100 = vmax.f32 %v4972, 0.0
    %v5101 = vmax.f32 %v4973, 0.0
    %v5102 = vmax.f32 %v4974, 0.0
    %v5103 = vmax.f32 %v4975, 0.0
    %v5104 = vmax.f32 %v4976, 0.0
    %v5105 = vmax.f32 %v4977, 0.0
    %v5106 = vmax.f32 %v4978, 0.0
    %v5107 = vmax.f32 %v4979, 0.0
    %v5108 = vmax.f32 %v4980, 0.0
    %v5109 = vmax.f32 %v4981, 0.0
    %v5110 = vmax.f32 %v4982, 0.0
    %v5111 = vmax.f32 %v4983, 0.0
    %v5112 = vmax.f32 %v4984, 0.0
    %v5113 = vmax.f32 %v4985, 0.0
    %v5114 = vmax.f32 %v4986, 0.0
    %v5115 = vmax.f32 %v4987, 0.0
    %v5116 = vmax.f32 %v4988, 0.0
    %v5117 = vmax.f32 %v4989, 0.0
    %v5118 = vmax.f32 %v4990, 0.0
    %v5119 = vmax.f32 %v4991, 0.0
    %v5120 = vmax.f32 %v4992, 0.0
    %v5121 = vmax.f32 %v4993, 0.0
    %v5122 = vmax.f32 %v4994, 0.0
    %v5123 = vmax.f32 %v4995, 0.0
    %v5124 = vmax.f32 %v4996, 0.0
    %v5125 = vmax.f32 %v4997, 0.0
    %v5126 = vmax.f32 %v4998, 0.0
    %v5127 = vmax.f32 %v4999, 0.0
    %v5128 = vmax.f32 %v5000, 0.0
    %v5129 = vmax.f32 %v5001, 0.0
    %v5130 = vmax.f32 %v5002, 0.0
    %v5131 = vmax.f32 %v5003, 0.0
    %v5132 = vmax.f32 %v5004, 0.0
    %v5133 = vmax.f32 %v5005, 0.0
    %v5134 = vmax.f32 %v5006, 0.0
    %v5135 = vmax.f32 %v5007, 0.0
    %v5136 = vmax.f32 %v5008, 0.0
    %v5137 = vmax.f32 %v5009, 0.0
    %v5138 = vmax.f32 %v5010, 0.0
    %v5139 = vmax.f32 %v5011, 0.0
    %v5140 = vmax.f32 %v5012, 0.0
    %v5141 = vmax.f32 %v5013, 0.0
    %v5142 = vmax.f32 %v5014, 0.0
    %v5143 = vmax.f32 %v5015, 0.0
    %v5144 = vmax.f32 %v5016, 0.0
    %v5145 = vmax.f32 %v5017, 0.0
    %v5146 = vmax.f32 %v5018, 0.0
    %v5147 = vmax.f32 %v5019, 0.0
    %v5148 = vmax.f32 %v5020, 0.0
    %v5149 = vmax.f32 %v5021, 0.0
    %v5150 = vmax.f32 %v5022, 0.0
    %v5151 = vmax.f32 %v5023, 0.0
    %v5152 = vmax.f32 %v5024, 0.0
    %v5153 = vmax.f32 %v5025, 0.0
    %v5154 = vmax.f32 %v5026, 0.0
    %v5155 = vmax.f32 %v5027, 0.0
    %v5156 = vmax.f32 %v5028, 0.0
    %v5157 = vmax.f32 %v5029, 0.0
    %v5158 = vmax.f32 %v5030, 0.0
    %v5159 = vmax.f32 %v5031, 0.0
    %v5160 = vmax.f32 %v5032, 0.0
    %v5161 = vmax.f32 %v5033, 0.0
    %v5162 = vmax.f32 %v5034, 0.0
    %v5163 = vmax.f32 %v5035, 0.0
    %v5164 = vmax.f32 %v5036, 0.0
    %v5165 = vmax.f32 %v5037, 0.0
    %v5166 = vmax.f32 %v5038, 0.0
    %v5167 = vmax.f32 %v5039, 0.0
    %v5168 = vmax.f32 %v5040, 0.0
    %v5169 = vmax.f32 %v5041, 0.0
    %v5170 = vmax.f32 %v5042, 0.0
    %v5171 = vmax.f32 %v5043, 0.0
    %v5172 = vmax.f32 %v5044, 0.0
    %v5173 = vmax.f32 %v5045, 0.0
    %v5174 = vmax.f32 %v5046, 0.0
    %v5175 = vmax.f32 %v5047, 0.0
    %v5176 = vmax.f32 %v5048, 0.0
    %v5177 = vld [vmem:[%s5] sm:$0xff]
    %v5178 = vld [vmem:[%s5 + $0x8] sm:$0xff]
    %v5179 = vld [vmem:[%s5 + $0x10] sm:$0xff]
    %v5180 = vld [vmem:[%s5 + $0x18] sm:$0xff]
    %v5181 = vld [vmem:[%s5 + $0x20] sm:$0xff]
    %v5182 = vld [vmem:[%s5 + $0x28] sm:$0xff]
    %v5183 = vld [vmem:[%s5 + $0x30] sm:$0xff]
    %v5184 = vld [vmem:[%s5 + $0x38] sm:$0xff]
    %v5185 = vld [vmem:[%s6] sm:$0x1]
    %v5187 = vperm.slane %v5185, 0
    %5317 = vrot.lane.b32.xlu0 %v5049, 96
    %v5318 = vpop.permute.xlu0 %5317
    %5319 = vrot.lane.b32.xlu0 %v5050, 96
    %v5320 = vpop.permute.xlu0 %5319
    %5321 = vrot.lane.b32.xlu0 %v5051, 96
    %v5322 = vpop.permute.xlu0 %5321
    %5323 = vrot.lane.b32.xlu0 %v5052, 96
    %v5324 = vpop.permute.xlu0 %5323
    %5325 = vrot.lane.b32.xlu0 %v5053, 96
    %v5326 = vpop.permute.xlu0 %5325
    %5327 = vrot.lane.b32.xlu0 %v5054, 96
    %v5328 = vpop.permute.xlu0 %5327
    %5329 = vrot.lane.b32.xlu0 %v5055, 96
    %v5330 = vpop.permute.xlu0 %5329
    %5331 = vrot.lane.b32.xlu0 %v5056, 96
    %v5332 = vpop.permute.xlu0 %5331
    %5333 = vrot.lane.b32.xlu0 %v5057, 96
    %v5334 = vpop.permute.xlu0 %5333
    %5335 = vrot.lane.b32.xlu0 %v5058, 96
    %v5336 = vpop.permute.xlu0 %5335
    %5337 = vrot.lane.b32.xlu0 %v5059, 96
    %v5338 = vpop.permute.xlu0 %5337
    %5339 = vrot.lane.b32.xlu0 %v5060, 96
    %v5340 = vpop.permute.xlu0 %5339
    %5341 = vrot.lane.b32.xlu0 %v5061, 96
    %v5342 = vpop.permute.xlu0 %5341
    %5343 = vrot.lane.b32.xlu0 %v5062, 96
    %v5344 = vpop.permute.xlu0 %5343
    %5345 = vrot.lane.b32.xlu0 %v5063, 96
    %v5346 = vpop.permute.xlu0 %5345
    %5347 = vrot.lane.b32.xlu0 %v5064, 96
    %v5348 = vpop.permute.xlu0 %5347
    %5349 = vrot.lane.b32.xlu0 %v5065, 96
    %v5350 = vpop.permute.xlu0 %5349
    %5351 = vrot.lane.b32.xlu0 %v5066, 96
    %v5352 = vpop.permute.xlu0 %5351
    %5353 = vrot.lane.b32.xlu0 %v5067, 96
    %v5354 = vpop.permute.xlu0 %5353
    %5355 = vrot.lane.b32.xlu0 %v5068, 96
    %v5356 = vpop.permute.xlu0 %5355
    %5357 = vrot.lane.b32.xlu0 %v5069, 96
    %v5358 = vpop.permute.xlu0 %5357
    %5359 = vrot.lane.b32.xlu0 %v5070, 96
    %v5360 = vpop.permute.xlu0 %5359
    %5361 = vrot.lane.b32.xlu0 %v5071, 96
    %v5362 = vpop.permute.xlu0 %5361
    %5363 = vrot.lane.b32.xlu0 %v5072, 96
    %v5364 = vpop.permute.xlu0 %5363
    %5365 = vrot.lane.b32.xlu0 %v5073, 96
    %v5366 = vpop.permute.xlu0 %5365
    %5367 = vrot.lane.b32.xlu0 %v5074, 96
    %v5368 = vpop.permute.xlu0 %5367
    %5369 = vrot.lane.b32.xlu0 %v5075, 96
    %v5370 = vpop.permute.xlu0 %5369
    %5371 = vrot.lane.b32.xlu0 %v5076, 96
    %v5372 = vpop.permute.xlu0 %5371
    %5373 = vrot.lane.b32.xlu0 %v5077, 96
    %v5374 = vpop.permute.xlu0 %5373
    %5375 = vrot.lane.b32.xlu0 %v5078, 96
    %v5376 = vpop.permute.xlu0 %5375
    %5377 = vrot.lane.b32.xlu0 %v5079, 96
    %v5378 = vpop.permute.xlu0 %5377
    %5379 = vrot.lane.b32.xlu0 %v5080, 96
    %v5380 = vpop.permute.xlu0 %5379
    %5381 = vrot.lane.b32.xlu0 %v5081, 96
    %v5382 = vpop.permute.xlu0 %5381
    %5383 = vrot.lane.b32.xlu0 %v5082, 96
    %v5384 = vpop.permute.xlu0 %5383
    %5385 = vrot.lane.b32.xlu0 %v5083, 96
    %v5386 = vpop.permute.xlu0 %5385
    %5387 = vrot.lane.b32.xlu0 %v5084, 96
    %v5388 = vpop.permute.xlu0 %5387
    %5389 = vrot.lane.b32.xlu0 %v5085, 96
    %v5390 = vpop.permute.xlu0 %5389
    %5391 = vrot.lane.b32.xlu0 %v5086, 96
    %v5392 = vpop.permute.xlu0 %5391
    %5393 = vrot.lane.b32.xlu0 %v5087, 96
    %v5394 = vpop.permute.xlu0 %5393
    %5395 = vrot.lane.b32.xlu0 %v5088, 96
    %v5396 = vpop.permute.xlu0 %5395
    %5397 = vrot.lane.b32.xlu0 %v5089, 96
    %v5398 = vpop.permute.xlu0 %5397
    %5399 = vrot.lane.b32.xlu0 %v5090, 96
    %v5400 = vpop.permute.xlu0 %5399
    %5401 = vrot.lane.b32.xlu0 %v5091, 96
    %v5402 = vpop.permute.xlu0 %5401
    %5403 = vrot.lane.b32.xlu0 %v5092, 96
    %v5404 = vpop.permute.xlu0 %5403
    %5405 = vrot.lane.b32.xlu0 %v5093, 96
    %v5406 = vpop.permute.xlu0 %5405
    %5407 = vrot.lane.b32.xlu0 %v5094, 96
    %v5408 = vpop.permute.xlu0 %5407
    %5409 = vrot.lane.b32.xlu0 %v5095, 96
    %v5410 = vpop.permute.xlu0 %5409
    %5411 = vrot.lane.b32.xlu0 %v5096, 96
    %v5412 = vpop.permute.xlu0 %5411
    %5413 = vrot.lane.b32.xlu0 %v5097, 96
    %v5414 = vpop.permute.xlu0 %5413
    %5415 = vrot.lane.b32.xlu0 %v5098, 96
    %v5416 = vpop.permute.xlu0 %5415
    %5417 = vrot.lane.b32.xlu0 %v5099, 96
    %v5418 = vpop.permute.xlu0 %5417
    %5419 = vrot.lane.b32.xlu0 %v5100, 96
    %v5420 = vpop.permute.xlu0 %5419
    %5421 = vrot.lane.b32.xlu0 %v5101, 96
    %v5422 = vpop.permute.xlu0 %5421
    %5423 = vrot.lane.b32.xlu0 %v5102, 96
    %v5424 = vpop.permute.xlu0 %5423
    %5425 = vrot.lane.b32.xlu0 %v5103, 96
    %v5426 = vpop.permute.xlu0 %5425
    %5427 = vrot.lane.b32.xlu0 %v5104, 96
    %v5428 = vpop.permute.xlu0 %5427
    %5429 = vrot.lane.b32.xlu0 %v5105, 96
    %v5430 = vpop.permute.xlu0 %5429
    %5431 = vrot.lane.b32.xlu0 %v5106, 96
    %v5432 = vpop.permute.xlu0 %5431
    %5433 = vrot.lane.b32.xlu0 %v5107, 96
    %v5434 = vpop.permute.xlu0 %5433
    %5435 = vrot.lane.b32.xlu0 %v5108, 96
    %v5436 = vpop.permute.xlu0 %5435
    %5437 = vrot.lane.b32.xlu0 %v5109, 96
    %v5438 = vpop.permute.xlu0 %5437
    %5439 = vrot.lane.b32.xlu0 %v5110, 96
    %v5440 = vpop.permute.xlu0 %5439
    %5441 = vrot.lane.b32.xlu0 %v5111, 96
    %v5442 = vpop.permute.xlu0 %5441
    %5443 = vrot.lane.b32.xlu0 %v5112, 96
    %v5444 = vpop.permute.xlu0 %5443
    %5445 = vrot.lane.b32.xlu0 %v5113, 96
    %v5446 = vpop.permute.xlu0 %5445
    %5447 = vrot.lane.b32.xlu0 %v5114, 96
    %v5448 = vpop.permute.xlu0 %5447
    %5449 = vrot.lane.b32.xlu0 %v5115, 96
    %v5450 = vpop.permute.xlu0 %5449
    %5451 = vrot.lane.b32.xlu0 %v5116, 96
    %v5452 = vpop.permute.xlu0 %5451
    %5453 = vrot.lane.b32.xlu0 %v5117, 96
    %v5454 = vpop.permute.xlu0 %5453
    %5455 = vrot.lane.b32.xlu0 %v5118, 96
    %v5456 = vpop.permute.xlu0 %5455
    %5457 = vrot.lane.b32.xlu0 %v5119, 96
    %v5458 = vpop.permute.xlu0 %5457
    %5459 = vrot.lane.b32.xlu0 %v5120, 96
    %v5460 = vpop.permute.xlu0 %5459
    %5461 = vrot.lane.b32.xlu0 %v5121, 96
    %v5462 = vpop.permute.xlu0 %5461
    %5463 = vrot.lane.b32.xlu0 %v5122, 96
    %v5464 = vpop.permute.xlu0 %5463
    %5465 = vrot.lane.b32.xlu0 %v5123, 96
    %v5466 = vpop.permute.xlu0 %5465
    %5467 = vrot.lane.b32.xlu0 %v5124, 96
    %v5468 = vpop.permute.xlu0 %5467
    %5469 = vrot.lane.b32.xlu0 %v5125, 96
    %v5470 = vpop.permute.xlu0 %5469
    %5471 = vrot.lane.b32.xlu0 %v5126, 96
    %v5472 = vpop.permute.xlu0 %5471
    %5473 = vrot.lane.b32.xlu0 %v5127, 96
    %v5474 = vpop.permute.xlu0 %5473
    %5475 = vrot.lane.b32.xlu0 %v5128, 96
    %v5476 = vpop.permute.xlu0 %5475
    %5477 = vrot.lane.b32.xlu0 %v5129, 96
    %v5478 = vpop.permute.xlu0 %5477
    %5479 = vrot.lane.b32.xlu0 %v5130, 96
    %v5480 = vpop.permute.xlu0 %5479
    %5481 = vrot.lane.b32.xlu0 %v5131, 96
    %v5482 = vpop.permute.xlu0 %5481
    %5483 = vrot.lane.b32.xlu0 %v5132, 96
    %v5484 = vpop.permute.xlu0 %5483
    %5485 = vrot.lane.b32.xlu0 %v5133, 96
    %v5486 = vpop.permute.xlu0 %5485
    %5487 = vrot.lane.b32.xlu0 %v5134, 96
    %v5488 = vpop.permute.xlu0 %5487
    %5489 = vrot.lane.b32.xlu0 %v5135, 96
    %v5490 = vpop.permute.xlu0 %5489
    %5491 = vrot.lane.b32.xlu0 %v5136, 96
    %v5492 = vpop.permute.xlu0 %5491
    %5493 = vrot.lane.b32.xlu0 %v5137, 96
    %v5494 = vpop.permute.xlu0 %5493
    %5495 = vrot.lane.b32.xlu0 %v5138, 96
    %v5496 = vpop.permute.xlu0 %5495
    %5497 = vrot.lane.b32.xlu0 %v5139, 96
    %v5498 = vpop.permute.xlu0 %5497
    %5499 = vrot.lane.b32.xlu0 %v5140, 96
    %v5500 = vpop.permute.xlu0 %5499
    %5501 = vrot.lane.b32.xlu0 %v5141, 96
    %v5502 = vpop.permute.xlu0 %5501
    %5503 = vrot.lane.b32.xlu0 %v5142, 96
    %v5504 = vpop.permute.xlu0 %5503
    %5505 = vrot.lane.b32.xlu0 %v5143, 96
    %v5506 = vpop.permute.xlu0 %5505
    %5507 = vrot.lane.b32.xlu0 %v5144, 96
    %v5508 = vpop.permute.xlu0 %5507
    %5509 = vrot.lane.b32.xlu0 %v5145, 96
    %v5510 = vpop.permute.xlu0 %5509
    %5511 = vrot.lane.b32.xlu0 %v5146, 96
    %v5512 = vpop.permute.xlu0 %5511
    %5513 = vrot.lane.b32.xlu0 %v5147, 96
    %v5514 = vpop.permute.xlu0 %5513
    %5515 = vrot.lane.b32.xlu0 %v5148, 96
    %v5516 = vpop.permute.xlu0 %5515
    %5517 = vrot.lane.b32.xlu0 %v5149, 96
    %v5518 = vpop.permute.xlu0 %5517
    %5519 = vrot.lane.b32.xlu0 %v5150, 96
    %v5520 = vpop.permute.xlu0 %5519
    %5521 = vrot.lane.b32.xlu0 %v5151, 96
    %v5522 = vpop.permute.xlu0 %5521
    %5523 = vrot.lane.b32.xlu0 %v5152, 96
    %v5524 = vpop.permute.xlu0 %5523
    %5525 = vrot.lane.b32.xlu0 %v5153, 96
    %v5526 = vpop.permute.xlu0 %5525
    %5527 = vrot.lane.b32.xlu0 %v5154, 96
    %v5528 = vpop.permute.xlu0 %5527
    %5529 = vrot.lane.b32.xlu0 %v5155, 96
    %v5530 = vpop.permute.xlu0 %5529
    %5531 = vrot.lane.b32.xlu0 %v5156, 96
    %v5532 = vpop.permute.xlu0 %5531
    %5533 = vrot.lane.b32.xlu0 %v5157, 96
    %v5534 = vpop.permute.xlu0 %5533
    %5535 = vrot.lane.b32.xlu0 %v5158, 96
    %v5536 = vpop.permute.xlu0 %5535
    %5537 = vrot.lane.b32.xlu0 %v5159, 96
    %v5538 = vpop.permute.xlu0 %5537
    %5539 = vrot.lane.b32.xlu0 %v5160, 96
    %v5540 = vpop.permute.xlu0 %5539
    %5541 = vrot.lane.b32.xlu0 %v5161, 96
    %v5542 = vpop.permute.xlu0 %5541
    %5543 = vrot.lane.b32.xlu0 %v5162, 96
    %v5544 = vpop.permute.xlu0 %5543
    %5545 = vrot.lane.b32.xlu0 %v5163, 96
    %v5546 = vpop.permute.xlu0 %5545
    %5547 = vrot.lane.b32.xlu0 %v5164, 96
    %v5548 = vpop.permute.xlu0 %5547
    %5549 = vrot.lane.b32.xlu0 %v5165, 96
    %v5550 = vpop.permute.xlu0 %5549
    %5551 = vrot.lane.b32.xlu0 %v5166, 96
    %v5552 = vpop.permute.xlu0 %5551
    %5553 = vrot.lane.b32.xlu0 %v5167, 96
    %v5554 = vpop.permute.xlu0 %5553
    %5555 = vrot.lane.b32.xlu0 %v5168, 96
    %v5556 = vpop.permute.xlu0 %5555
    %5557 = vrot.lane.b32.xlu0 %v5169, 96
    %v5558 = vpop.permute.xlu0 %5557
    %5559 = vrot.lane.b32.xlu0 %v5170, 96
    %v5560 = vpop.permute.xlu0 %5559
    %5561 = vrot.lane.b32.xlu0 %v5171, 96
    %v5562 = vpop.permute.xlu0 %5561
    %5563 = vrot.lane.b32.xlu0 %v5172, 96
    %v5564 = vpop.permute.xlu0 %5563
    %5565 = vrot.lane.b32.xlu0 %v5173, 96
    %v5566 = vpop.permute.xlu0 %5565
    %5567 = vrot.lane.b32.xlu0 %v5174, 96
    %v5568 = vpop.permute.xlu0 %5567
    %5569 = vrot.lane.b32.xlu0 %v5175, 96
    %v5570 = vpop.permute.xlu0 %5569
    %5571 = vrot.lane.b32.xlu0 %v5176, 96
    %v5572 = vpop.permute.xlu0 %5571
    %vm5573 = vcmask 523264
    %v5574 = vsel %vm5573, %v5318, 0
    %v5576 = vsel %vm5573, %v5320, 0
    %v5578 = vsel %vm5573, %v5322, 0
    %v5580 = vsel %vm5573, %v5324, 0
    %v5582 = vsel %vm5573, %v5326, 0
    %v5584 = vsel %vm5573, %v5328, 0
    %v5586 = vsel %vm5573, %v5330, 0
    %v5588 = vsel %vm5573, %v5332, 0
    %v5590 = vsel %vm5573, %v5334, 0
    %v5592 = vsel %vm5573, %v5336, 0
    %v5594 = vsel %vm5573, %v5338, 0
    %v5596 = vsel %vm5573, %v5340, 0
    %v5598 = vsel %vm5573, %v5342, 0
    %v5600 = vsel %vm5573, %v5344, 0
    %v5602 = vsel %vm5573, %v5346, 0
    %v5604 = vsel %vm5573, %v5348, 0
    %v5606 = vsel %vm5573, %v5350, 0
    %v5608 = vsel %vm5573, %v5352, 0
    %v5610 = vsel %vm5573, %v5354, 0
    %v5612 = vsel %vm5573, %v5356, 0
    %v5614 = vsel %vm5573, %v5358, 0
    %v5616 = vsel %vm5573, %v5360, 0
    %v5618 = vsel %vm5573, %v5362, 0
    %v5620 = vsel %vm5573, %v5364, 0
    %v5622 = vsel %vm5573, %v5366, 0
    %v5624 = vsel %vm5573, %v5368, 0
    %v5626 = vsel %vm5573, %v5370, 0
    %v5628 = vsel %vm5573, %v5372, 0
    %v5630 = vsel %vm5573, %v5374, 0
    %v5632 = vsel %vm5573, %v5376, 0
    %v5634 = vsel %vm5573, %v5378, 0
    %v5636 = vsel %vm5573, %v5380, 0
    %v5638 = vsel %vm5573, %v5382, 0
    %v5640 = vsel %vm5573, %v5384, 0
    %v5642 = vsel %vm5573, %v5386, 0
    %v5644 = vsel %vm5573, %v5388, 0
    %v5646 = vsel %vm5573, %v5390, 0
    %v5648 = vsel %vm5573, %v5392, 0
    %v5650 = vsel %vm5573, %v5394, 0
    %v5652 = vsel %vm5573, %v5396, 0
    %v5654 = vsel %vm5573, %v5398, 0
    %v5656 = vsel %vm5573, %v5400, 0
    %v5658 = vsel %vm5573, %v5402, 0
    %v5660 = vsel %vm5573, %v5404, 0
    %v5662 = vsel %vm5573, %v5406, 0
    %v5664 = vsel %vm5573, %v5408, 0
    %v5666 = vsel %vm5573, %v5410, 0
    %v5668 = vsel %vm5573, %v5412, 0
    %v5670 = vsel %vm5573, %v5414, 0
    %v5672 = vsel %vm5573, %v5416, 0
    %v5674 = vsel %vm5573, %v5418, 0
    %v5676 = vsel %vm5573, %v5420, 0
    %v5678 = vsel %vm5573, %v5422, 0
    %v5680 = vsel %vm5573, %v5424, 0
    %v5682 = vsel %vm5573, %v5426, 0
    %v5684 = vsel %vm5573, %v5428, 0
    %v5686 = vsel %vm5573, %v5430, 0
    %v5688 = vsel %vm5573, %v5432, 0
    %v5690 = vsel %vm5573, %v5434, 0
    %v5692 = vsel %vm5573, %v5436, 0
    %v5694 = vsel %vm5573, %v5438, 0
    %v5696 = vsel %vm5573, %v5440, 0
    %v5698 = vsel %vm5573, %v5442, 0
    %v5700 = vsel %vm5573, %v5444, 0
    %v5702 = vsel %vm5573, %v5446, 0
    %v5704 = vsel %vm5573, %v5448, 0
    %v5706 = vsel %vm5573, %v5450, 0
    %v5708 = vsel %vm5573, %v5452, 0
    %v5710 = vsel %vm5573, %v5454, 0
    %v5712 = vsel %vm5573, %v5456, 0
    %v5714 = vsel %vm5573, %v5458, 0
    %v5716 = vsel %vm5573, %v5460, 0
    %v5718 = vsel %vm5573, %v5462, 0
    %v5720 = vsel %vm5573, %v5464, 0
    %v5722 = vsel %vm5573, %v5466, 0
    %v5724 = vsel %vm5573, %v5468, 0
    %v5726 = vsel %vm5573, %v5470, 0
    %v5728 = vsel %vm5573, %v5472, 0
    %v5730 = vsel %vm5573, %v5474, 0
    %v5732 = vsel %vm5573, %v5476, 0
    %v5734 = vsel %vm5573, %v5478, 0
    %v5736 = vsel %vm5573, %v5480, 0
    %v5738 = vsel %vm5573, %v5482, 0
    %v5740 = vsel %vm5573, %v5484, 0
    %v5742 = vsel %vm5573, %v5486, 0
    %v5744 = vsel %vm5573, %v5488, 0
    %v5746 = vsel %vm5573, %v5490, 0
    %v5748 = vsel %vm5573, %v5492, 0
    %v5750 = vsel %vm5573, %v5494, 0
    %v5752 = vsel %vm5573, %v5496, 0
    %v5754 = vsel %vm5573, %v5498, 0
    %v5756 = vsel %vm5573, %v5500, 0
    %v5758 = vsel %vm5573, %v5502, 0
    %v5760 = vsel %vm5573, %v5504, 0
    %v5762 = vsel %vm5573, %v5506, 0
    %v5764 = vsel %vm5573, %v5508, 0
    %v5766 = vsel %vm5573, %v5510, 0
    %v5768 = vsel %vm5573, %v5512, 0
    %v5770 = vsel %vm5573, %v5514, 0
    %v5772 = vsel %vm5573, %v5516, 0
    %v5774 = vsel %vm5573, %v5518, 0
    %v5776 = vsel %vm5573, %v5520, 0
    %v5778 = vsel %vm5573, %v5522, 0
    %v5780 = vsel %vm5573, %v5524, 0
    %v5782 = vsel %vm5573, %v5526, 0
    %v5784 = vsel %vm5573, %v5528, 0
    %v5786 = vsel %vm5573, %v5530, 0
    %v5788 = vsel %vm5573, %v5532, 0
    %v5790 = vsel %vm5573, %v5534, 0
    %v5792 = vsel %vm5573, %v5536, 0
    %v5794 = vsel %vm5573, %v5538, 0
    %v5796 = vsel %vm5573, %v5540, 0
    %v5798 = vsel %vm5573, %v5542, 0
    %v5800 = vsel %vm5573, %v5544, 0
    %v5802 = vsel %vm5573, %v5546, 0
    %v5804 = vsel %vm5573, %v5548, 0
    %v5806 = vsel %vm5573, %v5550, 0
    %v5808 = vsel %vm5573, %v5552, 0
    %v5810 = vsel %vm5573, %v5554, 0
    %v5812 = vsel %vm5573, %v5556, 0
    %v5814 = vsel %vm5573, %v5558, 0
    %v5816 = vsel %vm5573, %v5560, 0
    %v5818 = vsel %vm5573, %v5562, 0
    %v5820 = vsel %vm5573, %v5564, 0
    %v5822 = vsel %vm5573, %v5566, 0
    %v5824 = vsel %vm5573, %v5568, 0
    %v5826 = vsel %vm5573, %v5570, 0
    %v5828 = vsel %vm5573, %v5572, 0
    %5830 = vmatpush.msra.mxu0 0.0
    %5831 = vmatpush.msra.mxu0 0.0
    %5832 = vmatpush.msra.mxu0 0.0
    %5833 = vmatpush.msra.mxu0 0.0
    %5834 = vmatpush.msra.mxu0 0.0
    %5835 = vmatpush.msra.mxu0 0.0
    %5836 = vmatpush.msra.mxu0 0.0
    %5837 = vmatpush.msra.mxu0 0.0
    %5838 = vmatpush.msra.mxu0 %v5184
    %5839 = vmatpush.msra.mxu0 %v5183
    %5840 = vmatpush.msra.mxu0 %v5182
    %5841 = vmatpush.msra.mxu0 %v5181
    %5842 = vmatpush.msra.mxu0 %v5180
    %5843 = vmatpush.msra.mxu0 %v5179
    %5844 = vmatpush.msra.mxu0 %v5178
    %5845 = vmatpush.msra.mxu0 %v5177
    %5846 = vmatmul.f32.gmra.mxu0 %v5574
    %v5847 = vpop.f32.mrf.mxu0
    %v5848 = vadd.f32 %v5187, %v5847
    %5849 = vmatmul.f32.gmra.mxu0 %v5576
    %v5850 = vpop.f32.mrf.mxu0
    %v5851 = vadd.f32 %v5187, %v5850
    %5852 = vmatmul.f32.gmra.mxu0 %v5578
    %v5853 = vpop.f32.mrf.mxu0
    %v5854 = vadd.f32 %v5187, %v5853
    %5855 = vmatmul.f32.gmra.mxu0 %v5580
    %v5856 = vpop.f32.mrf.mxu0
    %v5857 = vadd.f32 %v5187, %v5856
    %5858 = vmatmul.f32.gmra.mxu0 %v5582
    %v5859 = vpop.f32.mrf.mxu0
    %v5860 = vadd.f32 %v5187, %v5859
    %5861 = vmatmul.f32.gmra.mxu0 %v5584
    %v5862 = vpop.f32.mrf.mxu0
    %v5863 = vadd.f32 %v5187, %v5862
    %5864 = vmatmul.f32.gmra.mxu0 %v5586
    %v5865 = vpop.f32.mrf.mxu0
    %v5866 = vadd.f32 %v5187, %v5865
    %5867 = vmatmul.f32.gmra.mxu0 %v5588
    %v5868 = vpop.f32.mrf.mxu0
    %v5869 = vadd.f32 %v5187, %v5868
    %5870 = vmatmul.f32.gmra.mxu0 %v5590
    %v5871 = vpop.f32.mrf.mxu0
    %v5872 = vadd.f32 %v5187, %v5871
    %5873 = vmatmul.f32.gmra.mxu0 %v5592
    %v5874 = vpop.f32.mrf.mxu0
    %v5875 = vadd.f32 %v5187, %v5874
    %5876 = vmatmul.f32.gmra.mxu0 %v5594
    %v5877 = vpop.f32.mrf.mxu0
    %v5878 = vadd.f32 %v5187, %v5877
    %5879 = vmatmul.f32.gmra.mxu0 %v5596
    %v5880 = vpop.f32.mrf.mxu0
    %v5881 = vadd.f32 %v5187, %v5880
    %5882 = vmatmul.f32.gmra.mxu0 %v5598
    %v5883 = vpop.f32.mrf.mxu0
    %v5884 = vadd.f32 %v5187, %v5883
    %5885 = vmatmul.f32.gmra.mxu0 %v5600
    %v5886 = vpop.f32.mrf.mxu0
    %v5887 = vadd.f32 %v5187, %v5886
    %5888 = vmatmul.f32.gmra.mxu0 %v5602
    %v5889 = vpop.f32.mrf.mxu0
    %v5890 = vadd.f32 %v5187, %v5889
    %5891 = vmatmul.f32.gmra.mxu0 %v5604
    %v5892 = vpop.f32.mrf.mxu0
    %v5893 = vadd.f32 %v5187, %v5892
    %5894 = vmatmul.f32.gmra.mxu0 %v5606
    %v5895 = vpop.f32.mrf.mxu0
    %v5896 = vadd.f32 %v5187, %v5895
    %5897 = vmatmul.f32.gmra.mxu0 %v5608
    %v5898 = vpop.f32.mrf.mxu0
    %v5899 = vadd.f32 %v5187, %v5898
    %5900 = vmatmul.f32.gmra.mxu0 %v5610
    %v5901 = vpop.f32.mrf.mxu0
    %v5902 = vadd.f32 %v5187, %v5901
    %5903 = vmatmul.f32.gmra.mxu0 %v5612
    %v5904 = vpop.f32.mrf.mxu0
    %v5905 = vadd.f32 %v5187, %v5904
    %5906 = vmatmul.f32.gmra.mxu0 %v5614
    %v5907 = vpop.f32.mrf.mxu0
    %v5908 = vadd.f32 %v5187, %v5907
    %5909 = vmatmul.f32.gmra.mxu0 %v5616
    %v5910 = vpop.f32.mrf.mxu0
    %v5911 = vadd.f32 %v5187, %v5910
    %5912 = vmatmul.f32.gmra.mxu0 %v5618
    %v5913 = vpop.f32.mrf.mxu0
    %v5914 = vadd.f32 %v5187, %v5913
    %5915 = vmatmul.f32.gmra.mxu0 %v5620
    %v5916 = vpop.f32.mrf.mxu0
    %v5917 = vadd.f32 %v5187, %v5916
    %5918 = vmatmul.f32.gmra.mxu0 %v5622
    %v5919 = vpop.f32.mrf.mxu0
    %v5920 = vadd.f32 %v5187, %v5919
    %5921 = vmatmul.f32.gmra.mxu0 %v5624
    %v5922 = vpop.f32.mrf.mxu0
    %v5923 = vadd.f32 %v5187, %v5922
    %5924 = vmatmul.f32.gmra.mxu0 %v5626
    %v5925 = vpop.f32.mrf.mxu0
    %v5926 = vadd.f32 %v5187, %v5925
    %5927 = vmatmul.f32.gmra.mxu0 %v5628
    %v5928 = vpop.f32.mrf.mxu0
    %v5929 = vadd.f32 %v5187, %v5928
    %5930 = vmatmul.f32.gmra.mxu0 %v5630
    %v5931 = vpop.f32.mrf.mxu0
    %v5932 = vadd.f32 %v5187, %v5931
    %5933 = vmatmul.f32.gmra.mxu0 %v5632
    %v5934 = vpop.f32.mrf.mxu0
    %v5935 = vadd.f32 %v5187, %v5934
    %5936 = vmatmul.f32.gmra.mxu0 %v5634
    %v5937 = vpop.f32.mrf.mxu0
    %v5938 = vadd.f32 %v5187, %v5937
    %5939 = vmatmul.f32.gmra.mxu0 %v5636
    %v5940 = vpop.f32.mrf.mxu0
    %v5941 = vadd.f32 %v5187, %v5940
    %5942 = vmatmul.f32.gmra.mxu0 %v5638
    %v5943 = vpop.f32.mrf.mxu0
    %v5944 = vadd.f32 %v5187, %v5943
    %5945 = vmatmul.f32.gmra.mxu0 %v5640
    %v5946 = vpop.f32.mrf.mxu0
    %v5947 = vadd.f32 %v5187, %v5946
    %5948 = vmatmul.f32.gmra.mxu0 %v5642
    %v5949 = vpop.f32.mrf.mxu0
    %v5950 = vadd.f32 %v5187, %v5949
    %5951 = vmatmul.f32.gmra.mxu0 %v5644
    %v5952 = vpop.f32.mrf.mxu0
    %v5953 = vadd.f32 %v5187, %v5952
    %5954 = vmatmul.f32.gmra.mxu0 %v5646
    %v5955 = vpop.f32.mrf.mxu0
    %v5956 = vadd.f32 %v5187, %v5955
    %5957 = vmatmul.f32.gmra.mxu0 %v5648
    %v5958 = vpop.f32.mrf.mxu0
    %v5959 = vadd.f32 %v5187, %v5958
    %5960 = vmatmul.f32.gmra.mxu0 %v5650
    %v5961 = vpop.f32.mrf.mxu0
    %v5962 = vadd.f32 %v5187, %v5961
    %5963 = vmatmul.f32.gmra.mxu0 %v5652
    %v5964 = vpop.f32.mrf.mxu0
    %v5965 = vadd.f32 %v5187, %v5964
    %5966 = vmatmul.f32.gmra.mxu0 %v5654
    %v5967 = vpop.f32.mrf.mxu0
    %v5968 = vadd.f32 %v5187, %v5967
    %5969 = vmatmul.f32.gmra.mxu0 %v5656
    %v5970 = vpop.f32.mrf.mxu0
    %v5971 = vadd.f32 %v5187, %v5970
    %5972 = vmatmul.f32.gmra.mxu0 %v5658
    %v5973 = vpop.f32.mrf.mxu0
    %v5974 = vadd.f32 %v5187, %v5973
    %5975 = vmatmul.f32.gmra.mxu0 %v5660
    %v5976 = vpop.f32.mrf.mxu0
    %v5977 = vadd.f32 %v5187, %v5976
    %5978 = vmatmul.f32.gmra.mxu0 %v5662
    %v5979 = vpop.f32.mrf.mxu0
    %v5980 = vadd.f32 %v5187, %v5979
    %5981 = vmatmul.f32.gmra.mxu0 %v5664
    %v5982 = vpop.f32.mrf.mxu0
    %v5983 = vadd.f32 %v5187, %v5982
    %5984 = vmatmul.f32.gmra.mxu0 %v5666
    %v5985 = vpop.f32.mrf.mxu0
    %v5986 = vadd.f32 %v5187, %v5985
    %5987 = vmatmul.f32.gmra.mxu0 %v5668
    %v5988 = vpop.f32.mrf.mxu0
    %v5989 = vadd.f32 %v5187, %v5988
    %5990 = vmatmul.f32.gmra.mxu0 %v5670
    %v5991 = vpop.f32.mrf.mxu0
    %v5992 = vadd.f32 %v5187, %v5991
    %5993 = vmatmul.f32.gmra.mxu0 %v5672
    %v5994 = vpop.f32.mrf.mxu0
    %v5995 = vadd.f32 %v5187, %v5994
    %5996 = vmatmul.f32.gmra.mxu0 %v5674
    %v5997 = vpop.f32.mrf.mxu0
    %v5998 = vadd.f32 %v5187, %v5997
    %5999 = vmatmul.f32.gmra.mxu0 %v5676
    %v6000 = vpop.f32.mrf.mxu0
    %v6001 = vadd.f32 %v5187, %v6000
    %6002 = vmatmul.f32.gmra.mxu0 %v5678
    %v6003 = vpop.f32.mrf.mxu0
    %v6004 = vadd.f32 %v5187, %v6003
    %6005 = vmatmul.f32.gmra.mxu0 %v5680
    %v6006 = vpop.f32.mrf.mxu0
    %v6007 = vadd.f32 %v5187, %v6006
    %6008 = vmatmul.f32.gmra.mxu0 %v5682
    %v6009 = vpop.f32.mrf.mxu0
    %v6010 = vadd.f32 %v5187, %v6009
    %6011 = vmatmul.f32.gmra.mxu0 %v5684
    %v6012 = vpop.f32.mrf.mxu0
    %v6013 = vadd.f32 %v5187, %v6012
    %6014 = vmatmul.f32.gmra.mxu0 %v5686
    %v6015 = vpop.f32.mrf.mxu0
    %v6016 = vadd.f32 %v5187, %v6015
    %6017 = vmatmul.f32.gmra.mxu0 %v5688
    %v6018 = vpop.f32.mrf.mxu0
    %v6019 = vadd.f32 %v5187, %v6018
    %6020 = vmatmul.f32.gmra.mxu0 %v5690
    %v6021 = vpop.f32.mrf.mxu0
    %v6022 = vadd.f32 %v5187, %v6021
    %6023 = vmatmul.f32.gmra.mxu0 %v5692
    %v6024 = vpop.f32.mrf.mxu0
    %v6025 = vadd.f32 %v5187, %v6024
    %6026 = vmatmul.f32.gmra.mxu0 %v5694
    %v6027 = vpop.f32.mrf.mxu0
    %v6028 = vadd.f32 %v5187, %v6027
    %6029 = vmatmul.f32.gmra.mxu0 %v5696
    %v6030 = vpop.f32.mrf.mxu0
    %v6031 = vadd.f32 %v5187, %v6030
    %6032 = vmatmul.f32.gmra.mxu0 %v5698
    %v6033 = vpop.f32.mrf.mxu0
    %v6034 = vadd.f32 %v5187, %v6033
    %6035 = vmatmul.f32.gmra.mxu0 %v5700
    %v6036 = vpop.f32.mrf.mxu0
    %v6037 = vadd.f32 %v5187, %v6036
    %6038 = vmatmul.f32.gmra.mxu0 %v5702
    %v6039 = vpop.f32.mrf.mxu0
    %v6040 = vadd.f32 %v5187, %v6039
    %6041 = vmatmul.f32.gmra.mxu0 %v5704
    %v6042 = vpop.f32.mrf.mxu0
    %v6043 = vadd.f32 %v5187, %v6042
    %6044 = vmatmul.f32.gmra.mxu0 %v5706
    %v6045 = vpop.f32.mrf.mxu0
    %v6046 = vadd.f32 %v5187, %v6045
    %6047 = vmatmul.f32.gmra.mxu0 %v5708
    %v6048 = vpop.f32.mrf.mxu0
    %v6049 = vadd.f32 %v5187, %v6048
    %6050 = vmatmul.f32.gmra.mxu0 %v5710
    %v6051 = vpop.f32.mrf.mxu0
    %v6052 = vadd.f32 %v5187, %v6051
    %6053 = vmatmul.f32.gmra.mxu0 %v5712
    %v6054 = vpop.f32.mrf.mxu0
    %v6055 = vadd.f32 %v5187, %v6054
    %6056 = vmatmul.f32.gmra.mxu0 %v5714
    %v6057 = vpop.f32.mrf.mxu0
    %v6058 = vadd.f32 %v5187, %v6057
    %6059 = vmatmul.f32.gmra.mxu0 %v5716
    %v6060 = vpop.f32.mrf.mxu0
    %v6061 = vadd.f32 %v5187, %v6060
    %6062 = vmatmul.f32.gmra.mxu0 %v5718
    %v6063 = vpop.f32.mrf.mxu0
    %v6064 = vadd.f32 %v5187, %v6063
    %6065 = vmatmul.f32.gmra.mxu0 %v5720
    %v6066 = vpop.f32.mrf.mxu0
    %v6067 = vadd.f32 %v5187, %v6066
    %6068 = vmatmul.f32.gmra.mxu0 %v5722
    %v6069 = vpop.f32.mrf.mxu0
    %v6070 = vadd.f32 %v5187, %v6069
    %6071 = vmatmul.f32.gmra.mxu0 %v5724
    %v6072 = vpop.f32.mrf.mxu0
    %v6073 = vadd.f32 %v5187, %v6072
    %6074 = vmatmul.f32.gmra.mxu0 %v5726
    %v6075 = vpop.f32.mrf.mxu0
    %v6076 = vadd.f32 %v5187, %v6075
    %6077 = vmatmul.f32.gmra.mxu0 %v5728
    %v6078 = vpop.f32.mrf.mxu0
    %v6079 = vadd.f32 %v5187, %v6078
    %6080 = vmatmul.f32.gmra.mxu0 %v5730
    %v6081 = vpop.f32.mrf.mxu0
    %v6082 = vadd.f32 %v5187, %v6081
    %6083 = vmatmul.f32.gmra.mxu0 %v5732
    %v6084 = vpop.f32.mrf.mxu0
    %v6085 = vadd.f32 %v5187, %v6084
    %6086 = vmatmul.f32.gmra.mxu0 %v5734
    %v6087 = vpop.f32.mrf.mxu0
    %v6088 = vadd.f32 %v5187, %v6087
    %6089 = vmatmul.f32.gmra.mxu0 %v5736
    %v6090 = vpop.f32.mrf.mxu0
    %v6091 = vadd.f32 %v5187, %v6090
    %6092 = vmatmul.f32.gmra.mxu0 %v5738
    %v6093 = vpop.f32.mrf.mxu0
    %v6094 = vadd.f32 %v5187, %v6093
    %6095 = vmatmul.f32.gmra.mxu0 %v5740
    %v6096 = vpop.f32.mrf.mxu0
    %v6097 = vadd.f32 %v5187, %v6096
    %6098 = vmatmul.f32.gmra.mxu0 %v5742
    %v6099 = vpop.f32.mrf.mxu0
    %v6100 = vadd.f32 %v5187, %v6099
    %6101 = vmatmul.f32.gmra.mxu0 %v5744
    %v6102 = vpop.f32.mrf.mxu0
    %v6103 = vadd.f32 %v5187, %v6102
    %6104 = vmatmul.f32.gmra.mxu0 %v5746
    %v6105 = vpop.f32.mrf.mxu0
    %v6106 = vadd.f32 %v5187, %v6105
    %6107 = vmatmul.f32.gmra.mxu0 %v5748
    %v6108 = vpop.f32.mrf.mxu0
    %v6109 = vadd.f32 %v5187, %v6108
    %6110 = vmatmul.f32.gmra.mxu0 %v5750
    %v6111 = vpop.f32.mrf.mxu0
    %v6112 = vadd.f32 %v5187, %v6111
    %6113 = vmatmul.f32.gmra.mxu0 %v5752
    %v6114 = vpop.f32.mrf.mxu0
    %v6115 = vadd.f32 %v5187, %v6114
    %6116 = vmatmul.f32.gmra.mxu0 %v5754
    %v6117 = vpop.f32.mrf.mxu0
    %v6118 = vadd.f32 %v5187, %v6117
    %6119 = vmatmul.f32.gmra.mxu0 %v5756
    %v6120 = vpop.f32.mrf.mxu0
    %v6121 = vadd.f32 %v5187, %v6120
    %6122 = vmatmul.f32.gmra.mxu0 %v5758
    %v6123 = vpop.f32.mrf.mxu0
    %v6124 = vadd.f32 %v5187, %v6123
    %6125 = vmatmul.f32.gmra.mxu0 %v5760
    %v6126 = vpop.f32.mrf.mxu0
    %v6127 = vadd.f32 %v5187, %v6126
    %6128 = vmatmul.f32.gmra.mxu0 %v5762
    %v6129 = vpop.f32.mrf.mxu0
    %v6130 = vadd.f32 %v5187, %v6129
    %6131 = vmatmul.f32.gmra.mxu0 %v5764
    %v6132 = vpop.f32.mrf.mxu0
    %v6133 = vadd.f32 %v5187, %v6132
    %6134 = vmatmul.f32.gmra.mxu0 %v5766
    %v6135 = vpop.f32.mrf.mxu0
    %v6136 = vadd.f32 %v5187, %v6135
    %6137 = vmatmul.f32.gmra.mxu0 %v5768
    %v6138 = vpop.f32.mrf.mxu0
    %v6139 = vadd.f32 %v5187, %v6138
    %6140 = vmatmul.f32.gmra.mxu0 %v5770
    %v6141 = vpop.f32.mrf.mxu0
    %v6142 = vadd.f32 %v5187, %v6141
    %6143 = vmatmul.f32.gmra.mxu0 %v5772
    %v6144 = vpop.f32.mrf.mxu0
    %v6145 = vadd.f32 %v5187, %v6144
    %6146 = vmatmul.f32.gmra.mxu0 %v5774
    %v6147 = vpop.f32.mrf.mxu0
    %v6148 = vadd.f32 %v5187, %v6147
    %6149 = vmatmul.f32.gmra.mxu0 %v5776
    %v6150 = vpop.f32.mrf.mxu0
    %v6151 = vadd.f32 %v5187, %v6150
    %6152 = vmatmul.f32.gmra.mxu0 %v5778
    %v6153 = vpop.f32.mrf.mxu0
    %v6154 = vadd.f32 %v5187, %v6153
    %6155 = vmatmul.f32.gmra.mxu0 %v5780
    %v6156 = vpop.f32.mrf.mxu0
    %v6157 = vadd.f32 %v5187, %v6156
    %6158 = vmatmul.f32.gmra.mxu0 %v5782
    %v6159 = vpop.f32.mrf.mxu0
    %v6160 = vadd.f32 %v5187, %v6159
    %6161 = vmatmul.f32.gmra.mxu0 %v5784
    %v6162 = vpop.f32.mrf.mxu0
    %v6163 = vadd.f32 %v5187, %v6162
    %6164 = vmatmul.f32.gmra.mxu0 %v5786
    %v6165 = vpop.f32.mrf.mxu0
    %v6166 = vadd.f32 %v5187, %v6165
    %6167 = vmatmul.f32.gmra.mxu0 %v5788
    %v6168 = vpop.f32.mrf.mxu0
    %v6169 = vadd.f32 %v5187, %v6168
    %6170 = vmatmul.f32.gmra.mxu0 %v5790
    %v6171 = vpop.f32.mrf.mxu0
    %v6172 = vadd.f32 %v5187, %v6171
    %6173 = vmatmul.f32.gmra.mxu0 %v5792
    %v6174 = vpop.f32.mrf.mxu0
    %v6175 = vadd.f32 %v5187, %v6174
    %6176 = vmatmul.f32.gmra.mxu0 %v5794
    %v6177 = vpop.f32.mrf.mxu0
    %v6178 = vadd.f32 %v5187, %v6177
    %6179 = vmatmul.f32.gmra.mxu0 %v5796
    %v6180 = vpop.f32.mrf.mxu0
    %v6181 = vadd.f32 %v5187, %v6180
    %6182 = vmatmul.f32.gmra.mxu0 %v5798
    %v6183 = vpop.f32.mrf.mxu0
    %v6184 = vadd.f32 %v5187, %v6183
    %6185 = vmatmul.f32.gmra.mxu0 %v5800
    %v6186 = vpop.f32.mrf.mxu0
    %v6187 = vadd.f32 %v5187, %v6186
    %6188 = vmatmul.f32.gmra.mxu0 %v5802
    %v6189 = vpop.f32.mrf.mxu0
    %v6190 = vadd.f32 %v5187, %v6189
    %6191 = vmatmul.f32.gmra.mxu0 %v5804
    %v6192 = vpop.f32.mrf.mxu0
    %v6193 = vadd.f32 %v5187, %v6192
    %6194 = vmatmul.f32.gmra.mxu0 %v5806
    %v6195 = vpop.f32.mrf.mxu0
    %v6196 = vadd.f32 %v5187, %v6195
    %6197 = vmatmul.f32.gmra.mxu0 %v5808
    %v6198 = vpop.f32.mrf.mxu0
    %v6199 = vadd.f32 %v5187, %v6198
    %6200 = vmatmul.f32.gmra.mxu0 %v5810
    %v6201 = vpop.f32.mrf.mxu0
    %v6202 = vadd.f32 %v5187, %v6201
    %6203 = vmatmul.f32.gmra.mxu0 %v5812
    %v6204 = vpop.f32.mrf.mxu0
    %v6205 = vadd.f32 %v5187, %v6204
    %6206 = vmatmul.f32.gmra.mxu0 %v5814
    %v6207 = vpop.f32.mrf.mxu0
    %v6208 = vadd.f32 %v5187, %v6207
    %6209 = vmatmul.f32.gmra.mxu0 %v5816
    %v6210 = vpop.f32.mrf.mxu0
    %v6211 = vadd.f32 %v5187, %v6210
    %6212 = vmatmul.f32.gmra.mxu0 %v5818
    %v6213 = vpop.f32.mrf.mxu0
    %v6214 = vadd.f32 %v5187, %v6213
    %6215 = vmatmul.f32.gmra.mxu0 %v5820
    %v6216 = vpop.f32.mrf.mxu0
    %v6217 = vadd.f32 %v5187, %v6216
    %6218 = vmatmul.f32.gmra.mxu0 %v5822
    %v6219 = vpop.f32.mrf.mxu0
    %v6220 = vadd.f32 %v5187, %v6219
    %6221 = vmatmul.f32.gmra.mxu0 %v5824
    %v6222 = vpop.f32.mrf.mxu0
    %v6223 = vadd.f32 %v5187, %v6222
    %6224 = vmatmul.f32.gmra.mxu0 %v5826
    %v6225 = vpop.f32.mrf.mxu0
    %v6226 = vadd.f32 %v5187, %v6225
    %6227 = vmatmul.f32.gmra.mxu0 %v5828
    %v6228 = vpop.f32.mrf.mxu0
    %v6229 = vadd.f32 %v5187, %v6228
    %6230 = vdwg.mxu0
    %v6231 = vmax.f32 %v5848, 0.0
    %v6232 = vmax.f32 %v5851, 0.0
    %v6233 = vmax.f32 %v5854, 0.0
    %v6234 = vmax.f32 %v5857, 0.0
    %v6235 = vmax.f32 %v5860, 0.0
    %v6236 = vmax.f32 %v5863, 0.0
    %v6237 = vmax.f32 %v5866, 0.0
    %v6238 = vmax.f32 %v5869, 0.0
    %v6239 = vmax.f32 %v5872, 0.0
    %v6240 = vmax.f32 %v5875, 0.0
    %v6241 = vmax.f32 %v5878, 0.0
    %v6242 = vmax.f32 %v5881, 0.0
    %v6243 = vmax.f32 %v5884, 0.0
    %v6244 = vmax.f32 %v5887, 0.0
    %v6245 = vmax.f32 %v5890, 0.0
    %v6246 = vmax.f32 %v5893, 0.0
    %v6247 = vmax.f32 %v5896, 0.0
    %v6248 = vmax.f32 %v5899, 0.0
    %v6249 = vmax.f32 %v5902, 0.0
    %v6250 = vmax.f32 %v5905, 0.0
    %v6251 = vmax.f32 %v5908, 0.0
    %v6252 = vmax.f32 %v5911, 0.0
    %v6253 = vmax.f32 %v5914, 0.0
    %v6254 = vmax.f32 %v5917, 0.0
    %v6255 = vmax.f32 %v5920, 0.0
    %v6256 = vmax.f32 %v5923, 0.0
    %v6257 = vmax.f32 %v5926, 0.0
    %v6258 = vmax.f32 %v5929, 0.0
    %v6259 = vmax.f32 %v5932, 0.0
    %v6260 = vmax.f32 %v5935, 0.0
    %v6261 = vmax.f32 %v5938, 0.0
    %v6262 = vmax.f32 %v5941, 0.0
    %v6263 = vmax.f32 %v5944, 0.0
    %v6264 = vmax.f32 %v5947, 0.0
    %v6265 = vmax.f32 %v5950, 0.0
    %v6266 = vmax.f32 %v5953, 0.0
    %v6267 = vmax.f32 %v5956, 0.0
    %v6268 = vmax.f32 %v5959, 0.0
    %v6269 = vmax.f32 %v5962, 0.0
    %v6270 = vmax.f32 %v5965, 0.0
    %v6271 = vmax.f32 %v5968, 0.0
    %v6272 = vmax.f32 %v5971, 0.0
    %v6273 = vmax.f32 %v5974, 0.0
    %v6274 = vmax.f32 %v5977, 0.0
    %v6275 = vmax.f32 %v5980, 0.0
    %v6276 = vmax.f32 %v5983, 0.0
    %v6277 = vmax.f32 %v5986, 0.0
    %v6278 = vmax.f32 %v5989, 0.0
    %v6279 = vmax.f32 %v5992, 0.0
    %v6280 = vmax.f32 %v5995, 0.0
    %v6281 = vmax.f32 %v5998, 0.0
    %v6282 = vmax.f32 %v6001, 0.0
    %v6283 = vmax.f32 %v6004, 0.0
    %v6284 = vmax.f32 %v6007, 0.0
    %v6285 = vmax.f32 %v6010, 0.0
    %v6286 = vmax.f32 %v6013, 0.0
    %v6287 = vmax.f32 %v6016, 0.0
    %v6288 = vmax.f32 %v6019, 0.0
    %v6289 = vmax.f32 %v6022, 0.0
    %v6290 = vmax.f32 %v6025, 0.0
    %v6291 = vmax.f32 %v6028, 0.0
    %v6292 = vmax.f32 %v6031, 0.0
    %v6293 = vmax.f32 %v6034, 0.0
    %v6294 = vmax.f32 %v6037, 0.0
    %v6295 = vmax.f32 %v6040, 0.0
    %v6296 = vmax.f32 %v6043, 0.0
    %v6297 = vmax.f32 %v6046, 0.0
    %v6298 = vmax.f32 %v6049, 0.0
    %v6299 = vmax.f32 %v6052, 0.0
    %v6300 = vmax.f32 %v6055, 0.0
    %v6301 = vmax.f32 %v6058, 0.0
    %v6302 = vmax.f32 %v6061, 0.0
    %v6303 = vmax.f32 %v6064, 0.0
    %v6304 = vmax.f32 %v6067, 0.0
    %v6305 = vmax.f32 %v6070, 0.0
    %v6306 = vmax.f32 %v6073, 0.0
    %v6307 = vmax.f32 %v6076, 0.0
    %v6308 = vmax.f32 %v6079, 0.0
    %v6309 = vmax.f32 %v6082, 0.0
    %v6310 = vmax.f32 %v6085, 0.0
    %v6311 = vmax.f32 %v6088, 0.0
    %v6312 = vmax.f32 %v6091, 0.0
    %v6313 = vmax.f32 %v6094, 0.0
    %v6314 = vmax.f32 %v6097, 0.0
    %v6315 = vmax.f32 %v6100, 0.0
    %v6316 = vmax.f32 %v6103, 0.0
    %v6317 = vmax.f32 %v6106, 0.0
    %v6318 = vmax.f32 %v6109, 0.0
    %v6319 = vmax.f32 %v6112, 0.0
    %v6320 = vmax.f32 %v6115, 0.0
    %v6321 = vmax.f32 %v6118, 0.0
    %v6322 = vmax.f32 %v6121, 0.0
    %v6323 = vmax.f32 %v6124, 0.0
    %v6324 = vmax.f32 %v6127, 0.0
    %v6325 = vmax.f32 %v6130, 0.0
    %v6326 = vmax.f32 %v6133, 0.0
    %v6327 = vmax.f32 %v6136, 0.0
    %v6328 = vmax.f32 %v6139, 0.0
    %v6329 = vmax.f32 %v6142, 0.0
    %v6330 = vmax.f32 %v6145, 0.0
    %v6331 = vmax.f32 %v6148, 0.0
    %v6332 = vmax.f32 %v6151, 0.0
    %v6333 = vmax.f32 %v6154, 0.0
    %v6334 = vmax.f32 %v6157, 0.0
    %v6335 = vmax.f32 %v6160, 0.0
    %v6336 = vmax.f32 %v6163, 0.0
    %v6337 = vmax.f32 %v6166, 0.0
    %v6338 = vmax.f32 %v6169, 0.0
    %v6339 = vmax.f32 %v6172, 0.0
    %v6340 = vmax.f32 %v6175, 0.0
    %v6341 = vmax.f32 %v6178, 0.0
    %v6342 = vmax.f32 %v6181, 0.0
    %v6343 = vmax.f32 %v6184, 0.0
    %v6344 = vmax.f32 %v6187, 0.0
    %v6345 = vmax.f32 %v6190, 0.0
    %v6346 = vmax.f32 %v6193, 0.0
    %v6347 = vmax.f32 %v6196, 0.0
    %v6348 = vmax.f32 %v6199, 0.0
    %v6349 = vmax.f32 %v6202, 0.0
    %v6350 = vmax.f32 %v6205, 0.0
    %v6351 = vmax.f32 %v6208, 0.0
    %v6352 = vmax.f32 %v6211, 0.0
    %v6353 = vmax.f32 %v6214, 0.0
    %v6354 = vmax.f32 %v6217, 0.0
    %v6355 = vmax.f32 %v6220, 0.0
    %v6356 = vmax.f32 %v6223, 0.0
    %v6357 = vmax.f32 %v6226, 0.0
    %v6358 = vmax.f32 %v6229, 0.0
    %v6359 = vld [vmem:[%s2] sm:$0xff]
    %v6360 = vld [vmem:[%s2 + $0x8] sm:$0xff]
    %v6361 = vld [vmem:[%s2 + $0x10] sm:$0xff]
    %v6362 = vld [vmem:[%s2 + $0x18] sm:$0xff]
    %v6363 = vld [vmem:[%s3] sm:$0x3]
    %vm6364 = vcmask 261120
    %v6366 = vsel %vm6364, %v4596, 0
    %v6369 = vsel %vm6364, %v4598, 0
    %v6372 = vsel %vm6364, %v4601, 0
    %v6375 = vsel %vm6364, %v4603, 0
    %v6378 = vsel %vm6364, %v4606, 0
    %v6381 = vsel %vm6364, %v4608, 0
    %v6384 = vsel %vm6364, %v4611, 0
    %v6387 = vsel %vm6364, %v4613, 0
    %v6390 = vsel %vm6364, %v4616, 0
    %v6393 = vsel %vm6364, %v4618, 0
    %v6396 = vsel %vm6364, %v4621, 0
    %v6399 = vsel %vm6364, %v4623, 0
    %v6402 = vsel %vm6364, %v4626, 0
    %v6405 = vsel %vm6364, %v4628, 0
    %v6408 = vsel %vm6364, %v4631, 0
    %v6411 = vsel %vm6364, %v4633, 0
    %v6414 = vsel %vm6364, %v4636, 0
    %v6417 = vsel %vm6364, %v4638, 0
    %v6420 = vsel %vm6364, %v4641, 0
    %v6423 = vsel %vm6364, %v4643, 0
    %v6426 = vsel %vm6364, %v4646, 0
    %v6429 = vsel %vm6364, %v4648, 0
    %v6432 = vsel %vm6364, %v4651, 0
    %v6435 = vsel %vm6364, %v4653, 0
    %v6438 = vsel %vm6364, %v4656, 0
    %v6441 = vsel %vm6364, %v4658, 0
    %v6444 = vsel %vm6364, %v4661, 0
    %v6447 = vsel %vm6364, %v4663, 0
    %v6450 = vsel %vm6364, %v4666, 0
    %v6453 = vsel %vm6364, %v4668, 0
    %v6456 = vsel %vm6364, %v4671, 0
    %v6459 = vsel %vm6364, %v4673, 0
    %v6462 = vsel %vm6364, %v4676, 0
    %v6465 = vsel %vm6364, %v4678, 0
    %v6468 = vsel %vm6364, %v4681, 0
    %v6471 = vsel %vm6364, %v4683, 0
    %v6474 = vsel %vm6364, %v4686, 0
    %v6477 = vsel %vm6364, %v4688, 0
    %v6480 = vsel %vm6364, %v4691, 0
    %v6483 = vsel %vm6364, %v4693, 0
    %v6486 = vsel %vm6364, %v4696, 0
    %v6489 = vsel %vm6364, %v4698, 0
    %v6492 = vsel %vm6364, %v4701, 0
    %v6495 = vsel %vm6364, %v4703, 0
    %v6498 = vsel %vm6364, %v4706, 0
    %v6501 = vsel %vm6364, %v4708, 0
    %v6504 = vsel %vm6364, %v4711, 0
    %v6507 = vsel %vm6364, %v4713, 0
    %v6510 = vsel %vm6364, %v4716, 0
    %v6513 = vsel %vm6364, %v4718, 0
    %v6516 = vsel %vm6364, %v4721, 0
    %v6519 = vsel %vm6364, %v4723, 0
    %v6522 = vsel %vm6364, %v4726, 0
    %v6525 = vsel %vm6364, %v4728, 0
    %v6528 = vsel %vm6364, %v4731, 0
    %v6531 = vsel %vm6364, %v4733, 0
    %v6534 = vsel %vm6364, %v4736, 0
    %v6537 = vsel %vm6364, %v4738, 0
    %v6540 = vsel %vm6364, %v4741, 0
    %v6543 = vsel %vm6364, %v4743, 0
    %v6546 = vsel %vm6364, %v4746, 0
    %v6549 = vsel %vm6364, %v4748, 0
    %v6552 = vsel %vm6364, %v4751, 0
    %v6555 = vsel %vm6364, %v4753, 0
    %v6558 = vsel %vm6364, %v4756, 0
    %v6561 = vsel %vm6364, %v4758, 0
    %v6564 = vsel %vm6364, %v4761, 0
    %v6567 = vsel %vm6364, %v4763, 0
    %v6570 = vsel %vm6364, %v4766, 0
    %v6573 = vsel %vm6364, %v4768, 0
    %v6576 = vsel %vm6364, %v4771, 0
    %v6579 = vsel %vm6364, %v4773, 0
    %v6582 = vsel %vm6364, %v4776, 0
    %v6585 = vsel %vm6364, %v4778, 0
    %v6588 = vsel %vm6364, %v4781, 0
    %v6591 = vsel %vm6364, %v4783, 0
    %v6594 = vsel %vm6364, %v4786, 0
    %v6597 = vsel %vm6364, %v4788, 0
    %v6600 = vsel %vm6364, %v4791, 0
    %v6603 = vsel %vm6364, %v4793, 0
    %v6606 = vsel %vm6364, %v4796, 0
    %v6609 = vsel %vm6364, %v4798, 0
    %v6612 = vsel %vm6364, %v4801, 0
    %v6615 = vsel %vm6364, %v4803, 0
    %v6618 = vsel %vm6364, %v4806, 0
    %v6621 = vsel %vm6364, %v4808, 0
    %v6624 = vsel %vm6364, %v4811, 0
    %v6627 = vsel %vm6364, %v4813, 0
    %v6630 = vsel %vm6364, %v4816, 0
    %v6633 = vsel %vm6364, %v4818, 0
    %v6636 = vsel %vm6364, %v4821, 0
    %v6639 = vsel %vm6364, %v4823, 0
    %v6642 = vsel %vm6364, %v4826, 0
    %v6645 = vsel %vm6364, %v4828, 0
    %v6648 = vsel %vm6364, %v4831, 0
    %v6651 = vsel %vm6364, %v4833, 0
    %v6654 = vsel %vm6364, %v4836, 0
    %v6657 = vsel %vm6364, %v4838, 0
    %v6660 = vsel %vm6364, %v4841, 0
    %v6663 = vsel %vm6364, %v4843, 0
    %v6666 = vsel %vm6364, %v4846, 0
    %v6669 = vsel %vm6364, %v4848, 0
    %v6672 = vsel %vm6364, %v4851, 0
    %v6675 = vsel %vm6364, %v4853, 0
    %v6678 = vsel %vm6364, %v4856, 0
    %v6681 = vsel %vm6364, %v4858, 0
    %v6684 = vsel %vm6364, %v4861, 0
    %v6687 = vsel %vm6364, %v4863, 0
    %v6690 = vsel %vm6364, %v4866, 0
    %v6693 = vsel %vm6364, %v4868, 0
    %v6696 = vsel %vm6364, %v4871, 0
    %v6699 = vsel %vm6364, %v4873, 0
    %v6702 = vsel %vm6364, %v4876, 0
    %v6705 = vsel %vm6364, %v4878, 0
    %v6708 = vsel %vm6364, %v4881, 0
    %v6711 = vsel %vm6364, %v4883, 0
    %v6714 = vsel %vm6364, %v4886, 0
    %v6717 = vsel %vm6364, %v4888, 0
    %v6720 = vsel %vm6364, %v4891, 0
    %v6723 = vsel %vm6364, %v4893, 0
    %v6726 = vsel %vm6364, %v4896, 0
    %v6729 = vsel %vm6364, %v4898, 0
    %v6732 = vsel %vm6364, %v4901, 0
    %v6735 = vsel %vm6364, %v4903, 0
    %v6738 = vsel %vm6364, %v4906, 0
    %v6741 = vsel %vm6364, %v4908, 0
    %v6744 = vsel %vm6364, %v4911, 0
    %v6747 = vsel %vm6364, %v4913, 0
    %6749 = vmatpush.msra.mxu0 0.0
    %6750 = vmatpush.msra.mxu0 0.0
    %6751 = vmatpush.msra.mxu0 0.0
    %6752 = vmatpush.msra.mxu0 0.0
    %6753 = vmatpush.msra.mxu0 0.0
    %6754 = vmatpush.msra.mxu0 0.0
    %6755 = vmatpush.msra.mxu0 0.0
    %6756 = vmatpush.msra.mxu0 0.0
    %6757 = vmatpush.msra.mxu0 0.0
    %6758 = vmatpush.msra.mxu0 0.0
    %6759 = vmatpush.msra.mxu0 0.0
    %6760 = vmatpush.msra.mxu0 0.0
    %6761 = vmatpush.msra.mxu0 %v6362
    %6762 = vmatpush.msra.mxu0 %v6361
    %6763 = vmatpush.msra.mxu0 %v6360
    %6764 = vmatpush.msra.mxu0 %v6359
    %6765 = vmatmul.f32.gmra.mxu0 %v6366
    %v6766 = vpop.f32.mrf.mxu0
    %v6767 = vadd.f32 0.0, %v6766
    %6768 = vmatmul.f32.gmra.mxu0 %v6369
    %v6769 = vpop.f32.mrf.mxu0
    %v6770 = vadd.f32 0.0, %v6769
    %6771 = vmatmul.f32.gmra.mxu0 %v6372
    %v6772 = vpop.f32.mrf.mxu0
    %v6773 = vadd.f32 0.0, %v6772
    %6774 = vmatmul.f32.gmra.mxu0 %v6375
    %v6775 = vpop.f32.mrf.mxu0
    %v6776 = vadd.f32 0.0, %v6775
    %6777 = vmatmul.f32.gmra.mxu0 %v6378
    %v6778 = vpop.f32.mrf.mxu0
    %v6779 = vadd.f32 0.0, %v6778
    %6780 = vmatmul.f32.gmra.mxu0 %v6381
    %v6781 = vpop.f32.mrf.mxu0
    %v6782 = vadd.f32 0.0, %v6781
    %6783 = vmatmul.f32.gmra.mxu0 %v6384
    %v6784 = vpop.f32.mrf.mxu0
    %v6785 = vadd.f32 0.0, %v6784
    %6786 = vmatmul.f32.gmra.mxu0 %v6387
    %v6787 = vpop.f32.mrf.mxu0
    %v6788 = vadd.f32 0.0, %v6787
    %6789 = vmatmul.f32.gmra.mxu0 %v6390
    %v6790 = vpop.f32.mrf.mxu0
    %v6791 = vadd.f32 0.0, %v6790
    %6792 = vmatmul.f32.gmra.mxu0 %v6393
    %v6793 = vpop.f32.mrf.mxu0
    %v6794 = vadd.f32 0.0, %v6793
    %6795 = vmatmul.f32.gmra.mxu0 %v6396
    %v6796 = vpop.f32.mrf.mxu0
    %v6797 = vadd.f32 0.0, %v6796
    %6798 = vmatmul.f32.gmra.mxu0 %v6399
    %v6799 = vpop.f32.mrf.mxu0
    %v6800 = vadd.f32 0.0, %v6799
    %6801 = vmatmul.f32.gmra.mxu0 %v6402
    %v6802 = vpop.f32.mrf.mxu0
    %v6803 = vadd.f32 0.0, %v6802
    %6804 = vmatmul.f32.gmra.mxu0 %v6405
    %v6805 = vpop.f32.mrf.mxu0
    %v6806 = vadd.f32 0.0, %v6805
    %6807 = vmatmul.f32.gmra.mxu0 %v6408
    %v6808 = vpop.f32.mrf.mxu0
    %v6809 = vadd.f32 0.0, %v6808
    %6810 = vmatmul.f32.gmra.mxu0 %v6411
    %v6811 = vpop.f32.mrf.mxu0
    %v6812 = vadd.f32 0.0, %v6811
    %6813 = vmatmul.f32.gmra.mxu0 %v6414
    %v6814 = vpop.f32.mrf.mxu0
    %v6815 = vadd.f32 0.0, %v6814
    %6816 = vmatmul.f32.gmra.mxu0 %v6417
    %v6817 = vpop.f32.mrf.mxu0
    %v6818 = vadd.f32 0.0, %v6817
    %6819 = vmatmul.f32.gmra.mxu0 %v6420
    %v6820 = vpop.f32.mrf.mxu0
    %v6821 = vadd.f32 0.0, %v6820
    %6822 = vmatmul.f32.gmra.mxu0 %v6423
    %v6823 = vpop.f32.mrf.mxu0
    %v6824 = vadd.f32 0.0, %v6823
    %6825 = vmatmul.f32.gmra.mxu0 %v6426
    %v6826 = vpop.f32.mrf.mxu0
    %v6827 = vadd.f32 0.0, %v6826
    %6828 = vmatmul.f32.gmra.mxu0 %v6429
    %v6829 = vpop.f32.mrf.mxu0
    %v6830 = vadd.f32 0.0, %v6829
    %6831 = vmatmul.f32.gmra.mxu0 %v6432
    %v6832 = vpop.f32.mrf.mxu0
    %v6833 = vadd.f32 0.0, %v6832
    %6834 = vmatmul.f32.gmra.mxu0 %v6435
    %v6835 = vpop.f32.mrf.mxu0
    %v6836 = vadd.f32 0.0, %v6835
    %6837 = vmatmul.f32.gmra.mxu0 %v6438
    %v6838 = vpop.f32.mrf.mxu0
    %v6839 = vadd.f32 0.0, %v6838
    %6840 = vmatmul.f32.gmra.mxu0 %v6441
    %v6841 = vpop.f32.mrf.mxu0
    %v6842 = vadd.f32 0.0, %v6841
    %6843 = vmatmul.f32.gmra.mxu0 %v6444
    %v6844 = vpop.f32.mrf.mxu0
    %v6845 = vadd.f32 0.0, %v6844
    %6846 = vmatmul.f32.gmra.mxu0 %v6447
    %v6847 = vpop.f32.mrf.mxu0
    %v6848 = vadd.f32 0.0, %v6847
    %6849 = vmatmul.f32.gmra.mxu0 %v6450
    %v6850 = vpop.f32.mrf.mxu0
    %v6851 = vadd.f32 0.0, %v6850
    %6852 = vmatmul.f32.gmra.mxu0 %v6453
    %v6853 = vpop.f32.mrf.mxu0
    %v6854 = vadd.f32 0.0, %v6853
    %6855 = vmatmul.f32.gmra.mxu0 %v6456
    %v6856 = vpop.f32.mrf.mxu0
    %v6857 = vadd.f32 0.0, %v6856
    %6858 = vmatmul.f32.gmra.mxu0 %v6459
    %v6859 = vpop.f32.mrf.mxu0
    %v6860 = vadd.f32 0.0, %v6859
    %6861 = vmatmul.f32.gmra.mxu0 %v6462
    %v6862 = vpop.f32.mrf.mxu0
    %v6863 = vadd.f32 0.0, %v6862
    %6864 = vmatmul.f32.gmra.mxu0 %v6465
    %v6865 = vpop.f32.mrf.mxu0
    %v6866 = vadd.f32 0.0, %v6865
    %6867 = vmatmul.f32.gmra.mxu0 %v6468
    %v6868 = vpop.f32.mrf.mxu0
    %v6869 = vadd.f32 0.0, %v6868
    %6870 = vmatmul.f32.gmra.mxu0 %v6471
    %v6871 = vpop.f32.mrf.mxu0
    %v6872 = vadd.f32 0.0, %v6871
    %6873 = vmatmul.f32.gmra.mxu0 %v6474
    %v6874 = vpop.f32.mrf.mxu0
    %v6875 = vadd.f32 0.0, %v6874
    %6876 = vmatmul.f32.gmra.mxu0 %v6477
    %v6877 = vpop.f32.mrf.mxu0
    %v6878 = vadd.f32 0.0, %v6877
    %6879 = vmatmul.f32.gmra.mxu0 %v6480
    %v6880 = vpop.f32.mrf.mxu0
    %v6881 = vadd.f32 0.0, %v6880
    %6882 = vmatmul.f32.gmra.mxu0 %v6483
    %v6883 = vpop.f32.mrf.mxu0
    %v6884 = vadd.f32 0.0, %v6883
    %6885 = vmatmul.f32.gmra.mxu0 %v6486
    %v6886 = vpop.f32.mrf.mxu0
    %v6887 = vadd.f32 0.0, %v6886
    %6888 = vmatmul.f32.gmra.mxu0 %v6489
    %v6889 = vpop.f32.mrf.mxu0
    %v6890 = vadd.f32 0.0, %v6889
    %6891 = vmatmul.f32.gmra.mxu0 %v6492
    %v6892 = vpop.f32.mrf.mxu0
    %v6893 = vadd.f32 0.0, %v6892
    %6894 = vmatmul.f32.gmra.mxu0 %v6495
    %v6895 = vpop.f32.mrf.mxu0
    %v6896 = vadd.f32 0.0, %v6895
    %6897 = vmatmul.f32.gmra.mxu0 %v6498
    %v6898 = vpop.f32.mrf.mxu0
    %v6899 = vadd.f32 0.0, %v6898
    %6900 = vmatmul.f32.gmra.mxu0 %v6501
    %v6901 = vpop.f32.mrf.mxu0
    %v6902 = vadd.f32 0.0, %v6901
    %6903 = vmatmul.f32.gmra.mxu0 %v6504
    %v6904 = vpop.f32.mrf.mxu0
    %v6905 = vadd.f32 0.0, %v6904
    %6906 = vmatmul.f32.gmra.mxu0 %v6507
    %v6907 = vpop.f32.mrf.mxu0
    %v6908 = vadd.f32 0.0, %v6907
    %6909 = vmatmul.f32.gmra.mxu0 %v6510
    %v6910 = vpop.f32.mrf.mxu0
    %v6911 = vadd.f32 0.0, %v6910
    %6912 = vmatmul.f32.gmra.mxu0 %v6513
    %v6913 = vpop.f32.mrf.mxu0
    %v6914 = vadd.f32 0.0, %v6913
    %6915 = vmatmul.f32.gmra.mxu0 %v6516
    %v6916 = vpop.f32.mrf.mxu0
    %v6917 = vadd.f32 0.0, %v6916
    %6918 = vmatmul.f32.gmra.mxu0 %v6519
    %v6919 = vpop.f32.mrf.mxu0
    %v6920 = vadd.f32 0.0, %v6919
    %6921 = vmatmul.f32.gmra.mxu0 %v6522
    %v6922 = vpop.f32.mrf.mxu0
    %v6923 = vadd.f32 0.0, %v6922
    %6924 = vmatmul.f32.gmra.mxu0 %v6525
    %v6925 = vpop.f32.mrf.mxu0
    %v6926 = vadd.f32 0.0, %v6925
    %6927 = vmatmul.f32.gmra.mxu0 %v6528
    %v6928 = vpop.f32.mrf.mxu0
    %v6929 = vadd.f32 0.0, %v6928
    %6930 = vmatmul.f32.gmra.mxu0 %v6531
    %v6931 = vpop.f32.mrf.mxu0
    %v6932 = vadd.f32 0.0, %v6931
    %6933 = vmatmul.f32.gmra.mxu0 %v6534
    %v6934 = vpop.f32.mrf.mxu0
    %v6935 = vadd.f32 0.0, %v6934
    %6936 = vmatmul.f32.gmra.mxu0 %v6537
    %v6937 = vpop.f32.mrf.mxu0
    %v6938 = vadd.f32 0.0, %v6937
    %6939 = vmatmul.f32.gmra.mxu0 %v6540
    %v6940 = vpop.f32.mrf.mxu0
    %v6941 = vadd.f32 0.0, %v6940
    %6942 = vmatmul.f32.gmra.mxu0 %v6543
    %v6943 = vpop.f32.mrf.mxu0
    %v6944 = vadd.f32 0.0, %v6943
    %6945 = vmatmul.f32.gmra.mxu0 %v6546
    %v6946 = vpop.f32.mrf.mxu0
    %v6947 = vadd.f32 0.0, %v6946
    %6948 = vmatmul.f32.gmra.mxu0 %v6549
    %v6949 = vpop.f32.mrf.mxu0
    %v6950 = vadd.f32 0.0, %v6949
    %6951 = vmatmul.f32.gmra.mxu0 %v6552
    %v6952 = vpop.f32.mrf.mxu0
    %v6953 = vadd.f32 0.0, %v6952
    %6954 = vmatmul.f32.gmra.mxu0 %v6555
    %v6955 = vpop.f32.mrf.mxu0
    %v6956 = vadd.f32 0.0, %v6955
    %6957 = vmatmul.f32.gmra.mxu0 %v6558
    %v6958 = vpop.f32.mrf.mxu0
    %v6959 = vadd.f32 0.0, %v6958
    %6960 = vmatmul.f32.gmra.mxu0 %v6561
    %v6961 = vpop.f32.mrf.mxu0
    %v6962 = vadd.f32 0.0, %v6961
    %6963 = vmatmul.f32.gmra.mxu0 %v6564
    %v6964 = vpop.f32.mrf.mxu0
    %v6965 = vadd.f32 0.0, %v6964
    %6966 = vmatmul.f32.gmra.mxu0 %v6567
    %v6967 = vpop.f32.mrf.mxu0
    %v6968 = vadd.f32 0.0, %v6967
    %6969 = vmatmul.f32.gmra.mxu0 %v6570
    %v6970 = vpop.f32.mrf.mxu0
    %v6971 = vadd.f32 0.0, %v6970
    %6972 = vmatmul.f32.gmra.mxu0 %v6573
    %v6973 = vpop.f32.mrf.mxu0
    %v6974 = vadd.f32 0.0, %v6973
    %6975 = vmatmul.f32.gmra.mxu0 %v6576
    %v6976 = vpop.f32.mrf.mxu0
    %v6977 = vadd.f32 0.0, %v6976
    %6978 = vmatmul.f32.gmra.mxu0 %v6579
    %v6979 = vpop.f32.mrf.mxu0
    %v6980 = vadd.f32 0.0, %v6979
    %6981 = vmatmul.f32.gmra.mxu0 %v6582
    %v6982 = vpop.f32.mrf.mxu0
    %v6983 = vadd.f32 0.0, %v6982
    %6984 = vmatmul.f32.gmra.mxu0 %v6585
    %v6985 = vpop.f32.mrf.mxu0
    %v6986 = vadd.f32 0.0, %v6985
    %6987 = vmatmul.f32.gmra.mxu0 %v6588
    %v6988 = vpop.f32.mrf.mxu0
    %v6989 = vadd.f32 0.0, %v6988
    %6990 = vmatmul.f32.gmra.mxu0 %v6591
    %v6991 = vpop.f32.mrf.mxu0
    %v6992 = vadd.f32 0.0, %v6991
    %6993 = vmatmul.f32.gmra.mxu0 %v6594
    %v6994 = vpop.f32.mrf.mxu0
    %v6995 = vadd.f32 0.0, %v6994
    %6996 = vmatmul.f32.gmra.mxu0 %v6597
    %v6997 = vpop.f32.mrf.mxu0
    %v6998 = vadd.f32 0.0, %v6997
    %6999 = vmatmul.f32.gmra.mxu0 %v6600
    %v7000 = vpop.f32.mrf.mxu0
    %v7001 = vadd.f32 0.0, %v7000
    %7002 = vmatmul.f32.gmra.mxu0 %v6603
    %v7003 = vpop.f32.mrf.mxu0
    %v7004 = vadd.f32 0.0, %v7003
    %7005 = vmatmul.f32.gmra.mxu0 %v6606
    %v7006 = vpop.f32.mrf.mxu0
    %v7007 = vadd.f32 0.0, %v7006
    %7008 = vmatmul.f32.gmra.mxu0 %v6609
    %v7009 = vpop.f32.mrf.mxu0
    %v7010 = vadd.f32 0.0, %v7009
    %7011 = vmatmul.f32.gmra.mxu0 %v6612
    %v7012 = vpop.f32.mrf.mxu0
    %v7013 = vadd.f32 0.0, %v7012
    %7014 = vmatmul.f32.gmra.mxu0 %v6615
    %v7015 = vpop.f32.mrf.mxu0
    %v7016 = vadd.f32 0.0, %v7015
    %7017 = vmatmul.f32.gmra.mxu0 %v6618
    %v7018 = vpop.f32.mrf.mxu0
    %v7019 = vadd.f32 0.0, %v7018
    %7020 = vmatmul.f32.gmra.mxu0 %v6621
    %v7021 = vpop.f32.mrf.mxu0
    %v7022 = vadd.f32 0.0, %v7021
    %7023 = vmatmul.f32.gmra.mxu0 %v6624
    %v7024 = vpop.f32.mrf.mxu0
    %v7025 = vadd.f32 0.0, %v7024
    %7026 = vmatmul.f32.gmra.mxu0 %v6627
    %v7027 = vpop.f32.mrf.mxu0
    %v7028 = vadd.f32 0.0, %v7027
    %7029 = vmatmul.f32.gmra.mxu0 %v6630
    %v7030 = vpop.f32.mrf.mxu0
    %v7031 = vadd.f32 0.0, %v7030
    %7032 = vmatmul.f32.gmra.mxu0 %v6633
    %v7033 = vpop.f32.mrf.mxu0
    %v7034 = vadd.f32 0.0, %v7033
    %7035 = vmatmul.f32.gmra.mxu0 %v6636
    %v7036 = vpop.f32.mrf.mxu0
    %v7037 = vadd.f32 0.0, %v7036
    %7038 = vmatmul.f32.gmra.mxu0 %v6639
    %v7039 = vpop.f32.mrf.mxu0
    %v7040 = vadd.f32 0.0, %v7039
    %7041 = vmatmul.f32.gmra.mxu0 %v6642
    %v7042 = vpop.f32.mrf.mxu0
    %v7043 = vadd.f32 0.0, %v7042
    %7044 = vmatmul.f32.gmra.mxu0 %v6645
    %v7045 = vpop.f32.mrf.mxu0
    %v7046 = vadd.f32 0.0, %v7045
    %7047 = vmatmul.f32.gmra.mxu0 %v6648
    %v7048 = vpop.f32.mrf.mxu0
    %v7049 = vadd.f32 0.0, %v7048
    %7050 = vmatmul.f32.gmra.mxu0 %v6651
    %v7051 = vpop.f32.mrf.mxu0
    %v7052 = vadd.f32 0.0, %v7051
    %7053 = vmatmul.f32.gmra.mxu0 %v6654
    %v7054 = vpop.f32.mrf.mxu0
    %v7055 = vadd.f32 0.0, %v7054
    %7056 = vmatmul.f32.gmra.mxu0 %v6657
    %v7057 = vpop.f32.mrf.mxu0
    %v7058 = vadd.f32 0.0, %v7057
    %7059 = vmatmul.f32.gmra.mxu0 %v6660
    %v7060 = vpop.f32.mrf.mxu0
    %v7061 = vadd.f32 0.0, %v7060
    %7062 = vmatmul.f32.gmra.mxu0 %v6663
    %v7063 = vpop.f32.mrf.mxu0
    %v7064 = vadd.f32 0.0, %v7063
    %7065 = vmatmul.f32.gmra.mxu0 %v6666
    %v7066 = vpop.f32.mrf.mxu0
    %v7067 = vadd.f32 0.0, %v7066
    %7068 = vmatmul.f32.gmra.mxu0 %v6669
    %v7069 = vpop.f32.mrf.mxu0
    %v7070 = vadd.f32 0.0, %v7069
    %7071 = vmatmul.f32.gmra.mxu0 %v6672
    %v7072 = vpop.f32.mrf.mxu0
    %v7073 = vadd.f32 0.0, %v7072
    %7074 = vmatmul.f32.gmra.mxu0 %v6675
    %v7075 = vpop.f32.mrf.mxu0
    %v7076 = vadd.f32 0.0, %v7075
    %7077 = vmatmul.f32.gmra.mxu0 %v6678
    %v7078 = vpop.f32.mrf.mxu0
    %v7079 = vadd.f32 0.0, %v7078
    %7080 = vmatmul.f32.gmra.mxu0 %v6681
    %v7081 = vpop.f32.mrf.mxu0
    %v7082 = vadd.f32 0.0, %v7081
    %7083 = vmatmul.f32.gmra.mxu0 %v6684
    %v7084 = vpop.f32.mrf.mxu0
    %v7085 = vadd.f32 0.0, %v7084
    %7086 = vmatmul.f32.gmra.mxu0 %v6687
    %v7087 = vpop.f32.mrf.mxu0
    %v7088 = vadd.f32 0.0, %v7087
    %7089 = vmatmul.f32.gmra.mxu0 %v6690
    %v7090 = vpop.f32.mrf.mxu0
    %v7091 = vadd.f32 0.0, %v7090
    %7092 = vmatmul.f32.gmra.mxu0 %v6693
    %v7093 = vpop.f32.mrf.mxu0
    %v7094 = vadd.f32 0.0, %v7093
    %7095 = vmatmul.f32.gmra.mxu0 %v6696
    %v7096 = vpop.f32.mrf.mxu0
    %v7097 = vadd.f32 0.0, %v7096
    %7098 = vmatmul.f32.gmra.mxu0 %v6699
    %v7099 = vpop.f32.mrf.mxu0
    %v7100 = vadd.f32 0.0, %v7099
    %7101 = vmatmul.f32.gmra.mxu0 %v6702
    %v7102 = vpop.f32.mrf.mxu0
    %v7103 = vadd.f32 0.0, %v7102
    %7104 = vmatmul.f32.gmra.mxu0 %v6705
    %v7105 = vpop.f32.mrf.mxu0
    %v7106 = vadd.f32 0.0, %v7105
    %7107 = vmatmul.f32.gmra.mxu0 %v6708
    %v7108 = vpop.f32.mrf.mxu0
    %v7109 = vadd.f32 0.0, %v7108
    %7110 = vmatmul.f32.gmra.mxu0 %v6711
    %v7111 = vpop.f32.mrf.mxu0
    %v7112 = vadd.f32 0.0, %v7111
    %7113 = vmatmul.f32.gmra.mxu0 %v6714
    %v7114 = vpop.f32.mrf.mxu0
    %v7115 = vadd.f32 0.0, %v7114
    %7116 = vmatmul.f32.gmra.mxu0 %v6717
    %v7117 = vpop.f32.mrf.mxu0
    %v7118 = vadd.f32 0.0, %v7117
    %7119 = vmatmul.f32.gmra.mxu0 %v6720
    %v7120 = vpop.f32.mrf.mxu0
    %v7121 = vadd.f32 0.0, %v7120
    %7122 = vmatmul.f32.gmra.mxu0 %v6723
    %v7123 = vpop.f32.mrf.mxu0
    %v7124 = vadd.f32 0.0, %v7123
    %7125 = vmatmul.f32.gmra.mxu0 %v6726
    %v7126 = vpop.f32.mrf.mxu0
    %v7127 = vadd.f32 0.0, %v7126
    %7128 = vmatmul.f32.gmra.mxu0 %v6729
    %v7129 = vpop.f32.mrf.mxu0
    %v7130 = vadd.f32 0.0, %v7129
    %7131 = vmatmul.f32.gmra.mxu0 %v6732
    %v7132 = vpop.f32.mrf.mxu0
    %v7133 = vadd.f32 0.0, %v7132
    %7134 = vmatmul.f32.gmra.mxu0 %v6735
    %v7135 = vpop.f32.mrf.mxu0
    %v7136 = vadd.f32 0.0, %v7135
    %7137 = vmatmul.f32.gmra.mxu0 %v6738
    %v7138 = vpop.f32.mrf.mxu0
    %v7139 = vadd.f32 0.0, %v7138
    %7140 = vmatmul.f32.gmra.mxu0 %v6741
    %v7141 = vpop.f32.mrf.mxu0
    %v7142 = vadd.f32 0.0, %v7141
    %7143 = vmatmul.f32.gmra.mxu0 %v6744
    %v7144 = vpop.f32.mrf.mxu0
    %v7145 = vadd.f32 0.0, %v7144
    %7146 = vmatmul.f32.gmra.mxu0 %v6747
    %v7147 = vpop.f32.mrf.mxu0
    %v7148 = vadd.f32 0.0, %v7147
    %7149 = vdwg.mxu0
    %7151 = vset.pattern.permute.xlu0 0
    %7152 = vperm.xlu0 %7151, %v6767
    %v7153 = vpop.permute.xlu0 %7152
    %7156 = vset.pattern.permute.xlu0 0
    %7157 = vperm.xlu0 %7156, %v6770
    %v7158 = vpop.permute.xlu0 %7157
    %7161 = vset.pattern.permute.xlu0 0
    %7162 = vperm.xlu0 %7161, %v6773
    %v7163 = vpop.permute.xlu0 %7162
    %7166 = vset.pattern.permute.xlu0 0
    %7167 = vperm.xlu0 %7166, %v6776
    %v7168 = vpop.permute.xlu0 %7167
    %7171 = vset.pattern.permute.xlu0 0
    %7172 = vperm.xlu0 %7171, %v6779
    %v7173 = vpop.permute.xlu0 %7172
    %7176 = vset.pattern.permute.xlu0 0
    %7177 = vperm.xlu0 %7176, %v6782
    %v7178 = vpop.permute.xlu0 %7177
    %7181 = vset.pattern.permute.xlu0 0
    %7182 = vperm.xlu0 %7181, %v6785
    %v7183 = vpop.permute.xlu0 %7182
    %7186 = vset.pattern.permute.xlu0 0
    %7187 = vperm.xlu0 %7186, %v6788
    %v7188 = vpop.permute.xlu0 %7187
    %7191 = vset.pattern.permute.xlu0 0
    %7192 = vperm.xlu0 %7191, %v6791
    %v7193 = vpop.permute.xlu0 %7192
    %7196 = vset.pattern.permute.xlu0 0
    %7197 = vperm.xlu0 %7196, %v6794
    %v7198 = vpop.permute.xlu0 %7197
    %7201 = vset.pattern.permute.xlu0 0
    %7202 = vperm.xlu0 %7201, %v6797
    %v7203 = vpop.permute.xlu0 %7202
    %7206 = vset.pattern.permute.xlu0 0
    %7207 = vperm.xlu0 %7206, %v6800
    %v7208 = vpop.permute.xlu0 %7207
    %7211 = vset.pattern.permute.xlu0 0
    %7212 = vperm.xlu0 %7211, %v6803
    %v7213 = vpop.permute.xlu0 %7212
    %7216 = vset.pattern.permute.xlu0 0
    %7217 = vperm.xlu0 %7216, %v6806
    %v7218 = vpop.permute.xlu0 %7217
    %7221 = vset.pattern.permute.xlu0 0
    %7222 = vperm.xlu0 %7221, %v6809
    %v7223 = vpop.permute.xlu0 %7222
    %7226 = vset.pattern.permute.xlu0 0
    %7227 = vperm.xlu0 %7226, %v6812
    %v7228 = vpop.permute.xlu0 %7227
    %7231 = vset.pattern.permute.xlu0 0
    %7232 = vperm.xlu0 %7231, %v6815
    %v7233 = vpop.permute.xlu0 %7232
    %7236 = vset.pattern.permute.xlu0 0
    %7237 = vperm.xlu0 %7236, %v6818
    %v7238 = vpop.permute.xlu0 %7237
    %7241 = vset.pattern.permute.xlu0 0
    %7242 = vperm.xlu0 %7241, %v6821
    %v7243 = vpop.permute.xlu0 %7242
    %7246 = vset.pattern.permute.xlu0 0
    %7247 = vperm.xlu0 %7246, %v6824
    %v7248 = vpop.permute.xlu0 %7247
    %7251 = vset.pattern.permute.xlu0 0
    %7252 = vperm.xlu0 %7251, %v6827
    %v7253 = vpop.permute.xlu0 %7252
    %7256 = vset.pattern.permute.xlu0 0
    %7257 = vperm.xlu0 %7256, %v6830
    %v7258 = vpop.permute.xlu0 %7257
    %7261 = vset.pattern.permute.xlu0 0
    %7262 = vperm.xlu0 %7261, %v6833
    %v7263 = vpop.permute.xlu0 %7262
    %7266 = vset.pattern.permute.xlu0 0
    %7267 = vperm.xlu0 %7266, %v6836
    %v7268 = vpop.permute.xlu0 %7267
    %7271 = vset.pattern.permute.xlu0 0
    %7272 = vperm.xlu0 %7271, %v6839
    %v7273 = vpop.permute.xlu0 %7272
    %7276 = vset.pattern.permute.xlu0 0
    %7277 = vperm.xlu0 %7276, %v6842
    %v7278 = vpop.permute.xlu0 %7277
    %7281 = vset.pattern.permute.xlu0 0
    %7282 = vperm.xlu0 %7281, %v6845
    %v7283 = vpop.permute.xlu0 %7282
    %7286 = vset.pattern.permute.xlu0 0
    %7287 = vperm.xlu0 %7286, %v6848
    %v7288 = vpop.permute.xlu0 %7287
    %7291 = vset.pattern.permute.xlu0 0
    %7292 = vperm.xlu0 %7291, %v6851
    %v7293 = vpop.permute.xlu0 %7292
    %7296 = vset.pattern.permute.xlu0 0
    %7297 = vperm.xlu0 %7296, %v6854
    %v7298 = vpop.permute.xlu0 %7297
    %7301 = vset.pattern.permute.xlu0 0
    %7302 = vperm.xlu0 %7301, %v6857
    %v7303 = vpop.permute.xlu0 %7302
    %7306 = vset.pattern.permute.xlu0 0
    %7307 = vperm.xlu0 %7306, %v6860
    %v7308 = vpop.permute.xlu0 %7307
    %7311 = vset.pattern.permute.xlu0 0
    %7312 = vperm.xlu0 %7311, %v6863
    %v7313 = vpop.permute.xlu0 %7312
    %7316 = vset.pattern.permute.xlu0 0
    %7317 = vperm.xlu0 %7316, %v6866
    %v7318 = vpop.permute.xlu0 %7317
    %7321 = vset.pattern.permute.xlu0 0
    %7322 = vperm.xlu0 %7321, %v6869
    %v7323 = vpop.permute.xlu0 %7322
    %7326 = vset.pattern.permute.xlu0 0
    %7327 = vperm.xlu0 %7326, %v6872
    %v7328 = vpop.permute.xlu0 %7327
    %7331 = vset.pattern.permute.xlu0 0
    %7332 = vperm.xlu0 %7331, %v6875
    %v7333 = vpop.permute.xlu0 %7332
    %7336 = vset.pattern.permute.xlu0 0
    %7337 = vperm.xlu0 %7336, %v6878
    %v7338 = vpop.permute.xlu0 %7337
    %7341 = vset.pattern.permute.xlu0 0
    %7342 = vperm.xlu0 %7341, %v6881
    %v7343 = vpop.permute.xlu0 %7342
    %7346 = vset.pattern.permute.xlu0 0
    %7347 = vperm.xlu0 %7346, %v6884
    %v7348 = vpop.permute.xlu0 %7347
    %7351 = vset.pattern.permute.xlu0 0
    %7352 = vperm.xlu0 %7351, %v6887
    %v7353 = vpop.permute.xlu0 %7352
    %7356 = vset.pattern.permute.xlu0 0
    %7357 = vperm.xlu0 %7356, %v6890
    %v7358 = vpop.permute.xlu0 %7357
    %7361 = vset.pattern.permute.xlu0 0
    %7362 = vperm.xlu0 %7361, %v6893
    %v7363 = vpop.permute.xlu0 %7362
    %7366 = vset.pattern.permute.xlu0 0
    %7367 = vperm.xlu0 %7366, %v6896
    %v7368 = vpop.permute.xlu0 %7367
    %7371 = vset.pattern.permute.xlu0 0
    %7372 = vperm.xlu0 %7371, %v6899
    %v7373 = vpop.permute.xlu0 %7372
    %7376 = vset.pattern.permute.xlu0 0
    %7377 = vperm.xlu0 %7376, %v6902
    %v7378 = vpop.permute.xlu0 %7377
    %7381 = vset.pattern.permute.xlu0 0
    %7382 = vperm.xlu0 %7381, %v6905
    %v7383 = vpop.permute.xlu0 %7382
    %7386 = vset.pattern.permute.xlu0 0
    %7387 = vperm.xlu0 %7386, %v6908
    %v7388 = vpop.permute.xlu0 %7387
    %7391 = vset.pattern.permute.xlu0 0
    %7392 = vperm.xlu0 %7391, %v6911
    %v7393 = vpop.permute.xlu0 %7392
    %7396 = vset.pattern.permute.xlu0 0
    %7397 = vperm.xlu0 %7396, %v6914
    %v7398 = vpop.permute.xlu0 %7397
    %7401 = vset.pattern.permute.xlu0 0
    %7402 = vperm.xlu0 %7401, %v6917
    %v7403 = vpop.permute.xlu0 %7402
    %7406 = vset.pattern.permute.xlu0 0
    %7407 = vperm.xlu0 %7406, %v6920
    %v7408 = vpop.permute.xlu0 %7407
    %7411 = vset.pattern.permute.xlu0 0
    %7412 = vperm.xlu0 %7411, %v6923
    %v7413 = vpop.permute.xlu0 %7412
    %7416 = vset.pattern.permute.xlu0 0
    %7417 = vperm.xlu0 %7416, %v6926
    %v7418 = vpop.permute.xlu0 %7417
    %7421 = vset.pattern.permute.xlu0 0
    %7422 = vperm.xlu0 %7421, %v6929
    %v7423 = vpop.permute.xlu0 %7422
    %7426 = vset.pattern.permute.xlu0 0
    %7427 = vperm.xlu0 %7426, %v6932
    %v7428 = vpop.permute.xlu0 %7427
    %7431 = vset.pattern.permute.xlu0 0
    %7432 = vperm.xlu0 %7431, %v6935
    %v7433 = vpop.permute.xlu0 %7432
    %7436 = vset.pattern.permute.xlu0 0
    %7437 = vperm.xlu0 %7436, %v6938
    %v7438 = vpop.permute.xlu0 %7437
    %7441 = vset.pattern.permute.xlu0 0
    %7442 = vperm.xlu0 %7441, %v6941
    %v7443 = vpop.permute.xlu0 %7442
    %7446 = vset.pattern.permute.xlu0 0
    %7447 = vperm.xlu0 %7446, %v6944
    %v7448 = vpop.permute.xlu0 %7447
    %7451 = vset.pattern.permute.xlu0 0
    %7452 = vperm.xlu0 %7451, %v6947
    %v7453 = vpop.permute.xlu0 %7452
    %7456 = vset.pattern.permute.xlu0 0
    %7457 = vperm.xlu0 %7456, %v6950
    %v7458 = vpop.permute.xlu0 %7457
    %7461 = vset.pattern.permute.xlu0 0
    %7462 = vperm.xlu0 %7461, %v6953
    %v7463 = vpop.permute.xlu0 %7462
    %7466 = vset.pattern.permute.xlu0 0
    %7467 = vperm.xlu0 %7466, %v6956
    %v7468 = vpop.permute.xlu0 %7467
    %7471 = vset.pattern.permute.xlu0 0
    %7472 = vperm.xlu0 %7471, %v6959
    %v7473 = vpop.permute.xlu0 %7472
    %7476 = vset.pattern.permute.xlu0 0
    %7477 = vperm.xlu0 %7476, %v6962
    %v7478 = vpop.permute.xlu0 %7477
    %7481 = vset.pattern.permute.xlu0 0
    %7482 = vperm.xlu0 %7481, %v6965
    %v7483 = vpop.permute.xlu0 %7482
    %7486 = vset.pattern.permute.xlu0 0
    %7487 = vperm.xlu0 %7486, %v6968
    %v7488 = vpop.permute.xlu0 %7487
    %7491 = vset.pattern.permute.xlu0 0
    %7492 = vperm.xlu0 %7491, %v6971
    %v7493 = vpop.permute.xlu0 %7492
    %7496 = vset.pattern.permute.xlu0 0
    %7497 = vperm.xlu0 %7496, %v6974
    %v7498 = vpop.permute.xlu0 %7497
    %7501 = vset.pattern.permute.xlu0 0
    %7502 = vperm.xlu0 %7501, %v6977
    %v7503 = vpop.permute.xlu0 %7502
    %7506 = vset.pattern.permute.xlu0 0
    %7507 = vperm.xlu0 %7506, %v6980
    %v7508 = vpop.permute.xlu0 %7507
    %7511 = vset.pattern.permute.xlu0 0
    %7512 = vperm.xlu0 %7511, %v6983
    %v7513 = vpop.permute.xlu0 %7512
    %7516 = vset.pattern.permute.xlu0 0
    %7517 = vperm.xlu0 %7516, %v6986
    %v7518 = vpop.permute.xlu0 %7517
    %7521 = vset.pattern.permute.xlu0 0
    %7522 = vperm.xlu0 %7521, %v6989
    %v7523 = vpop.permute.xlu0 %7522
    %7526 = vset.pattern.permute.xlu0 0
    %7527 = vperm.xlu0 %7526, %v6992
    %v7528 = vpop.permute.xlu0 %7527
    %7531 = vset.pattern.permute.xlu0 0
    %7532 = vperm.xlu0 %7531, %v6995
    %v7533 = vpop.permute.xlu0 %7532
    %7536 = vset.pattern.permute.xlu0 0
    %7537 = vperm.xlu0 %7536, %v6998
    %v7538 = vpop.permute.xlu0 %7537
    %7541 = vset.pattern.permute.xlu0 0
    %7542 = vperm.xlu0 %7541, %v7001
    %v7543 = vpop.permute.xlu0 %7542
    %7546 = vset.pattern.permute.xlu0 0
    %7547 = vperm.xlu0 %7546, %v7004
    %v7548 = vpop.permute.xlu0 %7547
    %7551 = vset.pattern.permute.xlu0 0
    %7552 = vperm.xlu0 %7551, %v7007
    %v7553 = vpop.permute.xlu0 %7552
    %7556 = vset.pattern.permute.xlu0 0
    %7557 = vperm.xlu0 %7556, %v7010
    %v7558 = vpop.permute.xlu0 %7557
    %7561 = vset.pattern.permute.xlu0 0
    %7562 = vperm.xlu0 %7561, %v7013
    %v7563 = vpop.permute.xlu0 %7562
    %7566 = vset.pattern.permute.xlu0 0
    %7567 = vperm.xlu0 %7566, %v7016
    %v7568 = vpop.permute.xlu0 %7567
    %7571 = vset.pattern.permute.xlu0 0
    %7572 = vperm.xlu0 %7571, %v7019
    %v7573 = vpop.permute.xlu0 %7572
    %7576 = vset.pattern.permute.xlu0 0
    %7577 = vperm.xlu0 %7576, %v7022
    %v7578 = vpop.permute.xlu0 %7577
    %7581 = vset.pattern.permute.xlu0 0
    %7582 = vperm.xlu0 %7581, %v7025
    %v7583 = vpop.permute.xlu0 %7582
    %7586 = vset.pattern.permute.xlu0 0
    %7587 = vperm.xlu0 %7586, %v7028
    %v7588 = vpop.permute.xlu0 %7587
    %7591 = vset.pattern.permute.xlu0 0
    %7592 = vperm.xlu0 %7591, %v7031
    %v7593 = vpop.permute.xlu0 %7592
    %7596 = vset.pattern.permute.xlu0 0
    %7597 = vperm.xlu0 %7596, %v7034
    %v7598 = vpop.permute.xlu0 %7597
    %7601 = vset.pattern.permute.xlu0 0
    %7602 = vperm.xlu0 %7601, %v7037
    %v7603 = vpop.permute.xlu0 %7602
    %7606 = vset.pattern.permute.xlu0 0
    %7607 = vperm.xlu0 %7606, %v7040
    %v7608 = vpop.permute.xlu0 %7607
    %7611 = vset.pattern.permute.xlu0 0
    %7612 = vperm.xlu0 %7611, %v7043
    %v7613 = vpop.permute.xlu0 %7612
    %7616 = vset.pattern.permute.xlu0 0
    %7617 = vperm.xlu0 %7616, %v7046
    %v7618 = vpop.permute.xlu0 %7617
    %7621 = vset.pattern.permute.xlu0 0
    %7622 = vperm.xlu0 %7621, %v7049
    %v7623 = vpop.permute.xlu0 %7622
    %7626 = vset.pattern.permute.xlu0 0
    %7627 = vperm.xlu0 %7626, %v7052
    %v7628 = vpop.permute.xlu0 %7627
    %7631 = vset.pattern.permute.xlu0 0
    %7632 = vperm.xlu0 %7631, %v7055
    %v7633 = vpop.permute.xlu0 %7632
    %7636 = vset.pattern.permute.xlu0 0
    %7637 = vperm.xlu0 %7636, %v7058
    %v7638 = vpop.permute.xlu0 %7637
    %7641 = vset.pattern.permute.xlu0 0
    %7642 = vperm.xlu0 %7641, %v7061
    %v7643 = vpop.permute.xlu0 %7642
    %7646 = vset.pattern.permute.xlu0 0
    %7647 = vperm.xlu0 %7646, %v7064
    %v7648 = vpop.permute.xlu0 %7647
    %7651 = vset.pattern.permute.xlu0 0
    %7652 = vperm.xlu0 %7651, %v7067
    %v7653 = vpop.permute.xlu0 %7652
    %7656 = vset.pattern.permute.xlu0 0
    %7657 = vperm.xlu0 %7656, %v7070
    %v7658 = vpop.permute.xlu0 %7657
    %7661 = vset.pattern.permute.xlu0 0
    %7662 = vperm.xlu0 %7661, %v7073
    %v7663 = vpop.permute.xlu0 %7662
    %7666 = vset.pattern.permute.xlu0 0
    %7667 = vperm.xlu0 %7666, %v7076
    %v7668 = vpop.permute.xlu0 %7667
    %7671 = vset.pattern.permute.xlu0 0
    %7672 = vperm.xlu0 %7671, %v7079
    %v7673 = vpop.permute.xlu0 %7672
    %7676 = vset.pattern.permute.xlu0 0
    %7677 = vperm.xlu0 %7676, %v7082
    %v7678 = vpop.permute.xlu0 %7677
    %7681 = vset.pattern.permute.xlu0 0
    %7682 = vperm.xlu0 %7681, %v7085
    %v7683 = vpop.permute.xlu0 %7682
    %7686 = vset.pattern.permute.xlu0 0
    %7687 = vperm.xlu0 %7686, %v7088
    %v7688 = vpop.permute.xlu0 %7687
    %7691 = vset.pattern.permute.xlu0 0
    %7692 = vperm.xlu0 %7691, %v7091
    %v7693 = vpop.permute.xlu0 %7692
    %7696 = vset.pattern.permute.xlu0 0
    %7697 = vperm.xlu0 %7696, %v7094
    %v7698 = vpop.permute.xlu0 %7697
    %7701 = vset.pattern.permute.xlu0 0
    %7702 = vperm.xlu0 %7701, %v7097
    %v7703 = vpop.permute.xlu0 %7702
    %7706 = vset.pattern.permute.xlu0 0
    %7707 = vperm.xlu0 %7706, %v7100
    %v7708 = vpop.permute.xlu0 %7707
    %7711 = vset.pattern.permute.xlu0 0
    %7712 = vperm.xlu0 %7711, %v7103
    %v7713 = vpop.permute.xlu0 %7712
    %7716 = vset.pattern.permute.xlu0 0
    %7717 = vperm.xlu0 %7716, %v7106
    %v7718 = vpop.permute.xlu0 %7717
    %7721 = vset.pattern.permute.xlu0 0
    %7722 = vperm.xlu0 %7721, %v7109
    %v7723 = vpop.permute.xlu0 %7722
    %7726 = vset.pattern.permute.xlu0 0
    %7727 = vperm.xlu0 %7726, %v7112
    %v7728 = vpop.permute.xlu0 %7727
    %7731 = vset.pattern.permute.xlu0 0
    %7732 = vperm.xlu0 %7731, %v7115
    %v7733 = vpop.permute.xlu0 %7732
    %7736 = vset.pattern.permute.xlu0 0
    %7737 = vperm.xlu0 %7736, %v7118
    %v7738 = vpop.permute.xlu0 %7737
    %7741 = vset.pattern.permute.xlu0 0
    %7742 = vperm.xlu0 %7741, %v7121
    %v7743 = vpop.permute.xlu0 %7742
    %7746 = vset.pattern.permute.xlu0 0
    %7747 = vperm.xlu0 %7746, %v7124
    %v7748 = vpop.permute.xlu0 %7747
    %7751 = vset.pattern.permute.xlu0 0
    %7752 = vperm.xlu0 %7751, %v7127
    %v7753 = vpop.permute.xlu0 %7752
    %7756 = vset.pattern.permute.xlu0 0
    %7757 = vperm.xlu0 %7756, %v7130
    %v7758 = vpop.permute.xlu0 %7757
    %7761 = vset.pattern.permute.xlu0 0
    %7762 = vperm.xlu0 %7761, %v7133
    %v7763 = vpop.permute.xlu0 %7762
    %7766 = vset.pattern.permute.xlu0 0
    %7767 = vperm.xlu0 %7766, %v7136
    %v7768 = vpop.permute.xlu0 %7767
    %7771 = vset.pattern.permute.xlu0 0
    %7772 = vperm.xlu0 %7771, %v7139
    %v7773 = vpop.permute.xlu0 %7772
    %7776 = vset.pattern.permute.xlu0 0
    %7777 = vperm.xlu0 %7776, %v7142
    %v7778 = vpop.permute.xlu0 %7777
    %7781 = vset.pattern.permute.xlu0 0
    %7782 = vperm.xlu0 %7781, %v7145
    %v7783 = vpop.permute.xlu0 %7782
    %7786 = vset.pattern.permute.xlu0 0
    %7787 = vperm.xlu0 %7786, %v7148
    %v7788 = vpop.permute.xlu0 %7787
    %v7790 = vmul.f32 %v4596, %v7153
    %v7791 = vmul.f32 %v4598, %v7158
    %v7792 = vmul.f32 %v4601, %v7163
    %v7793 = vmul.f32 %v4603, %v7168
    %v7794 = vmul.f32 %v4606, %v7173
    %v7795 = vmul.f32 %v4608, %v7178
    %v7796 = vmul.f32 %v4611, %v7183
    %v7797 = vmul.f32 %v4613, %v7188
    %v7798 = vmul.f32 %v4616, %v7193
    %v7799 = vmul.f32 %v4618, %v7198
    %v7800 = vmul.f32 %v4621, %v7203
    %v7801 = vmul.f32 %v4623, %v7208
    %v7802 = vmul.f32 %v4626, %v7213
    %v7803 = vmul.f32 %v4628, %v7218
    %v7804 = vmul.f32 %v4631, %v7223
    %v7805 = vmul.f32 %v4633, %v7228
    %v7806 = vmul.f32 %v4636, %v7233
    %v7807 = vmul.f32 %v4638, %v7238
    %v7808 = vmul.f32 %v4641, %v7243
    %v7809 = vmul.f32 %v4643, %v7248
    %v7810 = vmul.f32 %v4646, %v7253
    %v7811 = vmul.f32 %v4648, %v7258
    %v7812 = vmul.f32 %v4651, %v7263
    %v7813 = vmul.f32 %v4653, %v7268
    %v7814 = vmul.f32 %v4656, %v7273
    %v7815 = vmul.f32 %v4658, %v7278
    %v7816 = vmul.f32 %v4661, %v7283
    %v7817 = vmul.f32 %v4663, %v7288
    %v7818 = vmul.f32 %v4666, %v7293
    %v7819 = vmul.f32 %v4668, %v7298
    %v7820 = vmul.f32 %v4671, %v7303
    %v7821 = vmul.f32 %v4673, %v7308
    %v7822 = vmul.f32 %v4676, %v7313
    %v7823 = vmul.f32 %v4678, %v7318
    %v7824 = vmul.f32 %v4681, %v7323
    %v7825 = vmul.f32 %v4683, %v7328
    %v7826 = vmul.f32 %v4686, %v7333
    %v7827 = vmul.f32 %v4688, %v7338
    %v7828 = vmul.f32 %v4691, %v7343
    %v7829 = vmul.f32 %v4693, %v7348
    %v7830 = vmul.f32 %v4696, %v7353
    %v7831 = vmul.f32 %v4698, %v7358
    %v7832 = vmul.f32 %v4701, %v7363
    %v7833 = vmul.f32 %v4703, %v7368
    %v7834 = vmul.f32 %v4706, %v7373
    %v7835 = vmul.f32 %v4708, %v7378
    %v7836 = vmul.f32 %v4711, %v7383
    %v7837 = vmul.f32 %v4713, %v7388
    %v7838 = vmul.f32 %v4716, %v7393
    %v7839 = vmul.f32 %v4718, %v7398
    %v7840 = vmul.f32 %v4721, %v7403
    %v7841 = vmul.f32 %v4723, %v7408
    %v7842 = vmul.f32 %v4726, %v7413
    %v7843 = vmul.f32 %v4728, %v7418
    %v7844 = vmul.f32 %v4731, %v7423
    %v7845 = vmul.f32 %v4733, %v7428
    %v7846 = vmul.f32 %v4736, %v7433
    %v7847 = vmul.f32 %v4738, %v7438
    %v7848 = vmul.f32 %v4741, %v7443
    %v7849 = vmul.f32 %v4743, %v7448
    %v7850 = vmul.f32 %v4746, %v7453
    %v7851 = vmul.f32 %v4748, %v7458
    %v7852 = vmul.f32 %v4751, %v7463
    %v7853 = vmul.f32 %v4753, %v7468
    %v7854 = vmul.f32 %v4756, %v7473
    %v7855 = vmul.f32 %v4758, %v7478
    %v7856 = vmul.f32 %v4761, %v7483
    %v7857 = vmul.f32 %v4763, %v7488
    %v7858 = vmul.f32 %v4766, %v7493
    %v7859 = vmul.f32 %v4768, %v7498
    %v7860 = vmul.f32 %v4771, %v7503
    %v7861 = vmul.f32 %v4773, %v7508
    %v7862 = vmul.f32 %v4776, %v7513
    %v7863 = vmul.f32 %v4778, %v7518
    %v7864 = vmul.f32 %v4781, %v7523
    %v7865 = vmul.f32 %v4783, %v7528
    %v7866 = vmul.f32 %v4786, %v7533
    %v7867 = vmul.f32 %v4788, %v7538
    %v7868 = vmul.f32 %v4791, %v7543
    %v7869 = vmul.f32 %v4793, %v7548
    %v7870 = vmul.f32 %v4796, %v7553
    %v7871 = vmul.f32 %v4798, %v7558
    %v7872 = vmul.f32 %v4801, %v7563
    %v7873 = vmul.f32 %v4803, %v7568
    %v7874 = vmul.f32 %v4806, %v7573
    %v7875 = vmul.f32 %v4808, %v7578
    %v7876 = vmul.f32 %v4811, %v7583
    %v7877 = vmul.f32 %v4813, %v7588
    %v7878 = vmul.f32 %v4816, %v7593
    %v7879 = vmul.f32 %v4818, %v7598
    %v7880 = vmul.f32 %v4821, %v7603
    %v7881 = vmul.f32 %v4823, %v7608
    %v7882 = vmul.f32 %v4826, %v7613
    %v7883 = vmul.f32 %v4828, %v7618
    %v7884 = vmul.f32 %v4831, %v7623
    %v7885 = vmul.f32 %v4833, %v7628
    %v7886 = vmul.f32 %v4836, %v7633
    %v7887 = vmul.f32 %v4838, %v7638
    %v7888 = vmul.f32 %v4841, %v7643
    %v7889 = vmul.f32 %v4843, %v7648
    %v7890 = vmul.f32 %v4846, %v7653
    %v7891 = vmul.f32 %v4848, %v7658
    %v7892 = vmul.f32 %v4851, %v7663
    %v7893 = vmul.f32 %v4853, %v7668
    %v7894 = vmul.f32 %v4856, %v7673
    %v7895 = vmul.f32 %v4858, %v7678
    %v7896 = vmul.f32 %v4861, %v7683
    %v7897 = vmul.f32 %v4863, %v7688
    %v7898 = vmul.f32 %v4866, %v7693
    %v7899 = vmul.f32 %v4868, %v7698
    %v7900 = vmul.f32 %v4871, %v7703
    %v7901 = vmul.f32 %v4873, %v7708
    %v7902 = vmul.f32 %v4876, %v7713
    %v7903 = vmul.f32 %v4878, %v7718
    %v7904 = vmul.f32 %v4881, %v7723
    %v7905 = vmul.f32 %v4883, %v7728
    %v7906 = vmul.f32 %v4886, %v7733
    %v7907 = vmul.f32 %v4888, %v7738
    %v7908 = vmul.f32 %v4891, %v7743
    %v7909 = vmul.f32 %v4893, %v7748
    %v7910 = vmul.f32 %v4896, %v7753
    %v7911 = vmul.f32 %v4898, %v7758
    %v7912 = vmul.f32 %v4901, %v7763
    %v7913 = vmul.f32 %v4903, %v7768
    %v7914 = vmul.f32 %v4906, %v7773
    %v7915 = vmul.f32 %v4908, %v7778
    %v7916 = vmul.f32 %v4911, %v7783
    %v7917 = vmul.f32 %v4913, %v7788
    %v7918 = vperm.slane %v6363, 0
    %v7919 = vadd.f32 %v7790, %v7918
    %v7920 = vadd.f32 %v7791, %v7918
    %v7921 = vadd.f32 %v7792, %v7918
    %v7922 = vadd.f32 %v7793, %v7918
    %v7923 = vadd.f32 %v7794, %v7918
    %v7924 = vadd.f32 %v7795, %v7918
    %v7925 = vadd.f32 %v7796, %v7918
    %v7926 = vadd.f32 %v7797, %v7918
    %v7927 = vadd.f32 %v7798, %v7918
    %v7928 = vadd.f32 %v7799, %v7918
    %v7929 = vadd.f32 %v7800, %v7918
    %v7930 = vadd.f32 %v7801, %v7918
    %v7931 = vadd.f32 %v7802, %v7918
    %v7932 = vadd.f32 %v7803, %v7918
    %v7933 = vadd.f32 %v7804, %v7918
    %v7934 = vadd.f32 %v7805, %v7918
    %v7935 = vadd.f32 %v7806, %v7918
    %v7936 = vadd.f32 %v7807, %v7918
    %v7937 = vadd.f32 %v7808, %v7918
    %v7938 = vadd.f32 %v7809, %v7918
    %v7939 = vadd.f32 %v7810, %v7918
    %v7940 = vadd.f32 %v7811, %v7918
    %v7941 = vadd.f32 %v7812, %v7918
    %v7942 = vadd.f32 %v7813, %v7918
    %v7943 = vadd.f32 %v7814, %v7918
    %v7944 = vadd.f32 %v7815, %v7918
    %v7945 = vadd.f32 %v7816, %v7918
    %v7946 = vadd.f32 %v7817, %v7918
    %v7947 = vadd.f32 %v7818, %v7918
    %v7948 = vadd.f32 %v7819, %v7918
    %v7949 = vadd.f32 %v7820, %v7918
    %v7950 = vadd.f32 %v7821, %v7918
    %v7951 = vadd.f32 %v7822, %v7918
    %v7952 = vadd.f32 %v7823, %v7918
    %v7953 = vadd.f32 %v7824, %v7918
    %v7954 = vadd.f32 %v7825, %v7918
    %v7955 = vadd.f32 %v7826, %v7918
    %v7956 = vadd.f32 %v7827, %v7918
    %v7957 = vadd.f32 %v7828, %v7918
    %v7958 = vadd.f32 %v7829, %v7918
    %v7959 = vadd.f32 %v7830, %v7918
    %v7960 = vadd.f32 %v7831, %v7918
    %v7961 = vadd.f32 %v7832, %v7918
    %v7962 = vadd.f32 %v7833, %v7918
    %v7963 = vadd.f32 %v7834, %v7918
    %v7964 = vadd.f32 %v7835, %v7918
    %v7965 = vadd.f32 %v7836, %v7918
    %v7966 = vadd.f32 %v7837, %v7918
    %v7967 = vadd.f32 %v7838, %v7918
    %v7968 = vadd.f32 %v7839, %v7918
    %v7969 = vadd.f32 %v7840, %v7918
    %v7970 = vadd.f32 %v7841, %v7918
    %v7971 = vadd.f32 %v7842, %v7918
    %v7972 = vadd.f32 %v7843, %v7918
    %v7973 = vadd.f32 %v7844, %v7918
    %v7974 = vadd.f32 %v7845, %v7918
    %v7975 = vadd.f32 %v7846, %v7918
    %v7976 = vadd.f32 %v7847, %v7918
    %v7977 = vadd.f32 %v7848, %v7918
    %v7978 = vadd.f32 %v7849, %v7918
    %v7979 = vadd.f32 %v7850, %v7918
    %v7980 = vadd.f32 %v7851, %v7918
    %v7981 = vadd.f32 %v7852, %v7918
    %v7982 = vadd.f32 %v7853, %v7918
    %v7983 = vadd.f32 %v7854, %v7918
    %v7984 = vadd.f32 %v7855, %v7918
    %v7985 = vadd.f32 %v7856, %v7918
    %v7986 = vadd.f32 %v7857, %v7918
    %v7987 = vadd.f32 %v7858, %v7918
    %v7988 = vadd.f32 %v7859, %v7918
    %v7989 = vadd.f32 %v7860, %v7918
    %v7990 = vadd.f32 %v7861, %v7918
    %v7991 = vadd.f32 %v7862, %v7918
    %v7992 = vadd.f32 %v7863, %v7918
    %v7993 = vadd.f32 %v7864, %v7918
    %v7994 = vadd.f32 %v7865, %v7918
    %v7995 = vadd.f32 %v7866, %v7918
    %v7996 = vadd.f32 %v7867, %v7918
    %v7997 = vadd.f32 %v7868, %v7918
    %v7998 = vadd.f32 %v7869, %v7918
    %v7999 = vadd.f32 %v7870, %v7918
    %v8000 = vadd.f32 %v7871, %v7918
    %v8001 = vadd.f32 %v7872, %v7918
    %v8002 = vadd.f32 %v7873, %v7918
    %v8003 = vadd.f32 %v7874, %v7918
    %v8004 = vadd.f32 %v7875, %v7918
    %v8005 = vadd.f32 %v7876, %v7918
    %v8006 = vadd.f32 %v7877, %v7918
    %v8007 = vadd.f32 %v7878, %v7918
    %v8008 = vadd.f32 %v7879, %v7918
    %v8009 = vadd.f32 %v7880, %v7918
    %v8010 = vadd.f32 %v7881, %v7918
    %v8011 = vadd.f32 %v7882, %v7918
    %v8012 = vadd.f32 %v7883, %v7918
    %v8013 = vadd.f32 %v7884, %v7918
    %v8014 = vadd.f32 %v7885, %v7918
    %v8015 = vadd.f32 %v7886, %v7918
    %v8016 = vadd.f32 %v7887, %v7918
    %v8017 = vadd.f32 %v7888, %v7918
    %v8018 = vadd.f32 %v7889, %v7918
    %v8019 = vadd.f32 %v7890, %v7918
    %v8020 = vadd.f32 %v7891, %v7918
    %v8021 = vadd.f32 %v7892, %v7918
    %v8022 = vadd.f32 %v7893, %v7918
    %v8023 = vadd.f32 %v7894, %v7918
    %v8024 = vadd.f32 %v7895, %v7918
    %v8025 = vadd.f32 %v7896, %v7918
    %v8026 = vadd.f32 %v7897, %v7918
    %v8027 = vadd.f32 %v7898, %v7918
    %v8028 = vadd.f32 %v7899, %v7918
    %v8029 = vadd.f32 %v7900, %v7918
    %v8030 = vadd.f32 %v7901, %v7918
    %v8031 = vadd.f32 %v7902, %v7918
    %v8032 = vadd.f32 %v7903, %v7918
    %v8033 = vadd.f32 %v7904, %v7918
    %v8034 = vadd.f32 %v7905, %v7918
    %v8035 = vadd.f32 %v7906, %v7918
    %v8036 = vadd.f32 %v7907, %v7918
    %v8037 = vadd.f32 %v7908, %v7918
    %v8038 = vadd.f32 %v7909, %v7918
    %v8039 = vadd.f32 %v7910, %v7918
    %v8040 = vadd.f32 %v7911, %v7918
    %v8041 = vadd.f32 %v7912, %v7918
    %v8042 = vadd.f32 %v7913, %v7918
    %v8043 = vadd.f32 %v7914, %v7918
    %v8044 = vadd.f32 %v7915, %v7918
    %v8045 = vadd.f32 %v7916, %v7918
    %v8046 = vadd.f32 %v7917, %v7918
    %v8047 = vadd.f32 %v7919, %v4596
    %v8048 = vadd.f32 %v7920, %v4598
    %v8049 = vadd.f32 %v7921, %v4601
    %v8050 = vadd.f32 %v7922, %v4603
    %v8051 = vadd.f32 %v7923, %v4606
    %v8052 = vadd.f32 %v7924, %v4608
    %v8053 = vadd.f32 %v7925, %v4611
    %v8054 = vadd.f32 %v7926, %v4613
    %v8055 = vadd.f32 %v7927, %v4616
    %v8056 = vadd.f32 %v7928, %v4618
    %v8057 = vadd.f32 %v7929, %v4621
    %v8058 = vadd.f32 %v7930, %v4623
    %v8059 = vadd.f32 %v7931, %v4626
    %v8060 = vadd.f32 %v7932, %v4628
    %v8061 = vadd.f32 %v7933, %v4631
    %v8062 = vadd.f32 %v7934, %v4633
    %v8063 = vadd.f32 %v7935, %v4636
    %v8064 = vadd.f32 %v7936, %v4638
    %v8065 = vadd.f32 %v7937, %v4641
    %v8066 = vadd.f32 %v7938, %v4643
    %v8067 = vadd.f32 %v7939, %v4646
    %v8068 = vadd.f32 %v7940, %v4648
    %v8069 = vadd.f32 %v7941, %v4651
    %v8070 = vadd.f32 %v7942, %v4653
    %v8071 = vadd.f32 %v7943, %v4656
    %v8072 = vadd.f32 %v7944, %v4658
    %v8073 = vadd.f32 %v7945, %v4661
    %v8074 = vadd.f32 %v7946, %v4663
    %v8075 = vadd.f32 %v7947, %v4666
    %v8076 = vadd.f32 %v7948, %v4668
    %v8077 = vadd.f32 %v7949, %v4671
    %v8078 = vadd.f32 %v7950, %v4673
    %v8079 = vadd.f32 %v7951, %v4676
    %v8080 = vadd.f32 %v7952, %v4678
    %v8081 = vadd.f32 %v7953, %v4681
    %v8082 = vadd.f32 %v7954, %v4683
    %v8083 = vadd.f32 %v7955, %v4686
    %v8084 = vadd.f32 %v7956, %v4688
    %v8085 = vadd.f32 %v7957, %v4691
    %v8086 = vadd.f32 %v7958, %v4693
    %v8087 = vadd.f32 %v7959, %v4696
    %v8088 = vadd.f32 %v7960, %v4698
    %v8089 = vadd.f32 %v7961, %v4701
    %v8090 = vadd.f32 %v7962, %v4703
    %v8091 = vadd.f32 %v7963, %v4706
    %v8092 = vadd.f32 %v7964, %v4708
    %v8093 = vadd.f32 %v7965, %v4711
    %v8094 = vadd.f32 %v7966, %v4713
    %v8095 = vadd.f32 %v7967, %v4716
    %v8096 = vadd.f32 %v7968, %v4718
    %v8097 = vadd.f32 %v7969, %v4721
    %v8098 = vadd.f32 %v7970, %v4723
    %v8099 = vadd.f32 %v7971, %v4726
    %v8100 = vadd.f32 %v7972, %v4728
    %v8101 = vadd.f32 %v7973, %v4731
    %v8102 = vadd.f32 %v7974, %v4733
    %v8103 = vadd.f32 %v7975, %v4736
    %v8104 = vadd.f32 %v7976, %v4738
    %v8105 = vadd.f32 %v7977, %v4741
    %v8106 = vadd.f32 %v7978, %v4743
    %v8107 = vadd.f32 %v7979, %v4746
    %v8108 = vadd.f32 %v7980, %v4748
    %v8109 = vadd.f32 %v7981, %v4751
    %v8110 = vadd.f32 %v7982, %v4753
    %v8111 = vadd.f32 %v7983, %v4756
    %v8112 = vadd.f32 %v7984, %v4758
    %v8113 = vadd.f32 %v7985, %v4761
    %v8114 = vadd.f32 %v7986, %v4763
    %v8115 = vadd.f32 %v7987, %v4766
    %v8116 = vadd.f32 %v7988, %v4768
    %v8117 = vadd.f32 %v7989, %v4771
    %v8118 = vadd.f32 %v7990, %v4773
    %v8119 = vadd.f32 %v7991, %v4776
    %v8120 = vadd.f32 %v7992, %v4778
    %v8121 = vadd.f32 %v7993, %v4781
    %v8122 = vadd.f32 %v7994, %v4783
    %v8123 = vadd.f32 %v7995, %v4786
    %v8124 = vadd.f32 %v7996, %v4788
    %v8125 = vadd.f32 %v7997, %v4791
    %v8126 = vadd.f32 %v7998, %v4793
    %v8127 = vadd.f32 %v7999, %v4796
    %v8128 = vadd.f32 %v8000, %v4798
    %v8129 = vadd.f32 %v8001, %v4801
    %v8130 = vadd.f32 %v8002, %v4803
    %v8131 = vadd.f32 %v8003, %v4806
    %v8132 = vadd.f32 %v8004, %v4808
    %v8133 = vadd.f32 %v8005, %v4811
    %v8134 = vadd.f32 %v8006, %v4813
    %v8135 = vadd.f32 %v8007, %v4816
    %v8136 = vadd.f32 %v8008, %v4818
    %v8137 = vadd.f32 %v8009, %v4821
    %v8138 = vadd.f32 %v8010, %v4823
    %v8139 = vadd.f32 %v8011, %v4826
    %v8140 = vadd.f32 %v8012, %v4828
    %v8141 = vadd.f32 %v8013, %v4831
    %v8142 = vadd.f32 %v8014, %v4833
    %v8143 = vadd.f32 %v8015, %v4836
    %v8144 = vadd.f32 %v8016, %v4838
    %v8145 = vadd.f32 %v8017, %v4841
    %v8146 = vadd.f32 %v8018, %v4843
    %v8147 = vadd.f32 %v8019, %v4846
    %v8148 = vadd.f32 %v8020, %v4848
    %v8149 = vadd.f32 %v8021, %v4851
    %v8150 = vadd.f32 %v8022, %v4853
    %v8151 = vadd.f32 %v8023, %v4856
    %v8152 = vadd.f32 %v8024, %v4858
    %v8153 = vadd.f32 %v8025, %v4861
    %v8154 = vadd.f32 %v8026, %v4863
    %v8155 = vadd.f32 %v8027, %v4866
    %v8156 = vadd.f32 %v8028, %v4868
    %v8157 = vadd.f32 %v8029, %v4871
    %v8158 = vadd.f32 %v8030, %v4873
    %v8159 = vadd.f32 %v8031, %v4876
    %v8160 = vadd.f32 %v8032, %v4878
    %v8161 = vadd.f32 %v8033, %v4881
    %v8162 = vadd.f32 %v8034, %v4883
    %v8163 = vadd.f32 %v8035, %v4886
    %v8164 = vadd.f32 %v8036, %v4888
    %v8165 = vadd.f32 %v8037, %v4891
    %v8166 = vadd.f32 %v8038, %v4893
    %v8167 = vadd.f32 %v8039, %v4896
    %v8168 = vadd.f32 %v8040, %v4898
    %v8169 = vadd.f32 %v8041, %v4901
    %v8170 = vadd.f32 %v8042, %v4903
    %v8171 = vadd.f32 %v8043, %v4906
    %v8172 = vadd.f32 %v8044, %v4908
    %v8173 = vadd.f32 %v8045, %v4911
    %v8174 = vadd.f32 %v8046, %v4913
    %8179 = vrot.lane.b32.xlu0 %v6359, 127
    %v8180 = vpop.permute.xlu0 %8179
    %8181 = vrot.lane.b32.xlu0 %v6360, 127
    %v8182 = vpop.permute.xlu0 %8181
    %8183 = vrot.lane.b32.xlu0 %v6361, 127
    %v8184 = vpop.permute.xlu0 %8183
    %8185 = vrot.lane.b32.xlu0 %v6362, 127
    %v8186 = vpop.permute.xlu0 %8185
    %v8192 = vsel %vm6364, %v8047, 0
    %v8195 = vsel %vm6364, %v8048, 0
    %v8198 = vsel %vm6364, %v8049, 0
    %v8201 = vsel %vm6364, %v8050, 0
    %v8204 = vsel %vm6364, %v8051, 0
    %v8207 = vsel %vm6364, %v8052, 0
    %v8210 = vsel %vm6364, %v8053, 0
    %v8213 = vsel %vm6364, %v8054, 0
    %v8216 = vsel %vm6364, %v8055, 0
    %v8219 = vsel %vm6364, %v8056, 0
    %v8222 = vsel %vm6364, %v8057, 0
    %v8225 = vsel %vm6364, %v8058, 0
    %v8228 = vsel %vm6364, %v8059, 0
    %v8231 = vsel %vm6364, %v8060, 0
    %v8234 = vsel %vm6364, %v8061, 0
    %v8237 = vsel %vm6364, %v8062, 0
    %v8240 = vsel %vm6364, %v8063, 0
    %v8243 = vsel %vm6364, %v8064, 0
    %v8246 = vsel %vm6364, %v8065, 0
    %v8249 = vsel %vm6364, %v8066, 0
    %v8252 = vsel %vm6364, %v8067, 0
    %v8255 = vsel %vm6364, %v8068, 0
    %v8258 = vsel %vm6364, %v8069, 0
    %v8261 = vsel %vm6364, %v8070, 0
    %v8264 = vsel %vm6364, %v8071, 0
    %v8267 = vsel %vm6364, %v8072, 0
    %v8270 = vsel %vm6364, %v8073, 0
    %v8273 = vsel %vm6364, %v8074, 0
    %v8276 = vsel %vm6364, %v8075, 0
    %v8279 = vsel %vm6364, %v8076, 0
    %v8282 = vsel %vm6364, %v8077, 0
    %v8285 = vsel %vm6364, %v8078, 0
    %v8288 = vsel %vm6364, %v8079, 0
    %v8291 = vsel %vm6364, %v8080, 0
    %v8294 = vsel %vm6364, %v8081, 0
    %v8297 = vsel %vm6364, %v8082, 0
    %v8300 = vsel %vm6364, %v8083, 0
    %v8303 = vsel %vm6364, %v8084, 0
    %v8306 = vsel %vm6364, %v8085, 0
    %v8309 = vsel %vm6364, %v8086, 0
    %v8312 = vsel %vm6364, %v8087, 0
    %v8315 = vsel %vm6364, %v8088, 0
    %v8318 = vsel %vm6364, %v8089, 0
    %v8321 = vsel %vm6364, %v8090, 0
    %v8324 = vsel %vm6364, %v8091, 0
    %v8327 = vsel %vm6364, %v8092, 0
    %v8330 = vsel %vm6364, %v8093, 0
    %v8333 = vsel %vm6364, %v8094, 0
    %v8336 = vsel %vm6364, %v8095, 0
    %v8339 = vsel %vm6364, %v8096, 0
    %v8342 = vsel %vm6364, %v8097, 0
    %v8345 = vsel %vm6364, %v8098, 0
    %v8348 = vsel %vm6364, %v8099, 0
    %v8351 = vsel %vm6364, %v8100, 0
    %v8354 = vsel %vm6364, %v8101, 0
    %v8357 = vsel %vm6364, %v8102, 0
    %v8360 = vsel %vm6364, %v8103, 0
    %v8363 = vsel %vm6364, %v8104, 0
    %v8366 = vsel %vm6364, %v8105, 0
    %v8369 = vsel %vm6364, %v8106, 0
    %v8372 = vsel %vm6364, %v8107, 0
    %v8375 = vsel %vm6364, %v8108, 0
    %v8378 = vsel %vm6364, %v8109, 0
    %v8381 = vsel %vm6364, %v8110, 0
    %v8384 = vsel %vm6364, %v8111, 0
    %v8387 = vsel %vm6364, %v8112, 0
    %v8390 = vsel %vm6364, %v8113, 0
    %v8393 = vsel %vm6364, %v8114, 0
    %v8396 = vsel %vm6364, %v8115, 0
    %v8399 = vsel %vm6364, %v8116, 0
    %v8402 = vsel %vm6364, %v8117, 0
    %v8405 = vsel %vm6364, %v8118, 0
    %v8408 = vsel %vm6364, %v8119, 0
    %v8411 = vsel %vm6364, %v8120, 0
    %v8414 = vsel %vm6364, %v8121, 0
    %v8417 = vsel %vm6364, %v8122, 0
    %v8420 = vsel %vm6364, %v8123, 0
    %v8423 = vsel %vm6364, %v8124, 0
    %v8426 = vsel %vm6364, %v8125, 0
    %v8429 = vsel %vm6364, %v8126, 0
    %v8432 = vsel %vm6364, %v8127, 0
    %v8435 = vsel %vm6364, %v8128, 0
    %v8438 = vsel %vm6364, %v8129, 0
    %v8441 = vsel %vm6364, %v8130, 0
    %v8444 = vsel %vm6364, %v8131, 0
    %v8447 = vsel %vm6364, %v8132, 0
    %v8450 = vsel %vm6364, %v8133, 0
    %v8453 = vsel %vm6364, %v8134, 0
    %v8456 = vsel %vm6364, %v8135, 0
    %v8459 = vsel %vm6364, %v8136, 0
    %v8462 = vsel %vm6364, %v8137, 0
    %v8465 = vsel %vm6364, %v8138, 0
    %v8468 = vsel %vm6364, %v8139, 0
    %v8471 = vsel %vm6364, %v8140, 0
    %v8474 = vsel %vm6364, %v8141, 0
    %v8477 = vsel %vm6364, %v8142, 0
    %v8480 = vsel %vm6364, %v8143, 0
    %v8483 = vsel %vm6364, %v8144, 0
    %v8486 = vsel %vm6364, %v8145, 0
    %v8489 = vsel %vm6364, %v8146, 0
    %v8492 = vsel %vm6364, %v8147, 0
    %v8495 = vsel %vm6364, %v8148, 0
    %v8498 = vsel %vm6364, %v8149, 0
    %v8501 = vsel %vm6364, %v8150, 0
    %v8504 = vsel %vm6364, %v8151, 0
    %v8507 = vsel %vm6364, %v8152, 0
    %v8510 = vsel %vm6364, %v8153, 0
    %v8513 = vsel %vm6364, %v8154, 0
    %v8516 = vsel %vm6364, %v8155, 0
    %v8519 = vsel %vm6364, %v8156, 0
    %v8522 = vsel %vm6364, %v8157, 0
    %v8525 = vsel %vm6364, %v8158, 0
    %v8528 = vsel %vm6364, %v8159, 0
    %v8531 = vsel %vm6364, %v8160, 0
    %v8534 = vsel %vm6364, %v8161, 0
    %v8537 = vsel %vm6364, %v8162, 0
    %v8540 = vsel %vm6364, %v8163, 0
    %v8543 = vsel %vm6364, %v8164, 0
    %v8546 = vsel %vm6364, %v8165, 0
    %v8549 = vsel %vm6364, %v8166, 0
    %v8552 = vsel %vm6364, %v8167, 0
    %v8555 = vsel %vm6364, %v8168, 0
    %v8558 = vsel %vm6364, %v8169, 0
    %v8561 = vsel %vm6364, %v8170, 0
    %v8564 = vsel %vm6364, %v8171, 0
    %v8567 = vsel %vm6364, %v8172, 0
    %v8570 = vsel %vm6364, %v8173, 0
    %v8573 = vsel %vm6364, %v8174, 0
    %8575 = vmatpush.msra.mxu0 0.0
    %8576 = vmatpush.msra.mxu0 0.0
    %8577 = vmatpush.msra.mxu0 0.0
    %8578 = vmatpush.msra.mxu0 0.0
    %8579 = vmatpush.msra.mxu0 0.0
    %8580 = vmatpush.msra.mxu0 0.0
    %8581 = vmatpush.msra.mxu0 0.0
    %8582 = vmatpush.msra.mxu0 0.0
    %8583 = vmatpush.msra.mxu0 0.0
    %8584 = vmatpush.msra.mxu0 0.0
    %8585 = vmatpush.msra.mxu0 0.0
    %8586 = vmatpush.msra.mxu0 0.0
    %8587 = vmatpush.msra.mxu0 %v8186
    %8588 = vmatpush.msra.mxu0 %v8184
    %8589 = vmatpush.msra.mxu0 %v8182
    %8590 = vmatpush.msra.mxu0 %v8180
    %8591 = vmatmul.f32.gmra.mxu0 %v8192
    %v8592 = vpop.f32.mrf.mxu0
    %v8593 = vadd.f32 0.0, %v8592
    %8594 = vmatmul.f32.gmra.mxu0 %v8195
    %v8595 = vpop.f32.mrf.mxu0
    %v8596 = vadd.f32 0.0, %v8595
    %8597 = vmatmul.f32.gmra.mxu0 %v8198
    %v8598 = vpop.f32.mrf.mxu0
    %v8599 = vadd.f32 0.0, %v8598
    %8600 = vmatmul.f32.gmra.mxu0 %v8201
    %v8601 = vpop.f32.mrf.mxu0
    %v8602 = vadd.f32 0.0, %v8601
    %8603 = vmatmul.f32.gmra.mxu0 %v8204
    %v8604 = vpop.f32.mrf.mxu0
    %v8605 = vadd.f32 0.0, %v8604
    %8606 = vmatmul.f32.gmra.mxu0 %v8207
    %v8607 = vpop.f32.mrf.mxu0
    %v8608 = vadd.f32 0.0, %v8607
    %8609 = vmatmul.f32.gmra.mxu0 %v8210
    %v8610 = vpop.f32.mrf.mxu0
    %v8611 = vadd.f32 0.0, %v8610
    %8612 = vmatmul.f32.gmra.mxu0 %v8213
    %v8613 = vpop.f32.mrf.mxu0
    %v8614 = vadd.f32 0.0, %v8613
    %8615 = vmatmul.f32.gmra.mxu0 %v8216
    %v8616 = vpop.f32.mrf.mxu0
    %v8617 = vadd.f32 0.0, %v8616
    %8618 = vmatmul.f32.gmra.mxu0 %v8219
    %v8619 = vpop.f32.mrf.mxu0
    %v8620 = vadd.f32 0.0, %v8619
    %8621 = vmatmul.f32.gmra.mxu0 %v8222
    %v8622 = vpop.f32.mrf.mxu0
    %v8623 = vadd.f32 0.0, %v8622
    %8624 = vmatmul.f32.gmra.mxu0 %v8225
    %v8625 = vpop.f32.mrf.mxu0
    %v8626 = vadd.f32 0.0, %v8625
    %8627 = vmatmul.f32.gmra.mxu0 %v8228
    %v8628 = vpop.f32.mrf.mxu0
    %v8629 = vadd.f32 0.0, %v8628
    %8630 = vmatmul.f32.gmra.mxu0 %v8231
    %v8631 = vpop.f32.mrf.mxu0
    %v8632 = vadd.f32 0.0, %v8631
    %8633 = vmatmul.f32.gmra.mxu0 %v8234
    %v8634 = vpop.f32.mrf.mxu0
    %v8635 = vadd.f32 0.0, %v8634
    %8636 = vmatmul.f32.gmra.mxu0 %v8237
    %v8637 = vpop.f32.mrf.mxu0
    %v8638 = vadd.f32 0.0, %v8637
    %8639 = vmatmul.f32.gmra.mxu0 %v8240
    %v8640 = vpop.f32.mrf.mxu0
    %v8641 = vadd.f32 0.0, %v8640
    %8642 = vmatmul.f32.gmra.mxu0 %v8243
    %v8643 = vpop.f32.mrf.mxu0
    %v8644 = vadd.f32 0.0, %v8643
    %8645 = vmatmul.f32.gmra.mxu0 %v8246
    %v8646 = vpop.f32.mrf.mxu0
    %v8647 = vadd.f32 0.0, %v8646
    %8648 = vmatmul.f32.gmra.mxu0 %v8249
    %v8649 = vpop.f32.mrf.mxu0
    %v8650 = vadd.f32 0.0, %v8649
    %8651 = vmatmul.f32.gmra.mxu0 %v8252
    %v8652 = vpop.f32.mrf.mxu0
    %v8653 = vadd.f32 0.0, %v8652
    %8654 = vmatmul.f32.gmra.mxu0 %v8255
    %v8655 = vpop.f32.mrf.mxu0
    %v8656 = vadd.f32 0.0, %v8655
    %8657 = vmatmul.f32.gmra.mxu0 %v8258
    %v8658 = vpop.f32.mrf.mxu0
    %v8659 = vadd.f32 0.0, %v8658
    %8660 = vmatmul.f32.gmra.mxu0 %v8261
    %v8661 = vpop.f32.mrf.mxu0
    %v8662 = vadd.f32 0.0, %v8661
    %8663 = vmatmul.f32.gmra.mxu0 %v8264
    %v8664 = vpop.f32.mrf.mxu0
    %v8665 = vadd.f32 0.0, %v8664
    %8666 = vmatmul.f32.gmra.mxu0 %v8267
    %v8667 = vpop.f32.mrf.mxu0
    %v8668 = vadd.f32 0.0, %v8667
    %8669 = vmatmul.f32.gmra.mxu0 %v8270
    %v8670 = vpop.f32.mrf.mxu0
    %v8671 = vadd.f32 0.0, %v8670
    %8672 = vmatmul.f32.gmra.mxu0 %v8273
    %v8673 = vpop.f32.mrf.mxu0
    %v8674 = vadd.f32 0.0, %v8673
    %8675 = vmatmul.f32.gmra.mxu0 %v8276
    %v8676 = vpop.f32.mrf.mxu0
    %v8677 = vadd.f32 0.0, %v8676
    %8678 = vmatmul.f32.gmra.mxu0 %v8279
    %v8679 = vpop.f32.mrf.mxu0
    %v8680 = vadd.f32 0.0, %v8679
    %8681 = vmatmul.f32.gmra.mxu0 %v8282
    %v8682 = vpop.f32.mrf.mxu0
    %v8683 = vadd.f32 0.0, %v8682
    %8684 = vmatmul.f32.gmra.mxu0 %v8285
    %v8685 = vpop.f32.mrf.mxu0
    %v8686 = vadd.f32 0.0, %v8685
    %8687 = vmatmul.f32.gmra.mxu0 %v8288
    %v8688 = vpop.f32.mrf.mxu0
    %v8689 = vadd.f32 0.0, %v8688
    %8690 = vmatmul.f32.gmra.mxu0 %v8291
    %v8691 = vpop.f32.mrf.mxu0
    %v8692 = vadd.f32 0.0, %v8691
    %8693 = vmatmul.f32.gmra.mxu0 %v8294
    %v8694 = vpop.f32.mrf.mxu0
    %v8695 = vadd.f32 0.0, %v8694
    %8696 = vmatmul.f32.gmra.mxu0 %v8297
    %v8697 = vpop.f32.mrf.mxu0
    %v8698 = vadd.f32 0.0, %v8697
    %8699 = vmatmul.f32.gmra.mxu0 %v8300
    %v8700 = vpop.f32.mrf.mxu0
    %v8701 = vadd.f32 0.0, %v8700
    %8702 = vmatmul.f32.gmra.mxu0 %v8303
    %v8703 = vpop.f32.mrf.mxu0
    %v8704 = vadd.f32 0.0, %v8703
    %8705 = vmatmul.f32.gmra.mxu0 %v8306
    %v8706 = vpop.f32.mrf.mxu0
    %v8707 = vadd.f32 0.0, %v8706
    %8708 = vmatmul.f32.gmra.mxu0 %v8309
    %v8709 = vpop.f32.mrf.mxu0
    %v8710 = vadd.f32 0.0, %v8709
    %8711 = vmatmul.f32.gmra.mxu0 %v8312
    %v8712 = vpop.f32.mrf.mxu0
    %v8713 = vadd.f32 0.0, %v8712
    %8714 = vmatmul.f32.gmra.mxu0 %v8315
    %v8715 = vpop.f32.mrf.mxu0
    %v8716 = vadd.f32 0.0, %v8715
    %8717 = vmatmul.f32.gmra.mxu0 %v8318
    %v8718 = vpop.f32.mrf.mxu0
    %v8719 = vadd.f32 0.0, %v8718
    %8720 = vmatmul.f32.gmra.mxu0 %v8321
    %v8721 = vpop.f32.mrf.mxu0
    %v8722 = vadd.f32 0.0, %v8721
    %8723 = vmatmul.f32.gmra.mxu0 %v8324
    %v8724 = vpop.f32.mrf.mxu0
    %v8725 = vadd.f32 0.0, %v8724
    %8726 = vmatmul.f32.gmra.mxu0 %v8327
    %v8727 = vpop.f32.mrf.mxu0
    %v8728 = vadd.f32 0.0, %v8727
    %8729 = vmatmul.f32.gmra.mxu0 %v8330
    %v8730 = vpop.f32.mrf.mxu0
    %v8731 = vadd.f32 0.0, %v8730
    %8732 = vmatmul.f32.gmra.mxu0 %v8333
    %v8733 = vpop.f32.mrf.mxu0
    %v8734 = vadd.f32 0.0, %v8733
    %8735 = vmatmul.f32.gmra.mxu0 %v8336
    %v8736 = vpop.f32.mrf.mxu0
    %v8737 = vadd.f32 0.0, %v8736
    %8738 = vmatmul.f32.gmra.mxu0 %v8339
    %v8739 = vpop.f32.mrf.mxu0
    %v8740 = vadd.f32 0.0, %v8739
    %8741 = vmatmul.f32.gmra.mxu0 %v8342
    %v8742 = vpop.f32.mrf.mxu0
    %v8743 = vadd.f32 0.0, %v8742
    %8744 = vmatmul.f32.gmra.mxu0 %v8345
    %v8745 = vpop.f32.mrf.mxu0
    %v8746 = vadd.f32 0.0, %v8745
    %8747 = vmatmul.f32.gmra.mxu0 %v8348
    %v8748 = vpop.f32.mrf.mxu0
    %v8749 = vadd.f32 0.0, %v8748
    %8750 = vmatmul.f32.gmra.mxu0 %v8351
    %v8751 = vpop.f32.mrf.mxu0
    %v8752 = vadd.f32 0.0, %v8751
    %8753 = vmatmul.f32.gmra.mxu0 %v8354
    %v8754 = vpop.f32.mrf.mxu0
    %v8755 = vadd.f32 0.0, %v8754
    %8756 = vmatmul.f32.gmra.mxu0 %v8357
    %v8757 = vpop.f32.mrf.mxu0
    %v8758 = vadd.f32 0.0, %v8757
    %8759 = vmatmul.f32.gmra.mxu0 %v8360
    %v8760 = vpop.f32.mrf.mxu0
    %v8761 = vadd.f32 0.0, %v8760
    %8762 = vmatmul.f32.gmra.mxu0 %v8363
    %v8763 = vpop.f32.mrf.mxu0
    %v8764 = vadd.f32 0.0, %v8763
    %8765 = vmatmul.f32.gmra.mxu0 %v8366
    %v8766 = vpop.f32.mrf.mxu0
    %v8767 = vadd.f32 0.0, %v8766
    %8768 = vmatmul.f32.gmra.mxu0 %v8369
    %v8769 = vpop.f32.mrf.mxu0
    %v8770 = vadd.f32 0.0, %v8769
    %8771 = vmatmul.f32.gmra.mxu0 %v8372
    %v8772 = vpop.f32.mrf.mxu0
    %v8773 = vadd.f32 0.0, %v8772
    %8774 = vmatmul.f32.gmra.mxu0 %v8375
    %v8775 = vpop.f32.mrf.mxu0
    %v8776 = vadd.f32 0.0, %v8775
    %8777 = vmatmul.f32.gmra.mxu0 %v8378
    %v8778 = vpop.f32.mrf.mxu0
    %v8779 = vadd.f32 0.0, %v8778
    %8780 = vmatmul.f32.gmra.mxu0 %v8381
    %v8781 = vpop.f32.mrf.mxu0
    %v8782 = vadd.f32 0.0, %v8781
    %8783 = vmatmul.f32.gmra.mxu0 %v8384
    %v8784 = vpop.f32.mrf.mxu0
    %v8785 = vadd.f32 0.0, %v8784
    %8786 = vmatmul.f32.gmra.mxu0 %v8387
    %v8787 = vpop.f32.mrf.mxu0
    %v8788 = vadd.f32 0.0, %v8787
    %8789 = vmatmul.f32.gmra.mxu0 %v8390
    %v8790 = vpop.f32.mrf.mxu0
    %v8791 = vadd.f32 0.0, %v8790
    %8792 = vmatmul.f32.gmra.mxu0 %v8393
    %v8793 = vpop.f32.mrf.mxu0
    %v8794 = vadd.f32 0.0, %v8793
    %8795 = vmatmul.f32.gmra.mxu0 %v8396
    %v8796 = vpop.f32.mrf.mxu0
    %v8797 = vadd.f32 0.0, %v8796
    %8798 = vmatmul.f32.gmra.mxu0 %v8399
    %v8799 = vpop.f32.mrf.mxu0
    %v8800 = vadd.f32 0.0, %v8799
    %8801 = vmatmul.f32.gmra.mxu0 %v8402
    %v8802 = vpop.f32.mrf.mxu0
    %v8803 = vadd.f32 0.0, %v8802
    %8804 = vmatmul.f32.gmra.mxu0 %v8405
    %v8805 = vpop.f32.mrf.mxu0
    %v8806 = vadd.f32 0.0, %v8805
    %8807 = vmatmul.f32.gmra.mxu0 %v8408
    %v8808 = vpop.f32.mrf.mxu0
    %v8809 = vadd.f32 0.0, %v8808
    %8810 = vmatmul.f32.gmra.mxu0 %v8411
    %v8811 = vpop.f32.mrf.mxu0
    %v8812 = vadd.f32 0.0, %v8811
    %8813 = vmatmul.f32.gmra.mxu0 %v8414
    %v8814 = vpop.f32.mrf.mxu0
    %v8815 = vadd.f32 0.0, %v8814
    %8816 = vmatmul.f32.gmra.mxu0 %v8417
    %v8817 = vpop.f32.mrf.mxu0
    %v8818 = vadd.f32 0.0, %v8817
    %8819 = vmatmul.f32.gmra.mxu0 %v8420
    %v8820 = vpop.f32.mrf.mxu0
    %v8821 = vadd.f32 0.0, %v8820
    %8822 = vmatmul.f32.gmra.mxu0 %v8423
    %v8823 = vpop.f32.mrf.mxu0
    %v8824 = vadd.f32 0.0, %v8823
    %8825 = vmatmul.f32.gmra.mxu0 %v8426
    %v8826 = vpop.f32.mrf.mxu0
    %v8827 = vadd.f32 0.0, %v8826
    %8828 = vmatmul.f32.gmra.mxu0 %v8429
    %v8829 = vpop.f32.mrf.mxu0
    %v8830 = vadd.f32 0.0, %v8829
    %8831 = vmatmul.f32.gmra.mxu0 %v8432
    %v8832 = vpop.f32.mrf.mxu0
    %v8833 = vadd.f32 0.0, %v8832
    %8834 = vmatmul.f32.gmra.mxu0 %v8435
    %v8835 = vpop.f32.mrf.mxu0
    %v8836 = vadd.f32 0.0, %v8835
    %8837 = vmatmul.f32.gmra.mxu0 %v8438
    %v8838 = vpop.f32.mrf.mxu0
    %v8839 = vadd.f32 0.0, %v8838
    %8840 = vmatmul.f32.gmra.mxu0 %v8441
    %v8841 = vpop.f32.mrf.mxu0
    %v8842 = vadd.f32 0.0, %v8841
    %8843 = vmatmul.f32.gmra.mxu0 %v8444
    %v8844 = vpop.f32.mrf.mxu0
    %v8845 = vadd.f32 0.0, %v8844
    %8846 = vmatmul.f32.gmra.mxu0 %v8447
    %v8847 = vpop.f32.mrf.mxu0
    %v8848 = vadd.f32 0.0, %v8847
    %8849 = vmatmul.f32.gmra.mxu0 %v8450
    %v8850 = vpop.f32.mrf.mxu0
    %v8851 = vadd.f32 0.0, %v8850
    %8852 = vmatmul.f32.gmra.mxu0 %v8453
    %v8853 = vpop.f32.mrf.mxu0
    %v8854 = vadd.f32 0.0, %v8853
    %8855 = vmatmul.f32.gmra.mxu0 %v8456
    %v8856 = vpop.f32.mrf.mxu0
    %v8857 = vadd.f32 0.0, %v8856
    %8858 = vmatmul.f32.gmra.mxu0 %v8459
    %v8859 = vpop.f32.mrf.mxu0
    %v8860 = vadd.f32 0.0, %v8859
    %8861 = vmatmul.f32.gmra.mxu0 %v8462
    %v8862 = vpop.f32.mrf.mxu0
    %v8863 = vadd.f32 0.0, %v8862
    %8864 = vmatmul.f32.gmra.mxu0 %v8465
    %v8865 = vpop.f32.mrf.mxu0
    %v8866 = vadd.f32 0.0, %v8865
    %8867 = vmatmul.f32.gmra.mxu0 %v8468
    %v8868 = vpop.f32.mrf.mxu0
    %v8869 = vadd.f32 0.0, %v8868
    %8870 = vmatmul.f32.gmra.mxu0 %v8471
    %v8871 = vpop.f32.mrf.mxu0
    %v8872 = vadd.f32 0.0, %v8871
    %8873 = vmatmul.f32.gmra.mxu0 %v8474
    %v8874 = vpop.f32.mrf.mxu0
    %v8875 = vadd.f32 0.0, %v8874
    %8876 = vmatmul.f32.gmra.mxu0 %v8477
    %v8877 = vpop.f32.mrf.mxu0
    %v8878 = vadd.f32 0.0, %v8877
    %8879 = vmatmul.f32.gmra.mxu0 %v8480
    %v8880 = vpop.f32.mrf.mxu0
    %v8881 = vadd.f32 0.0, %v8880
    %8882 = vmatmul.f32.gmra.mxu0 %v8483
    %v8883 = vpop.f32.mrf.mxu0
    %v8884 = vadd.f32 0.0, %v8883
    %8885 = vmatmul.f32.gmra.mxu0 %v8486
    %v8886 = vpop.f32.mrf.mxu0
    %v8887 = vadd.f32 0.0, %v8886
    %8888 = vmatmul.f32.gmra.mxu0 %v8489
    %v8889 = vpop.f32.mrf.mxu0
    %v8890 = vadd.f32 0.0, %v8889
    %8891 = vmatmul.f32.gmra.mxu0 %v8492
    %v8892 = vpop.f32.mrf.mxu0
    %v8893 = vadd.f32 0.0, %v8892
    %8894 = vmatmul.f32.gmra.mxu0 %v8495
    %v8895 = vpop.f32.mrf.mxu0
    %v8896 = vadd.f32 0.0, %v8895
    %8897 = vmatmul.f32.gmra.mxu0 %v8498
    %v8898 = vpop.f32.mrf.mxu0
    %v8899 = vadd.f32 0.0, %v8898
    %8900 = vmatmul.f32.gmra.mxu0 %v8501
    %v8901 = vpop.f32.mrf.mxu0
    %v8902 = vadd.f32 0.0, %v8901
    %8903 = vmatmul.f32.gmra.mxu0 %v8504
    %v8904 = vpop.f32.mrf.mxu0
    %v8905 = vadd.f32 0.0, %v8904
    %8906 = vmatmul.f32.gmra.mxu0 %v8507
    %v8907 = vpop.f32.mrf.mxu0
    %v8908 = vadd.f32 0.0, %v8907
    %8909 = vmatmul.f32.gmra.mxu0 %v8510
    %v8910 = vpop.f32.mrf.mxu0
    %v8911 = vadd.f32 0.0, %v8910
    %8912 = vmatmul.f32.gmra.mxu0 %v8513
    %v8913 = vpop.f32.mrf.mxu0
    %v8914 = vadd.f32 0.0, %v8913
    %8915 = vmatmul.f32.gmra.mxu0 %v8516
    %v8916 = vpop.f32.mrf.mxu0
    %v8917 = vadd.f32 0.0, %v8916
    %8918 = vmatmul.f32.gmra.mxu0 %v8519
    %v8919 = vpop.f32.mrf.mxu0
    %v8920 = vadd.f32 0.0, %v8919
    %8921 = vmatmul.f32.gmra.mxu0 %v8522
    %v8922 = vpop.f32.mrf.mxu0
    %v8923 = vadd.f32 0.0, %v8922
    %8924 = vmatmul.f32.gmra.mxu0 %v8525
    %v8925 = vpop.f32.mrf.mxu0
    %v8926 = vadd.f32 0.0, %v8925
    %8927 = vmatmul.f32.gmra.mxu0 %v8528
    %v8928 = vpop.f32.mrf.mxu0
    %v8929 = vadd.f32 0.0, %v8928
    %8930 = vmatmul.f32.gmra.mxu0 %v8531
    %v8931 = vpop.f32.mrf.mxu0
    %v8932 = vadd.f32 0.0, %v8931
    %8933 = vmatmul.f32.gmra.mxu0 %v8534
    %v8934 = vpop.f32.mrf.mxu0
    %v8935 = vadd.f32 0.0, %v8934
    %8936 = vmatmul.f32.gmra.mxu0 %v8537
    %v8937 = vpop.f32.mrf.mxu0
    %v8938 = vadd.f32 0.0, %v8937
    %8939 = vmatmul.f32.gmra.mxu0 %v8540
    %v8940 = vpop.f32.mrf.mxu0
    %v8941 = vadd.f32 0.0, %v8940
    %8942 = vmatmul.f32.gmra.mxu0 %v8543
    %v8943 = vpop.f32.mrf.mxu0
    %v8944 = vadd.f32 0.0, %v8943
    %8945 = vmatmul.f32.gmra.mxu0 %v8546
    %v8946 = vpop.f32.mrf.mxu0
    %v8947 = vadd.f32 0.0, %v8946
    %8948 = vmatmul.f32.gmra.mxu0 %v8549
    %v8949 = vpop.f32.mrf.mxu0
    %v8950 = vadd.f32 0.0, %v8949
    %8951 = vmatmul.f32.gmra.mxu0 %v8552
    %v8952 = vpop.f32.mrf.mxu0
    %v8953 = vadd.f32 0.0, %v8952
    %8954 = vmatmul.f32.gmra.mxu0 %v8555
    %v8955 = vpop.f32.mrf.mxu0
    %v8956 = vadd.f32 0.0, %v8955
    %8957 = vmatmul.f32.gmra.mxu0 %v8558
    %v8958 = vpop.f32.mrf.mxu0
    %v8959 = vadd.f32 0.0, %v8958
    %8960 = vmatmul.f32.gmra.mxu0 %v8561
    %v8961 = vpop.f32.mrf.mxu0
    %v8962 = vadd.f32 0.0, %v8961
    %8963 = vmatmul.f32.gmra.mxu0 %v8564
    %v8964 = vpop.f32.mrf.mxu0
    %v8965 = vadd.f32 0.0, %v8964
    %8966 = vmatmul.f32.gmra.mxu0 %v8567
    %v8967 = vpop.f32.mrf.mxu0
    %v8968 = vadd.f32 0.0, %v8967
    %8969 = vmatmul.f32.gmra.mxu0 %v8570
    %v8970 = vpop.f32.mrf.mxu0
    %v8971 = vadd.f32 0.0, %v8970
    %8972 = vmatmul.f32.gmra.mxu0 %v8573
    %v8973 = vpop.f32.mrf.mxu0
    %v8974 = vadd.f32 0.0, %v8973
    %8975 = vdwg.mxu0
    %8977 = vset.pattern.permute.xlu0 0
    %8978 = vperm.xlu0 %8977, %v8593
    %v8979 = vpop.permute.xlu0 %8978
    %8982 = vset.pattern.permute.xlu0 0
    %8983 = vperm.xlu0 %8982, %v8596
    %v8984 = vpop.permute.xlu0 %8983
    %8987 = vset.pattern.permute.xlu0 0
    %8988 = vperm.xlu0 %8987, %v8599
    %v8989 = vpop.permute.xlu0 %8988
    %8992 = vset.pattern.permute.xlu0 0
    %8993 = vperm.xlu0 %8992, %v8602
    %v8994 = vpop.permute.xlu0 %8993
    %8997 = vset.pattern.permute.xlu0 0
    %8998 = vperm.xlu0 %8997, %v8605
    %v8999 = vpop.permute.xlu0 %8998
    %9002 = vset.pattern.permute.xlu0 0
    %9003 = vperm.xlu0 %9002, %v8608
    %v9004 = vpop.permute.xlu0 %9003
    %9007 = vset.pattern.permute.xlu0 0
    %9008 = vperm.xlu0 %9007, %v8611
    %v9009 = vpop.permute.xlu0 %9008
    %9012 = vset.pattern.permute.xlu0 0
    %9013 = vperm.xlu0 %9012, %v8614
    %v9014 = vpop.permute.xlu0 %9013
    %9017 = vset.pattern.permute.xlu0 0
    %9018 = vperm.xlu0 %9017, %v8617
    %v9019 = vpop.permute.xlu0 %9018
    %9022 = vset.pattern.permute.xlu0 0
    %9023 = vperm.xlu0 %9022, %v8620
    %v9024 = vpop.permute.xlu0 %9023
    %9027 = vset.pattern.permute.xlu0 0
    %9028 = vperm.xlu0 %9027, %v8623
    %v9029 = vpop.permute.xlu0 %9028
    %9032 = vset.pattern.permute.xlu0 0
    %9033 = vperm.xlu0 %9032, %v8626
    %v9034 = vpop.permute.xlu0 %9033
    %9037 = vset.pattern.permute.xlu0 0
    %9038 = vperm.xlu0 %9037, %v8629
    %v9039 = vpop.permute.xlu0 %9038
    %9042 = vset.pattern.permute.xlu0 0
    %9043 = vperm.xlu0 %9042, %v8632
    %v9044 = vpop.permute.xlu0 %9043
    %9047 = vset.pattern.permute.xlu0 0
    %9048 = vperm.xlu0 %9047, %v8635
    %v9049 = vpop.permute.xlu0 %9048
    %9052 = vset.pattern.permute.xlu0 0
    %9053 = vperm.xlu0 %9052, %v8638
    %v9054 = vpop.permute.xlu0 %9053
    %9057 = vset.pattern.permute.xlu0 0
    %9058 = vperm.xlu0 %9057, %v8641
    %v9059 = vpop.permute.xlu0 %9058
    %9062 = vset.pattern.permute.xlu0 0
    %9063 = vperm.xlu0 %9062, %v8644
    %v9064 = vpop.permute.xlu0 %9063
    %9067 = vset.pattern.permute.xlu0 0
    %9068 = vperm.xlu0 %9067, %v8647
    %v9069 = vpop.permute.xlu0 %9068
    %9072 = vset.pattern.permute.xlu0 0
    %9073 = vperm.xlu0 %9072, %v8650
    %v9074 = vpop.permute.xlu0 %9073
    %9077 = vset.pattern.permute.xlu0 0
    %9078 = vperm.xlu0 %9077, %v8653
    %v9079 = vpop.permute.xlu0 %9078
    %9082 = vset.pattern.permute.xlu0 0
    %9083 = vperm.xlu0 %9082, %v8656
    %v9084 = vpop.permute.xlu0 %9083
    %9087 = vset.pattern.permute.xlu0 0
    %9088 = vperm.xlu0 %9087, %v8659
    %v9089 = vpop.permute.xlu0 %9088
    %9092 = vset.pattern.permute.xlu0 0
    %9093 = vperm.xlu0 %9092, %v8662
    %v9094 = vpop.permute.xlu0 %9093
    %9097 = vset.pattern.permute.xlu0 0
    %9098 = vperm.xlu0 %9097, %v8665
    %v9099 = vpop.permute.xlu0 %9098
    %9102 = vset.pattern.permute.xlu0 0
    %9103 = vperm.xlu0 %9102, %v8668
    %v9104 = vpop.permute.xlu0 %9103
    %9107 = vset.pattern.permute.xlu0 0
    %9108 = vperm.xlu0 %9107, %v8671
    %v9109 = vpop.permute.xlu0 %9108
    %9112 = vset.pattern.permute.xlu0 0
    %9113 = vperm.xlu0 %9112, %v8674
    %v9114 = vpop.permute.xlu0 %9113
    %9117 = vset.pattern.permute.xlu0 0
    %9118 = vperm.xlu0 %9117, %v8677
    %v9119 = vpop.permute.xlu0 %9118
    %9122 = vset.pattern.permute.xlu0 0
    %9123 = vperm.xlu0 %9122, %v8680
    %v9124 = vpop.permute.xlu0 %9123
    %9127 = vset.pattern.permute.xlu0 0
    %9128 = vperm.xlu0 %9127, %v8683
    %v9129 = vpop.permute.xlu0 %9128
    %9132 = vset.pattern.permute.xlu0 0
    %9133 = vperm.xlu0 %9132, %v8686
    %v9134 = vpop.permute.xlu0 %9133
    %9137 = vset.pattern.permute.xlu0 0
    %9138 = vperm.xlu0 %9137, %v8689
    %v9139 = vpop.permute.xlu0 %9138
    %9142 = vset.pattern.permute.xlu0 0
    %9143 = vperm.xlu0 %9142, %v8692
    %v9144 = vpop.permute.xlu0 %9143
    %9147 = vset.pattern.permute.xlu0 0
    %9148 = vperm.xlu0 %9147, %v8695
    %v9149 = vpop.permute.xlu0 %9148
    %9152 = vset.pattern.permute.xlu0 0
    %9153 = vperm.xlu0 %9152, %v8698
    %v9154 = vpop.permute.xlu0 %9153
    %9157 = vset.pattern.permute.xlu0 0
    %9158 = vperm.xlu0 %9157, %v8701
    %v9159 = vpop.permute.xlu0 %9158
    %9162 = vset.pattern.permute.xlu0 0
    %9163 = vperm.xlu0 %9162, %v8704
    %v9164 = vpop.permute.xlu0 %9163
    %9167 = vset.pattern.permute.xlu0 0
    %9168 = vperm.xlu0 %9167, %v8707
    %v9169 = vpop.permute.xlu0 %9168
    %9172 = vset.pattern.permute.xlu0 0
    %9173 = vperm.xlu0 %9172, %v8710
    %v9174 = vpop.permute.xlu0 %9173
    %9177 = vset.pattern.permute.xlu0 0
    %9178 = vperm.xlu0 %9177, %v8713
    %v9179 = vpop.permute.xlu0 %9178
    %9182 = vset.pattern.permute.xlu0 0
    %9183 = vperm.xlu0 %9182, %v8716
    %v9184 = vpop.permute.xlu0 %9183
    %9187 = vset.pattern.permute.xlu0 0
    %9188 = vperm.xlu0 %9187, %v8719
    %v9189 = vpop.permute.xlu0 %9188
    %9192 = vset.pattern.permute.xlu0 0
    %9193 = vperm.xlu0 %9192, %v8722
    %v9194 = vpop.permute.xlu0 %9193
    %9197 = vset.pattern.permute.xlu0 0
    %9198 = vperm.xlu0 %9197, %v8725
    %v9199 = vpop.permute.xlu0 %9198
    %9202 = vset.pattern.permute.xlu0 0
    %9203 = vperm.xlu0 %9202, %v8728
    %v9204 = vpop.permute.xlu0 %9203
    %9207 = vset.pattern.permute.xlu0 0
    %9208 = vperm.xlu0 %9207, %v8731
    %v9209 = vpop.permute.xlu0 %9208
    %9212 = vset.pattern.permute.xlu0 0
    %9213 = vperm.xlu0 %9212, %v8734
    %v9214 = vpop.permute.xlu0 %9213
    %9217 = vset.pattern.permute.xlu0 0
    %9218 = vperm.xlu0 %9217, %v8737
    %v9219 = vpop.permute.xlu0 %9218
    %9222 = vset.pattern.permute.xlu0 0
    %9223 = vperm.xlu0 %9222, %v8740
    %v9224 = vpop.permute.xlu0 %9223
    %9227 = vset.pattern.permute.xlu0 0
    %9228 = vperm.xlu0 %9227, %v8743
    %v9229 = vpop.permute.xlu0 %9228
    %9232 = vset.pattern.permute.xlu0 0
    %9233 = vperm.xlu0 %9232, %v8746
    %v9234 = vpop.permute.xlu0 %9233
    %9237 = vset.pattern.permute.xlu0 0
    %9238 = vperm.xlu0 %9237, %v8749
    %v9239 = vpop.permute.xlu0 %9238
    %9242 = vset.pattern.permute.xlu0 0
    %9243 = vperm.xlu0 %9242, %v8752
    %v9244 = vpop.permute.xlu0 %9243
    %9247 = vset.pattern.permute.xlu0 0
    %9248 = vperm.xlu0 %9247, %v8755
    %v9249 = vpop.permute.xlu0 %9248
    %9252 = vset.pattern.permute.xlu0 0
    %9253 = vperm.xlu0 %9252, %v8758
    %v9254 = vpop.permute.xlu0 %9253
    %9257 = vset.pattern.permute.xlu0 0
    %9258 = vperm.xlu0 %9257, %v8761
    %v9259 = vpop.permute.xlu0 %9258
    %9262 = vset.pattern.permute.xlu0 0
    %9263 = vperm.xlu0 %9262, %v8764
    %v9264 = vpop.permute.xlu0 %9263
    %9267 = vset.pattern.permute.xlu0 0
    %9268 = vperm.xlu0 %9267, %v8767
    %v9269 = vpop.permute.xlu0 %9268
    %9272 = vset.pattern.permute.xlu0 0
    %9273 = vperm.xlu0 %9272, %v8770
    %v9274 = vpop.permute.xlu0 %9273
    %9277 = vset.pattern.permute.xlu0 0
    %9278 = vperm.xlu0 %9277, %v8773
    %v9279 = vpop.permute.xlu0 %9278
    %9282 = vset.pattern.permute.xlu0 0
    %9283 = vperm.xlu0 %9282, %v8776
    %v9284 = vpop.permute.xlu0 %9283
    %9287 = vset.pattern.permute.xlu0 0
    %9288 = vperm.xlu0 %9287, %v8779
    %v9289 = vpop.permute.xlu0 %9288
    %9292 = vset.pattern.permute.xlu0 0
    %9293 = vperm.xlu0 %9292, %v8782
    %v9294 = vpop.permute.xlu0 %9293
    %9297 = vset.pattern.permute.xlu0 0
    %9298 = vperm.xlu0 %9297, %v8785
    %v9299 = vpop.permute.xlu0 %9298
    %9302 = vset.pattern.permute.xlu0 0
    %9303 = vperm.xlu0 %9302, %v8788
    %v9304 = vpop.permute.xlu0 %9303
    %9307 = vset.pattern.permute.xlu0 0
    %9308 = vperm.xlu0 %9307, %v8791
    %v9309 = vpop.permute.xlu0 %9308
    %9312 = vset.pattern.permute.xlu0 0
    %9313 = vperm.xlu0 %9312, %v8794
    %v9314 = vpop.permute.xlu0 %9313
    %9317 = vset.pattern.permute.xlu0 0
    %9318 = vperm.xlu0 %9317, %v8797
    %v9319 = vpop.permute.xlu0 %9318
    %9322 = vset.pattern.permute.xlu0 0
    %9323 = vperm.xlu0 %9322, %v8800
    %v9324 = vpop.permute.xlu0 %9323
    %9327 = vset.pattern.permute.xlu0 0
    %9328 = vperm.xlu0 %9327, %v8803
    %v9329 = vpop.permute.xlu0 %9328
    %9332 = vset.pattern.permute.xlu0 0
    %9333 = vperm.xlu0 %9332, %v8806
    %v9334 = vpop.permute.xlu0 %9333
    %9337 = vset.pattern.permute.xlu0 0
    %9338 = vperm.xlu0 %9337, %v8809
    %v9339 = vpop.permute.xlu0 %9338
    %9342 = vset.pattern.permute.xlu0 0
    %9343 = vperm.xlu0 %9342, %v8812
    %v9344 = vpop.permute.xlu0 %9343
    %9347 = vset.pattern.permute.xlu0 0
    %9348 = vperm.xlu0 %9347, %v8815
    %v9349 = vpop.permute.xlu0 %9348
    %9352 = vset.pattern.permute.xlu0 0
    %9353 = vperm.xlu0 %9352, %v8818
    %v9354 = vpop.permute.xlu0 %9353
    %9357 = vset.pattern.permute.xlu0 0
    %9358 = vperm.xlu0 %9357, %v8821
    %v9359 = vpop.permute.xlu0 %9358
    %9362 = vset.pattern.permute.xlu0 0
    %9363 = vperm.xlu0 %9362, %v8824
    %v9364 = vpop.permute.xlu0 %9363
    %9367 = vset.pattern.permute.xlu0 0
    %9368 = vperm.xlu0 %9367, %v8827
    %v9369 = vpop.permute.xlu0 %9368
    %9372 = vset.pattern.permute.xlu0 0
    %9373 = vperm.xlu0 %9372, %v8830
    %v9374 = vpop.permute.xlu0 %9373
    %9377 = vset.pattern.permute.xlu0 0
    %9378 = vperm.xlu0 %9377, %v8833
    %v9379 = vpop.permute.xlu0 %9378
    %9382 = vset.pattern.permute.xlu0 0
    %9383 = vperm.xlu0 %9382, %v8836
    %v9384 = vpop.permute.xlu0 %9383
    %9387 = vset.pattern.permute.xlu0 0
    %9388 = vperm.xlu0 %9387, %v8839
    %v9389 = vpop.permute.xlu0 %9388
    %9392 = vset.pattern.permute.xlu0 0
    %9393 = vperm.xlu0 %9392, %v8842
    %v9394 = vpop.permute.xlu0 %9393
    %9397 = vset.pattern.permute.xlu0 0
    %9398 = vperm.xlu0 %9397, %v8845
    %v9399 = vpop.permute.xlu0 %9398
    %9402 = vset.pattern.permute.xlu0 0
    %9403 = vperm.xlu0 %9402, %v8848
    %v9404 = vpop.permute.xlu0 %9403
    %9407 = vset.pattern.permute.xlu0 0
    %9408 = vperm.xlu0 %9407, %v8851
    %v9409 = vpop.permute.xlu0 %9408
    %9412 = vset.pattern.permute.xlu0 0
    %9413 = vperm.xlu0 %9412, %v8854
    %v9414 = vpop.permute.xlu0 %9413
    %9417 = vset.pattern.permute.xlu0 0
    %9418 = vperm.xlu0 %9417, %v8857
    %v9419 = vpop.permute.xlu0 %9418
    %9422 = vset.pattern.permute.xlu0 0
    %9423 = vperm.xlu0 %9422, %v8860
    %v9424 = vpop.permute.xlu0 %9423
    %9427 = vset.pattern.permute.xlu0 0
    %9428 = vperm.xlu0 %9427, %v8863
    %v9429 = vpop.permute.xlu0 %9428
    %9432 = vset.pattern.permute.xlu0 0
    %9433 = vperm.xlu0 %9432, %v8866
    %v9434 = vpop.permute.xlu0 %9433
    %9437 = vset.pattern.permute.xlu0 0
    %9438 = vperm.xlu0 %9437, %v8869
    %v9439 = vpop.permute.xlu0 %9438
    %9442 = vset.pattern.permute.xlu0 0
    %9443 = vperm.xlu0 %9442, %v8872
    %v9444 = vpop.permute.xlu0 %9443
    %9447 = vset.pattern.permute.xlu0 0
    %9448 = vperm.xlu0 %9447, %v8875
    %v9449 = vpop.permute.xlu0 %9448
    %9452 = vset.pattern.permute.xlu0 0
    %9453 = vperm.xlu0 %9452, %v8878
    %v9454 = vpop.permute.xlu0 %9453
    %9457 = vset.pattern.permute.xlu0 0
    %9458 = vperm.xlu0 %9457, %v8881
    %v9459 = vpop.permute.xlu0 %9458
    %9462 = vset.pattern.permute.xlu0 0
    %9463 = vperm.xlu0 %9462, %v8884
    %v9464 = vpop.permute.xlu0 %9463
    %9467 = vset.pattern.permute.xlu0 0
    %9468 = vperm.xlu0 %9467, %v8887
    %v9469 = vpop.permute.xlu0 %9468
    %9472 = vset.pattern.permute.xlu0 0
    %9473 = vperm.xlu0 %9472, %v8890
    %v9474 = vpop.permute.xlu0 %9473
    %9477 = vset.pattern.permute.xlu0 0
    %9478 = vperm.xlu0 %9477, %v8893
    %v9479 = vpop.permute.xlu0 %9478
    %9482 = vset.pattern.permute.xlu0 0
    %9483 = vperm.xlu0 %9482, %v8896
    %v9484 = vpop.permute.xlu0 %9483
    %9487 = vset.pattern.permute.xlu0 0
    %9488 = vperm.xlu0 %9487, %v8899
    %v9489 = vpop.permute.xlu0 %9488
    %9492 = vset.pattern.permute.xlu0 0
    %9493 = vperm.xlu0 %9492, %v8902
    %v9494 = vpop.permute.xlu0 %9493
    %9497 = vset.pattern.permute.xlu0 0
    %9498 = vperm.xlu0 %9497, %v8905
    %v9499 = vpop.permute.xlu0 %9498
    %9502 = vset.pattern.permute.xlu0 0
    %9503 = vperm.xlu0 %9502, %v8908
    %v9504 = vpop.permute.xlu0 %9503
    %9507 = vset.pattern.permute.xlu0 0
    %9508 = vperm.xlu0 %9507, %v8911
    %v9509 = vpop.permute.xlu0 %9508
    %9512 = vset.pattern.permute.xlu0 0
    %9513 = vperm.xlu0 %9512, %v8914
    %v9514 = vpop.permute.xlu0 %9513
    %9517 = vset.pattern.permute.xlu0 0
    %9518 = vperm.xlu0 %9517, %v8917
    %v9519 = vpop.permute.xlu0 %9518
    %9522 = vset.pattern.permute.xlu0 0
    %9523 = vperm.xlu0 %9522, %v8920
    %v9524 = vpop.permute.xlu0 %9523
    %9527 = vset.pattern.permute.xlu0 0
    %9528 = vperm.xlu0 %9527, %v8923
    %v9529 = vpop.permute.xlu0 %9528
    %9532 = vset.pattern.permute.xlu0 0
    %9533 = vperm.xlu0 %9532, %v8926
    %v9534 = vpop.permute.xlu0 %9533
    %9537 = vset.pattern.permute.xlu0 0
    %9538 = vperm.xlu0 %9537, %v8929
    %v9539 = vpop.permute.xlu0 %9538
    %9542 = vset.pattern.permute.xlu0 0
    %9543 = vperm.xlu0 %9542, %v8932
    %v9544 = vpop.permute.xlu0 %9543
    %9547 = vset.pattern.permute.xlu0 0
    %9548 = vperm.xlu0 %9547, %v8935
    %v9549 = vpop.permute.xlu0 %9548
    %9552 = vset.pattern.permute.xlu0 0
    %9553 = vperm.xlu0 %9552, %v8938
    %v9554 = vpop.permute.xlu0 %9553
    %9557 = vset.pattern.permute.xlu0 0
    %9558 = vperm.xlu0 %9557, %v8941
    %v9559 = vpop.permute.xlu0 %9558
    %9562 = vset.pattern.permute.xlu0 0
    %9563 = vperm.xlu0 %9562, %v8944
    %v9564 = vpop.permute.xlu0 %9563
    %9567 = vset.pattern.permute.xlu0 0
    %9568 = vperm.xlu0 %9567, %v8947
    %v9569 = vpop.permute.xlu0 %9568
    %9572 = vset.pattern.permute.xlu0 0
    %9573 = vperm.xlu0 %9572, %v8950
    %v9574 = vpop.permute.xlu0 %9573
    %9577 = vset.pattern.permute.xlu0 0
    %9578 = vperm.xlu0 %9577, %v8953
    %v9579 = vpop.permute.xlu0 %9578
    %9582 = vset.pattern.permute.xlu0 0
    %9583 = vperm.xlu0 %9582, %v8956
    %v9584 = vpop.permute.xlu0 %9583
    %9587 = vset.pattern.permute.xlu0 0
    %9588 = vperm.xlu0 %9587, %v8959
    %v9589 = vpop.permute.xlu0 %9588
    %9592 = vset.pattern.permute.xlu0 0
    %9593 = vperm.xlu0 %9592, %v8962
    %v9594 = vpop.permute.xlu0 %9593
    %9597 = vset.pattern.permute.xlu0 0
    %9598 = vperm.xlu0 %9597, %v8965
    %v9599 = vpop.permute.xlu0 %9598
    %9602 = vset.pattern.permute.xlu0 0
    %9603 = vperm.xlu0 %9602, %v8968
    %v9604 = vpop.permute.xlu0 %9603
    %9607 = vset.pattern.permute.xlu0 0
    %9608 = vperm.xlu0 %9607, %v8971
    %v9609 = vpop.permute.xlu0 %9608
    %9612 = vset.pattern.permute.xlu0 0
    %9613 = vperm.xlu0 %9612, %v8974
    %v9614 = vpop.permute.xlu0 %9613
    %v9616 = vmul.f32 %v4596, %v8979
    %v9617 = vmul.f32 %v4598, %v8984
    %v9618 = vmul.f32 %v4601, %v8989
    %v9619 = vmul.f32 %v4603, %v8994
    %v9620 = vmul.f32 %v4606, %v8999
    %v9621 = vmul.f32 %v4608, %v9004
    %v9622 = vmul.f32 %v4611, %v9009
    %v9623 = vmul.f32 %v4613, %v9014
    %v9624 = vmul.f32 %v4616, %v9019
    %v9625 = vmul.f32 %v4618, %v9024
    %v9626 = vmul.f32 %v4621, %v9029
    %v9627 = vmul.f32 %v4623, %v9034
    %v9628 = vmul.f32 %v4626, %v9039
    %v9629 = vmul.f32 %v4628, %v9044
    %v9630 = vmul.f32 %v4631, %v9049
    %v9631 = vmul.f32 %v4633, %v9054
    %v9632 = vmul.f32 %v4636, %v9059
    %v9633 = vmul.f32 %v4638, %v9064
    %v9634 = vmul.f32 %v4641, %v9069
    %v9635 = vmul.f32 %v4643, %v9074
    %v9636 = vmul.f32 %v4646, %v9079
    %v9637 = vmul.f32 %v4648, %v9084
    %v9638 = vmul.f32 %v4651, %v9089
    %v9639 = vmul.f32 %v4653, %v9094
    %v9640 = vmul.f32 %v4656, %v9099
    %v9641 = vmul.f32 %v4658, %v9104
    %v9642 = vmul.f32 %v4661, %v9109
    %v9643 = vmul.f32 %v4663, %v9114
    %v9644 = vmul.f32 %v4666, %v9119
    %v9645 = vmul.f32 %v4668, %v9124
    %v9646 = vmul.f32 %v4671, %v9129
    %v9647 = vmul.f32 %v4673, %v9134
    %v9648 = vmul.f32 %v4676, %v9139
    %v9649 = vmul.f32 %v4678, %v9144
    %v9650 = vmul.f32 %v4681, %v9149
    %v9651 = vmul.f32 %v4683, %v9154
    %v9652 = vmul.f32 %v4686, %v9159
    %v9653 = vmul.f32 %v4688, %v9164
    %v9654 = vmul.f32 %v4691, %v9169
    %v9655 = vmul.f32 %v4693, %v9174
    %v9656 = vmul.f32 %v4696, %v9179
    %v9657 = vmul.f32 %v4698, %v9184
    %v9658 = vmul.f32 %v4701, %v9189
    %v9659 = vmul.f32 %v4703, %v9194
    %v9660 = vmul.f32 %v4706, %v9199
    %v9661 = vmul.f32 %v4708, %v9204
    %v9662 = vmul.f32 %v4711, %v9209
    %v9663 = vmul.f32 %v4713, %v9214
    %v9664 = vmul.f32 %v4716, %v9219
    %v9665 = vmul.f32 %v4718, %v9224
    %v9666 = vmul.f32 %v4721, %v9229
    %v9667 = vmul.f32 %v4723, %v9234
    %v9668 = vmul.f32 %v4726, %v9239
    %v9669 = vmul.f32 %v4728, %v9244
    %v9670 = vmul.f32 %v4731, %v9249
    %v9671 = vmul.f32 %v4733, %v9254
    %v9672 = vmul.f32 %v4736, %v9259
    %v9673 = vmul.f32 %v4738, %v9264
    %v9674 = vmul.f32 %v4741, %v9269
    %v9675 = vmul.f32 %v4743, %v9274
    %v9676 = vmul.f32 %v4746, %v9279
    %v9677 = vmul.f32 %v4748, %v9284
    %v9678 = vmul.f32 %v4751, %v9289
    %v9679 = vmul.f32 %v4753, %v9294
    %v9680 = vmul.f32 %v4756, %v9299
    %v9681 = vmul.f32 %v4758, %v9304
    %v9682 = vmul.f32 %v4761, %v9309
    %v9683 = vmul.f32 %v4763, %v9314
    %v9684 = vmul.f32 %v4766, %v9319
    %v9685 = vmul.f32 %v4768, %v9324
    %v9686 = vmul.f32 %v4771, %v9329
    %v9687 = vmul.f32 %v4773, %v9334
    %v9688 = vmul.f32 %v4776, %v9339
    %v9689 = vmul.f32 %v4778, %v9344
    %v9690 = vmul.f32 %v4781, %v9349
    %v9691 = vmul.f32 %v4783, %v9354
    %v9692 = vmul.f32 %v4786, %v9359
    %v9693 = vmul.f32 %v4788, %v9364
    %v9694 = vmul.f32 %v4791, %v9369
    %v9695 = vmul.f32 %v4793, %v9374
    %v9696 = vmul.f32 %v4796, %v9379
    %v9697 = vmul.f32 %v4798, %v9384
    %v9698 = vmul.f32 %v4801, %v9389
    %v9699 = vmul.f32 %v4803, %v9394
    %v9700 = vmul.f32 %v4806, %v9399
    %v9701 = vmul.f32 %v4808, %v9404
    %v9702 = vmul.f32 %v4811, %v9409
    %v9703 = vmul.f32 %v4813, %v9414
    %v9704 = vmul.f32 %v4816, %v9419
    %v9705 = vmul.f32 %v4818, %v9424
    %v9706 = vmul.f32 %v4821, %v9429
    %v9707 = vmul.f32 %v4823, %v9434
    %v9708 = vmul.f32 %v4826, %v9439
    %v9709 = vmul.f32 %v4828, %v9444
    %v9710 = vmul.f32 %v4831, %v9449
    %v9711 = vmul.f32 %v4833, %v9454
    %v9712 = vmul.f32 %v4836, %v9459
    %v9713 = vmul.f32 %v4838, %v9464
    %v9714 = vmul.f32 %v4841, %v9469
    %v9715 = vmul.f32 %v4843, %v9474
    %v9716 = vmul.f32 %v4846, %v9479
    %v9717 = vmul.f32 %v4848, %v9484
    %v9718 = vmul.f32 %v4851, %v9489
    %v9719 = vmul.f32 %v4853, %v9494
    %v9720 = vmul.f32 %v4856, %v9499
    %v9721 = vmul.f32 %v4858, %v9504
    %v9722 = vmul.f32 %v4861, %v9509
    %v9723 = vmul.f32 %v4863, %v9514
    %v9724 = vmul.f32 %v4866, %v9519
    %v9725 = vmul.f32 %v4868, %v9524
    %v9726 = vmul.f32 %v4871, %v9529
    %v9727 = vmul.f32 %v4873, %v9534
    %v9728 = vmul.f32 %v4876, %v9539
    %v9729 = vmul.f32 %v4878, %v9544
    %v9730 = vmul.f32 %v4881, %v9549
    %v9731 = vmul.f32 %v4883, %v9554
    %v9732 = vmul.f32 %v4886, %v9559
    %v9733 = vmul.f32 %v4888, %v9564
    %v9734 = vmul.f32 %v4891, %v9569
    %v9735 = vmul.f32 %v4893, %v9574
    %v9736 = vmul.f32 %v4896, %v9579
    %v9737 = vmul.f32 %v4898, %v9584
    %v9738 = vmul.f32 %v4901, %v9589
    %v9739 = vmul.f32 %v4903, %v9594
    %v9740 = vmul.f32 %v4906, %v9599
    %v9741 = vmul.f32 %v4908, %v9604
    %v9742 = vmul.f32 %v4911, %v9609
    %v9743 = vmul.f32 %v4913, %v9614
    %v9744 = vperm.slane %v6363, 1
    %v9745 = vadd.f32 %v9616, %v9744
    %v9746 = vadd.f32 %v9617, %v9744
    %v9747 = vadd.f32 %v9618, %v9744
    %v9748 = vadd.f32 %v9619, %v9744
    %v9749 = vadd.f32 %v9620, %v9744
    %v9750 = vadd.f32 %v9621, %v9744
    %v9751 = vadd.f32 %v9622, %v9744
    %v9752 = vadd.f32 %v9623, %v9744
    %v9753 = vadd.f32 %v9624, %v9744
    %v9754 = vadd.f32 %v9625, %v9744
    %v9755 = vadd.f32 %v9626, %v9744
    %v9756 = vadd.f32 %v9627, %v9744
    %v9757 = vadd.f32 %v9628, %v9744
    %v9758 = vadd.f32 %v9629, %v9744
    %v9759 = vadd.f32 %v9630, %v9744
    %v9760 = vadd.f32 %v9631, %v9744
    %v9761 = vadd.f32 %v9632, %v9744
    %v9762 = vadd.f32 %v9633, %v9744
    %v9763 = vadd.f32 %v9634, %v9744
    %v9764 = vadd.f32 %v9635, %v9744
    %v9765 = vadd.f32 %v9636, %v9744
    %v9766 = vadd.f32 %v9637, %v9744
    %v9767 = vadd.f32 %v9638, %v9744
    %v9768 = vadd.f32 %v9639, %v9744
    %v9769 = vadd.f32 %v9640, %v9744
    %v9770 = vadd.f32 %v9641, %v9744
    %v9771 = vadd.f32 %v9642, %v9744
    %v9772 = vadd.f32 %v9643, %v9744
    %v9773 = vadd.f32 %v9644, %v9744
    %v9774 = vadd.f32 %v9645, %v9744
    %v9775 = vadd.f32 %v9646, %v9744
    %v9776 = vadd.f32 %v9647, %v9744
    %v9777 = vadd.f32 %v9648, %v9744
    %v9778 = vadd.f32 %v9649, %v9744
    %v9779 = vadd.f32 %v9650, %v9744
    %v9780 = vadd.f32 %v9651, %v9744
    %v9781 = vadd.f32 %v9652, %v9744
    %v9782 = vadd.f32 %v9653, %v9744
    %v9783 = vadd.f32 %v9654, %v9744
    %v9784 = vadd.f32 %v9655, %v9744
    %v9785 = vadd.f32 %v9656, %v9744
    %v9786 = vadd.f32 %v9657, %v9744
    %v9787 = vadd.f32 %v9658, %v9744
    %v9788 = vadd.f32 %v9659, %v9744
    %v9789 = vadd.f32 %v9660, %v9744
    %v9790 = vadd.f32 %v9661, %v9744
    %v9791 = vadd.f32 %v9662, %v9744
    %v9792 = vadd.f32 %v9663, %v9744
    %v9793 = vadd.f32 %v9664, %v9744
    %v9794 = vadd.f32 %v9665, %v9744
    %v9795 = vadd.f32 %v9666, %v9744
    %v9796 = vadd.f32 %v9667, %v9744
    %v9797 = vadd.f32 %v9668, %v9744
    %v9798 = vadd.f32 %v9669, %v9744
    %v9799 = vadd.f32 %v9670, %v9744
    %v9800 = vadd.f32 %v9671, %v9744
    %v9801 = vadd.f32 %v9672, %v9744
    %v9802 = vadd.f32 %v9673, %v9744
    %v9803 = vadd.f32 %v9674, %v9744
    %v9804 = vadd.f32 %v9675, %v9744
    %v9805 = vadd.f32 %v9676, %v9744
    %v9806 = vadd.f32 %v9677, %v9744
    %v9807 = vadd.f32 %v9678, %v9744
    %v9808 = vadd.f32 %v9679, %v9744
    %v9809 = vadd.f32 %v9680, %v9744
    %v9810 = vadd.f32 %v9681, %v9744
    %v9811 = vadd.f32 %v9682, %v9744
    %v9812 = vadd.f32 %v9683, %v9744
    %v9813 = vadd.f32 %v9684, %v9744
    %v9814 = vadd.f32 %v9685, %v9744
    %v9815 = vadd.f32 %v9686, %v9744
    %v9816 = vadd.f32 %v9687, %v9744
    %v9817 = vadd.f32 %v9688, %v9744
    %v9818 = vadd.f32 %v9689, %v9744
    %v9819 = vadd.f32 %v9690, %v9744
    %v9820 = vadd.f32 %v9691, %v9744
    %v9821 = vadd.f32 %v9692, %v9744
    %v9822 = vadd.f32 %v9693, %v9744
    %v9823 = vadd.f32 %v9694, %v9744
    %v9824 = vadd.f32 %v9695, %v9744
    %v9825 = vadd.f32 %v9696, %v9744
    %v9826 = vadd.f32 %v9697, %v9744
    %v9827 = vadd.f32 %v9698, %v9744
    %v9828 = vadd.f32 %v9699, %v9744
    %v9829 = vadd.f32 %v9700, %v9744
    %v9830 = vadd.f32 %v9701, %v9744
    %v9831 = vadd.f32 %v9702, %v9744
    %v9832 = vadd.f32 %v9703, %v9744
    %v9833 = vadd.f32 %v9704, %v9744
    %v9834 = vadd.f32 %v9705, %v9744
    %v9835 = vadd.f32 %v9706, %v9744
    %v9836 = vadd.f32 %v9707, %v9744
    %v9837 = vadd.f32 %v9708, %v9744
    %v9838 = vadd.f32 %v9709, %v9744
    %v9839 = vadd.f32 %v9710, %v9744
    %v9840 = vadd.f32 %v9711, %v9744
    %v9841 = vadd.f32 %v9712, %v9744
    %v9842 = vadd.f32 %v9713, %v9744
    %v9843 = vadd.f32 %v9714, %v9744
    %v9844 = vadd.f32 %v9715, %v9744
    %v9845 = vadd.f32 %v9716, %v9744
    %v9846 = vadd.f32 %v9717, %v9744
    %v9847 = vadd.f32 %v9718, %v9744
    %v9848 = vadd.f32 %v9719, %v9744
    %v9849 = vadd.f32 %v9720, %v9744
    %v9850 = vadd.f32 %v9721, %v9744
    %v9851 = vadd.f32 %v9722, %v9744
    %v9852 = vadd.f32 %v9723, %v9744
    %v9853 = vadd.f32 %v9724, %v9744
    %v9854 = vadd.f32 %v9725, %v9744
    %v9855 = vadd.f32 %v9726, %v9744
    %v9856 = vadd.f32 %v9727, %v9744
    %v9857 = vadd.f32 %v9728, %v9744
    %v9858 = vadd.f32 %v9729, %v9744
    %v9859 = vadd.f32 %v9730, %v9744
    %v9860 = vadd.f32 %v9731, %v9744
    %v9861 = vadd.f32 %v9732, %v9744
    %v9862 = vadd.f32 %v9733, %v9744
    %v9863 = vadd.f32 %v9734, %v9744
    %v9864 = vadd.f32 %v9735, %v9744
    %v9865 = vadd.f32 %v9736, %v9744
    %v9866 = vadd.f32 %v9737, %v9744
    %v9867 = vadd.f32 %v9738, %v9744
    %v9868 = vadd.f32 %v9739, %v9744
    %v9869 = vadd.f32 %v9740, %v9744
    %v9870 = vadd.f32 %v9741, %v9744
    %v9871 = vadd.f32 %v9742, %v9744
    %v9872 = vadd.f32 %v9743, %v9744
    %v9873 = vadd.f32 %v9745, %v8047
    %v9874 = vadd.f32 %v9746, %v8048
    %v9875 = vadd.f32 %v9747, %v8049
    %v9876 = vadd.f32 %v9748, %v8050
    %v9877 = vadd.f32 %v9749, %v8051
    %v9878 = vadd.f32 %v9750, %v8052
    %v9879 = vadd.f32 %v9751, %v8053
    %v9880 = vadd.f32 %v9752, %v8054
    %v9881 = vadd.f32 %v9753, %v8055
    %v9882 = vadd.f32 %v9754, %v8056
    %v9883 = vadd.f32 %v9755, %v8057
    %v9884 = vadd.f32 %v9756, %v8058
    %v9885 = vadd.f32 %v9757, %v8059
    %v9886 = vadd.f32 %v9758, %v8060
    %v9887 = vadd.f32 %v9759, %v8061
    %v9888 = vadd.f32 %v9760, %v8062
    %v9889 = vadd.f32 %v9761, %v8063
    %v9890 = vadd.f32 %v9762, %v8064
    %v9891 = vadd.f32 %v9763, %v8065
    %v9892 = vadd.f32 %v9764, %v8066
    %v9893 = vadd.f32 %v9765, %v8067
    %v9894 = vadd.f32 %v9766, %v8068
    %v9895 = vadd.f32 %v9767, %v8069
    %v9896 = vadd.f32 %v9768, %v8070
    %v9897 = vadd.f32 %v9769, %v8071
    %v9898 = vadd.f32 %v9770, %v8072
    %v9899 = vadd.f32 %v9771, %v8073
    %v9900 = vadd.f32 %v9772, %v8074
    %v9901 = vadd.f32 %v9773, %v8075
    %v9902 = vadd.f32 %v9774, %v8076
    %v9903 = vadd.f32 %v9775, %v8077
    %v9904 = vadd.f32 %v9776, %v8078
    %v9905 = vadd.f32 %v9777, %v8079
    %v9906 = vadd.f32 %v9778, %v8080
    %v9907 = vadd.f32 %v9779, %v8081
    %v9908 = vadd.f32 %v9780, %v8082
    %v9909 = vadd.f32 %v9781, %v8083
    %v9910 = vadd.f32 %v9782, %v8084
    %v9911 = vadd.f32 %v9783, %v8085
    %v9912 = vadd.f32 %v9784, %v8086
    %v9913 = vadd.f32 %v9785, %v8087
    %v9914 = vadd.f32 %v9786, %v8088
    %v9915 = vadd.f32 %v9787, %v8089
    %v9916 = vadd.f32 %v9788, %v8090
    %v9917 = vadd.f32 %v9789, %v8091
    %v9918 = vadd.f32 %v9790, %v8092
    %v9919 = vadd.f32 %v9791, %v8093
    %v9920 = vadd.f32 %v9792, %v8094
    %v9921 = vadd.f32 %v9793, %v8095
    %v9922 = vadd.f32 %v9794, %v8096
    %v9923 = vadd.f32 %v9795, %v8097
    %v9924 = vadd.f32 %v9796, %v8098
    %v9925 = vadd.f32 %v9797, %v8099
    %v9926 = vadd.f32 %v9798, %v8100
    %v9927 = vadd.f32 %v9799, %v8101
    %v9928 = vadd.f32 %v9800, %v8102
    %v9929 = vadd.f32 %v9801, %v8103
    %v9930 = vadd.f32 %v9802, %v8104
    %v9931 = vadd.f32 %v9803, %v8105
    %v9932 = vadd.f32 %v9804, %v8106
    %v9933 = vadd.f32 %v9805, %v8107
    %v9934 = vadd.f32 %v9806, %v8108
    %v9935 = vadd.f32 %v9807, %v8109
    %v9936 = vadd.f32 %v9808, %v8110
    %v9937 = vadd.f32 %v9809, %v8111
    %v9938 = vadd.f32 %v9810, %v8112
    %v9939 = vadd.f32 %v9811, %v8113
    %v9940 = vadd.f32 %v9812, %v8114
    %v9941 = vadd.f32 %v9813, %v8115
    %v9942 = vadd.f32 %v9814, %v8116
    %v9943 = vadd.f32 %v9815, %v8117
    %v9944 = vadd.f32 %v9816, %v8118
    %v9945 = vadd.f32 %v9817, %v8119
    %v9946 = vadd.f32 %v9818, %v8120
    %v9947 = vadd.f32 %v9819, %v8121
    %v9948 = vadd.f32 %v9820, %v8122
    %v9949 = vadd.f32 %v9821, %v8123
    %v9950 = vadd.f32 %v9822, %v8124
    %v9951 = vadd.f32 %v9823, %v8125
    %v9952 = vadd.f32 %v9824, %v8126
    %v9953 = vadd.f32 %v9825, %v8127
    %v9954 = vadd.f32 %v9826, %v8128
    %v9955 = vadd.f32 %v9827, %v8129
    %v9956 = vadd.f32 %v9828, %v8130
    %v9957 = vadd.f32 %v9829, %v8131
    %v9958 = vadd.f32 %v9830, %v8132
    %v9959 = vadd.f32 %v9831, %v8133
    %v9960 = vadd.f32 %v9832, %v8134
    %v9961 = vadd.f32 %v9833, %v8135
    %v9962 = vadd.f32 %v9834, %v8136
    %v9963 = vadd.f32 %v9835, %v8137
    %v9964 = vadd.f32 %v9836, %v8138
    %v9965 = vadd.f32 %v9837, %v8139
    %v9966 = vadd.f32 %v9838, %v8140
    %v9967 = vadd.f32 %v9839, %v8141
    %v9968 = vadd.f32 %v9840, %v8142
    %v9969 = vadd.f32 %v9841, %v8143
    %v9970 = vadd.f32 %v9842, %v8144
    %v9971 = vadd.f32 %v9843, %v8145
    %v9972 = vadd.f32 %v9844, %v8146
    %v9973 = vadd.f32 %v9845, %v8147
    %v9974 = vadd.f32 %v9846, %v8148
    %v9975 = vadd.f32 %v9847, %v8149
    %v9976 = vadd.f32 %v9848, %v8150
    %v9977 = vadd.f32 %v9849, %v8151
    %v9978 = vadd.f32 %v9850, %v8152
    %v9979 = vadd.f32 %v9851, %v8153
    %v9980 = vadd.f32 %v9852, %v8154
    %v9981 = vadd.f32 %v9853, %v8155
    %v9982 = vadd.f32 %v9854, %v8156
    %v9983 = vadd.f32 %v9855, %v8157
    %v9984 = vadd.f32 %v9856, %v8158
    %v9985 = vadd.f32 %v9857, %v8159
    %v9986 = vadd.f32 %v9858, %v8160
    %v9987 = vadd.f32 %v9859, %v8161
    %v9988 = vadd.f32 %v9860, %v8162
    %v9989 = vadd.f32 %v9861, %v8163
    %v9990 = vadd.f32 %v9862, %v8164
    %v9991 = vadd.f32 %v9863, %v8165
    %v9992 = vadd.f32 %v9864, %v8166
    %v9993 = vadd.f32 %v9865, %v8167
    %v9994 = vadd.f32 %v9866, %v8168
    %v9995 = vadd.f32 %v9867, %v8169
    %v9996 = vadd.f32 %v9868, %v8170
    %v9997 = vadd.f32 %v9869, %v8171
    %v9998 = vadd.f32 %v9870, %v8172
    %v9999 = vadd.f32 %v9871, %v8173
    %v10000 = vadd.f32 %v9872, %v8174
    %10129 = vrot.lane.b32.xlu0 %v6231, 32
    %v10130 = vpop.permute.xlu0 %10129
    %10131 = vrot.lane.b32.xlu0 %v6232, 32
    %v10132 = vpop.permute.xlu0 %10131
    %10133 = vrot.lane.b32.xlu0 %v6233, 32
    %v10134 = vpop.permute.xlu0 %10133
    %10135 = vrot.lane.b32.xlu0 %v6234, 32
    %v10136 = vpop.permute.xlu0 %10135
    %10137 = vrot.lane.b32.xlu0 %v6235, 32
    %v10138 = vpop.permute.xlu0 %10137
    %10139 = vrot.lane.b32.xlu0 %v6236, 32
    %v10140 = vpop.permute.xlu0 %10139
    %10141 = vrot.lane.b32.xlu0 %v6237, 32
    %v10142 = vpop.permute.xlu0 %10141
    %10143 = vrot.lane.b32.xlu0 %v6238, 32
    %v10144 = vpop.permute.xlu0 %10143
    %10145 = vrot.lane.b32.xlu0 %v6239, 32
    %v10146 = vpop.permute.xlu0 %10145
    %10147 = vrot.lane.b32.xlu0 %v6240, 32
    %v10148 = vpop.permute.xlu0 %10147
    %10149 = vrot.lane.b32.xlu0 %v6241, 32
    %v10150 = vpop.permute.xlu0 %10149
    %10151 = vrot.lane.b32.xlu0 %v6242, 32
    %v10152 = vpop.permute.xlu0 %10151
    %10153 = vrot.lane.b32.xlu0 %v6243, 32
    %v10154 = vpop.permute.xlu0 %10153
    %10155 = vrot.lane.b32.xlu0 %v6244, 32
    %v10156 = vpop.permute.xlu0 %10155
    %10157 = vrot.lane.b32.xlu0 %v6245, 32
    %v10158 = vpop.permute.xlu0 %10157
    %10159 = vrot.lane.b32.xlu0 %v6246, 32
    %v10160 = vpop.permute.xlu0 %10159
    %10161 = vrot.lane.b32.xlu0 %v6247, 32
    %v10162 = vpop.permute.xlu0 %10161
    %10163 = vrot.lane.b32.xlu0 %v6248, 32
    %v10164 = vpop.permute.xlu0 %10163
    %10165 = vrot.lane.b32.xlu0 %v6249, 32
    %v10166 = vpop.permute.xlu0 %10165
    %10167 = vrot.lane.b32.xlu0 %v6250, 32
    %v10168 = vpop.permute.xlu0 %10167
    %10169 = vrot.lane.b32.xlu0 %v6251, 32
    %v10170 = vpop.permute.xlu0 %10169
    %10171 = vrot.lane.b32.xlu0 %v6252, 32
    %v10172 = vpop.permute.xlu0 %10171
    %10173 = vrot.lane.b32.xlu0 %v6253, 32
    %v10174 = vpop.permute.xlu0 %10173
    %10175 = vrot.lane.b32.xlu0 %v6254, 32
    %v10176 = vpop.permute.xlu0 %10175
    %10177 = vrot.lane.b32.xlu0 %v6255, 32
    %v10178 = vpop.permute.xlu0 %10177
    %10179 = vrot.lane.b32.xlu0 %v6256, 32
    %v10180 = vpop.permute.xlu0 %10179
    %10181 = vrot.lane.b32.xlu0 %v6257, 32
    %v10182 = vpop.permute.xlu0 %10181
    %10183 = vrot.lane.b32.xlu0 %v6258, 32
    %v10184 = vpop.permute.xlu0 %10183
    %10185 = vrot.lane.b32.xlu0 %v6259, 32
    %v10186 = vpop.permute.xlu0 %10185
    %10187 = vrot.lane.b32.xlu0 %v6260, 32
    %v10188 = vpop.permute.xlu0 %10187
    %10189 = vrot.lane.b32.xlu0 %v6261, 32
    %v10190 = vpop.permute.xlu0 %10189
    %10191 = vrot.lane.b32.xlu0 %v6262, 32
    %v10192 = vpop.permute.xlu0 %10191
    %10193 = vrot.lane.b32.xlu0 %v6263, 32
    %v10194 = vpop.permute.xlu0 %10193
    %10195 = vrot.lane.b32.xlu0 %v6264, 32
    %v10196 = vpop.permute.xlu0 %10195
    %10197 = vrot.lane.b32.xlu0 %v6265, 32
    %v10198 = vpop.permute.xlu0 %10197
    %10199 = vrot.lane.b32.xlu0 %v6266, 32
    %v10200 = vpop.permute.xlu0 %10199
    %10201 = vrot.lane.b32.xlu0 %v6267, 32
    %v10202 = vpop.permute.xlu0 %10201
    %10203 = vrot.lane.b32.xlu0 %v6268, 32
    %v10204 = vpop.permute.xlu0 %10203
    %10205 = vrot.lane.b32.xlu0 %v6269, 32
    %v10206 = vpop.permute.xlu0 %10205
    %10207 = vrot.lane.b32.xlu0 %v6270, 32
    %v10208 = vpop.permute.xlu0 %10207
    %10209 = vrot.lane.b32.xlu0 %v6271, 32
    %v10210 = vpop.permute.xlu0 %10209
    %10211 = vrot.lane.b32.xlu0 %v6272, 32
    %v10212 = vpop.permute.xlu0 %10211
    %10213 = vrot.lane.b32.xlu0 %v6273, 32
    %v10214 = vpop.permute.xlu0 %10213
    %10215 = vrot.lane.b32.xlu0 %v6274, 32
    %v10216 = vpop.permute.xlu0 %10215
    %10217 = vrot.lane.b32.xlu0 %v6275, 32
    %v10218 = vpop.permute.xlu0 %10217
    %10219 = vrot.lane.b32.xlu0 %v6276, 32
    %v10220 = vpop.permute.xlu0 %10219
    %10221 = vrot.lane.b32.xlu0 %v6277, 32
    %v10222 = vpop.permute.xlu0 %10221
    %10223 = vrot.lane.b32.xlu0 %v6278, 32
    %v10224 = vpop.permute.xlu0 %10223
    %10225 = vrot.lane.b32.xlu0 %v6279, 32
    %v10226 = vpop.permute.xlu0 %10225
    %10227 = vrot.lane.b32.xlu0 %v6280, 32
    %v10228 = vpop.permute.xlu0 %10227
    %10229 = vrot.lane.b32.xlu0 %v6281, 32
    %v10230 = vpop.permute.xlu0 %10229
    %10231 = vrot.lane.b32.xlu0 %v6282, 32
    %v10232 = vpop.permute.xlu0 %10231
    %10233 = vrot.lane.b32.xlu0 %v6283, 32
    %v10234 = vpop.permute.xlu0 %10233
    %10235 = vrot.lane.b32.xlu0 %v6284, 32
    %v10236 = vpop.permute.xlu0 %10235
    %10237 = vrot.lane.b32.xlu0 %v6285, 32
    %v10238 = vpop.permute.xlu0 %10237
    %10239 = vrot.lane.b32.xlu0 %v6286, 32
    %v10240 = vpop.permute.xlu0 %10239
    %10241 = vrot.lane.b32.xlu0 %v6287, 32
    %v10242 = vpop.permute.xlu0 %10241
    %10243 = vrot.lane.b32.xlu0 %v6288, 32
    %v10244 = vpop.permute.xlu0 %10243
    %10245 = vrot.lane.b32.xlu0 %v6289, 32
    %v10246 = vpop.permute.xlu0 %10245
    %10247 = vrot.lane.b32.xlu0 %v6290, 32
    %v10248 = vpop.permute.xlu0 %10247
    %10249 = vrot.lane.b32.xlu0 %v6291, 32
    %v10250 = vpop.permute.xlu0 %10249
    %10251 = vrot.lane.b32.xlu0 %v6292, 32
    %v10252 = vpop.permute.xlu0 %10251
    %10253 = vrot.lane.b32.xlu0 %v6293, 32
    %v10254 = vpop.permute.xlu0 %10253
    %10255 = vrot.lane.b32.xlu0 %v6294, 32
    %v10256 = vpop.permute.xlu0 %10255
    %10257 = vrot.lane.b32.xlu0 %v6295, 32
    %v10258 = vpop.permute.xlu0 %10257
    %10259 = vrot.lane.b32.xlu0 %v6296, 32
    %v10260 = vpop.permute.xlu0 %10259
    %10261 = vrot.lane.b32.xlu0 %v6297, 32
    %v10262 = vpop.permute.xlu0 %10261
    %10263 = vrot.lane.b32.xlu0 %v6298, 32
    %v10264 = vpop.permute.xlu0 %10263
    %10265 = vrot.lane.b32.xlu0 %v6299, 32
    %v10266 = vpop.permute.xlu0 %10265
    %10267 = vrot.lane.b32.xlu0 %v6300, 32
    %v10268 = vpop.permute.xlu0 %10267
    %10269 = vrot.lane.b32.xlu0 %v6301, 32
    %v10270 = vpop.permute.xlu0 %10269
    %10271 = vrot.lane.b32.xlu0 %v6302, 32
    %v10272 = vpop.permute.xlu0 %10271
    %10273 = vrot.lane.b32.xlu0 %v6303, 32
    %v10274 = vpop.permute.xlu0 %10273
    %10275 = vrot.lane.b32.xlu0 %v6304, 32
    %v10276 = vpop.permute.xlu0 %10275
    %10277 = vrot.lane.b32.xlu0 %v6305, 32
    %v10278 = vpop.permute.xlu0 %10277
    %10279 = vrot.lane.b32.xlu0 %v6306, 32
    %v10280 = vpop.permute.xlu0 %10279
    %10281 = vrot.lane.b32.xlu0 %v6307, 32
    %v10282 = vpop.permute.xlu0 %10281
    %10283 = vrot.lane.b32.xlu0 %v6308, 32
    %v10284 = vpop.permute.xlu0 %10283
    %10285 = vrot.lane.b32.xlu0 %v6309, 32
    %v10286 = vpop.permute.xlu0 %10285
    %10287 = vrot.lane.b32.xlu0 %v6310, 32
    %v10288 = vpop.permute.xlu0 %10287
    %10289 = vrot.lane.b32.xlu0 %v6311, 32
    %v10290 = vpop.permute.xlu0 %10289
    %10291 = vrot.lane.b32.xlu0 %v6312, 32
    %v10292 = vpop.permute.xlu0 %10291
    %10293 = vrot.lane.b32.xlu0 %v6313, 32
    %v10294 = vpop.permute.xlu0 %10293
    %10295 = vrot.lane.b32.xlu0 %v6314, 32
    %v10296 = vpop.permute.xlu0 %10295
    %10297 = vrot.lane.b32.xlu0 %v6315, 32
    %v10298 = vpop.permute.xlu0 %10297
    %10299 = vrot.lane.b32.xlu0 %v6316, 32
    %v10300 = vpop.permute.xlu0 %10299
    %10301 = vrot.lane.b32.xlu0 %v6317, 32
    %v10302 = vpop.permute.xlu0 %10301
    %10303 = vrot.lane.b32.xlu0 %v6318, 32
    %v10304 = vpop.permute.xlu0 %10303
    %10305 = vrot.lane.b32.xlu0 %v6319, 32
    %v10306 = vpop.permute.xlu0 %10305
    %10307 = vrot.lane.b32.xlu0 %v6320, 32
    %v10308 = vpop.permute.xlu0 %10307
    %10309 = vrot.lane.b32.xlu0 %v6321, 32
    %v10310 = vpop.permute.xlu0 %10309
    %10311 = vrot.lane.b32.xlu0 %v6322, 32
    %v10312 = vpop.permute.xlu0 %10311
    %10313 = vrot.lane.b32.xlu0 %v6323, 32
    %v10314 = vpop.permute.xlu0 %10313
    %10315 = vrot.lane.b32.xlu0 %v6324, 32
    %v10316 = vpop.permute.xlu0 %10315
    %10317 = vrot.lane.b32.xlu0 %v6325, 32
    %v10318 = vpop.permute.xlu0 %10317
    %10319 = vrot.lane.b32.xlu0 %v6326, 32
    %v10320 = vpop.permute.xlu0 %10319
    %10321 = vrot.lane.b32.xlu0 %v6327, 32
    %v10322 = vpop.permute.xlu0 %10321
    %10323 = vrot.lane.b32.xlu0 %v6328, 32
    %v10324 = vpop.permute.xlu0 %10323
    %10325 = vrot.lane.b32.xlu0 %v6329, 32
    %v10326 = vpop.permute.xlu0 %10325
    %10327 = vrot.lane.b32.xlu0 %v6330, 32
    %v10328 = vpop.permute.xlu0 %10327
    %10329 = vrot.lane.b32.xlu0 %v6331, 32
    %v10330 = vpop.permute.xlu0 %10329
    %10331 = vrot.lane.b32.xlu0 %v6332, 32
    %v10332 = vpop.permute.xlu0 %10331
    %10333 = vrot.lane.b32.xlu0 %v6333, 32
    %v10334 = vpop.permute.xlu0 %10333
    %10335 = vrot.lane.b32.xlu0 %v6334, 32
    %v10336 = vpop.permute.xlu0 %10335
    %10337 = vrot.lane.b32.xlu0 %v6335, 32
    %v10338 = vpop.permute.xlu0 %10337
    %10339 = vrot.lane.b32.xlu0 %v6336, 32
    %v10340 = vpop.permute.xlu0 %10339
    %10341 = vrot.lane.b32.xlu0 %v6337, 32
    %v10342 = vpop.permute.xlu0 %10341
    %10343 = vrot.lane.b32.xlu0 %v6338, 32
    %v10344 = vpop.permute.xlu0 %10343
    %10345 = vrot.lane.b32.xlu0 %v6339, 32
    %v10346 = vpop.permute.xlu0 %10345
    %10347 = vrot.lane.b32.xlu0 %v6340, 32
    %v10348 = vpop.permute.xlu0 %10347
    %10349 = vrot.lane.b32.xlu0 %v6341, 32
    %v10350 = vpop.permute.xlu0 %10349
    %10351 = vrot.lane.b32.xlu0 %v6342, 32
    %v10352 = vpop.permute.xlu0 %10351
    %10353 = vrot.lane.b32.xlu0 %v6343, 32
    %v10354 = vpop.permute.xlu0 %10353
    %10355 = vrot.lane.b32.xlu0 %v6344, 32
    %v10356 = vpop.permute.xlu0 %10355
    %10357 = vrot.lane.b32.xlu0 %v6345, 32
    %v10358 = vpop.permute.xlu0 %10357
    %10359 = vrot.lane.b32.xlu0 %v6346, 32
    %v10360 = vpop.permute.xlu0 %10359
    %10361 = vrot.lane.b32.xlu0 %v6347, 32
    %v10362 = vpop.permute.xlu0 %10361
    %10363 = vrot.lane.b32.xlu0 %v6348, 32
    %v10364 = vpop.permute.xlu0 %10363
    %10365 = vrot.lane.b32.xlu0 %v6349, 32
    %v10366 = vpop.permute.xlu0 %10365
    %10367 = vrot.lane.b32.xlu0 %v6350, 32
    %v10368 = vpop.permute.xlu0 %10367
    %10369 = vrot.lane.b32.xlu0 %v6351, 32
    %v10370 = vpop.permute.xlu0 %10369
    %10371 = vrot.lane.b32.xlu0 %v6352, 32
    %v10372 = vpop.permute.xlu0 %10371
    %10373 = vrot.lane.b32.xlu0 %v6353, 32
    %v10374 = vpop.permute.xlu0 %10373
    %10375 = vrot.lane.b32.xlu0 %v6354, 32
    %v10376 = vpop.permute.xlu0 %10375
    %10377 = vrot.lane.b32.xlu0 %v6355, 32
    %v10378 = vpop.permute.xlu0 %10377
    %10379 = vrot.lane.b32.xlu0 %v6356, 32
    %v10380 = vpop.permute.xlu0 %10379
    %10381 = vrot.lane.b32.xlu0 %v6357, 32
    %v10382 = vpop.permute.xlu0 %10381
    %10383 = vrot.lane.b32.xlu0 %v6358, 32
    %v10384 = vpop.permute.xlu0 %10383
    %v10513 = vsel %vm6364, %v9873, %v10130
    %v10514 = vsel %vm6364, %v9874, %v10132
    %v10515 = vsel %vm6364, %v9875, %v10134
    %v10516 = vsel %vm6364, %v9876, %v10136
    %v10517 = vsel %vm6364, %v9877, %v10138
    %v10518 = vsel %vm6364, %v9878, %v10140
    %v10519 = vsel %vm6364, %v9879, %v10142
    %v10520 = vsel %vm6364, %v9880, %v10144
    %v10521 = vsel %vm6364, %v9881, %v10146
    %v10522 = vsel %vm6364, %v9882, %v10148
    %v10523 = vsel %vm6364, %v9883, %v10150
    %v10524 = vsel %vm6364, %v9884, %v10152
    %v10525 = vsel %vm6364, %v9885, %v10154
    %v10526 = vsel %vm6364, %v9886, %v10156
    %v10527 = vsel %vm6364, %v9887, %v10158
    %v10528 = vsel %vm6364, %v9888, %v10160
    %v10529 = vsel %vm6364, %v9889, %v10162
    %v10530 = vsel %vm6364, %v9890, %v10164
    %v10531 = vsel %vm6364, %v9891, %v10166
    %v10532 = vsel %vm6364, %v9892, %v10168
    %v10533 = vsel %vm6364, %v9893, %v10170
    %v10534 = vsel %vm6364, %v9894, %v10172
    %v10535 = vsel %vm6364, %v9895, %v10174
    %v10536 = vsel %vm6364, %v9896, %v10176
    %v10537 = vsel %vm6364, %v9897, %v10178
    %v10538 = vsel %vm6364, %v9898, %v10180
    %v10539 = vsel %vm6364, %v9899, %v10182
    %v10540 = vsel %vm6364, %v9900, %v10184
    %v10541 = vsel %vm6364, %v9901, %v10186
    %v10542 = vsel %vm6364, %v9902, %v10188
    %v10543 = vsel %vm6364, %v9903, %v10190
    %v10544 = vsel %vm6364, %v9904, %v10192
    %v10545 = vsel %vm6364, %v9905, %v10194
    %v10546 = vsel %vm6364, %v9906, %v10196
    %v10547 = vsel %vm6364, %v9907, %v10198
    %v10548 = vsel %vm6364, %v9908, %v10200
    %v10549 = vsel %vm6364, %v9909, %v10202
    %v10550 = vsel %vm6364, %v9910, %v10204
    %v10551 = vsel %vm6364, %v9911, %v10206
    %v10552 = vsel %vm6364, %v9912, %v10208
    %v10553 = vsel %vm6364, %v9913, %v10210
    %v10554 = vsel %vm6364, %v9914, %v10212
    %v10555 = vsel %vm6364, %v9915, %v10214
    %v10556 = vsel %vm6364, %v9916, %v10216
    %v10557 = vsel %vm6364, %v9917, %v10218
    %v10558 = vsel %vm6364, %v9918, %v10220
    %v10559 = vsel %vm6364, %v9919, %v10222
    %v10560 = vsel %vm6364, %v9920, %v10224
    %v10561 = vsel %vm6364, %v9921, %v10226
    %v10562 = vsel %vm6364, %v9922, %v10228
    %v10563 = vsel %vm6364, %v9923, %v10230
    %v10564 = vsel %vm6364, %v9924, %v10232
    %v10565 = vsel %vm6364, %v9925, %v10234
    %v10566 = vsel %vm6364, %v9926, %v10236
    %v10567 = vsel %vm6364, %v9927, %v10238
    %v10568 = vsel %vm6364, %v9928, %v10240
    %v10569 = vsel %vm6364, %v9929, %v10242
    %v10570 = vsel %vm6364, %v9930, %v10244
    %v10571 = vsel %vm6364, %v9931, %v10246
    %v10572 = vsel %vm6364, %v9932, %v10248
    %v10573 = vsel %vm6364, %v9933, %v10250
    %v10574 = vsel %vm6364, %v9934, %v10252
    %v10575 = vsel %vm6364, %v9935, %v10254
    %v10576 = vsel %vm6364, %v9936, %v10256
    %v10577 = vsel %vm6364, %v9937, %v10258
    %v10578 = vsel %vm6364, %v9938, %v10260
    %v10579 = vsel %vm6364, %v9939, %v10262
    %v10580 = vsel %vm6364, %v9940, %v10264
    %v10581 = vsel %vm6364, %v9941, %v10266
    %v10582 = vsel %vm6364, %v9942, %v10268
    %v10583 = vsel %vm6364, %v9943, %v10270
    %v10584 = vsel %vm6364, %v9944, %v10272
    %v10585 = vsel %vm6364, %v9945, %v10274
    %v10586 = vsel %vm6364, %v9946, %v10276
    %v10587 = vsel %vm6364, %v9947, %v10278
    %v10588 = vsel %vm6364, %v9948, %v10280
    %v10589 = vsel %vm6364, %v9949, %v10282
    %v10590 = vsel %vm6364, %v9950, %v10284
    %v10591 = vsel %vm6364, %v9951, %v10286
    %v10592 = vsel %vm6364, %v9952, %v10288
    %v10593 = vsel %vm6364, %v9953, %v10290
    %v10594 = vsel %vm6364, %v9954, %v10292
    %v10595 = vsel %vm6364, %v9955, %v10294
    %v10596 = vsel %vm6364, %v9956, %v10296
    %v10597 = vsel %vm6364, %v9957, %v10298
    %v10598 = vsel %vm6364, %v9958, %v10300
    %v10599 = vsel %vm6364, %v9959, %v10302
    %v10600 = vsel %vm6364, %v9960, %v10304
    %v10601 = vsel %vm6364, %v9961, %v10306
    %v10602 = vsel %vm6364, %v9962, %v10308
    %v10603 = vsel %vm6364, %v9963, %v10310
    %v10604 = vsel %vm6364, %v9964, %v10312
    %v10605 = vsel %vm6364, %v9965, %v10314
    %v10606 = vsel %vm6364, %v9966, %v10316
    %v10607 = vsel %vm6364, %v9967, %v10318
    %v10608 = vsel %vm6364, %v9968, %v10320
    %v10609 = vsel %vm6364, %v9969, %v10322
    %v10610 = vsel %vm6364, %v9970, %v10324
    %v10611 = vsel %vm6364, %v9971, %v10326
    %v10612 = vsel %vm6364, %v9972, %v10328
    %v10613 = vsel %vm6364, %v9973, %v10330
    %v10614 = vsel %vm6364, %v9974, %v10332
    %v10615 = vsel %vm6364, %v9975, %v10334
    %v10616 = vsel %vm6364, %v9976, %v10336
    %v10617 = vsel %vm6364, %v9977, %v10338
    %v10618 = vsel %vm6364, %v9978, %v10340
    %v10619 = vsel %vm6364, %v9979, %v10342
    %v10620 = vsel %vm6364, %v9980, %v10344
    %v10621 = vsel %vm6364, %v9981, %v10346
    %v10622 = vsel %vm6364, %v9982, %v10348
    %v10623 = vsel %vm6364, %v9983, %v10350
    %v10624 = vsel %vm6364, %v9984, %v10352
    %v10625 = vsel %vm6364, %v9985, %v10354
    %v10626 = vsel %vm6364, %v9986, %v10356
    %v10627 = vsel %vm6364, %v9987, %v10358
    %v10628 = vsel %vm6364, %v9988, %v10360
    %v10629 = vsel %vm6364, %v9989, %v10362
    %v10630 = vsel %vm6364, %v9990, %v10364
    %v10631 = vsel %vm6364, %v9991, %v10366
    %v10632 = vsel %vm6364, %v9992, %v10368
    %v10633 = vsel %vm6364, %v9993, %v10370
    %v10634 = vsel %vm6364, %v9994, %v10372
    %v10635 = vsel %vm6364, %v9995, %v10374
    %v10636 = vsel %vm6364, %v9996, %v10376
    %v10637 = vsel %vm6364, %v9997, %v10378
    %v10638 = vsel %vm6364, %v9998, %v10380
    %v10639 = vsel %vm6364, %v9999, %v10382
    %v10640 = vsel %vm6364, %v10000, %v10384
    %v10641 = vld [vmem:[%s7] sm:$0xff]
    %v10642 = vld [vmem:[%s7 + $0x8] sm:$0xff]
    %v10643 = vld [vmem:[%s7 + $0x10] sm:$0xff]
    %v10644 = vld [vmem:[%s7 + $0x18] sm:$0xff]
    %v10645 = vld [vmem:[%s7 + $0x20] sm:$0xff]
    %v10646 = vld [vmem:[%s7 + $0x28] sm:$0xff]
    %v10647 = vld [vmem:[%s7 + $0x30] sm:$0xff]
    %v10648 = vld [vmem:[%s7 + $0x38] sm:$0xff]
    %v10650 = vsel %vm5573, %v10513, 0
    %v10653 = vsel %vm5573, %v10514, 0
    %v10656 = vsel %vm5573, %v10515, 0
    %v10659 = vsel %vm5573, %v10516, 0
    %v10662 = vsel %vm5573, %v10517, 0
    %v10665 = vsel %vm5573, %v10518, 0
    %v10668 = vsel %vm5573, %v10519, 0
    %v10671 = vsel %vm5573, %v10520, 0
    %v10674 = vsel %vm5573, %v10521, 0
    %v10677 = vsel %vm5573, %v10522, 0
    %v10680 = vsel %vm5573, %v10523, 0
    %v10683 = vsel %vm5573, %v10524, 0
    %v10686 = vsel %vm5573, %v10525, 0
    %v10689 = vsel %vm5573, %v10526, 0
    %v10692 = vsel %vm5573, %v10527, 0
    %v10695 = vsel %vm5573, %v10528, 0
    %v10698 = vsel %vm5573, %v10529, 0
    %v10701 = vsel %vm5573, %v10530, 0
    %v10704 = vsel %vm5573, %v10531, 0
    %v10707 = vsel %vm5573, %v10532, 0
    %v10710 = vsel %vm5573, %v10533, 0
    %v10713 = vsel %vm5573, %v10534, 0
    %v10716 = vsel %vm5573, %v10535, 0
    %v10719 = vsel %vm5573, %v10536, 0
    %v10722 = vsel %vm5573, %v10537, 0
    %v10725 = vsel %vm5573, %v10538, 0
    %v10728 = vsel %vm5573, %v10539, 0
    %v10731 = vsel %vm5573, %v10540, 0
    %v10734 = vsel %vm5573, %v10541, 0
    %v10737 = vsel %vm5573, %v10542, 0
    %v10740 = vsel %vm5573, %v10543, 0
    %v10743 = vsel %vm5573, %v10544, 0
    %v10746 = vsel %vm5573, %v10545, 0
    %v10749 = vsel %vm5573, %v10546, 0
    %v10752 = vsel %vm5573, %v10547, 0
    %v10755 = vsel %vm5573, %v10548, 0
    %v10758 = vsel %vm5573, %v10549, 0
    %v10761 = vsel %vm5573, %v10550, 0
    %v10764 = vsel %vm5573, %v10551, 0
    %v10767 = vsel %vm5573, %v10552, 0
    %v10770 = vsel %vm5573, %v10553, 0
    %v10773 = vsel %vm5573, %v10554, 0
    %v10776 = vsel %vm5573, %v10555, 0
    %v10779 = vsel %vm5573, %v10556, 0
    %v10782 = vsel %vm5573, %v10557, 0
    %v10785 = vsel %vm5573, %v10558, 0
    %v10788 = vsel %vm5573, %v10559, 0
    %v10791 = vsel %vm5573, %v10560, 0
    %v10794 = vsel %vm5573, %v10561, 0
    %v10797 = vsel %vm5573, %v10562, 0
    %v10800 = vsel %vm5573, %v10563, 0
    %v10803 = vsel %vm5573, %v10564, 0
    %v10806 = vsel %vm5573, %v10565, 0
    %v10809 = vsel %vm5573, %v10566, 0
    %v10812 = vsel %vm5573, %v10567, 0
    %v10815 = vsel %vm5573, %v10568, 0
    %v10818 = vsel %vm5573, %v10569, 0
    %v10821 = vsel %vm5573, %v10570, 0
    %v10824 = vsel %vm5573, %v10571, 0
    %v10827 = vsel %vm5573, %v10572, 0
    %v10830 = vsel %vm5573, %v10573, 0
    %v10833 = vsel %vm5573, %v10574, 0
    %v10836 = vsel %vm5573, %v10575, 0
    %v10839 = vsel %vm5573, %v10576, 0
    %v10842 = vsel %vm5573, %v10577, 0
    %v10845 = vsel %vm5573, %v10578, 0
    %v10848 = vsel %vm5573, %v10579, 0
    %v10851 = vsel %vm5573, %v10580, 0
    %v10854 = vsel %vm5573, %v10581, 0
    %v10857 = vsel %vm5573, %v10582, 0
    %v10860 = vsel %vm5573, %v10583, 0
    %v10863 = vsel %vm5573, %v10584, 0
    %v10866 = vsel %vm5573, %v10585, 0
    %v10869 = vsel %vm5573, %v10586, 0
    %v10872 = vsel %vm5573, %v10587, 0
    %v10875 = vsel %vm5573, %v10588, 0
    %v10878 = vsel %vm5573, %v10589, 0
    %v10881 = vsel %vm5573, %v10590, 0
    %v10884 = vsel %vm5573, %v10591, 0
    %v10887 = vsel %vm5573, %v10592, 0
    %v10890 = vsel %vm5573, %v10593, 0
    %v10893 = vsel %vm5573, %v10594, 0
    %v10896 = vsel %vm5573, %v10595, 0
    %v10899 = vsel %vm5573, %v10596, 0
    %v10902 = vsel %vm5573, %v10597, 0
    %v10905 = vsel %vm5573, %v10598, 0
    %v10908 = vsel %vm5573, %v10599, 0
    %v10911 = vsel %vm5573, %v10600, 0
    %v10914 = vsel %vm5573, %v10601, 0
    %v10917 = vsel %vm5573, %v10602, 0
    %v10920 = vsel %vm5573, %v10603, 0
    %v10923 = vsel %vm5573, %v10604, 0
    %v10926 = vsel %vm5573, %v10605, 0
    %v10929 = vsel %vm5573, %v10606, 0
    %v10932 = vsel %vm5573, %v10607, 0
    %v10935 = vsel %vm5573, %v10608, 0
    %v10938 = vsel %vm5573, %v10609, 0
    %v10941 = vsel %vm5573, %v10610, 0
    %v10944 = vsel %vm5573, %v10611, 0
    %v10947 = vsel %vm5573, %v10612, 0
    %v10950 = vsel %vm5573, %v10613, 0
    %v10953 = vsel %vm5573, %v10614, 0
    %v10956 = vsel %vm5573, %v10615, 0
    %v10959 = vsel %vm5573, %v10616, 0
    %v10962 = vsel %vm5573, %v10617, 0
    %v10965 = vsel %vm5573, %v10618, 0
    %v10968 = vsel %vm5573, %v10619, 0
    %v10971 = vsel %vm5573, %v10620, 0
    %v10974 = vsel %vm5573, %v10621, 0
    %v10977 = vsel %vm5573, %v10622, 0
    %v10980 = vsel %vm5573, %v10623, 0
    %v10983 = vsel %vm5573, %v10624, 0
    %v10986 = vsel %vm5573, %v10625, 0
    %v10989 = vsel %vm5573, %v10626, 0
    %v10992 = vsel %vm5573, %v10627, 0
    %v10995 = vsel %vm5573, %v10628, 0
    %v10998 = vsel %vm5573, %v10629, 0
    %v11001 = vsel %vm5573, %v10630, 0
    %v11004 = vsel %vm5573, %v10631, 0
    %v11007 = vsel %vm5573, %v10632, 0
    %v11010 = vsel %vm5573, %v10633, 0
    %v11013 = vsel %vm5573, %v10634, 0
    %v11016 = vsel %vm5573, %v10635, 0
    %v11019 = vsel %vm5573, %v10636, 0
    %v11022 = vsel %vm5573, %v10637, 0
    %v11025 = vsel %vm5573, %v10638, 0
    %v11028 = vsel %vm5573, %v10639, 0
    %v11031 = vsel %vm5573, %v10640, 0
    %11033 = vmatpush.msra.mxu0 0.0
    %11034 = vmatpush.msra.mxu0 0.0
    %11035 = vmatpush.msra.mxu0 0.0
    %11036 = vmatpush.msra.mxu0 0.0
    %11037 = vmatpush.msra.mxu0 0.0
    %11038 = vmatpush.msra.mxu0 0.0
    %11039 = vmatpush.msra.mxu0 0.0
    %11040 = vmatpush.msra.mxu0 0.0
    %11041 = vmatpush.msra.mxu0 %v10648
    %11042 = vmatpush.msra.mxu0 %v10647
    %11043 = vmatpush.msra.mxu0 %v10646
    %11044 = vmatpush.msra.mxu0 %v10645
    %11045 = vmatpush.msra.mxu0 %v10644
    %11046 = vmatpush.msra.mxu0 %v10643
    %11047 = vmatpush.msra.mxu0 %v10642
    %11048 = vmatpush.msra.mxu0 %v10641
    %11049 = vmatmul.f32.gmra.mxu0 %v10650
    %v11050 = vpop.f32.mrf.mxu0
    %v11051 = vadd.f32 0.0, %v11050
    %11052 = vmatmul.f32.gmra.mxu0 %v10653
    %v11053 = vpop.f32.mrf.mxu0
    %v11054 = vadd.f32 0.0, %v11053
    %11055 = vmatmul.f32.gmra.mxu0 %v10656
    %v11056 = vpop.f32.mrf.mxu0
    %v11057 = vadd.f32 0.0, %v11056
    %11058 = vmatmul.f32.gmra.mxu0 %v10659
    %v11059 = vpop.f32.mrf.mxu0
    %v11060 = vadd.f32 0.0, %v11059
    %11061 = vmatmul.f32.gmra.mxu0 %v10662
    %v11062 = vpop.f32.mrf.mxu0
    %v11063 = vadd.f32 0.0, %v11062
    %11064 = vmatmul.f32.gmra.mxu0 %v10665
    %v11065 = vpop.f32.mrf.mxu0
    %v11066 = vadd.f32 0.0, %v11065
    %11067 = vmatmul.f32.gmra.mxu0 %v10668
    %v11068 = vpop.f32.mrf.mxu0
    %v11069 = vadd.f32 0.0, %v11068
    %11070 = vmatmul.f32.gmra.mxu0 %v10671
    %v11071 = vpop.f32.mrf.mxu0
    %v11072 = vadd.f32 0.0, %v11071
    %11073 = vmatmul.f32.gmra.mxu0 %v10674
    %v11074 = vpop.f32.mrf.mxu0
    %v11075 = vadd.f32 0.0, %v11074
    %11076 = vmatmul.f32.gmra.mxu0 %v10677
    %v11077 = vpop.f32.mrf.mxu0
    %v11078 = vadd.f32 0.0, %v11077
    %11079 = vmatmul.f32.gmra.mxu0 %v10680
    %v11080 = vpop.f32.mrf.mxu0
    %v11081 = vadd.f32 0.0, %v11080
    %11082 = vmatmul.f32.gmra.mxu0 %v10683
    %v11083 = vpop.f32.mrf.mxu0
    %v11084 = vadd.f32 0.0, %v11083
    %11085 = vmatmul.f32.gmra.mxu0 %v10686
    %v11086 = vpop.f32.mrf.mxu0
    %v11087 = vadd.f32 0.0, %v11086
    %11088 = vmatmul.f32.gmra.mxu0 %v10689
    %v11089 = vpop.f32.mrf.mxu0
    %v11090 = vadd.f32 0.0, %v11089
    %11091 = vmatmul.f32.gmra.mxu0 %v10692
    %v11092 = vpop.f32.mrf.mxu0
    %v11093 = vadd.f32 0.0, %v11092
    %11094 = vmatmul.f32.gmra.mxu0 %v10695
    %v11095 = vpop.f32.mrf.mxu0
    %v11096 = vadd.f32 0.0, %v11095
    %11097 = vmatmul.f32.gmra.mxu0 %v10698
    %v11098 = vpop.f32.mrf.mxu0
    %v11099 = vadd.f32 0.0, %v11098
    %11100 = vmatmul.f32.gmra.mxu0 %v10701
    %v11101 = vpop.f32.mrf.mxu0
    %v11102 = vadd.f32 0.0, %v11101
    %11103 = vmatmul.f32.gmra.mxu0 %v10704
    %v11104 = vpop.f32.mrf.mxu0
    %v11105 = vadd.f32 0.0, %v11104
    %11106 = vmatmul.f32.gmra.mxu0 %v10707
    %v11107 = vpop.f32.mrf.mxu0
    %v11108 = vadd.f32 0.0, %v11107
    %11109 = vmatmul.f32.gmra.mxu0 %v10710
    %v11110 = vpop.f32.mrf.mxu0
    %v11111 = vadd.f32 0.0, %v11110
    %11112 = vmatmul.f32.gmra.mxu0 %v10713
    %v11113 = vpop.f32.mrf.mxu0
    %v11114 = vadd.f32 0.0, %v11113
    %11115 = vmatmul.f32.gmra.mxu0 %v10716
    %v11116 = vpop.f32.mrf.mxu0
    %v11117 = vadd.f32 0.0, %v11116
    %11118 = vmatmul.f32.gmra.mxu0 %v10719
    %v11119 = vpop.f32.mrf.mxu0
    %v11120 = vadd.f32 0.0, %v11119
    %11121 = vmatmul.f32.gmra.mxu0 %v10722
    %v11122 = vpop.f32.mrf.mxu0
    %v11123 = vadd.f32 0.0, %v11122
    %11124 = vmatmul.f32.gmra.mxu0 %v10725
    %v11125 = vpop.f32.mrf.mxu0
    %v11126 = vadd.f32 0.0, %v11125
    %11127 = vmatmul.f32.gmra.mxu0 %v10728
    %v11128 = vpop.f32.mrf.mxu0
    %v11129 = vadd.f32 0.0, %v11128
    %11130 = vmatmul.f32.gmra.mxu0 %v10731
    %v11131 = vpop.f32.mrf.mxu0
    %v11132 = vadd.f32 0.0, %v11131
    %11133 = vmatmul.f32.gmra.mxu0 %v10734
    %v11134 = vpop.f32.mrf.mxu0
    %v11135 = vadd.f32 0.0, %v11134
    %11136 = vmatmul.f32.gmra.mxu0 %v10737
    %v11137 = vpop.f32.mrf.mxu0
    %v11138 = vadd.f32 0.0, %v11137
    %11139 = vmatmul.f32.gmra.mxu0 %v10740
    %v11140 = vpop.f32.mrf.mxu0
    %v11141 = vadd.f32 0.0, %v11140
    %11142 = vmatmul.f32.gmra.mxu0 %v10743
    %v11143 = vpop.f32.mrf.mxu0
    %v11144 = vadd.f32 0.0, %v11143
    %11145 = vmatmul.f32.gmra.mxu0 %v10746
    %v11146 = vpop.f32.mrf.mxu0
    %v11147 = vadd.f32 0.0, %v11146
    %11148 = vmatmul.f32.gmra.mxu0 %v10749
    %v11149 = vpop.f32.mrf.mxu0
    %v11150 = vadd.f32 0.0, %v11149
    %11151 = vmatmul.f32.gmra.mxu0 %v10752
    %v11152 = vpop.f32.mrf.mxu0
    %v11153 = vadd.f32 0.0, %v11152
    %11154 = vmatmul.f32.gmra.mxu0 %v10755
    %v11155 = vpop.f32.mrf.mxu0
    %v11156 = vadd.f32 0.0, %v11155
    %11157 = vmatmul.f32.gmra.mxu0 %v10758
    %v11158 = vpop.f32.mrf.mxu0
    %v11159 = vadd.f32 0.0, %v11158
    %11160 = vmatmul.f32.gmra.mxu0 %v10761
    %v11161 = vpop.f32.mrf.mxu0
    %v11162 = vadd.f32 0.0, %v11161
    %11163 = vmatmul.f32.gmra.mxu0 %v10764
    %v11164 = vpop.f32.mrf.mxu0
    %v11165 = vadd.f32 0.0, %v11164
    %11166 = vmatmul.f32.gmra.mxu0 %v10767
    %v11167 = vpop.f32.mrf.mxu0
    %v11168 = vadd.f32 0.0, %v11167
    %11169 = vmatmul.f32.gmra.mxu0 %v10770
    %v11170 = vpop.f32.mrf.mxu0
    %v11171 = vadd.f32 0.0, %v11170
    %11172 = vmatmul.f32.gmra.mxu0 %v10773
    %v11173 = vpop.f32.mrf.mxu0
    %v11174 = vadd.f32 0.0, %v11173
    %11175 = vmatmul.f32.gmra.mxu0 %v10776
    %v11176 = vpop.f32.mrf.mxu0
    %v11177 = vadd.f32 0.0, %v11176
    %11178 = vmatmul.f32.gmra.mxu0 %v10779
    %v11179 = vpop.f32.mrf.mxu0
    %v11180 = vadd.f32 0.0, %v11179
    %11181 = vmatmul.f32.gmra.mxu0 %v10782
    %v11182 = vpop.f32.mrf.mxu0
    %v11183 = vadd.f32 0.0, %v11182
    %11184 = vmatmul.f32.gmra.mxu0 %v10785
    %v11185 = vpop.f32.mrf.mxu0
    %v11186 = vadd.f32 0.0, %v11185
    %11187 = vmatmul.f32.gmra.mxu0 %v10788
    %v11188 = vpop.f32.mrf.mxu0
    %v11189 = vadd.f32 0.0, %v11188
    %11190 = vmatmul.f32.gmra.mxu0 %v10791
    %v11191 = vpop.f32.mrf.mxu0
    %v11192 = vadd.f32 0.0, %v11191
    %11193 = vmatmul.f32.gmra.mxu0 %v10794
    %v11194 = vpop.f32.mrf.mxu0
    %v11195 = vadd.f32 0.0, %v11194
    %11196 = vmatmul.f32.gmra.mxu0 %v10797
    %v11197 = vpop.f32.mrf.mxu0
    %v11198 = vadd.f32 0.0, %v11197
    %11199 = vmatmul.f32.gmra.mxu0 %v10800
    %v11200 = vpop.f32.mrf.mxu0
    %v11201 = vadd.f32 0.0, %v11200
    %11202 = vmatmul.f32.gmra.mxu0 %v10803
    %v11203 = vpop.f32.mrf.mxu0
    %v11204 = vadd.f32 0.0, %v11203
    %11205 = vmatmul.f32.gmra.mxu0 %v10806
    %v11206 = vpop.f32.mrf.mxu0
    %v11207 = vadd.f32 0.0, %v11206
    %11208 = vmatmul.f32.gmra.mxu0 %v10809
    %v11209 = vpop.f32.mrf.mxu0
    %v11210 = vadd.f32 0.0, %v11209
    %11211 = vmatmul.f32.gmra.mxu0 %v10812
    %v11212 = vpop.f32.mrf.mxu0
    %v11213 = vadd.f32 0.0, %v11212
    %11214 = vmatmul.f32.gmra.mxu0 %v10815
    %v11215 = vpop.f32.mrf.mxu0
    %v11216 = vadd.f32 0.0, %v11215
    %11217 = vmatmul.f32.gmra.mxu0 %v10818
    %v11218 = vpop.f32.mrf.mxu0
    %v11219 = vadd.f32 0.0, %v11218
    %11220 = vmatmul.f32.gmra.mxu0 %v10821
    %v11221 = vpop.f32.mrf.mxu0
    %v11222 = vadd.f32 0.0, %v11221
    %11223 = vmatmul.f32.gmra.mxu0 %v10824
    %v11224 = vpop.f32.mrf.mxu0
    %v11225 = vadd.f32 0.0, %v11224
    %11226 = vmatmul.f32.gmra.mxu0 %v10827
    %v11227 = vpop.f32.mrf.mxu0
    %v11228 = vadd.f32 0.0, %v11227
    %11229 = vmatmul.f32.gmra.mxu0 %v10830
    %v11230 = vpop.f32.mrf.mxu0
    %v11231 = vadd.f32 0.0, %v11230
    %11232 = vmatmul.f32.gmra.mxu0 %v10833
    %v11233 = vpop.f32.mrf.mxu0
    %v11234 = vadd.f32 0.0, %v11233
    %11235 = vmatmul.f32.gmra.mxu0 %v10836
    %v11236 = vpop.f32.mrf.mxu0
    %v11237 = vadd.f32 0.0, %v11236
    %11238 = vmatmul.f32.gmra.mxu0 %v10839
    %v11239 = vpop.f32.mrf.mxu0
    %v11240 = vadd.f32 0.0, %v11239
    %11241 = vmatmul.f32.gmra.mxu0 %v10842
    %v11242 = vpop.f32.mrf.mxu0
    %v11243 = vadd.f32 0.0, %v11242
    %11244 = vmatmul.f32.gmra.mxu0 %v10845
    %v11245 = vpop.f32.mrf.mxu0
    %v11246 = vadd.f32 0.0, %v11245
    %11247 = vmatmul.f32.gmra.mxu0 %v10848
    %v11248 = vpop.f32.mrf.mxu0
    %v11249 = vadd.f32 0.0, %v11248
    %11250 = vmatmul.f32.gmra.mxu0 %v10851
    %v11251 = vpop.f32.mrf.mxu0
    %v11252 = vadd.f32 0.0, %v11251
    %11253 = vmatmul.f32.gmra.mxu0 %v10854
    %v11254 = vpop.f32.mrf.mxu0
    %v11255 = vadd.f32 0.0, %v11254
    %11256 = vmatmul.f32.gmra.mxu0 %v10857
    %v11257 = vpop.f32.mrf.mxu0
    %v11258 = vadd.f32 0.0, %v11257
    %11259 = vmatmul.f32.gmra.mxu0 %v10860
    %v11260 = vpop.f32.mrf.mxu0
    %v11261 = vadd.f32 0.0, %v11260
    %11262 = vmatmul.f32.gmra.mxu0 %v10863
    %v11263 = vpop.f32.mrf.mxu0
    %v11264 = vadd.f32 0.0, %v11263
    %11265 = vmatmul.f32.gmra.mxu0 %v10866
    %v11266 = vpop.f32.mrf.mxu0
    %v11267 = vadd.f32 0.0, %v11266
    %11268 = vmatmul.f32.gmra.mxu0 %v10869
    %v11269 = vpop.f32.mrf.mxu0
    %v11270 = vadd.f32 0.0, %v11269
    %11271 = vmatmul.f32.gmra.mxu0 %v10872
    %v11272 = vpop.f32.mrf.mxu0
    %v11273 = vadd.f32 0.0, %v11272
    %11274 = vmatmul.f32.gmra.mxu0 %v10875
    %v11275 = vpop.f32.mrf.mxu0
    %v11276 = vadd.f32 0.0, %v11275
    %11277 = vmatmul.f32.gmra.mxu0 %v10878
    %v11278 = vpop.f32.mrf.mxu0
    %v11279 = vadd.f32 0.0, %v11278
    %11280 = vmatmul.f32.gmra.mxu0 %v10881
    %v11281 = vpop.f32.mrf.mxu0
    %v11282 = vadd.f32 0.0, %v11281
    %11283 = vmatmul.f32.gmra.mxu0 %v10884
    %v11284 = vpop.f32.mrf.mxu0
    %v11285 = vadd.f32 0.0, %v11284
    %11286 = vmatmul.f32.gmra.mxu0 %v10887
    %v11287 = vpop.f32.mrf.mxu0
    %v11288 = vadd.f32 0.0, %v11287
    %11289 = vmatmul.f32.gmra.mxu0 %v10890
    %v11290 = vpop.f32.mrf.mxu0
    %v11291 = vadd.f32 0.0, %v11290
    %11292 = vmatmul.f32.gmra.mxu0 %v10893
    %v11293 = vpop.f32.mrf.mxu0
    %v11294 = vadd.f32 0.0, %v11293
    %11295 = vmatmul.f32.gmra.mxu0 %v10896
    %v11296 = vpop.f32.mrf.mxu0
    %v11297 = vadd.f32 0.0, %v11296
    %11298 = vmatmul.f32.gmra.mxu0 %v10899
    %v11299 = vpop.f32.mrf.mxu0
    %v11300 = vadd.f32 0.0, %v11299
    %11301 = vmatmul.f32.gmra.mxu0 %v10902
    %v11302 = vpop.f32.mrf.mxu0
    %v11303 = vadd.f32 0.0, %v11302
    %11304 = vmatmul.f32.gmra.mxu0 %v10905
    %v11305 = vpop.f32.mrf.mxu0
    %v11306 = vadd.f32 0.0, %v11305
    %11307 = vmatmul.f32.gmra.mxu0 %v10908
    %v11308 = vpop.f32.mrf.mxu0
    %v11309 = vadd.f32 0.0, %v11308
    %11310 = vmatmul.f32.gmra.mxu0 %v10911
    %v11311 = vpop.f32.mrf.mxu0
    %v11312 = vadd.f32 0.0, %v11311
    %11313 = vmatmul.f32.gmra.mxu0 %v10914
    %v11314 = vpop.f32.mrf.mxu0
    %v11315 = vadd.f32 0.0, %v11314
    %11316 = vmatmul.f32.gmra.mxu0 %v10917
    %v11317 = vpop.f32.mrf.mxu0
    %v11318 = vadd.f32 0.0, %v11317
    %11319 = vmatmul.f32.gmra.mxu0 %v10920
    %v11320 = vpop.f32.mrf.mxu0
    %v11321 = vadd.f32 0.0, %v11320
    %11322 = vmatmul.f32.gmra.mxu0 %v10923
    %v11323 = vpop.f32.mrf.mxu0
    %v11324 = vadd.f32 0.0, %v11323
    %11325 = vmatmul.f32.gmra.mxu0 %v10926
    %v11326 = vpop.f32.mrf.mxu0
    %v11327 = vadd.f32 0.0, %v11326
    %11328 = vmatmul.f32.gmra.mxu0 %v10929
    %v11329 = vpop.f32.mrf.mxu0
    %v11330 = vadd.f32 0.0, %v11329
    %11331 = vmatmul.f32.gmra.mxu0 %v10932
    %v11332 = vpop.f32.mrf.mxu0
    %v11333 = vadd.f32 0.0, %v11332
    %11334 = vmatmul.f32.gmra.mxu0 %v10935
    %v11335 = vpop.f32.mrf.mxu0
    %v11336 = vadd.f32 0.0, %v11335
    %11337 = vmatmul.f32.gmra.mxu0 %v10938
    %v11338 = vpop.f32.mrf.mxu0
    %v11339 = vadd.f32 0.0, %v11338
    %11340 = vmatmul.f32.gmra.mxu0 %v10941
    %v11341 = vpop.f32.mrf.mxu0
    %v11342 = vadd.f32 0.0, %v11341
    %11343 = vmatmul.f32.gmra.mxu0 %v10944
    %v11344 = vpop.f32.mrf.mxu0
    %v11345 = vadd.f32 0.0, %v11344
    %11346 = vmatmul.f32.gmra.mxu0 %v10947
    %v11347 = vpop.f32.mrf.mxu0
    %v11348 = vadd.f32 0.0, %v11347
    %11349 = vmatmul.f32.gmra.mxu0 %v10950
    %v11350 = vpop.f32.mrf.mxu0
    %v11351 = vadd.f32 0.0, %v11350
    %11352 = vmatmul.f32.gmra.mxu0 %v10953
    %v11353 = vpop.f32.mrf.mxu0
    %v11354 = vadd.f32 0.0, %v11353
    %11355 = vmatmul.f32.gmra.mxu0 %v10956
    %v11356 = vpop.f32.mrf.mxu0
    %v11357 = vadd.f32 0.0, %v11356
    %11358 = vmatmul.f32.gmra.mxu0 %v10959
    %v11359 = vpop.f32.mrf.mxu0
    %v11360 = vadd.f32 0.0, %v11359
    %11361 = vmatmul.f32.gmra.mxu0 %v10962
    %v11362 = vpop.f32.mrf.mxu0
    %v11363 = vadd.f32 0.0, %v11362
    %11364 = vmatmul.f32.gmra.mxu0 %v10965
    %v11365 = vpop.f32.mrf.mxu0
    %v11366 = vadd.f32 0.0, %v11365
    %11367 = vmatmul.f32.gmra.mxu0 %v10968
    %v11368 = vpop.f32.mrf.mxu0
    %v11369 = vadd.f32 0.0, %v11368
    %11370 = vmatmul.f32.gmra.mxu0 %v10971
    %v11371 = vpop.f32.mrf.mxu0
    %v11372 = vadd.f32 0.0, %v11371
    %11373 = vmatmul.f32.gmra.mxu0 %v10974
    %v11374 = vpop.f32.mrf.mxu0
    %v11375 = vadd.f32 0.0, %v11374
    %11376 = vmatmul.f32.gmra.mxu0 %v10977
    %v11377 = vpop.f32.mrf.mxu0
    %v11378 = vadd.f32 0.0, %v11377
    %11379 = vmatmul.f32.gmra.mxu0 %v10980
    %v11380 = vpop.f32.mrf.mxu0
    %v11381 = vadd.f32 0.0, %v11380
    %11382 = vmatmul.f32.gmra.mxu0 %v10983
    %v11383 = vpop.f32.mrf.mxu0
    %v11384 = vadd.f32 0.0, %v11383
    %11385 = vmatmul.f32.gmra.mxu0 %v10986
    %v11386 = vpop.f32.mrf.mxu0
    %v11387 = vadd.f32 0.0, %v11386
    %11388 = vmatmul.f32.gmra.mxu0 %v10989
    %v11389 = vpop.f32.mrf.mxu0
    %v11390 = vadd.f32 0.0, %v11389
    %11391 = vmatmul.f32.gmra.mxu0 %v10992
    %v11392 = vpop.f32.mrf.mxu0
    %v11393 = vadd.f32 0.0, %v11392
    %11394 = vmatmul.f32.gmra.mxu0 %v10995
    %v11395 = vpop.f32.mrf.mxu0
    %v11396 = vadd.f32 0.0, %v11395
    %11397 = vmatmul.f32.gmra.mxu0 %v10998
    %v11398 = vpop.f32.mrf.mxu0
    %v11399 = vadd.f32 0.0, %v11398
    %11400 = vmatmul.f32.gmra.mxu0 %v11001
    %v11401 = vpop.f32.mrf.mxu0
    %v11402 = vadd.f32 0.0, %v11401
    %11403 = vmatmul.f32.gmra.mxu0 %v11004
    %v11404 = vpop.f32.mrf.mxu0
    %v11405 = vadd.f32 0.0, %v11404
    %11406 = vmatmul.f32.gmra.mxu0 %v11007
    %v11407 = vpop.f32.mrf.mxu0
    %v11408 = vadd.f32 0.0, %v11407
    %11409 = vmatmul.f32.gmra.mxu0 %v11010
    %v11410 = vpop.f32.mrf.mxu0
    %v11411 = vadd.f32 0.0, %v11410
    %11412 = vmatmul.f32.gmra.mxu0 %v11013
    %v11413 = vpop.f32.mrf.mxu0
    %v11414 = vadd.f32 0.0, %v11413
    %11415 = vmatmul.f32.gmra.mxu0 %v11016
    %v11416 = vpop.f32.mrf.mxu0
    %v11417 = vadd.f32 0.0, %v11416
    %11418 = vmatmul.f32.gmra.mxu0 %v11019
    %v11419 = vpop.f32.mrf.mxu0
    %v11420 = vadd.f32 0.0, %v11419
    %11421 = vmatmul.f32.gmra.mxu0 %v11022
    %v11422 = vpop.f32.mrf.mxu0
    %v11423 = vadd.f32 0.0, %v11422
    %11424 = vmatmul.f32.gmra.mxu0 %v11025
    %v11425 = vpop.f32.mrf.mxu0
    %v11426 = vadd.f32 0.0, %v11425
    %11427 = vmatmul.f32.gmra.mxu0 %v11028
    %v11428 = vpop.f32.mrf.mxu0
    %v11429 = vadd.f32 0.0, %v11428
    %11430 = vmatmul.f32.gmra.mxu0 %v11031
    %v11431 = vpop.f32.mrf.mxu0
    %v11432 = vadd.f32 0.0, %v11431
    %11433 = vdwg.mxu0
    %11562 = vset.pattern.permute.xlu0 0
    %11563 = vperm.xlu0 %11562, %v11051
    %v11564 = vpop.permute.xlu0 %11563
    %11565 = vset.pattern.permute.xlu0 0
    %11566 = vperm.xlu0 %11565, %v11054
    %v11567 = vpop.permute.xlu0 %11566
    %11568 = vset.pattern.permute.xlu0 0
    %11569 = vperm.xlu0 %11568, %v11057
    %v11570 = vpop.permute.xlu0 %11569
    %11571 = vset.pattern.permute.xlu0 0
    %11572 = vperm.xlu0 %11571, %v11060
    %v11573 = vpop.permute.xlu0 %11572
    %11574 = vset.pattern.permute.xlu0 0
    %11575 = vperm.xlu0 %11574, %v11063
    %v11576 = vpop.permute.xlu0 %11575
    %11577 = vset.pattern.permute.xlu0 0
    %11578 = vperm.xlu0 %11577, %v11066
    %v11579 = vpop.permute.xlu0 %11578
    %11580 = vset.pattern.permute.xlu0 0
    %11581 = vperm.xlu0 %11580, %v11069
    %v11582 = vpop.permute.xlu0 %11581
    %11583 = vset.pattern.permute.xlu0 0
    %11584 = vperm.xlu0 %11583, %v11072
    %v11585 = vpop.permute.xlu0 %11584
    %11586 = vset.pattern.permute.xlu0 0
    %11587 = vperm.xlu0 %11586, %v11075
    %v11588 = vpop.permute.xlu0 %11587
    %11589 = vset.pattern.permute.xlu0 0
    %11590 = vperm.xlu0 %11589, %v11078
    %v11591 = vpop.permute.xlu0 %11590
    %11592 = vset.pattern.permute.xlu0 0
    %11593 = vperm.xlu0 %11592, %v11081
    %v11594 = vpop.permute.xlu0 %11593
    %11595 = vset.pattern.permute.xlu0 0
    %11596 = vperm.xlu0 %11595, %v11084
    %v11597 = vpop.permute.xlu0 %11596
    %11598 = vset.pattern.permute.xlu0 0
    %11599 = vperm.xlu0 %11598, %v11087
    %v11600 = vpop.permute.xlu0 %11599
    %11601 = vset.pattern.permute.xlu0 0
    %11602 = vperm.xlu0 %11601, %v11090
    %v11603 = vpop.permute.xlu0 %11602
    %11604 = vset.pattern.permute.xlu0 0
    %11605 = vperm.xlu0 %11604, %v11093
    %v11606 = vpop.permute.xlu0 %11605
    %11607 = vset.pattern.permute.xlu0 0
    %11608 = vperm.xlu0 %11607, %v11096
    %v11609 = vpop.permute.xlu0 %11608
    %11610 = vset.pattern.permute.xlu0 0
    %11611 = vperm.xlu0 %11610, %v11099
    %v11612 = vpop.permute.xlu0 %11611
    %11613 = vset.pattern.permute.xlu0 0
    %11614 = vperm.xlu0 %11613, %v11102
    %v11615 = vpop.permute.xlu0 %11614
    %11616 = vset.pattern.permute.xlu0 0
    %11617 = vperm.xlu0 %11616, %v11105
    %v11618 = vpop.permute.xlu0 %11617
    %11619 = vset.pattern.permute.xlu0 0
    %11620 = vperm.xlu0 %11619, %v11108
    %v11621 = vpop.permute.xlu0 %11620
    %11622 = vset.pattern.permute.xlu0 0
    %11623 = vperm.xlu0 %11622, %v11111
    %v11624 = vpop.permute.xlu0 %11623
    %11625 = vset.pattern.permute.xlu0 0
    %11626 = vperm.xlu0 %11625, %v11114
    %v11627 = vpop.permute.xlu0 %11626
    %11628 = vset.pattern.permute.xlu0 0
    %11629 = vperm.xlu0 %11628, %v11117
    %v11630 = vpop.permute.xlu0 %11629
    %11631 = vset.pattern.permute.xlu0 0
    %11632 = vperm.xlu0 %11631, %v11120
    %v11633 = vpop.permute.xlu0 %11632
    %11634 = vset.pattern.permute.xlu0 0
    %11635 = vperm.xlu0 %11634, %v11123
    %v11636 = vpop.permute.xlu0 %11635
    %11637 = vset.pattern.permute.xlu0 0
    %11638 = vperm.xlu0 %11637, %v11126
    %v11639 = vpop.permute.xlu0 %11638
    %11640 = vset.pattern.permute.xlu0 0
    %11641 = vperm.xlu0 %11640, %v11129
    %v11642 = vpop.permute.xlu0 %11641
    %11643 = vset.pattern.permute.xlu0 0
    %11644 = vperm.xlu0 %11643, %v11132
    %v11645 = vpop.permute.xlu0 %11644
    %11646 = vset.pattern.permute.xlu0 0
    %11647 = vperm.xlu0 %11646, %v11135
    %v11648 = vpop.permute.xlu0 %11647
    %11649 = vset.pattern.permute.xlu0 0
    %11650 = vperm.xlu0 %11649, %v11138
    %v11651 = vpop.permute.xlu0 %11650
    %11652 = vset.pattern.permute.xlu0 0
    %11653 = vperm.xlu0 %11652, %v11141
    %v11654 = vpop.permute.xlu0 %11653
    %11655 = vset.pattern.permute.xlu0 0
    %11656 = vperm.xlu0 %11655, %v11144
    %v11657 = vpop.permute.xlu0 %11656
    %11658 = vset.pattern.permute.xlu0 0
    %11659 = vperm.xlu0 %11658, %v11147
    %v11660 = vpop.permute.xlu0 %11659
    %11661 = vset.pattern.permute.xlu0 0
    %11662 = vperm.xlu0 %11661, %v11150
    %v11663 = vpop.permute.xlu0 %11662
    %11664 = vset.pattern.permute.xlu0 0
    %11665 = vperm.xlu0 %11664, %v11153
    %v11666 = vpop.permute.xlu0 %11665
    %11667 = vset.pattern.permute.xlu0 0
    %11668 = vperm.xlu0 %11667, %v11156
    %v11669 = vpop.permute.xlu0 %11668
    %11670 = vset.pattern.permute.xlu0 0
    %11671 = vperm.xlu0 %11670, %v11159
    %v11672 = vpop.permute.xlu0 %11671
    %11673 = vset.pattern.permute.xlu0 0
    %11674 = vperm.xlu0 %11673, %v11162
    %v11675 = vpop.permute.xlu0 %11674
    %11676 = vset.pattern.permute.xlu0 0
    %11677 = vperm.xlu0 %11676, %v11165
    %v11678 = vpop.permute.xlu0 %11677
    %11679 = vset.pattern.permute.xlu0 0
    %11680 = vperm.xlu0 %11679, %v11168
    %v11681 = vpop.permute.xlu0 %11680
    %11682 = vset.pattern.permute.xlu0 0
    %11683 = vperm.xlu0 %11682, %v11171
    %v11684 = vpop.permute.xlu0 %11683
    %11685 = vset.pattern.permute.xlu0 0
    %11686 = vperm.xlu0 %11685, %v11174
    %v11687 = vpop.permute.xlu0 %11686
    %11688 = vset.pattern.permute.xlu0 0
    %11689 = vperm.xlu0 %11688, %v11177
    %v11690 = vpop.permute.xlu0 %11689
    %11691 = vset.pattern.permute.xlu0 0
    %11692 = vperm.xlu0 %11691, %v11180
    %v11693 = vpop.permute.xlu0 %11692
    %11694 = vset.pattern.permute.xlu0 0
    %11695 = vperm.xlu0 %11694, %v11183
    %v11696 = vpop.permute.xlu0 %11695
    %11697 = vset.pattern.permute.xlu0 0
    %11698 = vperm.xlu0 %11697, %v11186
    %v11699 = vpop.permute.xlu0 %11698
    %11700 = vset.pattern.permute.xlu0 0
    %11701 = vperm.xlu0 %11700, %v11189
    %v11702 = vpop.permute.xlu0 %11701
    %11703 = vset.pattern.permute.xlu0 0
    %11704 = vperm.xlu0 %11703, %v11192
    %v11705 = vpop.permute.xlu0 %11704
    %11706 = vset.pattern.permute.xlu0 0
    %11707 = vperm.xlu0 %11706, %v11195
    %v11708 = vpop.permute.xlu0 %11707
    %11709 = vset.pattern.permute.xlu0 0
    %11710 = vperm.xlu0 %11709, %v11198
    %v11711 = vpop.permute.xlu0 %11710
    %11712 = vset.pattern.permute.xlu0 0
    %11713 = vperm.xlu0 %11712, %v11201
    %v11714 = vpop.permute.xlu0 %11713
    %11715 = vset.pattern.permute.xlu0 0
    %11716 = vperm.xlu0 %11715, %v11204
    %v11717 = vpop.permute.xlu0 %11716
    %11718 = vset.pattern.permute.xlu0 0
    %11719 = vperm.xlu0 %11718, %v11207
    %v11720 = vpop.permute.xlu0 %11719
    %11721 = vset.pattern.permute.xlu0 0
    %11722 = vperm.xlu0 %11721, %v11210
    %v11723 = vpop.permute.xlu0 %11722
    %11724 = vset.pattern.permute.xlu0 0
    %11725 = vperm.xlu0 %11724, %v11213
    %v11726 = vpop.permute.xlu0 %11725
    %11727 = vset.pattern.permute.xlu0 0
    %11728 = vperm.xlu0 %11727, %v11216
    %v11729 = vpop.permute.xlu0 %11728
    %11730 = vset.pattern.permute.xlu0 0
    %11731 = vperm.xlu0 %11730, %v11219
    %v11732 = vpop.permute.xlu0 %11731
    %11733 = vset.pattern.permute.xlu0 0
    %11734 = vperm.xlu0 %11733, %v11222
    %v11735 = vpop.permute.xlu0 %11734
    %11736 = vset.pattern.permute.xlu0 0
    %11737 = vperm.xlu0 %11736, %v11225
    %v11738 = vpop.permute.xlu0 %11737
    %11739 = vset.pattern.permute.xlu0 0
    %11740 = vperm.xlu0 %11739, %v11228
    %v11741 = vpop.permute.xlu0 %11740
    %11742 = vset.pattern.permute.xlu0 0
    %11743 = vperm.xlu0 %11742, %v11231
    %v11744 = vpop.permute.xlu0 %11743
    %11745 = vset.pattern.permute.xlu0 0
    %11746 = vperm.xlu0 %11745, %v11234
    %v11747 = vpop.permute.xlu0 %11746
    %11748 = vset.pattern.permute.xlu0 0
    %11749 = vperm.xlu0 %11748, %v11237
    %v11750 = vpop.permute.xlu0 %11749
    %11751 = vset.pattern.permute.xlu0 0
    %11752 = vperm.xlu0 %11751, %v11240
    %v11753 = vpop.permute.xlu0 %11752
    %11754 = vset.pattern.permute.xlu0 0
    %11755 = vperm.xlu0 %11754, %v11243
    %v11756 = vpop.permute.xlu0 %11755
    %11757 = vset.pattern.permute.xlu0 0
    %11758 = vperm.xlu0 %11757, %v11246
    %v11759 = vpop.permute.xlu0 %11758
    %11760 = vset.pattern.permute.xlu0 0
    %11761 = vperm.xlu0 %11760, %v11249
    %v11762 = vpop.permute.xlu0 %11761
    %11763 = vset.pattern.permute.xlu0 0
    %11764 = vperm.xlu0 %11763, %v11252
    %v11765 = vpop.permute.xlu0 %11764
    %11766 = vset.pattern.permute.xlu0 0
    %11767 = vperm.xlu0 %11766, %v11255
    %v11768 = vpop.permute.xlu0 %11767
    %11769 = vset.pattern.permute.xlu0 0
    %11770 = vperm.xlu0 %11769, %v11258
    %v11771 = vpop.permute.xlu0 %11770
    %11772 = vset.pattern.permute.xlu0 0
    %11773 = vperm.xlu0 %11772, %v11261
    %v11774 = vpop.permute.xlu0 %11773
    %11775 = vset.pattern.permute.xlu0 0
    %11776 = vperm.xlu0 %11775, %v11264
    %v11777 = vpop.permute.xlu0 %11776
    %11778 = vset.pattern.permute.xlu0 0
    %11779 = vperm.xlu0 %11778, %v11267
    %v11780 = vpop.permute.xlu0 %11779
    %11781 = vset.pattern.permute.xlu0 0
    %11782 = vperm.xlu0 %11781, %v11270
    %v11783 = vpop.permute.xlu0 %11782
    %11784 = vset.pattern.permute.xlu0 0
    %11785 = vperm.xlu0 %11784, %v11273
    %v11786 = vpop.permute.xlu0 %11785
    %11787 = vset.pattern.permute.xlu0 0
    %11788 = vperm.xlu0 %11787, %v11276
    %v11789 = vpop.permute.xlu0 %11788
    %11790 = vset.pattern.permute.xlu0 0
    %11791 = vperm.xlu0 %11790, %v11279
    %v11792 = vpop.permute.xlu0 %11791
    %11793 = vset.pattern.permute.xlu0 0
    %11794 = vperm.xlu0 %11793, %v11282
    %v11795 = vpop.permute.xlu0 %11794
    %11796 = vset.pattern.permute.xlu0 0
    %11797 = vperm.xlu0 %11796, %v11285
    %v11798 = vpop.permute.xlu0 %11797
    %11799 = vset.pattern.permute.xlu0 0
    %11800 = vperm.xlu0 %11799, %v11288
    %v11801 = vpop.permute.xlu0 %11800
    %11802 = vset.pattern.permute.xlu0 0
    %11803 = vperm.xlu0 %11802, %v11291
    %v11804 = vpop.permute.xlu0 %11803
    %11805 = vset.pattern.permute.xlu0 0
    %11806 = vperm.xlu0 %11805, %v11294
    %v11807 = vpop.permute.xlu0 %11806
    %11808 = vset.pattern.permute.xlu0 0
    %11809 = vperm.xlu0 %11808, %v11297
    %v11810 = vpop.permute.xlu0 %11809
    %11811 = vset.pattern.permute.xlu0 0
    %11812 = vperm.xlu0 %11811, %v11300
    %v11813 = vpop.permute.xlu0 %11812
    %11814 = vset.pattern.permute.xlu0 0
    %11815 = vperm.xlu0 %11814, %v11303
    %v11816 = vpop.permute.xlu0 %11815
    %11817 = vset.pattern.permute.xlu0 0
    %11818 = vperm.xlu0 %11817, %v11306
    %v11819 = vpop.permute.xlu0 %11818
    %11820 = vset.pattern.permute.xlu0 0
    %11821 = vperm.xlu0 %11820, %v11309
    %v11822 = vpop.permute.xlu0 %11821
    %11823 = vset.pattern.permute.xlu0 0
    %11824 = vperm.xlu0 %11823, %v11312
    %v11825 = vpop.permute.xlu0 %11824
    %11826 = vset.pattern.permute.xlu0 0
    %11827 = vperm.xlu0 %11826, %v11315
    %v11828 = vpop.permute.xlu0 %11827
    %11829 = vset.pattern.permute.xlu0 0
    %11830 = vperm.xlu0 %11829, %v11318
    %v11831 = vpop.permute.xlu0 %11830
    %11832 = vset.pattern.permute.xlu0 0
    %11833 = vperm.xlu0 %11832, %v11321
    %v11834 = vpop.permute.xlu0 %11833
    %11835 = vset.pattern.permute.xlu0 0
    %11836 = vperm.xlu0 %11835, %v11324
    %v11837 = vpop.permute.xlu0 %11836
    %11838 = vset.pattern.permute.xlu0 0
    %11839 = vperm.xlu0 %11838, %v11327
    %v11840 = vpop.permute.xlu0 %11839
    %11841 = vset.pattern.permute.xlu0 0
    %11842 = vperm.xlu0 %11841, %v11330
    %v11843 = vpop.permute.xlu0 %11842
    %11844 = vset.pattern.permute.xlu0 0
    %11845 = vperm.xlu0 %11844, %v11333
    %v11846 = vpop.permute.xlu0 %11845
    %11847 = vset.pattern.permute.xlu0 0
    %11848 = vperm.xlu0 %11847, %v11336
    %v11849 = vpop.permute.xlu0 %11848
    %11850 = vset.pattern.permute.xlu0 0
    %11851 = vperm.xlu0 %11850, %v11339
    %v11852 = vpop.permute.xlu0 %11851
    %11853 = vset.pattern.permute.xlu0 0
    %11854 = vperm.xlu0 %11853, %v11342
    %v11855 = vpop.permute.xlu0 %11854
    %11856 = vset.pattern.permute.xlu0 0
    %11857 = vperm.xlu0 %11856, %v11345
    %v11858 = vpop.permute.xlu0 %11857
    %11859 = vset.pattern.permute.xlu0 0
    %11860 = vperm.xlu0 %11859, %v11348
    %v11861 = vpop.permute.xlu0 %11860
    %11862 = vset.pattern.permute.xlu0 0
    %11863 = vperm.xlu0 %11862, %v11351
    %v11864 = vpop.permute.xlu0 %11863
    %11865 = vset.pattern.permute.xlu0 0
    %11866 = vperm.xlu0 %11865, %v11354
    %v11867 = vpop.permute.xlu0 %11866
    %11868 = vset.pattern.permute.xlu0 0
    %11869 = vperm.xlu0 %11868, %v11357
    %v11870 = vpop.permute.xlu0 %11869
    %11871 = vset.pattern.permute.xlu0 0
    %11872 = vperm.xlu0 %11871, %v11360
    %v11873 = vpop.permute.xlu0 %11872
    %11874 = vset.pattern.permute.xlu0 0
    %11875 = vperm.xlu0 %11874, %v11363
    %v11876 = vpop.permute.xlu0 %11875
    %11877 = vset.pattern.permute.xlu0 0
    %11878 = vperm.xlu0 %11877, %v11366
    %v11879 = vpop.permute.xlu0 %11878
    %11880 = vset.pattern.permute.xlu0 0
    %11881 = vperm.xlu0 %11880, %v11369
    %v11882 = vpop.permute.xlu0 %11881
    %11883 = vset.pattern.permute.xlu0 0
    %11884 = vperm.xlu0 %11883, %v11372
    %v11885 = vpop.permute.xlu0 %11884
    %11886 = vset.pattern.permute.xlu0 0
    %11887 = vperm.xlu0 %11886, %v11375
    %v11888 = vpop.permute.xlu0 %11887
    %11889 = vset.pattern.permute.xlu0 0
    %11890 = vperm.xlu0 %11889, %v11378
    %v11891 = vpop.permute.xlu0 %11890
    %11892 = vset.pattern.permute.xlu0 0
    %11893 = vperm.xlu0 %11892, %v11381
    %v11894 = vpop.permute.xlu0 %11893
    %11895 = vset.pattern.permute.xlu0 0
    %11896 = vperm.xlu0 %11895, %v11384
    %v11897 = vpop.permute.xlu0 %11896
    %11898 = vset.pattern.permute.xlu0 0
    %11899 = vperm.xlu0 %11898, %v11387
    %v11900 = vpop.permute.xlu0 %11899
    %11901 = vset.pattern.permute.xlu0 0
    %11902 = vperm.xlu0 %11901, %v11390
    %v11903 = vpop.permute.xlu0 %11902
    %11904 = vset.pattern.permute.xlu0 0
    %11905 = vperm.xlu0 %11904, %v11393
    %v11906 = vpop.permute.xlu0 %11905
    %11907 = vset.pattern.permute.xlu0 0
    %11908 = vperm.xlu0 %11907, %v11396
    %v11909 = vpop.permute.xlu0 %11908
    %11910 = vset.pattern.permute.xlu0 0
    %11911 = vperm.xlu0 %11910, %v11399
    %v11912 = vpop.permute.xlu0 %11911
    %11913 = vset.pattern.permute.xlu0 0
    %11914 = vperm.xlu0 %11913, %v11402
    %v11915 = vpop.permute.xlu0 %11914
    %11916 = vset.pattern.permute.xlu0 0
    %11917 = vperm.xlu0 %11916, %v11405
    %v11918 = vpop.permute.xlu0 %11917
    %11919 = vset.pattern.permute.xlu0 0
    %11920 = vperm.xlu0 %11919, %v11408
    %v11921 = vpop.permute.xlu0 %11920
    %11922 = vset.pattern.permute.xlu0 0
    %11923 = vperm.xlu0 %11922, %v11411
    %v11924 = vpop.permute.xlu0 %11923
    %11925 = vset.pattern.permute.xlu0 0
    %11926 = vperm.xlu0 %11925, %v11414
    %v11927 = vpop.permute.xlu0 %11926
    %11928 = vset.pattern.permute.xlu0 0
    %11929 = vperm.xlu0 %11928, %v11417
    %v11930 = vpop.permute.xlu0 %11929
    %11931 = vset.pattern.permute.xlu0 0
    %11932 = vperm.xlu0 %11931, %v11420
    %v11933 = vpop.permute.xlu0 %11932
    %11934 = vset.pattern.permute.xlu0 0
    %11935 = vperm.xlu0 %11934, %v11423
    %v11936 = vpop.permute.xlu0 %11935
    %11937 = vset.pattern.permute.xlu0 0
    %11938 = vperm.xlu0 %11937, %v11426
    %v11939 = vpop.permute.xlu0 %11938
    %11940 = vset.pattern.permute.xlu0 0
    %11941 = vperm.xlu0 %11940, %v11429
    %v11942 = vpop.permute.xlu0 %11941
    %11943 = vset.pattern.permute.xlu0 0
    %11944 = vperm.xlu0 %11943, %v11432
    %v11945 = vpop.permute.xlu0 %11944
    %v11946 = vperm.slane %v11564, %v159
    %v11947 = vadd.s32 %v159, 4294967288
    %v11948 = vperm.slane %v11567, %v11947
    %vm11949 = vcmask 130112
    %v11950 = vsel %vm11949, %v11948, %v11946
    %v11951 = vadd.s32 %v159, 4294967280
    %v11952 = vperm.slane %v11570, %v11951
    %vm11953 = vcmask 195712
    %v11954 = vsel %vm11953, %v11952, %v11950
    %v11955 = vadd.s32 %v159, 4294967272
    %v11956 = vperm.slane %v11573, %v11955
    %vm11957 = vcmask 261312
    %v11958 = vsel %vm11957, %v11956, %v11954
    %v11959 = vadd.s32 %v159, 4294967264
    %v11960 = vperm.slane %v11576, %v11959
    %vm11961 = vcmask 326912
    %v11962 = vsel %vm11961, %v11960, %v11958
    %v11963 = vadd.s32 %v159, 4294967256
    %v11964 = vperm.slane %v11579, %v11963
    %vm11965 = vcmask 392512
    %v11966 = vsel %vm11965, %v11964, %v11962
    %v11967 = vadd.s32 %v159, 4294967248
    %v11968 = vperm.slane %v11582, %v11967
    %vm11969 = vcmask 458112
    %v11970 = vsel %vm11969, %v11968, %v11966
    %v11971 = vadd.s32 %v159, 4294967240
    %v11972 = vperm.slane %v11585, %v11971
    %vm11973 = vcmask 523712
    %v11974 = vsel %vm11973, %v11972, %v11970
    %v11975 = vadd.s32 %v159, 4294967232
    %v11976 = vperm.slane %v11588, %v11975
    %vm11977 = vcmask 589312
    %v11978 = vsel %vm11977, %v11976, %v11974
    %v11979 = vadd.s32 %v159, 4294967224
    %v11980 = vperm.slane %v11591, %v11979
    %vm11981 = vcmask 654912
    %v11982 = vsel %vm11981, %v11980, %v11978
    %v11983 = vadd.s32 %v159, 4294967216
    %v11984 = vperm.slane %v11594, %v11983
    %vm11985 = vcmask 720512
    %v11986 = vsel %vm11985, %v11984, %v11982
    %v11987 = vadd.s32 %v159, 4294967208
    %v11988 = vperm.slane %v11597, %v11987
    %vm11989 = vcmask 786112
    %v11990 = vsel %vm11989, %v11988, %v11986
    %v11991 = vadd.s32 %v159, 4294967200
    %v11992 = vperm.slane %v11600, %v11991
    %vm11993 = vcmask 851712
    %v11994 = vsel %vm11993, %v11992, %v11990
    %v11995 = vadd.s32 %v159, 4294967192
    %v11996 = vperm.slane %v11603, %v11995
    %vm11997 = vcmask 917312
    %v11998 = vsel %vm11997, %v11996, %v11994
    %v11999 = vadd.s32 %v159, 4294967184
    %v12000 = vperm.slane %v11606, %v11999
    %vm12001 = vcmask 982912
    %v12002 = vsel %vm12001, %v12000, %v11998
    %v12003 = vadd.s32 %v159, 4294967176
    %v12004 = vperm.slane %v11609, %v12003
    %vm12005 = vcmask 1048512
    %v12006 = vsel %vm12005, %v12004, %v12002
    %v12007 = vperm.slane %v11612, %v159
    %v12008 = vperm.slane %v11615, %v11947
    %v12009 = vsel %vm11949, %v12008, %v12007
    %v12010 = vperm.slane %v11618, %v11951
    %v12011 = vsel %vm11953, %v12010, %v12009
    %v12012 = vperm.slane %v11621, %v11955
    %v12013 = vsel %vm11957, %v12012, %v12011
    %v12014 = vperm.slane %v11624, %v11959
    %v12015 = vsel %vm11961, %v12014, %v12013
    %v12016 = vperm.slane %v11627, %v11963
    %v12017 = vsel %vm11965, %v12016, %v12015
    %v12018 = vperm.slane %v11630, %v11967
    %v12019 = vsel %vm11969, %v12018, %v12017
    %v12020 = vperm.slane %v11633, %v11971
    %v12021 = vsel %vm11973, %v12020, %v12019
    %v12022 = vperm.slane %v11636, %v11975
    %v12023 = vsel %vm11977, %v12022, %v12021
    %v12024 = vperm.slane %v11639, %v11979
    %v12025 = vsel %vm11981, %v12024, %v12023
    %v12026 = vperm.slane %v11642, %v11983
    %v12027 = vsel %vm11985, %v12026, %v12025
    %v12028 = vperm.slane %v11645, %v11987
    %v12029 = vsel %vm11989, %v12028, %v12027
    %v12030 = vperm.slane %v11648, %v11991
    %v12031 = vsel %vm11993, %v12030, %v12029
    %v12032 = vperm.slane %v11651, %v11995
    %v12033 = vsel %vm11997, %v12032, %v12031
    %v12034 = vperm.slane %v11654, %v11999
    %v12035 = vsel %vm12001, %v12034, %v12033
    %v12036 = vperm.slane %v11657, %v12003
    %v12037 = vsel %vm12005, %v12036, %v12035
    %v12038 = vperm.slane %v11660, %v159
    %v12039 = vperm.slane %v11663, %v11947
    %v12040 = vsel %vm11949, %v12039, %v12038
    %v12041 = vperm.slane %v11666, %v11951
    %v12042 = vsel %vm11953, %v12041, %v12040
    %v12043 = vperm.slane %v11669, %v11955
    %v12044 = vsel %vm11957, %v12043, %v12042
    %v12045 = vperm.slane %v11672, %v11959
    %v12046 = vsel %vm11961, %v12045, %v12044
    %v12047 = vperm.slane %v11675, %v11963
    %v12048 = vsel %vm11965, %v12047, %v12046
    %v12049 = vperm.slane %v11678, %v11967
    %v12050 = vsel %vm11969, %v12049, %v12048
    %v12051 = vperm.slane %v11681, %v11971
    %v12052 = vsel %vm11973, %v12051, %v12050
    %v12053 = vperm.slane %v11684, %v11975
    %v12054 = vsel %vm11977, %v12053, %v12052
    %v12055 = vperm.slane %v11687, %v11979
    %v12056 = vsel %vm11981, %v12055, %v12054
    %v12057 = vperm.slane %v11690, %v11983
    %v12058 = vsel %vm11985, %v12057, %v12056
    %v12059 = vperm.slane %v11693, %v11987
    %v12060 = vsel %vm11989, %v12059, %v12058
    %v12061 = vperm.slane %v11696, %v11991
    %v12062 = vsel %vm11993, %v12061, %v12060
    %v12063 = vperm.slane %v11699, %v11995
    %v12064 = vsel %vm11997, %v12063, %v12062
    %v12065 = vperm.slane %v11702, %v11999
    %v12066 = vsel %vm12001, %v12065, %v12064
    %v12067 = vperm.slane %v11705, %v12003
    %v12068 = vsel %vm12005, %v12067, %v12066
    %v12069 = vperm.slane %v11708, %v159
    %v12070 = vperm.slane %v11711, %v11947
    %v12071 = vsel %vm11949, %v12070, %v12069
    %v12072 = vperm.slane %v11714, %v11951
    %v12073 = vsel %vm11953, %v12072, %v12071
    %v12074 = vperm.slane %v11717, %v11955
    %v12075 = vsel %vm11957, %v12074, %v12073
    %v12076 = vperm.slane %v11720, %v11959
    %v12077 = vsel %vm11961, %v12076, %v12075
    %v12078 = vperm.slane %v11723, %v11963
    %v12079 = vsel %vm11965, %v12078, %v12077
    %v12080 = vperm.slane %v11726, %v11967
    %v12081 = vsel %vm11969, %v12080, %v12079
    %v12082 = vperm.slane %v11729, %v11971
    %v12083 = vsel %vm11973, %v12082, %v12081
    %v12084 = vperm.slane %v11732, %v11975
    %v12085 = vsel %vm11977, %v12084, %v12083
    %v12086 = vperm.slane %v11735, %v11979
    %v12087 = vsel %vm11981, %v12086, %v12085
    %v12088 = vperm.slane %v11738, %v11983
    %v12089 = vsel %vm11985, %v12088, %v12087
    %v12090 = vperm.slane %v11741, %v11987
    %v12091 = vsel %vm11989, %v12090, %v12089
    %v12092 = vperm.slane %v11744, %v11991
    %v12093 = vsel %vm11993, %v12092, %v12091
    %v12094 = vperm.slane %v11747, %v11995
    %v12095 = vsel %vm11997, %v12094, %v12093
    %v12096 = vperm.slane %v11750, %v11999
    %v12097 = vsel %vm12001, %v12096, %v12095
    %v12098 = vperm.slane %v11753, %v12003
    %v12099 = vsel %vm12005, %v12098, %v12097
    %v12100 = vperm.slane %v11756, %v159
    %v12101 = vperm.slane %v11759, %v11947
    %v12102 = vsel %vm11949, %v12101, %v12100
    %v12103 = vperm.slane %v11762, %v11951
    %v12104 = vsel %vm11953, %v12103, %v12102
    %v12105 = vperm.slane %v11765, %v11955
    %v12106 = vsel %vm11957, %v12105, %v12104
    %v12107 = vperm.slane %v11768, %v11959
    %v12108 = vsel %vm11961, %v12107, %v12106
    %v12109 = vperm.slane %v11771, %v11963
    %v12110 = vsel %vm11965, %v12109, %v12108
    %v12111 = vperm.slane %v11774, %v11967
    %v12112 = vsel %vm11969, %v12111, %v12110
    %v12113 = vperm.slane %v11777, %v11971
    %v12114 = vsel %vm11973, %v12113, %v12112
    %v12115 = vperm.slane %v11780, %v11975
    %v12116 = vsel %vm11977, %v12115, %v12114
    %v12117 = vperm.slane %v11783, %v11979
    %v12118 = vsel %vm11981, %v12117, %v12116
    %v12119 = vperm.slane %v11786, %v11983
    %v12120 = vsel %vm11985, %v12119, %v12118
    %v12121 = vperm.slane %v11789, %v11987
    %v12122 = vsel %vm11989, %v12121, %v12120
    %v12123 = vperm.slane %v11792, %v11991
    %v12124 = vsel %vm11993, %v12123, %v12122
    %v12125 = vperm.slane %v11795, %v11995
    %v12126 = vsel %vm11997, %v12125, %v12124
    %v12127 = vperm.slane %v11798, %v11999
    %v12128 = vsel %vm12001, %v12127, %v12126
    %v12129 = vperm.slane %v11801, %v12003
    %v12130 = vsel %vm12005, %v12129, %v12128
    %v12131 = vperm.slane %v11804, %v159
    %v12132 = vperm.slane %v11807, %v11947
    %v12133 = vsel %vm11949, %v12132, %v12131
    %v12134 = vperm.slane %v11810, %v11951
    %v12135 = vsel %vm11953, %v12134, %v12133
    %v12136 = vperm.slane %v11813, %v11955
    %v12137 = vsel %vm11957, %v12136, %v12135
    %v12138 = vperm.slane %v11816, %v11959
    %v12139 = vsel %vm11961, %v12138, %v12137
    %v12140 = vperm.slane %v11819, %v11963
    %v12141 = vsel %vm11965, %v12140, %v12139
    %v12142 = vperm.slane %v11822, %v11967
    %v12143 = vsel %vm11969, %v12142, %v12141
    %v12144 = vperm.slane %v11825, %v11971
    %v12145 = vsel %vm11973, %v12144, %v12143
    %v12146 = vperm.slane %v11828, %v11975
    %v12147 = vsel %vm11977, %v12146, %v12145
    %v12148 = vperm.slane %v11831, %v11979
    %v12149 = vsel %vm11981, %v12148, %v12147
    %v12150 = vperm.slane %v11834, %v11983
    %v12151 = vsel %vm11985, %v12150, %v12149
    %v12152 = vperm.slane %v11837, %v11987
    %v12153 = vsel %vm11989, %v12152, %v12151
    %v12154 = vperm.slane %v11840, %v11991
    %v12155 = vsel %vm11993, %v12154, %v12153
    %v12156 = vperm.slane %v11843, %v11995
    %v12157 = vsel %vm11997, %v12156, %v12155
    %v12158 = vperm.slane %v11846, %v11999
    %v12159 = vsel %vm12001, %v12158, %v12157
    %v12160 = vperm.slane %v11849, %v12003
    %v12161 = vsel %vm12005, %v12160, %v12159
    %v12162 = vperm.slane %v11852, %v159
    %v12163 = vperm.slane %v11855, %v11947
    %v12164 = vsel %vm11949, %v12163, %v12162
    %v12165 = vperm.slane %v11858, %v11951
    %v12166 = vsel %vm11953, %v12165, %v12164
    %v12167 = vperm.slane %v11861, %v11955
    %v12168 = vsel %vm11957, %v12167, %v12166
    %v12169 = vperm.slane %v11864, %v11959
    %v12170 = vsel %vm11961, %v12169, %v12168
    %v12171 = vperm.slane %v11867, %v11963
    %v12172 = vsel %vm11965, %v12171, %v12170
    %v12173 = vperm.slane %v11870, %v11967
    %v12174 = vsel %vm11969, %v12173, %v12172
    %v12175 = vperm.slane %v11873, %v11971
    %v12176 = vsel %vm11973, %v12175, %v12174
    %v12177 = vperm.slane %v11876, %v11975
    %v12178 = vsel %vm11977, %v12177, %v12176
    %v12179 = vperm.slane %v11879, %v11979
    %v12180 = vsel %vm11981, %v12179, %v12178
    %v12181 = vperm.slane %v11882, %v11983
    %v12182 = vsel %vm11985, %v12181, %v12180
    %v12183 = vperm.slane %v11885, %v11987
    %v12184 = vsel %vm11989, %v12183, %v12182
    %v12185 = vperm.slane %v11888, %v11991
    %v12186 = vsel %vm11993, %v12185, %v12184
    %v12187 = vperm.slane %v11891, %v11995
    %v12188 = vsel %vm11997, %v12187, %v12186
    %v12189 = vperm.slane %v11894, %v11999
    %v12190 = vsel %vm12001, %v12189, %v12188
    %v12191 = vperm.slane %v11897, %v12003
    %v12192 = vsel %vm12005, %v12191, %v12190
    %v12193 = vperm.slane %v11900, %v159
    %v12194 = vperm.slane %v11903, %v11947
    %v12195 = vsel %vm11949, %v12194, %v12193
    %v12196 = vperm.slane %v11906, %v11951
    %v12197 = vsel %vm11953, %v12196, %v12195
    %v12198 = vperm.slane %v11909, %v11955
    %v12199 = vsel %vm11957, %v12198, %v12197
    %v12200 = vperm.slane %v11912, %v11959
    %v12201 = vsel %vm11961, %v12200, %v12199
    %v12202 = vperm.slane %v11915, %v11963
    %v12203 = vsel %vm11965, %v12202, %v12201
    %v12204 = vperm.slane %v11918, %v11967
    %v12205 = vsel %vm11969, %v12204, %v12203
    %v12206 = vperm.slane %v11921, %v11971
    %v12207 = vsel %vm11973, %v12206, %v12205
    %v12208 = vperm.slane %v11924, %v11975
    %v12209 = vsel %vm11977, %v12208, %v12207
    %v12210 = vperm.slane %v11927, %v11979
    %v12211 = vsel %vm11981, %v12210, %v12209
    %v12212 = vperm.slane %v11930, %v11983
    %v12213 = vsel %vm11985, %v12212, %v12211
    %v12214 = vperm.slane %v11933, %v11987
    %v12215 = vsel %vm11989, %v12214, %v12213
    %v12216 = vperm.slane %v11936, %v11991
    %v12217 = vsel %vm11993, %v12216, %v12215
    %v12218 = vperm.slane %v11939, %v11995
    %v12219 = vsel %vm11997, %v12218, %v12217
    %v12220 = vperm.slane %v11942, %v11999
    %v12221 = vsel %vm12001, %v12220, %v12219
    %v12222 = vperm.slane %v11945, %v12003
    %v12223 = vsel %vm12005, %v12222, %v12221
    %vm12224 = vcmask 1041409
    %v12225 = vsel %vm12224, %v12037, %v12006
    %vm12226 = vcmask 1042434
    %v12227 = vsel %vm12226, %v12068, %v12225
    %vm12228 = vcmask 1043459
    %v12229 = vsel %vm12228, %v12099, %v12227
    %vm12230 = vcmask 1044484
    %v12231 = vsel %vm12230, %v12130, %v12229
    %vm12232 = vcmask 1045509
    %v12233 = vsel %vm12232, %v12161, %v12231
    %vm12234 = vcmask 1046534
    %v12235 = vsel %vm12234, %v12192, %v12233
    %vm12236 = vcmask 1047559
    %v12237 = vsel %vm12236, %v12223, %v12235
    %12239 = vst [vmem:[#allocation2] sm:$0xff] %v12237
    // Predicated region
    $region34: #{tpu_custom_call.1} parent=1 // pred_check
      _
    $region35: #{tpu_custom_call.1} parent=1 // pred_check_branch
      %12241 = sbr.rel (0) target = $region37
    $region36: #{tpu_custom_call.1} parent=1 // pred_region
      %12243 = vsyncadd [#allocation3], 0
      %s12245 = sshll.u32 [#allocation2], 4
      %s12246 = int_to_ptr.vmem [resolvable:$true] %s12245
      %s12247 = sshll.u32 %s8, 4
      %s12248 = int_to_ptr.hbm [resolvable:$true] %s12247
      %12250 = dma.vmem_to_hbm [thread:$0]  %s12246, 128, %s12248, [#allocation3]
    $region37: #{tpu_custom_call.1} parent=1 // pred_fallthru
      _
    // Predicated region
    $region38: #{tpu_custom_call.1} parent=1 // pred_check
      _
    $region39: #{tpu_custom_call.1} parent=1 // pred_check_branch
      %12252 = sbr.rel (0) target = $region41
    $region40: #{tpu_custom_call.1} parent=1 // pred_region
      %12254 = dma.done [#allocation3], 128
    $region41: #{tpu_custom_call.1} parent=1 // pred_fallthru
      _
    %12255 = vsyncpa [#allocation3], 1

</llo_original>
